<compile_context>
chip_gen: v7x
topology: tpu7x:2x2x1
jax: 0.10.0
libtpu: 0.0.40
codegen_flags: <defaults>
</compile_context>

<pallas_src>
import functools
import math

import jax
import jax.numpy as jnp
import numpy as np
from jax.experimental import pallas as pl
from jax.experimental.pallas import tpu as pltpu


# ----------------------------------------------------------------------------
# Pallas kernel: fused (bf16 matmul) + bias + activation, f32 epilogue
# ----------------------------------------------------------------------------
def _matmul_act_kernel(a_ref, w_ref, b_ref, o_ref, *, act):
    acc = jnp.dot(a_ref[...], w_ref[...], preferred_element_type=jnp.float32)
    acc = acc + b_ref[...]
    if act == "gelu":
        # tanh-approx GELU (EUP tanh); TODO(synk): nn.GELU() default is exact
        # erf -- tanh approximation differs by <1e-3, acceptable for this loss.
        acc = 0.5 * acc * (1.0 + jnp.tanh(
            0.7978845608028654 * (acc + 0.044715 * acc * acc * acc)))
    elif act == "leaky_relu":          # nn.LeakyReLU default slope 0.01
        acc = jnp.where(acc >= 0.0, acc, 0.01 * acc)
    elif act == "sigmoid":
        acc = 1.0 / (1.0 + jnp.exp(-acc))
    # act == "none": passthrough
    o_ref[...] = acc


def _round_up(x, m):
    return (x + m - 1) // m * m


def matmul_act(a, layer, act="none", tm=256):
    """Y[:M,:N] = act(a @ W + b) with W/b pre-padded to (Kp, Np)/(1, Np)."""
    M, K = a.shape
    Kp, Np = layer["w"].shape
    N = layer["N"]
    tm = min(tm, _round_up(M, 8))
    Mp = _round_up(M, tm)

    # Per-call prep: only the activation matrix (bf16, zero-padded).
    a_p = jnp.zeros((Mp, Kp), jnp.bfloat16).at[:M, :K].set(
        a.astype(jnp.bfloat16))

    flops = int(2 * Mp * Kp * Np)
    transcendentals = int(Mp * Np) if act in ("gelu", "sigmoid") else 0
    bytes_accessed = int(Mp * Kp * 2 + Kp * Np * 2 + Np * 4 + Mp * Np * 4)

    kern = functools.partial(_matmul_act_kernel, act=act)
    out = pl.pallas_call(
        kern,
        out_shape=jax.ShapeDtypeStruct((Mp, Np), jnp.float32),
        grid=(Mp // tm,),
        in_specs=[
            pl.BlockSpec((tm, Kp), lambda i: (i, 0)),   # A tile (pipelined)
            pl.BlockSpec((Kp, Np), lambda i: (0, 0)),   # W resident
            pl.BlockSpec((1, Np), lambda i: (0, 0)),    # bias resident
        ],
        out_specs=pl.BlockSpec((tm, Np), lambda i: (i, 0)),
        compiler_params=pltpu.CompilerParams(
            dimension_semantics=("parallel",)),
        cost_estimate=pl.CostEstimate(
            flops=flops, transcendentals=transcendentals,
            bytes_accessed=bytes_accessed),
    )(a_p, layer["w"], layer["b"])
    return out[:M, :N]


# ----------------------------------------------------------------------------
# Conv2d (valid, stride 1) via NHWC im2col + the Pallas kernel
# ----------------------------------------------------------------------------
def conv2d_nhwc(x, layer, k, act):
    # x: (B, H, W, C) NHWC
    B, H, W, C = x.shape
    Ho, Wo = H - k + 1, W - k + 1
    # Lane-contiguous patches: feature index = (di*k + dj)*C + c, matching the
    # (kh, kw, Cin, Cout) weight flattening done at init.
    patches = jnp.concatenate(
        [x[:, di:di + Ho, dj:dj + Wo, :] for di in range(k) for dj in range(k)],
        axis=-1)                                        # (B, Ho, Wo, k*k*C)
    a = patches.reshape(B * Ho * Wo, k * k * C)
    y = matmul_act(a, layer, act)                       # (B*Ho*Wo, Cout)
    return y.reshape(B, Ho, Wo, layer["N"])


def maxpool2_nhwc(x):
    B, H, W, C = x.shape
    return x.reshape(B, H // 2, 2, W // 2, 2, C).max(axis=(2, 4))


# ----------------------------------------------------------------------------
# Parameter prep: PyTorch-style init, BN folding, one-time pad/transpose/bf16
# ----------------------------------------------------------------------------
def _prep_matmul(w_mat, b):
    K, N = int(w_mat.shape[0]), int(w_mat.shape[1])
    Kp, Np = _round_up(K, 128), _round_up(N, 128)
    w_p = jnp.zeros((Kp, Np), jnp.bfloat16).at[:K, :N].set(
        w_mat.astype(jnp.bfloat16))
    b_p = jnp.zeros((1, Np), jnp.float32).at[:, :N].set(
        b.reshape(1, N).astype(jnp.float32))
    return {"w": w_p, "b": b_p, "K": K, "N": N}


def _prep_conv(w, b):
    cout, cin, k, _ = w.shape
    w_mat = w.transpose(2, 3, 1, 0).reshape(k * k * cin, cout)
    return _prep_matmul(w_mat, b)


def _bn_eval(c):
    # eval-mode BatchNorm with default init: scale=1, shift=0 (identity).
    gamma, beta = jnp.ones(c, jnp.float32), jnp.zeros(c, jnp.float32)
    mean, var, eps = jnp.zeros(c, jnp.float32), jnp.ones(c, jnp.float32), 1e-5
    scale = gamma / jnp.sqrt(var + eps)
    shift = beta - mean * scale
    return scale, shift


def _fold_bn_into_conv(w, b, scale, shift):
    # next conv consumes BN(a) = scale*a + shift on its input channels
    # (commutes through MaxPool since scale > 0).
    w_f = w * scale[None, :, None, None]
    b_f = b + jnp.einsum("oikl,i->o", w, shift)
    return w_f, b_f


def _fold_bn_into_linear(w, b, scale, shift):
    # w: (din, dout)
    w_f = w * scale[:, None]
    b_f = b + shift @ w
    return w_f, b_f


def init_params(key):
    def conv_init(k, cout, cin, ksz):
        k1, k2 = jax.random.split(k)
        bound = 1.0 / math.sqrt(cin * ksz * ksz)
        w = jax.random.uniform(k1, (cout, cin, ksz, ksz), jnp.float32,
                               -bound, bound)
        b = jax.random.uniform(k2, (cout,), jnp.float32, -bound, bound)
        return w, b

    def linear_init(k, din, dout):
        k1, k2 = jax.random.split(k)
        bound = 1.0 / math.sqrt(din)
        w = jax.random.uniform(k1, (din, dout), jnp.float32, -bound, bound)
        b = jax.random.uniform(k2, (dout,), jnp.float32, -bound, bound)
        return w, b

    ks = jax.random.split(key, 8)
    c1 = conv_init(ks[0], 128, 65, 3)
    c2 = conv_init(ks[1], 64, 128, 3)
    c3 = conv_init(ks[2], 32, 64, 3)
    c4 = conv_init(ks[3], 16, 32, 3)
    c5 = conv_init(ks[4], 2, 16, 4)
    l1 = linear_init(ks[5], 64, 256)
    l2 = linear_init(ks[6], 256, 128)
    l3 = linear_init(ks[7], 128, 1)

    # Fold the (identity) eval-mode BatchNorms into the next layer's weights
    # at init time (numerically a no-op here, zero runtime cost).
    s1, t1 = _bn_eval(128)
    s2, t2 = _bn_eval(64)
    s3, t3 = _bn_eval(32)
    s4, t4 = _bn_eval(16)
    c2 = _fold_bn_into_conv(*c2, s1, t1)
    c3 = _fold_bn_into_conv(*c3, s2, t2)
    c4 = _fold_bn_into_conv(*c4, s3, t3)
    c5 = _fold_bn_into_conv(*c5, s4, t4)

    p1s, p1t = _bn_eval(256)
    p2s, p2t = _bn_eval(128)
    l2 = _fold_bn_into_linear(*l2, p1s, p1t)
    l3 = _fold_bn_into_linear(*l3, p2s, p2t)

    return {
        "c1": _prep_conv(*c1), "c2": _prep_conv(*c2), "c3": _prep_conv(*c3),
        "c4": _prep_conv(*c4), "c5": _prep_conv(*c5),
        "l1": _prep_matmul(*l1), "l2": _prep_matmul(*l2),
        "l3": _prep_matmul(*l3),
    }


# ----------------------------------------------------------------------------
# Modules (NHWC internally; NCHW only at the model boundary)
# ----------------------------------------------------------------------------
def gnld_forward(p, emb, img_nhwc):
    # emb: (B, 64)   img_nhwc: (B, 32, 32, 1)
    B = img_nhwc.shape[0]
    em = jnp.broadcast_to(emb[:, None, None, :], (B, 32, 32, emb.shape[-1]))
    x = jnp.concatenate([img_nhwc, em], axis=-1)         # (B, 32, 32, 65)
    x = conv2d_nhwc(x, p["c1"], 3, "gelu")               # (B, 30, 30, 128)
    x = conv2d_nhwc(x, p["c2"], 3, "gelu")               # (B, 28, 28, 64)
    x = maxpool2_nhwc(x)                                 # (B, 14, 14, 64)
    x = conv2d_nhwc(x, p["c3"], 3, "gelu")               # (B, 12, 12, 32)
    x = maxpool2_nhwc(x)                                 # (B, 6, 6, 32)
    x = conv2d_nhwc(x, p["c4"], 3, "gelu")               # (B, 4, 4, 16)
    x = conv2d_nhwc(x, p["c5"], 4, "none")               # (B, 1, 1, 2)
    return x.reshape(B, -1)                              # (B, 2)


def priord_forward(p, x):
    x = matmul_act(x, p["l1"], "leaky_relu")
    x = matmul_act(x, p["l2"], "leaky_relu")
    x = matmul_act(x, p["l3"], "sigmoid")
    return x                                             # (bs, 1)


def dim_forward(params, EDisease, M, noise_key, soft=0.7, alpha=1.0,
                gamma=1.0, mode=None):
    bs = EDisease.shape[0]
    shuffle = 1
    EDiseaseFake = jnp.concatenate([EDisease[shuffle:], EDisease[:shuffle]],
                                   axis=0)

    # Batch the real / fake GnLD passes into one forward (half the launches).
    emb_cat = jnp.concatenate([EDisease, EDiseaseFake], axis=0)    # (2bs, 64)
    img_nhwc = jnp.transpose(M, (0, 2, 3, 1))                      # NCHW->NHWC
    img_cat = jnp.concatenate([img_nhwc, img_nhwc], axis=0)        # (2bs,32,32,1)
    logits = gnld_forward(params, emb_cat, img_cat)                # (2bs, 2)
    GLD0, GLD1 = logits[:bs], logits[bs:]

    def ce_fixed_target(lg, target_idx):                 # nn.CrossEntropyLoss
        lse = jax.nn.logsumexp(lg, axis=1)
        return jnp.mean(lse - lg[:, target_idx])

    GLD_loss = alpha * (ce_fixed_target(GLD0, 0) + ce_fixed_target(GLD1, 1))

    # target_real_fake: fake_domain = soft, plus uniform noise (mode != 'D').
    fake_domain = soft * jnp.ones((bs, 1), jnp.float32)
    fake_domain = fake_domain + 1.1 * (1.0 - soft) * jax.random.uniform(
        noise_key, (bs, 1), jnp.float32)

    pred_domain_T = priord_forward(params, EDisease.reshape(bs, -1))
    loss_domain_T = jnp.mean((pred_domain_T - fake_domain) ** 2)
    return GLD_loss + gamma * loss_domain_T


# ----------------------------------------------------------------------------
if __name__ == "__main__":
    key = jax.random.PRNGKey(0)
    k_e, k_m, k_noise = jax.random.split(key, 3)

    bs = 2
    EDisease = jax.random.normal(k_e, (bs, 64), jnp.float32)     # embedding
    M = jax.random.normal(k_m, (bs, 1, 32, 32), jnp.float32)     # image (NCHW)

    params = init_params(jax.random.PRNGKey(42))

    # jit with params closed over (padded shapes stay static Python ints).
    loss_fn = jax.jit(lambda e, m, k: dim_forward(params, e, m, k, soft=0.7))
    loss = jax.block_until_ready(loss_fn(EDisease, M, k_noise))
    assert np.isfinite(np.asarray(loss)), f"non-finite loss: {loss}"
    print("KERNEL_OK")
</pallas_src>

<mosaic_0001>
module attributes {stable_mosaic.version = 11 : i64} {
  func.func @_matmul_act_kernel(%arg0: i32, %arg1: memref<256x640xbf16, #tpu.memory_space<vmem>>, %arg2: memref<640x128xbf16, #tpu.memory_space<vmem>>, %arg3: memref<1x128xf32, #tpu.memory_space<vmem>>, %arg4: memref<256x128xf32, #tpu.memory_space<vmem>>) attributes {dimension_semantics = [#tpu.dimension_semantics<parallel>], iteration_bounds = array<i64: 15>, scalar_prefetch = 0 : i64, scratch_operands = 0 : i64, tpu.core_type = #tpu.core_type<tc>, window_params = [{transform_indices = @transform_0, window_bounds = array<i64: 256, 640>}, {pipeline_mode = #tpu.pipeline_mode<synchronous>, transform_indices = @transform_1, window_bounds = array<i64: 640, 128>}, {pipeline_mode = #tpu.pipeline_mode<synchronous>, transform_indices = @transform_2, window_bounds = array<i64: 1, 128>}, {transform_indices = @transform_3, window_bounds = array<i64: 256, 128>}]} {
    %c0 = arith.constant 0 : index
    %c0_0 = arith.constant 0 : index
    %0 = vector.load %arg1[%c0, %c0_0] : memref<256x640xbf16, #tpu.memory_space<vmem>>, vector<256x640xbf16>
    %c0_1 = arith.constant 0 : index
    %c0_2 = arith.constant 0 : index
    %1 = vector.load %arg2[%c0_1, %c0_2] : memref<640x128xbf16, #tpu.memory_space<vmem>>, vector<640x128xbf16>
    %cst = arith.constant dense<0.000000e+00> : vector<256x128xf32>
    %2 = tpu.matmul %0, %1, %cst {dimension_numbers = #tpu.dot_dimension_numbers<[1], [0], [0], [1], [0, 0, 1, 1], [], []>} : vector<256x640xbf16>, vector<640x128xbf16>, vector<256x128xf32> -> vector<256x128xf32>
    %c0_3 = arith.constant 0 : index
    %c0_4 = arith.constant 0 : index
    %3 = vector.load %arg3[%c0_3, %c0_4] : memref<1x128xf32, #tpu.memory_space<vmem>>, vector<1x128xf32>
    %4 = vector.broadcast %3 : vector<1x128xf32> to vector<256x128xf32>
    %5 = arith.addf %2, %4 : vector<256x128xf32>
    %cst_5 = arith.constant 5.000000e-01 : f32
    %6 = vector.broadcast %cst_5 : f32 to vector<256x128xf32>
    %7 = arith.mulf %6, %5 : vector<256x128xf32>
    %cst_6 = arith.constant 4.471500e-02 : f32
    %8 = vector.broadcast %cst_6 : f32 to vector<256x128xf32>
    %9 = arith.mulf %8, %5 : vector<256x128xf32>
    %10 = arith.mulf %9, %5 : vector<256x128xf32>
    %11 = arith.mulf %10, %5 : vector<256x128xf32>
    %12 = arith.addf %5, %11 : vector<256x128xf32>
    %cst_7 = arith.constant 0.797884583 : f32
    %13 = vector.broadcast %cst_7 : f32 to vector<256x128xf32>
    %14 = arith.mulf %13, %12 : vector<256x128xf32>
    %15 = math.tanh %14 : vector<256x128xf32>
    %cst_8 = arith.constant 1.000000e+00 : f32
    %16 = vector.broadcast %cst_8 : f32 to vector<256x128xf32>
    %17 = arith.addf %16, %15 : vector<256x128xf32>
    %18 = arith.mulf %7, %17 : vector<256x128xf32>
    %c0_9 = arith.constant 0 : index
    %c0_10 = arith.constant 0 : index
    %19 = vector.load %arg4[%c0_9, %c0_10] : memref<256x128xf32, #tpu.memory_space<vmem>>, vector<256x128xf32>
    tpu.vector_store %arg4[%c0_9, %c0_10], %18 {strides = array<i32>} : memref<256x128xf32, #tpu.memory_space<vmem>>, vector<256x128xf32>,
    return
  }
  func.func @transform_0(%arg0: i32) -> (i32, i32) {
    %c0_i32 = arith.constant 0 : i32
    %c0_i32_0 = arith.constant 0 : i32
    return %arg0, %c0_i32 : i32, i32
  }
  func.func @transform_1(%arg0: i32) -> (i32, i32) {
    %c0_i32 = arith.constant 0 : i32
    %c0_i32_0 = arith.constant 0 : i32
    %c0_i32_1 = arith.constant 0 : i32
    return %c0_i32, %c0_i32_0 : i32, i32
  }
  func.func @transform_2(%arg0: i32) -> (i32, i32) {
    %c0_i32 = arith.constant 0 : i32
    %c0_i32_0 = arith.constant 0 : i32
    %c0_i32_1 = arith.constant 0 : i32
    return %c0_i32, %c0_i32_0 : i32, i32
  }
  func.func @transform_3(%arg0: i32) -> (i32, i32) {
    %c0_i32 = arith.constant 0 : i32
    %c0_i32_0 = arith.constant 0 : i32
    return %arg0, %c0_i32 : i32, i32
  }
}

module attributes {stable_mosaic.version = 11 : i64} {
  func.func @_matmul_act_kernel(%arg0: i32, %arg1: memref<256x1152xbf16, #tpu.memory_space<vmem>>, %arg2: memref<1152x128xbf16, #tpu.memory_space<vmem>>, %arg3: memref<1x128xf32, #tpu.memory_space<vmem>>, %arg4: memref<256x128xf32, #tpu.memory_space<vmem>>) attributes {dimension_semantics = [#tpu.dimension_semantics<parallel>], iteration_bounds = array<i64: 13>, scalar_prefetch = 0 : i64, scratch_operands = 0 : i64, tpu.core_type = #tpu.core_type<tc>, window_params = [{transform_indices = @transform_0, window_bounds = array<i64: 256, 1152>}, {pipeline_mode = #tpu.pipeline_mode<synchronous>, transform_indices = @transform_1, window_bounds = array<i64: 1152, 128>}, {pipeline_mode = #tpu.pipeline_mode<synchronous>, transform_indices = @transform_2, window_bounds = array<i64: 1, 128>}, {transform_indices = @transform_3, window_bounds = array<i64: 256, 128>}]} {
    %c0 = arith.constant 0 : index
    %c0_0 = arith.constant 0 : index
    %0 = vector.load %arg1[%c0, %c0_0] : memref<256x1152xbf16, #tpu.memory_space<vmem>>, vector<256x1152xbf16>
    %c0_1 = arith.constant 0 : index
    %c0_2 = arith.constant 0 : index
    %1 = vector.load %arg2[%c0_1, %c0_2] : memref<1152x128xbf16, #tpu.memory_space<vmem>>, vector<1152x128xbf16>
    %cst = arith.constant dense<0.000000e+00> : vector<256x128xf32>
    %2 = tpu.matmul %0, %1, %cst {dimension_numbers = #tpu.dot_dimension_numbers<[1], [0], [0], [1], [0, 0, 1, 1], [], []>} : vector<256x1152xbf16>, vector<1152x128xbf16>, vector<256x128xf32> -> vector<256x128xf32>
    %c0_3 = arith.constant 0 : index
    %c0_4 = arith.constant 0 : index
    %3 = vector.load %arg3[%c0_3, %c0_4] : memref<1x128xf32, #tpu.memory_space<vmem>>, vector<1x128xf32>
    %4 = vector.broadcast %3 : vector<1x128xf32> to vector<256x128xf32>
    %5 = arith.addf %2, %4 : vector<256x128xf32>
    %cst_5 = arith.constant 5.000000e-01 : f32
    %6 = vector.broadcast %cst_5 : f32 to vector<256x128xf32>
    %7 = arith.mulf %6, %5 : vector<256x128xf32>
    %cst_6 = arith.constant 4.471500e-02 : f32
    %8 = vector.broadcast %cst_6 : f32 to vector<256x128xf32>
    %9 = arith.mulf %8, %5 : vector<256x128xf32>
    %10 = arith.mulf %9, %5 : vector<256x128xf32>
    %11 = arith.mulf %10, %5 : vector<256x128xf32>
    %12 = arith.addf %5, %11 : vector<256x128xf32>
    %cst_7 = arith.constant 0.797884583 : f32
    %13 = vector.broadcast %cst_7 : f32 to vector<256x128xf32>
    %14 = arith.mulf %13, %12 : vector<256x128xf32>
    %15 = math.tanh %14 : vector<256x128xf32>
    %cst_8 = arith.constant 1.000000e+00 : f32
    %16 = vector.broadcast %cst_8 : f32 to vector<256x128xf32>
    %17 = arith.addf %16, %15 : vector<256x128xf32>
    %18 = arith.mulf %7, %17 : vector<256x128xf32>
    %c0_9 = arith.constant 0 : index
    %c0_10 = arith.constant 0 : index
    %19 = vector.load %arg4[%c0_9, %c0_10] : memref<256x128xf32, #tpu.memory_space<vmem>>, vector<256x128xf32>
    tpu.vector_store %arg4[%c0_9, %c0_10], %18 {strides = array<i32>} : memref<256x128xf32, #tpu.memory_space<vmem>>, vector<256x128xf32>,
    return
  }
  func.func @transform_0(%arg0: i32) -> (i32, i32) {
    %c0_i32 = arith.constant 0 : i32
    %c0_i32_0 = arith.constant 0 : i32
    return %arg0, %c0_i32 : i32, i32
  }
  func.func @transform_1(%arg0: i32) -> (i32, i32) {
    %c0_i32 = arith.constant 0 : i32
    %c0_i32_0 = arith.constant 0 : i32
    %c0_i32_1 = arith.constant 0 : i32
    return %c0_i32, %c0_i32_0 : i32, i32
  }
  func.func @transform_2(%arg0: i32) -> (i32, i32) {
    %c0_i32 = arith.constant 0 : i32
    %c0_i32_0 = arith.constant 0 : i32
    %c0_i32_1 = arith.constant 0 : i32
    return %c0_i32, %c0_i32_0 : i32, i32
  }
  func.func @transform_3(%arg0: i32) -> (i32, i32) {
    %c0_i32 = arith.constant 0 : i32
    %c0_i32_0 = arith.constant 0 : i32
    return %arg0, %c0_i32 : i32, i32
  }
}

module attributes {stable_mosaic.version = 11 : i64} {
  func.func @_matmul_act_kernel(%arg0: i32, %arg1: memref<256x640xbf16, #tpu.memory_space<vmem>>, %arg2: memref<640x128xbf16, #tpu.memory_space<vmem>>, %arg3: memref<1x128xf32, #tpu.memory_space<vmem>>, %arg4: memref<256x128xf32, #tpu.memory_space<vmem>>) attributes {dimension_semantics = [#tpu.dimension_semantics<parallel>], iteration_bounds = array<i64: 3>, scalar_prefetch = 0 : i64, scratch_operands = 0 : i64, tpu.core_type = #tpu.core_type<tc>, window_params = [{transform_indices = @transform_0, window_bounds = array<i64: 256, 640>}, {pipeline_mode = #tpu.pipeline_mode<synchronous>, transform_indices = @transform_1, window_bounds = array<i64: 640, 128>}, {pipeline_mode = #tpu.pipeline_mode<synchronous>, transform_indices = @transform_2, window_bounds = array<i64: 1, 128>}, {transform_indices = @transform_3, window_bounds = array<i64: 256, 128>}]} {
    %c0 = arith.constant 0 : index
    %c0_0 = arith.constant 0 : index
    %0 = vector.load %arg1[%c0, %c0_0] : memref<256x640xbf16, #tpu.memory_space<vmem>>, vector<256x640xbf16>
    %c0_1 = arith.constant 0 : index
    %c0_2 = arith.constant 0 : index
    %1 = vector.load %arg2[%c0_1, %c0_2] : memref<640x128xbf16, #tpu.memory_space<vmem>>, vector<640x128xbf16>
    %cst = arith.constant dense<0.000000e+00> : vector<256x128xf32>
    %2 = tpu.matmul %0, %1, %cst {dimension_numbers = #tpu.dot_dimension_numbers<[1], [0], [0], [1], [0, 0, 1, 1], [], []>} : vector<256x640xbf16>, vector<640x128xbf16>, vector<256x128xf32> -> vector<256x128xf32>
    %c0_3 = arith.constant 0 : index
    %c0_4 = arith.constant 0 : index
    %3 = vector.load %arg3[%c0_3, %c0_4] : memref<1x128xf32, #tpu.memory_space<vmem>>, vector<1x128xf32>
    %4 = vector.broadcast %3 : vector<1x128xf32> to vector<256x128xf32>
    %5 = arith.addf %2, %4 : vector<256x128xf32>
    %cst_5 = arith.constant 5.000000e-01 : f32
    %6 = vector.broadcast %cst_5 : f32 to vector<256x128xf32>
    %7 = arith.mulf %6, %5 : vector<256x128xf32>
    %cst_6 = arith.constant 4.471500e-02 : f32
    %8 = vector.broadcast %cst_6 : f32 to vector<256x128xf32>
    %9 = arith.mulf %8, %5 : vector<256x128xf32>
    %10 = arith.mulf %9, %5 : vector<256x128xf32>
    %11 = arith.mulf %10, %5 : vector<256x128xf32>
    %12 = arith.addf %5, %11 : vector<256x128xf32>
    %cst_7 = arith.constant 0.797884583 : f32
    %13 = vector.broadcast %cst_7 : f32 to vector<256x128xf32>
    %14 = arith.mulf %13, %12 : vector<256x128xf32>
    %15 = math.tanh %14 : vector<256x128xf32>
    %cst_8 = arith.constant 1.000000e+00 : f32
    %16 = vector.broadcast %cst_8 : f32 to vector<256x128xf32>
    %17 = arith.addf %16, %15 : vector<256x128xf32>
    %18 = arith.mulf %7, %17 : vector<256x128xf32>
    %c0_9 = arith.constant 0 : index
    %c0_10 = arith.constant 0 : index
    %19 = vector.load %arg4[%c0_9, %c0_10] : memref<256x128xf32, #tpu.memory_space<vmem>>, vector<256x128xf32>
    tpu.vector_store %arg4[%c0_9, %c0_10], %18 {strides = array<i32>} : memref<256x128xf32, #tpu.memory_space<vmem>>, vector<256x128xf32>,
    return
  }
  func.func @transform_0(%arg0: i32) -> (i32, i32) {
    %c0_i32 = arith.constant 0 : i32
    %c0_i32_0 = arith.constant 0 : i32
    return %arg0, %c0_i32 : i32, i32
  }
  func.func @transform_1(%arg0: i32) -> (i32, i32) {
    %c0_i32 = arith.constant 0 : i32
    %c0_i32_0 = arith.constant 0 : i32
    %c0_i32_1 = arith.constant 0 : i32
    return %c0_i32, %c0_i32_0 : i32, i32
  }
  func.func @transform_2(%arg0: i32) -> (i32, i32) {
    %c0_i32 = arith.constant 0 : i32
    %c0_i32_0 = arith.constant 0 : i32
    %c0_i32_1 = arith.constant 0 : i32
    return %c0_i32, %c0_i32_0 : i32, i32
  }
  func.func @transform_3(%arg0: i32) -> (i32, i32) {
    %c0_i32 = arith.constant 0 : i32
    %c0_i32_0 = arith.constant 0 : i32
    return %arg0, %c0_i32 : i32, i32
  }
}

module attributes {stable_mosaic.version = 11 : i64} {
  func.func @_matmul_act_kernel(%arg0: i32, %arg1: memref<64x384xbf16, #tpu.memory_space<vmem>>, %arg2: memref<384x128xbf16, #tpu.memory_space<vmem>>, %arg3: memref<1x128xf32, #tpu.memory_space<vmem>>, %arg4: memref<64x128xf32, #tpu.memory_space<vmem>>) attributes {dimension_semantics = [#tpu.dimension_semantics<parallel>], iteration_bounds = array<i64: 1>, scalar_prefetch = 0 : i64, scratch_operands = 0 : i64, tpu.core_type = #tpu.core_type<tc>, window_params = [{transform_indices = @transform_0, window_bounds = array<i64: 64, 384>}, {pipeline_mode = #tpu.pipeline_mode<synchronous>, transform_indices = @transform_1, window_bounds = array<i64: 384, 128>}, {pipeline_mode = #tpu.pipeline_mode<synchronous>, transform_indices = @transform_2, window_bounds = array<i64: 1, 128>}, {transform_indices = @transform_3, window_bounds = array<i64: 64, 128>}]} {
    %c0 = arith.constant 0 : index
    %c0_0 = arith.constant 0 : index
    %0 = vector.load %arg1[%c0, %c0_0] : memref<64x384xbf16, #tpu.memory_space<vmem>>, vector<64x384xbf16>
    %c0_1 = arith.constant 0 : index
    %c0_2 = arith.constant 0 : index
    %1 = vector.load %arg2[%c0_1, %c0_2] : memref<384x128xbf16, #tpu.memory_space<vmem>>, vector<384x128xbf16>
    %cst = arith.constant dense<0.000000e+00> : vector<64x128xf32>
    %2 = tpu.matmul %0, %1, %cst {dimension_numbers = #tpu.dot_dimension_numbers<[1], [0], [0], [1], [0, 0, 1, 1], [], []>} : vector<64x384xbf16>, vector<384x128xbf16>, vector<64x128xf32> -> vector<64x128xf32>
    %c0_3 = arith.constant 0 : index
    %c0_4 = arith.constant 0 : index
    %3 = vector.load %arg3[%c0_3, %c0_4] : memref<1x128xf32, #tpu.memory_space<vmem>>, vector<1x128xf32>
    %4 = vector.broadcast %3 : vector<1x128xf32> to vector<64x128xf32>
    %5 = arith.addf %2, %4 : vector<64x128xf32>
    %cst_5 = arith.constant 5.000000e-01 : f32
    %6 = vector.broadcast %cst_5 : f32 to vector<64x128xf32>
    %7 = arith.mulf %6, %5 : vector<64x128xf32>
    %cst_6 = arith.constant 4.471500e-02 : f32
    %8 = vector.broadcast %cst_6 : f32 to vector<64x128xf32>
    %9 = arith.mulf %8, %5 : vector<64x128xf32>
    %10 = arith.mulf %9, %5 : vector<64x128xf32>
    %11 = arith.mulf %10, %5 : vector<64x128xf32>
    %12 = arith.addf %5, %11 : vector<64x128xf32>
    %cst_7 = arith.constant 0.797884583 : f32
    %13 = vector.broadcast %cst_7 : f32 to vector<64x128xf32>
    %14 = arith.mulf %13, %12 : vector<64x128xf32>
    %15 = math.tanh %14 : vector<64x128xf32>
    %cst_8 = arith.constant 1.000000e+00 : f32
    %16 = vector.broadcast %cst_8 : f32 to vector<64x128xf32>
    %17 = arith.addf %16, %15 : vector<64x128xf32>
    %18 = arith.mulf %7, %17 : vector<64x128xf32>
    %c0_9 = arith.constant 0 : index
    %c0_10 = arith.constant 0 : index
    %19 = vector.load %arg4[%c0_9, %c0_10] : memref<64x128xf32, #tpu.memory_space<vmem>>, vector<64x128xf32>
    tpu.vector_store %arg4[%c0_9, %c0_10], %18 {strides = array<i32>} : memref<64x128xf32, #tpu.memory_space<vmem>>, vector<64x128xf32>,
    return
  }
  func.func @transform_0(%arg0: i32) -> (i32, i32) {
    %c0_i32 = arith.constant 0 : i32
    %c0_i32_0 = arith.constant 0 : i32
    return %arg0, %c0_i32 : i32, i32
  }
  func.func @transform_1(%arg0: i32) -> (i32, i32) {
    %c0_i32 = arith.constant 0 : i32
    %c0_i32_0 = arith.constant 0 : i32
    %c0_i32_1 = arith.constant 0 : i32
    return %c0_i32, %c0_i32_0 : i32, i32
  }
  func.func @transform_2(%arg0: i32) -> (i32, i32) {
    %c0_i32 = arith.constant 0 : i32
    %c0_i32_0 = arith.constant 0 : i32
    %c0_i32_1 = arith.constant 0 : i32
    return %c0_i32, %c0_i32_0 : i32, i32
  }
  func.func @transform_3(%arg0: i32) -> (i32, i32) {
    %c0_i32 = arith.constant 0 : i32
    %c0_i32_0 = arith.constant 0 : i32
    return %arg0, %c0_i32 : i32, i32
  }
}

module attributes {stable_mosaic.version = 11 : i64} {
  func.func @_matmul_act_kernel(%arg0: i32, %arg1: memref<8x256xbf16, #tpu.memory_space<vmem>>, %arg2: memref<256x128xbf16, #tpu.memory_space<vmem>>, %arg3: memref<1x128xf32, #tpu.memory_space<vmem>>, %arg4: memref<8x128xf32, #tpu.memory_space<vmem>>) attributes {dimension_semantics = [#tpu.dimension_semantics<parallel>], iteration_bounds = array<i64: 1>, scalar_prefetch = 0 : i64, scratch_operands = 0 : i64, tpu.core_type = #tpu.core_type<tc>, window_params = [{transform_indices = @transform_0, window_bounds = array<i64: 8, 256>}, {pipeline_mode = #tpu.pipeline_mode<synchronous>, transform_indices = @transform_1, window_bounds = array<i64: 256, 128>}, {pipeline_mode = #tpu.pipeline_mode<synchronous>, transform_indices = @transform_2, window_bounds = array<i64: 1, 128>}, {transform_indices = @transform_3, window_bounds = array<i64: 8, 128>}]} {
    %c0 = arith.constant 0 : index
    %c0_0 = arith.constant 0 : index
    %0 = vector.load %arg1[%c0, %c0_0] : memref<8x256xbf16, #tpu.memory_space<vmem>>, vector<8x256xbf16>
    %c0_1 = arith.constant 0 : index
    %c0_2 = arith.constant 0 : index
    %1 = vector.load %arg2[%c0_1, %c0_2] : memref<256x128xbf16, #tpu.memory_space<vmem>>, vector<256x128xbf16>
    %cst = arith.constant dense<0.000000e+00> : vector<8x128xf32>
    %2 = tpu.matmul %0, %1, %cst {dimension_numbers = #tpu.dot_dimension_numbers<[1], [0], [0], [1], [0, 0, 1, 1], [], []>} : vector<8x256xbf16>, vector<256x128xbf16>, vector<8x128xf32> -> vector<8x128xf32>
    %c0_3 = arith.constant 0 : index
    %c0_4 = arith.constant 0 : index
    %3 = vector.load %arg3[%c0_3, %c0_4] : memref<1x128xf32, #tpu.memory_space<vmem>>, vector<1x128xf32>
    %4 = vector.broadcast %3 : vector<1x128xf32> to vector<8x128xf32>
    %5 = arith.addf %2, %4 : vector<8x128xf32>
    %c0_5 = arith.constant 0 : index
    %c0_6 = arith.constant 0 : index
    %6 = vector.load %arg4[%c0_5, %c0_6] : memref<8x128xf32, #tpu.memory_space<vmem>>, vector<8x128xf32>
    tpu.vector_store %arg4[%c0_5, %c0_6], %5 {strides = array<i32>} : memref<8x128xf32, #tpu.memory_space<vmem>>, vector<8x128xf32>,
    return
  }
  func.func @transform_0(%arg0: i32) -> (i32, i32) {
    %c0_i32 = arith.constant 0 : i32
    %c0_i32_0 = arith.constant 0 : i32
    return %arg0, %c0_i32 : i32, i32
  }
  func.func @transform_1(%arg0: i32) -> (i32, i32) {
    %c0_i32 = arith.constant 0 : i32
    %c0_i32_0 = arith.constant 0 : i32
    %c0_i32_1 = arith.constant 0 : i32
    return %c0_i32, %c0_i32_0 : i32, i32
  }
  func.func @transform_2(%arg0: i32) -> (i32, i32) {
    %c0_i32 = arith.constant 0 : i32
    %c0_i32_0 = arith.constant 0 : i32
    %c0_i32_1 = arith.constant 0 : i32
    return %c0_i32, %c0_i32_0 : i32, i32
  }
  func.func @transform_3(%arg0: i32) -> (i32, i32) {
    %c0_i32 = arith.constant 0 : i32
    %c0_i32_0 = arith.constant 0 : i32
    return %arg0, %c0_i32 : i32, i32
  }
}

module attributes {stable_mosaic.version = 11 : i64} {
  func.func @_matmul_act_kernel(%arg0: i32, %arg1: memref<8x128xbf16, #tpu.memory_space<vmem>>, %arg2: memref<128x256xbf16, #tpu.memory_space<vmem>>, %arg3: memref<1x256xf32, #tpu.memory_space<vmem>>, %arg4: memref<8x256xf32, #tpu.memory_space<vmem>>) attributes {dimension_semantics = [#tpu.dimension_semantics<parallel>], iteration_bounds = array<i64: 1>, scalar_prefetch = 0 : i64, scratch_operands = 0 : i64, tpu.core_type = #tpu.core_type<tc>, window_params = [{transform_indices = @transform_0, window_bounds = array<i64: 8, 128>}, {pipeline_mode = #tpu.pipeline_mode<synchronous>, transform_indices = @transform_1, window_bounds = array<i64: 128, 256>}, {pipeline_mode = #tpu.pipeline_mode<synchronous>, transform_indices = @transform_2, window_bounds = array<i64: 1, 256>}, {transform_indices = @transform_3, window_bounds = array<i64: 8, 256>}]} {
    %c0 = arith.constant 0 : index
    %c0_0 = arith.constant 0 : index
    %0 = vector.load %arg1[%c0, %c0_0] : memref<8x128xbf16, #tpu.memory_space<vmem>>, vector<8x128xbf16>
    %c0_1 = arith.constant 0 : index
    %c0_2 = arith.constant 0 : index
    %1 = vector.load %arg2[%c0_1, %c0_2] : memref<128x256xbf16, #tpu.memory_space<vmem>>, vector<128x256xbf16>
    %cst = arith.constant dense<0.000000e+00> : vector<8x256xf32>
    %2 = tpu.matmul %0, %1, %cst {dimension_numbers = #tpu.dot_dimension_numbers<[1], [0], [0], [1], [0, 0, 1, 1], [], []>} : vector<8x128xbf16>, vector<128x256xbf16>, vector<8x256xf32> -> vector<8x256xf32>
    %c0_3 = arith.constant 0 : index
    %c0_4 = arith.constant 0 : index
    %3 = vector.load %arg3[%c0_3, %c0_4] : memref<1x256xf32, #tpu.memory_space<vmem>>, vector<1x256xf32>
    %4 = vector.broadcast %3 : vector<1x256xf32> to vector<8x256xf32>
    %5 = arith.addf %2, %4 : vector<8x256xf32>
    %cst_5 = arith.constant 0.000000e+00 : f32
    %6 = vector.broadcast %cst_5 : f32 to vector<8x256xf32>
    %7 = arith.cmpf oge, %5, %6 : vector<8x256xf32>
    %cst_6 = arith.constant 0.00999999977 : f32
    %8 = vector.broadcast %cst_6 : f32 to vector<8x256xf32>
    %9 = arith.mulf %8, %5 : vector<8x256xf32>
    %10 = arith.select %7, %5, %9 : vector<8x256xi1>, vector<8x256xf32>
    %c0_7 = arith.constant 0 : index
    %c0_8 = arith.constant 0 : index
    %11 = vector.load %arg4[%c0_7, %c0_8] : memref<8x256xf32, #tpu.memory_space<vmem>>, vector<8x256xf32>
    tpu.vector_store %arg4[%c0_7, %c0_8], %10 {strides = array<i32>} : memref<8x256xf32, #tpu.memory_space<vmem>>, vector<8x256xf32>,
    return
  }
  func.func @transform_0(%arg0: i32) -> (i32, i32) {
    %c0_i32 = arith.constant 0 : i32
    %c0_i32_0 = arith.constant 0 : i32
    return %arg0, %c0_i32 : i32, i32
  }
  func.func @transform_1(%arg0: i32) -> (i32, i32) {
    %c0_i32 = arith.constant 0 : i32
    %c0_i32_0 = arith.constant 0 : i32
    %c0_i32_1 = arith.constant 0 : i32
    return %c0_i32, %c0_i32_0 : i32, i32
  }
  func.func @transform_2(%arg0: i32) -> (i32, i32) {
    %c0_i32 = arith.constant 0 : i32
    %c0_i32_0 = arith.constant 0 : i32
    %c0_i32_1 = arith.constant 0 : i32
    return %c0_i32, %c0_i32_0 : i32, i32
  }
  func.func @transform_3(%arg0: i32) -> (i32, i32) {
    %c0_i32 = arith.constant 0 : i32
    %c0_i32_0 = arith.constant 0 : i32
    return %arg0, %c0_i32 : i32, i32
  }
}

module attributes {stable_mosaic.version = 11 : i64} {
  func.func @_matmul_act_kernel(%arg0: i32, %arg1: memref<8x128xbf16, #tpu.memory_space<vmem>>, %arg2: memref<128x128xbf16, #tpu.memory_space<vmem>>, %arg3: memref<1x128xf32, #tpu.memory_space<vmem>>, %arg4: memref<8x128xf32, #tpu.memory_space<vmem>>) attributes {dimension_semantics = [#tpu.dimension_semantics<parallel>], iteration_bounds = array<i64: 1>, scalar_prefetch = 0 : i64, scratch_operands = 0 : i64, tpu.core_type = #tpu.core_type<tc>, window_params = [{transform_indices = @transform_0, window_bounds = array<i64: 8, 128>}, {pipeline_mode = #tpu.pipeline_mode<synchronous>, transform_indices = @transform_1, window_bounds = array<i64: 128, 128>}, {pipeline_mode = #tpu.pipeline_mode<synchronous>, transform_indices = @transform_2, window_bounds = array<i64: 1, 128>}, {transform_indices = @transform_3, window_bounds = array<i64: 8, 128>}]} {
    %c0 = arith.constant 0 : index
    %c0_0 = arith.constant 0 : index
    %0 = vector.load %arg1[%c0, %c0_0] : memref<8x128xbf16, #tpu.memory_space<vmem>>, vector<8x128xbf16>
    %c0_1 = arith.constant 0 : index
    %c0_2 = arith.constant 0 : index
    %1 = vector.load %arg2[%c0_1, %c0_2] : memref<128x128xbf16, #tpu.memory_space<vmem>>, vector<128x128xbf16>
    %cst = arith.constant dense<0.000000e+00> : vector<8x128xf32>
    %2 = tpu.matmul %0, %1, %cst {dimension_numbers = #tpu.dot_dimension_numbers<[1], [0], [0], [1], [0, 0, 1, 1], [], []>} : vector<8x128xbf16>, vector<128x128xbf16>, vector<8x128xf32> -> vector<8x128xf32>
    %c0_3 = arith.constant 0 : index
    %c0_4 = arith.constant 0 : index
    %3 = vector.load %arg3[%c0_3, %c0_4] : memref<1x128xf32, #tpu.memory_space<vmem>>, vector<1x128xf32>
    %4 = vector.broadcast %3 : vector<1x128xf32> to vector<8x128xf32>
    %5 = arith.addf %2, %4 : vector<8x128xf32>
    %cst_5 = arith.constant 0.000000e+00 : f32
    %6 = vector.broadcast %cst_5 : f32 to vector<8x128xf32>
    %7 = arith.subf %6, %5 : vector<8x128xf32>
    %8 = math.exp %7 : vector<8x128xf32>
    %cst_6 = arith.constant 1.000000e+00 : f32
    %9 = vector.broadcast %cst_6 : f32 to vector<8x128xf32>
    %10 = arith.addf %9, %8 : vector<8x128xf32>
    %cst_7 = arith.constant 1.000000e+00 : f32
    %11 = vector.broadcast %cst_7 : f32 to vector<8x128xf32>
    %12 = arith.divf %11, %10 : vector<8x128xf32>
    %c0_8 = arith.constant 0 : index
    %c0_9 = arith.constant 0 : index
    %13 = vector.load %arg4[%c0_8, %c0_9] : memref<8x128xf32, #tpu.memory_space<vmem>>, vector<8x128xf32>
    tpu.vector_store %arg4[%c0_8, %c0_9], %12 {strides = array<i32>} : memref<8x128xf32, #tpu.memory_space<vmem>>, vector<8x128xf32>,
    return
  }
  func.func @transform_0(%arg0: i32) -> (i32, i32) {
    %c0_i32 = arith.constant 0 : i32
    %c0_i32_0 = arith.constant 0 : i32
    return %arg0, %c0_i32 : i32, i32
  }
  func.func @transform_1(%arg0: i32) -> (i32, i32) {
    %c0_i32 = arith.constant 0 : i32
    %c0_i32_0 = arith.constant 0 : i32
    %c0_i32_1 = arith.constant 0 : i32
    return %c0_i32, %c0_i32_0 : i32, i32
  }
  func.func @transform_2(%arg0: i32) -> (i32, i32) {
    %c0_i32 = arith.constant 0 : i32
    %c0_i32_0 = arith.constant 0 : i32
    %c0_i32_1 = arith.constant 0 : i32
    return %c0_i32, %c0_i32_0 : i32, i32
  }
  func.func @transform_3(%arg0: i32) -> (i32, i32) {
    %c0_i32 = arith.constant 0 : i32
    %c0_i32_0 = arith.constant 0 : i32
    return %arg0, %c0_i32 : i32, i32
  }
}

module attributes {stable_mosaic.version = 11 : i64} {
  func.func @_matmul_act_kernel(%arg0: i32, %arg1: memref<8x256xbf16, #tpu.memory_space<vmem>>, %arg2: memref<256x128xbf16, #tpu.memory_space<vmem>>, %arg3: memref<1x128xf32, #tpu.memory_space<vmem>>, %arg4: memref<8x128xf32, #tpu.memory_space<vmem>>) attributes {dimension_semantics = [#tpu.dimension_semantics<parallel>], iteration_bounds = array<i64: 1>, scalar_prefetch = 0 : i64, scratch_operands = 0 : i64, tpu.core_type = #tpu.core_type<tc>, window_params = [{transform_indices = @transform_0, window_bounds = array<i64: 8, 256>}, {pipeline_mode = #tpu.pipeline_mode<synchronous>, transform_indices = @transform_1, window_bounds = array<i64: 256, 128>}, {pipeline_mode = #tpu.pipeline_mode<synchronous>, transform_indices = @transform_2, window_bounds = array<i64: 1, 128>}, {transform_indices = @transform_3, window_bounds = array<i64: 8, 128>}]} {
    %c0 = arith.constant 0 : index
    %c0_0 = arith.constant 0 : index
    %0 = vector.load %arg1[%c0, %c0_0] : memref<8x256xbf16, #tpu.memory_space<vmem>>, vector<8x256xbf16>
    %c0_1 = arith.constant 0 : index
    %c0_2 = arith.constant 0 : index
    %1 = vector.load %arg2[%c0_1, %c0_2] : memref<256x128xbf16, #tpu.memory_space<vmem>>, vector<256x128xbf16>
    %cst = arith.constant dense<0.000000e+00> : vector<8x128xf32>
    %2 = tpu.matmul %0, %1, %cst {dimension_numbers = #tpu.dot_dimension_numbers<[1], [0], [0], [1], [0, 0, 1, 1], [], []>} : vector<8x256xbf16>, vector<256x128xbf16>, vector<8x128xf32> -> vector<8x128xf32>
    %c0_3 = arith.constant 0 : index
    %c0_4 = arith.constant 0 : index
    %3 = vector.load %arg3[%c0_3, %c0_4] : memref<1x128xf32, #tpu.memory_space<vmem>>, vector<1x128xf32>
    %4 = vector.broadcast %3 : vector<1x128xf32> to vector<8x128xf32>
    %5 = arith.addf %2, %4 : vector<8x128xf32>
    %cst_5 = arith.constant 0.000000e+00 : f32
    %6 = vector.broadcast %cst_5 : f32 to vector<8x128xf32>
    %7 = arith.cmpf oge, %5, %6 : vector<8x128xf32>
    %cst_6 = arith.constant 0.00999999977 : f32
    %8 = vector.broadcast %cst_6 : f32 to vector<8x128xf32>
    %9 = arith.mulf %8, %5 : vector<8x128xf32>
    %10 = arith.select %7, %5, %9 : vector<8x128xi1>, vector<8x128xf32>
    %c0_7 = arith.constant 0 : index
    %c0_8 = arith.constant 0 : index
    %11 = vector.load %arg4[%c0_7, %c0_8] : memref<8x128xf32, #tpu.memory_space<vmem>>, vector<8x128xf32>
    tpu.vector_store %arg4[%c0_7, %c0_8], %10 {strides = array<i32>} : memref<8x128xf32, #tpu.memory_space<vmem>>, vector<8x128xf32>,
    return
  }
  func.func @transform_0(%arg0: i32) -> (i32, i32) {
    %c0_i32 = arith.constant 0 : i32
    %c0_i32_0 = arith.constant 0 : i32
    return %arg0, %c0_i32 : i32, i32
  }
  func.func @transform_1(%arg0: i32) -> (i32, i32) {
    %c0_i32 = arith.constant 0 : i32
    %c0_i32_0 = arith.constant 0 : i32
    %c0_i32_1 = arith.constant 0 : i32
    return %c0_i32, %c0_i32_0 : i32, i32
  }
  func.func @transform_2(%arg0: i32) -> (i32, i32) {
    %c0_i32 = arith.constant 0 : i32
    %c0_i32_0 = arith.constant 0 : i32
    %c0_i32_1 = arith.constant 0 : i32
    return %c0_i32, %c0_i32_0 : i32, i32
  }
  func.func @transform_3(%arg0: i32) -> (i32, i32) {
    %c0_i32 = arith.constant 0 : i32
    %c0_i32_0 = arith.constant 0 : i32
    return %arg0, %c0_i32 : i32, i32
  }
}

</mosaic_0001>

<llo_original>
// kernel: _lambda_.8
$region0: #{_lambda_.8}
  #allocation0 [shape = 'u32[]', space=smem, size = 0x4, offset = 0x4, fixed_abs, tag = 'smem constant byte address 0x4 - core index']
  #allocation1 [shape = 'u32[144,128]{1,0:T(1,128)}', space=vmem, size = 0x12000, scoped, tag = 'internal scratch']
  %s0 = inlined_call_operand.vmem [shape: bf16[3840,640], index: 0, kind: input, shape index: {}]
  %s1 = inlined_call_operand.vmem [shape: bf16[640,128], index: 1, kind: input, shape index: {}]
  %s2 = inlined_call_operand.vmem [shape: f32[1,128], index: 2, kind: input, shape index: {}]
  %s3 = inlined_call_operand.vmem [shape: f32[3840,128], index: 3, kind: output, shape index: {}]
  %s4 = sld [smem:[#allocation0]]
  $region45: #{_lambda_.8} parent=0
    _
  %s6 = ssub.s32 1, %s4
  %s7 = scalar_select 0, %s6, %s4
  loop: start=0, step=1, limit=17
  $region2: #{_lambda_.8} parent=0 // loop_pre_header
    _
  $region3: #{_lambda_.8} parent=0 // loop_header
    %s9 = sphi 0, %s13
    %p10 = scmp.ge.s32.totalorder %s9, 17
    %s19 = sphi 0, %s21
    %s22 = sphi 0, %s19
    %s23 = sphi 0, %s22
    %s39 = sphi 0, %s23
    %s43 = sphi 0, %s43
    %s45 = sphi 0, %s43
    %s46 = sphi 0, %s45
    %s60 = sphi 0, %s46
    %s64 = sphi 0, %s64
    %s66 = sphi 0, %s64
    %s67 = sphi 0, %s66
    %s81 = sphi 0, %s67
    %s87 = sphi 0, %s89
    %s90 = sphi 0, %s87
    %s91 = sphi 0, %s90
    %s107 = sphi 0, %s91
  $region4: #{_lambda_.8} parent=0 // loop_header_branch
    %12 = sbr.rel (%p10) target = $region8
  $region5: #{_lambda_.8} parent=0 // loop_body
    %s14 = ssub.s32 %s9, 1
    %s15 = ssub.s32 %s9, 2
    %s16 = sadd.s32 %s9, 1
    %s17 = ssub.s32 %s9, %s16
    %p18 = scmp.eq.s32.totalorder %s17, 0
    %s20 = sadd.s32 %s19, 1
    %s21 = scalar_select %p18, %s19, %s20
    %p24 = pneg %p18
    %p25 = scmp.eq.s32.totalorder %s9, 14
    %p26 = por %p24, %p25
    %p27 = scmp.ne.s32.totalorder %s19, %s22
    %p28 = scmp.eq.s32.totalorder %s9, 0
    %p29 = por %p27, %p28
    %p30 = scmp.ne.s32.totalorder %s19, %s22
    %p31 = scmp.eq.s32.totalorder %s14, 14
    %p32 = por %p30, %p31
    %p33 = scmp.ne.s32.totalorder %s22, %s23
    %p34 = scmp.eq.s32.totalorder %s14, 0
    %p35 = por %p33, %p34
    %p36 = scmp.ne.s32.totalorder %s22, %s23
    %p37 = scmp.eq.s32.totalorder %s15, 14
    %p38 = por %p36, %p37
    %p40 = scmp.ne.s32.totalorder %s23, %s39
    %p41 = scmp.eq.s32.totalorder %s15, 0
    %p42 = por %p40, %p41
    %s44 = sadd.s32 %s43, 1
    %p47 = scmp.eq.s32.totalorder %s9, 14
    %p48 = scmp.ne.s32.totalorder %s43, %s45
    %p49 = scmp.eq.s32.totalorder %s9, 0
    %p50 = por %p48, %p49
    %p51 = scmp.ne.s32.totalorder %s43, %s45
    %p52 = scmp.eq.s32.totalorder %s14, 14
    %p53 = por %p51, %p52
    %p54 = scmp.ne.s32.totalorder %s45, %s46
    %p55 = scmp.eq.s32.totalorder %s14, 0
    %p56 = por %p54, %p55
    %p57 = scmp.ne.s32.totalorder %s45, %s46
    %p58 = scmp.eq.s32.totalorder %s15, 14
    %p59 = por %p57, %p58
    %p61 = scmp.ne.s32.totalorder %s46, %s60
    %p62 = scmp.eq.s32.totalorder %s15, 0
    %p63 = por %p61, %p62
    %s65 = sadd.s32 %s64, 1
    %p68 = scmp.eq.s32.totalorder %s9, 14
    %p69 = scmp.ne.s32.totalorder %s64, %s66
    %p70 = scmp.eq.s32.totalorder %s9, 0
    %p71 = por %p69, %p70
    %p72 = scmp.ne.s32.totalorder %s64, %s66
    %p73 = scmp.eq.s32.totalorder %s14, 14
    %p74 = por %p72, %p73
    %p75 = scmp.ne.s32.totalorder %s66, %s67
    %p76 = scmp.eq.s32.totalorder %s14, 0
    %p77 = por %p75, %p76
    %p78 = scmp.ne.s32.totalorder %s66, %s67
    %p79 = scmp.eq.s32.totalorder %s15, 14
    %p80 = por %p78, %p79
    %p82 = scmp.ne.s32.totalorder %s67, %s81
    %p83 = scmp.eq.s32.totalorder %s15, 0
    %p84 = por %p82, %p83
    %s85 = ssub.s32 %s9, %s16
    %p86 = scmp.eq.s32.totalorder %s85, 0
    %s88 = sadd.s32 %s87, 1
    %s89 = scalar_select %p86, %s87, %s88
    %p92 = pneg %p86
    %p93 = scmp.eq.s32.totalorder %s9, 14
    %p94 = por %p92, %p93
    %p95 = scmp.ne.s32.totalorder %s87, %s90
    %p96 = scmp.eq.s32.totalorder %s9, 0
    %p97 = por %p95, %p96
    %p98 = scmp.ne.s32.totalorder %s87, %s90
    %p99 = scmp.eq.s32.totalorder %s14, 14
    %p100 = por %p98, %p99
    %p101 = scmp.ne.s32.totalorder %s90, %s91
    %p102 = scmp.eq.s32.totalorder %s14, 0
    %p103 = por %p101, %p102
    %p104 = scmp.ne.s32.totalorder %s90, %s91
    %p105 = scmp.eq.s32.totalorder %s15, 14
    %p106 = por %p104, %p105
    %p108 = scmp.ne.s32.totalorder %s91, %s107
    %p109 = scmp.eq.s32.totalorder %s15, 0
    %p110 = por %p108, %p109
    %p111 = scmp.le.s32.totalorder 1, %s9
    %p112 = scmp.lt.s32.totalorder %s9, 16
    %p113 = pnand %p111, %p112
    %p114 = pneg %p113
    // Predicated region
    $region9: #{_lambda_.8} parent=5 // pred_check
      _
    $region10: #{_lambda_.8} parent=5 // pred_check_branch
      %116 = sbr.rel (%p113) target = $region12
    $region11: #{_lambda_.8} parent=5 // pred_region
      %s117 = ssub.s32 %s9, 1
      // Predicated region
      $region13: #{_lambda_.8} parent=11 // pred_check
        %p118 = pneg %p56
      $region14: #{_lambda_.8} parent=11 // pred_check_branch
        %120 = sbr.rel (%p118) target = $region16
      $region15: #{_lambda_.8} parent=11 // pred_region
        _
      $region16: #{_lambda_.8} parent=11 // pred_fallthru
        _
      // Predicated region
      $region17: #{_lambda_.8} parent=11 // pred_check
        %p121 = pneg %p77
      $region18: #{_lambda_.8} parent=11 // pred_check_branch
        %123 = sbr.rel (%p121) target = $region20
      $region19: #{_lambda_.8} parent=11 // pred_region
        _
      $region20: #{_lambda_.8} parent=11 // pred_fallthru
        _
    $region12: #{_lambda_.8} parent=5 // pred_fallthru
      _
    %p124 = scmp.lt.s32.totalorder %s9, 15
    // Predicated region
    $region21: #{_lambda_.8} parent=5 // pred_check
      %p125 = pneg %p124
    $region22: #{_lambda_.8} parent=5 // pred_check_branch
      %127 = sbr.rel (%p125) target = $region24
    $region23: #{_lambda_.8} parent=5 // pred_region
      // Predicated region
      $region25: #{_lambda_.8} parent=23 // pred_check
        %p128 = pneg %p29
      $region26: #{_lambda_.8} parent=23 // pred_check_branch
        %130 = sbr.rel (%p128) target = $region28
      $region27: #{_lambda_.8} parent=23 // pred_region
        %s131 = smul.u32 32, %s9
        %p132 = scmp.lt.s32.totalorder %s131, 479
        %s133 = scalar_select %p132, %s131, 479
        %s134 = smul.addr %s133, 5
        %s135 = smul.addr %s134, 4
        %s136 = scalar_lea.vmem %s0, %s135
        %s137 = smul.u32 32, %s9
      $region28: #{_lambda_.8} parent=23 // pred_fallthru
        _
    $region24: #{_lambda_.8} parent=5 // pred_fallthru
      _
    %p138 = scmp.le.s32.totalorder 1, %s9
    %p139 = scmp.lt.s32.totalorder %s9, 16
    %p140 = pnand %p138, %p139
    %p141 = pneg %p140
    // Predicated region
    $region29: #{_lambda_.8} parent=5 // pred_check
      _
    $region30: #{_lambda_.8} parent=5 // pred_check_branch
      %143 = sbr.rel (%p140) target = $region32
    $region31: #{_lambda_.8} parent=5 // pred_region
      %s144 = ssub.s32 %s9, 1
      %s145 = smul.u32 32, %s14
      %p146 = scmp.lt.s32.totalorder %s145, 479
      %s147 = scalar_select %p146, %s145, 479
      %s148 = smul.addr %s147, 5
      %s149 = smul.addr %s148, 4
      %s150 = scalar_lea.vmem %s0, %s149
      %p151 = pneg %p35
      %p152 = pneg %p32
      %p153 = pneg %p56
      %p154 = pneg %p53
      %p155 = pneg %p77
      %p156 = pneg %p74
      %p157 = pneg %p103
      %p158 = pneg %p100
      %s159 = smul.u32 32, %s14
      %p160 = scmp.lt.s32.totalorder %s159, 479
      %s161 = scalar_select %p160, %s159, 479
      %s162 = smul.addr %s161, 8
      %s163 = scalar_lea.vmem %s3, %s162
      %s164 = smul.u32 32, %s14
      %p165 = scmp.lt.s32.totalorder %s164, 479
      %s166 = scalar_select %p165, %s164, 479
      %s167 = smul.addr %s166, 5
      %s168 = smul.addr %s167, 4
      %s169 = scalar_lea.vmem %s0, %s168
      %s170 = smul.u32 32, %s14
      %s171 = smul.u32 32, %s14
      %p172 = scmp.lt.s32.totalorder %s171, 479
      %s173 = scalar_select %p172, %s171, 479
      %s174 = smul.addr %s173, 8
      %s175 = scalar_lea.vmem %s3, %s174
      %s176 = smul.u32 32, %s14
      %v178 = vld [vmem:[%s169] sm:$0xff]
      %v179 = vld [vmem:[%s169 + $0x8] sm:$0xff]
      %v180 = vld [vmem:[%s169 + $0x10] sm:$0xf]
      %v181 = vld [vmem:[%s169 + $0x14] sm:$0xff]
      %v182 = vld [vmem:[%s169 + $0x1c] sm:$0xff]
      %v183 = vld [vmem:[%s169 + $0x24] sm:$0xf]
      %v184 = vld [vmem:[%s169 + $0x28] sm:$0xff]
      %v185 = vld [vmem:[%s169 + $0x30] sm:$0xff]
      %v186 = vld [vmem:[%s169 + $0x38] sm:$0xf]
      %v187 = vld [vmem:[%s169 + $0x3c] sm:$0xff]
      %v188 = vld [vmem:[%s169 + $0x44] sm:$0xff]
      %v189 = vld [vmem:[%s169 + $0x4c] sm:$0xf]
      %v190 = vld [vmem:[%s169 + $0x50] sm:$0xff]
      %v191 = vld [vmem:[%s169 + $0x58] sm:$0xff]
      %v192 = vld [vmem:[%s169 + $0x60] sm:$0xf]
      %v193 = vld [vmem:[%s169 + $0x64] sm:$0xff]
      %v194 = vld [vmem:[%s169 + $0x6c] sm:$0xff]
      %v195 = vld [vmem:[%s169 + $0x74] sm:$0xf]
      %v196 = vld [vmem:[%s169 + $0x78] sm:$0xff]
      %v197 = vld [vmem:[%s169 + $0x80] sm:$0xff]
      %v198 = vld [vmem:[%s169 + $0x88] sm:$0xf]
      %v199 = vld [vmem:[%s169 + $0x8c] sm:$0xff]
      %v200 = vld [vmem:[%s169 + $0x94] sm:$0xff]
      %v201 = vld [vmem:[%s169 + $0x9c] sm:$0xf]
      %v202 = vld [vmem:[%s169 + $0xa0] sm:$0xff]
      %v203 = vld [vmem:[%s169 + $0xa8] sm:$0xff]
      %v204 = vld [vmem:[%s169 + $0xb0] sm:$0xf]
      %v205 = vld [vmem:[%s169 + $0xb4] sm:$0xff]
      %v206 = vld [vmem:[%s169 + $0xbc] sm:$0xff]
      %v207 = vld [vmem:[%s169 + $0xc4] sm:$0xf]
      %v208 = vld [vmem:[%s169 + $0xc8] sm:$0xff]
      %v209 = vld [vmem:[%s169 + $0xd0] sm:$0xff]
      %v210 = vld [vmem:[%s169 + $0xd8] sm:$0xf]
      %v211 = vld [vmem:[%s169 + $0xdc] sm:$0xff]
      %v212 = vld [vmem:[%s169 + $0xe4] sm:$0xff]
      %v213 = vld [vmem:[%s169 + $0xec] sm:$0xf]
      %v214 = vld [vmem:[%s169 + $0xf0] sm:$0xff]
      %v215 = vld [vmem:[%s169 + $0xf8] sm:$0xff]
      %v216 = vld [vmem:[%s169 + $0x100] sm:$0xf]
      %v217 = vld [vmem:[%s169 + $0x104] sm:$0xff]
      %v218 = vld [vmem:[%s169 + $0x10c] sm:$0xff]
      %v219 = vld [vmem:[%s169 + $0x114] sm:$0xf]
      %v220 = vld [vmem:[%s169 + $0x118] sm:$0xff]
      %v221 = vld [vmem:[%s169 + $0x120] sm:$0xff]
      %v222 = vld [vmem:[%s169 + $0x128] sm:$0xf]
      %v223 = vld [vmem:[%s169 + $0x12c] sm:$0xff]
      %v224 = vld [vmem:[%s169 + $0x134] sm:$0xff]
      %v225 = vld [vmem:[%s169 + $0x13c] sm:$0xf]
      %v226 = vld [vmem:[%s169 + $0x140] sm:$0xff]
      %v227 = vld [vmem:[%s169 + $0x148] sm:$0xff]
      %v228 = vld [vmem:[%s169 + $0x150] sm:$0xf]
      %v229 = vld [vmem:[%s169 + $0x154] sm:$0xff]
      %v230 = vld [vmem:[%s169 + $0x15c] sm:$0xff]
      %v231 = vld [vmem:[%s169 + $0x164] sm:$0xf]
      %v232 = vld [vmem:[%s169 + $0x168] sm:$0xff]
      %v233 = vld [vmem:[%s169 + $0x170] sm:$0xff]
      %v234 = vld [vmem:[%s169 + $0x178] sm:$0xf]
      %v235 = vld [vmem:[%s169 + $0x17c] sm:$0xff]
      %v236 = vld [vmem:[%s169 + $0x184] sm:$0xff]
      %v237 = vld [vmem:[%s169 + $0x18c] sm:$0xf]
      %v238 = vld [vmem:[%s169 + $0x190] sm:$0xff]
      %v239 = vld [vmem:[%s169 + $0x198] sm:$0xff]
      %v240 = vld [vmem:[%s169 + $0x1a0] sm:$0xf]
      %v241 = vld [vmem:[%s169 + $0x1a4] sm:$0xff]
      %v242 = vld [vmem:[%s169 + $0x1ac] sm:$0xff]
      %v243 = vld [vmem:[%s169 + $0x1b4] sm:$0xf]
      %v244 = vld [vmem:[%s169 + $0x1b8] sm:$0xff]
      %v245 = vld [vmem:[%s169 + $0x1c0] sm:$0xff]
      %v246 = vld [vmem:[%s169 + $0x1c8] sm:$0xf]
      %v247 = vld [vmem:[%s169 + $0x1cc] sm:$0xff]
      %v248 = vld [vmem:[%s169 + $0x1d4] sm:$0xff]
      %v249 = vld [vmem:[%s169 + $0x1dc] sm:$0xf]
      %v250 = vld [vmem:[%s169 + $0x1e0] sm:$0xff]
      %v251 = vld [vmem:[%s169 + $0x1e8] sm:$0xff]
      %v252 = vld [vmem:[%s169 + $0x1f0] sm:$0xf]
      %v253 = vld [vmem:[%s169 + $0x1f4] sm:$0xff]
      %v254 = vld [vmem:[%s169 + $0x1fc] sm:$0xff]
      %v255 = vld [vmem:[%s169 + $0x204] sm:$0xf]
      %v256 = vld [vmem:[%s169 + $0x208] sm:$0xff]
      %v257 = vld [vmem:[%s169 + $0x210] sm:$0xff]
      %v258 = vld [vmem:[%s169 + $0x218] sm:$0xf]
      %v259 = vld [vmem:[%s169 + $0x21c] sm:$0xff]
      %v260 = vld [vmem:[%s169 + $0x224] sm:$0xff]
      %v261 = vld [vmem:[%s169 + $0x22c] sm:$0xf]
      %v262 = vld [vmem:[%s169 + $0x230] sm:$0xff]
      %v263 = vld [vmem:[%s169 + $0x238] sm:$0xff]
      %v264 = vld [vmem:[%s169 + $0x240] sm:$0xf]
      %v265 = vld [vmem:[%s169 + $0x244] sm:$0xff]
      %v266 = vld [vmem:[%s169 + $0x24c] sm:$0xff]
      %v267 = vld [vmem:[%s169 + $0x254] sm:$0xf]
      %v268 = vld [vmem:[%s169 + $0x258] sm:$0xff]
      %v269 = vld [vmem:[%s169 + $0x260] sm:$0xff]
      %v270 = vld [vmem:[%s169 + $0x268] sm:$0xf]
      %v271 = vld [vmem:[%s169 + $0x26c] sm:$0xff]
      %v272 = vld [vmem:[%s169 + $0x274] sm:$0xff]
      %v273 = vld [vmem:[%s169 + $0x27c] sm:$0xf]
      %v274 = vld [vmem:[%s1] sm:$0xf]
      %v275 = vld [vmem:[%s1 + $0x4] sm:$0xf]
      %v276 = vld [vmem:[%s1 + $0x8] sm:$0xf]
      %v277 = vld [vmem:[%s1 + $0xc] sm:$0xf]
      %v278 = vld [vmem:[%s1 + $0x10] sm:$0xf]
      %v279 = vld [vmem:[%s1 + $0x14] sm:$0xf]
      %v280 = vld [vmem:[%s1 + $0x18] sm:$0xf]
      %v281 = vld [vmem:[%s1 + $0x1c] sm:$0xf]
      %v282 = vld [vmem:[%s1 + $0x20] sm:$0xf]
      %v283 = vld [vmem:[%s1 + $0x24] sm:$0xf]
      %v284 = vld [vmem:[%s1 + $0x28] sm:$0xf]
      %v285 = vld [vmem:[%s1 + $0x2c] sm:$0xf]
      %v286 = vld [vmem:[%s1 + $0x30] sm:$0xf]
      %v287 = vld [vmem:[%s1 + $0x34] sm:$0xf]
      %v288 = vld [vmem:[%s1 + $0x38] sm:$0xf]
      %v289 = vld [vmem:[%s1 + $0x3c] sm:$0xf]
      %v290 = vld [vmem:[%s1 + $0x40] sm:$0xf]
      %v291 = vld [vmem:[%s1 + $0x44] sm:$0xf]
      %v292 = vld [vmem:[%s1 + $0x48] sm:$0xf]
      %v293 = vld [vmem:[%s1 + $0x4c] sm:$0xf]
      %v294 = vld [vmem:[%s1 + $0x50] sm:$0xf]
      %v295 = vld [vmem:[%s1 + $0x54] sm:$0xf]
      %v296 = vld [vmem:[%s1 + $0x58] sm:$0xf]
      %v297 = vld [vmem:[%s1 + $0x5c] sm:$0xf]
      %v298 = vld [vmem:[%s1 + $0x60] sm:$0xf]
      %v299 = vld [vmem:[%s1 + $0x64] sm:$0xf]
      %v300 = vld [vmem:[%s1 + $0x68] sm:$0xf]
      %v301 = vld [vmem:[%s1 + $0x6c] sm:$0xf]
      %v302 = vld [vmem:[%s1 + $0x70] sm:$0xf]
      %v303 = vld [vmem:[%s1 + $0x74] sm:$0xf]
      %v304 = vld [vmem:[%s1 + $0x78] sm:$0xf]
      %v305 = vld [vmem:[%s1 + $0x7c] sm:$0xf]
      %v306 = vld [vmem:[%s1 + $0x80] sm:$0xf]
      %v307 = vld [vmem:[%s1 + $0x84] sm:$0xf]
      %v308 = vld [vmem:[%s1 + $0x88] sm:$0xf]
      %v309 = vld [vmem:[%s1 + $0x8c] sm:$0xf]
      %v310 = vld [vmem:[%s1 + $0x90] sm:$0xf]
      %v311 = vld [vmem:[%s1 + $0x94] sm:$0xf]
      %v312 = vld [vmem:[%s1 + $0x98] sm:$0xf]
      %v313 = vld [vmem:[%s1 + $0x9c] sm:$0xf]
      %v314 = vld [vmem:[%s1 + $0xa0] sm:$0xf]
      %v315 = vld [vmem:[%s1 + $0xa4] sm:$0xf]
      %v316 = vld [vmem:[%s1 + $0xa8] sm:$0xf]
      %v317 = vld [vmem:[%s1 + $0xac] sm:$0xf]
      %v318 = vld [vmem:[%s1 + $0xb0] sm:$0xf]
      %v319 = vld [vmem:[%s1 + $0xb4] sm:$0xf]
      %v320 = vld [vmem:[%s1 + $0xb8] sm:$0xf]
      %v321 = vld [vmem:[%s1 + $0xbc] sm:$0xf]
      %v322 = vld [vmem:[%s1 + $0xc0] sm:$0xf]
      %v323 = vld [vmem:[%s1 + $0xc4] sm:$0xf]
      %v324 = vld [vmem:[%s1 + $0xc8] sm:$0xf]
      %v325 = vld [vmem:[%s1 + $0xcc] sm:$0xf]
      %v326 = vld [vmem:[%s1 + $0xd0] sm:$0xf]
      %v327 = vld [vmem:[%s1 + $0xd4] sm:$0xf]
      %v328 = vld [vmem:[%s1 + $0xd8] sm:$0xf]
      %v329 = vld [vmem:[%s1 + $0xdc] sm:$0xf]
      %v330 = vld [vmem:[%s1 + $0xe0] sm:$0xf]
      %v331 = vld [vmem:[%s1 + $0xe4] sm:$0xf]
      %v332 = vld [vmem:[%s1 + $0xe8] sm:$0xf]
      %v333 = vld [vmem:[%s1 + $0xec] sm:$0xf]
      %v334 = vld [vmem:[%s1 + $0xf0] sm:$0xf]
      %v335 = vld [vmem:[%s1 + $0xf4] sm:$0xf]
      %v336 = vld [vmem:[%s1 + $0xf8] sm:$0xf]
      %v337 = vld [vmem:[%s1 + $0xfc] sm:$0xf]
      %v338 = vld [vmem:[%s1 + $0x100] sm:$0xf]
      %v339 = vld [vmem:[%s1 + $0x104] sm:$0xf]
      %v340 = vld [vmem:[%s1 + $0x108] sm:$0xf]
      %v341 = vld [vmem:[%s1 + $0x10c] sm:$0xf]
      %v342 = vld [vmem:[%s1 + $0x110] sm:$0xf]
      %v343 = vld [vmem:[%s1 + $0x114] sm:$0xf]
      %v344 = vld [vmem:[%s1 + $0x118] sm:$0xf]
      %v345 = vld [vmem:[%s1 + $0x11c] sm:$0xf]
      %v346 = vld [vmem:[%s1 + $0x120] sm:$0xf]
      %v347 = vld [vmem:[%s1 + $0x124] sm:$0xf]
      %v348 = vld [vmem:[%s1 + $0x128] sm:$0xf]
      %v349 = vld [vmem:[%s1 + $0x12c] sm:$0xf]
      %v350 = vld [vmem:[%s1 + $0x130] sm:$0xf]
      %v351 = vld [vmem:[%s1 + $0x134] sm:$0xf]
      %v352 = vld [vmem:[%s1 + $0x138] sm:$0xf]
      %v353 = vld [vmem:[%s1 + $0x13c] sm:$0xf]
      %v354 = vld [vmem:[%s2] sm:$0x1]
      %v356 = vlaneseq
      %v357 = vshrl.u32 %v356, 7
      %v358 = vsub.s32 0, %v357
      %v359 = vrot.slane %v354, %v358
      %v457 = vunpack.c.l.b16 %v178
      %v458 = vunpack.c.h.b16 %v178
      %v459 = vunpack.c.l.b16 %v179
      %v460 = vunpack.c.h.b16 %v179
      %v461 = vunpack.c.l.b16 %v180
      %v462 = vunpack.c.l.b16 %v181
      %v463 = vunpack.c.h.b16 %v181
      %v464 = vunpack.c.l.b16 %v182
      %v465 = vunpack.c.h.b16 %v182
      %v466 = vunpack.c.l.b16 %v183
      %v467 = vunpack.c.l.b16 %v184
      %v468 = vunpack.c.h.b16 %v184
      %v469 = vunpack.c.l.b16 %v185
      %v470 = vunpack.c.h.b16 %v185
      %v471 = vunpack.c.l.b16 %v186
      %v472 = vunpack.c.l.b16 %v187
      %v473 = vunpack.c.h.b16 %v187
      %v474 = vunpack.c.l.b16 %v188
      %v475 = vunpack.c.h.b16 %v188
      %v476 = vunpack.c.l.b16 %v189
      %v477 = vunpack.c.l.b16 %v190
      %v478 = vunpack.c.h.b16 %v190
      %v479 = vunpack.c.l.b16 %v191
      %v480 = vunpack.c.h.b16 %v191
      %v481 = vunpack.c.l.b16 %v192
      %v482 = vunpack.c.l.b16 %v193
      %v483 = vunpack.c.h.b16 %v193
      %v484 = vunpack.c.l.b16 %v194
      %v485 = vunpack.c.h.b16 %v194
      %v486 = vunpack.c.l.b16 %v195
      %v487 = vunpack.c.l.b16 %v196
      %v488 = vunpack.c.h.b16 %v196
      %v489 = vunpack.c.l.b16 %v197
      %v490 = vunpack.c.h.b16 %v197
      %v491 = vunpack.c.l.b16 %v198
      %v492 = vunpack.c.l.b16 %v199
      %v493 = vunpack.c.h.b16 %v199
      %v494 = vunpack.c.l.b16 %v200
      %v495 = vunpack.c.h.b16 %v200
      %v496 = vunpack.c.l.b16 %v201
      %v497 = vunpack.c.l.b16 %v202
      %v498 = vunpack.c.h.b16 %v202
      %v499 = vunpack.c.l.b16 %v203
      %v500 = vunpack.c.h.b16 %v203
      %v501 = vunpack.c.l.b16 %v204
      %v502 = vunpack.c.l.b16 %v205
      %v503 = vunpack.c.h.b16 %v205
      %v504 = vunpack.c.l.b16 %v206
      %v505 = vunpack.c.h.b16 %v206
      %v506 = vunpack.c.l.b16 %v207
      %v507 = vunpack.c.l.b16 %v208
      %v508 = vunpack.c.h.b16 %v208
      %v509 = vunpack.c.l.b16 %v209
      %v510 = vunpack.c.h.b16 %v209
      %v511 = vunpack.c.l.b16 %v210
      %v512 = vunpack.c.l.b16 %v211
      %v513 = vunpack.c.h.b16 %v211
      %v514 = vunpack.c.l.b16 %v212
      %v515 = vunpack.c.h.b16 %v212
      %v516 = vunpack.c.l.b16 %v213
      %v517 = vunpack.c.l.b16 %v214
      %v518 = vunpack.c.h.b16 %v214
      %v519 = vunpack.c.l.b16 %v215
      %v520 = vunpack.c.h.b16 %v215
      %v521 = vunpack.c.l.b16 %v216
      %v522 = vunpack.c.l.b16 %v217
      %v523 = vunpack.c.h.b16 %v217
      %v524 = vunpack.c.l.b16 %v218
      %v525 = vunpack.c.h.b16 %v218
      %v526 = vunpack.c.l.b16 %v219
      %v527 = vunpack.c.l.b16 %v220
      %v528 = vunpack.c.h.b16 %v220
      %v529 = vunpack.c.l.b16 %v221
      %v530 = vunpack.c.h.b16 %v221
      %v531 = vunpack.c.l.b16 %v222
      %v532 = vunpack.c.l.b16 %v223
      %v533 = vunpack.c.h.b16 %v223
      %v534 = vunpack.c.l.b16 %v224
      %v535 = vunpack.c.h.b16 %v224
      %v536 = vunpack.c.l.b16 %v225
      %v537 = vunpack.c.l.b16 %v226
      %v538 = vunpack.c.h.b16 %v226
      %v539 = vunpack.c.l.b16 %v227
      %v540 = vunpack.c.h.b16 %v227
      %v541 = vunpack.c.l.b16 %v228
      %v542 = vunpack.c.l.b16 %v229
      %v543 = vunpack.c.h.b16 %v229
      %v544 = vunpack.c.l.b16 %v230
      %v545 = vunpack.c.h.b16 %v230
      %v546 = vunpack.c.l.b16 %v231
      %v547 = vunpack.c.l.b16 %v232
      %v548 = vunpack.c.h.b16 %v232
      %v549 = vunpack.c.l.b16 %v233
      %v550 = vunpack.c.h.b16 %v233
      %v551 = vunpack.c.l.b16 %v234
      %v552 = vunpack.c.l.b16 %v235
      %v553 = vunpack.c.h.b16 %v235
      %v554 = vunpack.c.l.b16 %v236
      %v555 = vunpack.c.h.b16 %v236
      %v556 = vunpack.c.l.b16 %v237
      %v557 = vunpack.c.l.b16 %v238
      %v558 = vunpack.c.h.b16 %v238
      %v559 = vunpack.c.l.b16 %v239
      %v560 = vunpack.c.h.b16 %v239
      %v561 = vunpack.c.l.b16 %v240
      %v562 = vunpack.c.l.b16 %v241
      %v563 = vunpack.c.h.b16 %v241
      %v564 = vunpack.c.l.b16 %v242
      %v565 = vunpack.c.h.b16 %v242
      %v566 = vunpack.c.l.b16 %v243
      %v567 = vunpack.c.l.b16 %v244
      %v568 = vunpack.c.h.b16 %v244
      %v569 = vunpack.c.l.b16 %v245
      %v570 = vunpack.c.h.b16 %v245
      %v571 = vunpack.c.l.b16 %v246
      %v572 = vunpack.c.l.b16 %v247
      %v573 = vunpack.c.h.b16 %v247
      %v574 = vunpack.c.l.b16 %v248
      %v575 = vunpack.c.h.b16 %v248
      %v576 = vunpack.c.l.b16 %v249
      %v577 = vunpack.c.l.b16 %v250
      %v578 = vunpack.c.h.b16 %v250
      %v579 = vunpack.c.l.b16 %v251
      %v580 = vunpack.c.h.b16 %v251
      %v581 = vunpack.c.l.b16 %v252
      %v582 = vunpack.c.l.b16 %v253
      %v583 = vunpack.c.h.b16 %v253
      %v584 = vunpack.c.l.b16 %v254
      %v585 = vunpack.c.h.b16 %v254
      %v586 = vunpack.c.l.b16 %v255
      %v587 = vunpack.c.l.b16 %v256
      %v588 = vunpack.c.h.b16 %v256
      %v589 = vunpack.c.l.b16 %v257
      %v590 = vunpack.c.h.b16 %v257
      %v591 = vunpack.c.l.b16 %v258
      %v592 = vunpack.c.l.b16 %v259
      %v593 = vunpack.c.h.b16 %v259
      %v594 = vunpack.c.l.b16 %v260
      %v595 = vunpack.c.h.b16 %v260
      %v596 = vunpack.c.l.b16 %v261
      %v597 = vunpack.c.l.b16 %v262
      %v598 = vunpack.c.h.b16 %v262
      %v599 = vunpack.c.l.b16 %v263
      %v600 = vunpack.c.h.b16 %v263
      %v601 = vunpack.c.l.b16 %v264
      %v602 = vunpack.c.l.b16 %v265
      %v603 = vunpack.c.h.b16 %v265
      %v604 = vunpack.c.l.b16 %v266
      %v605 = vunpack.c.h.b16 %v266
      %v606 = vunpack.c.l.b16 %v267
      %v607 = vunpack.c.l.b16 %v268
      %v608 = vunpack.c.h.b16 %v268
      %v609 = vunpack.c.l.b16 %v269
      %v610 = vunpack.c.h.b16 %v269
      %v611 = vunpack.c.l.b16 %v270
      %v612 = vunpack.c.l.b16 %v271
      %v613 = vunpack.c.h.b16 %v271
      %v614 = vunpack.c.l.b16 %v272
      %v615 = vunpack.c.h.b16 %v272
      %v616 = vunpack.c.l.b16 %v273
      %v617 = vpack.c.b16 %v462, %v457
      %v618 = vpack.c.b16 %v463, %v458
      %v619 = vpack.c.b16 %v464, %v459
      %v620 = vpack.c.b16 %v465, %v460
      %v621 = vpack.c.b16 %v466, %v461
      %v622 = vpack.c.b16 %v472, %v467
      %v623 = vpack.c.b16 %v473, %v468
      %v624 = vpack.c.b16 %v474, %v469
      %v625 = vpack.c.b16 %v475, %v470
      %v626 = vpack.c.b16 %v476, %v471
      %v627 = vpack.c.b16 %v482, %v477
      %v628 = vpack.c.b16 %v483, %v478
      %v629 = vpack.c.b16 %v484, %v479
      %v630 = vpack.c.b16 %v485, %v480
      %v631 = vpack.c.b16 %v486, %v481
      %v632 = vpack.c.b16 %v492, %v487
      %v633 = vpack.c.b16 %v493, %v488
      %v634 = vpack.c.b16 %v494, %v489
      %v635 = vpack.c.b16 %v495, %v490
      %v636 = vpack.c.b16 %v496, %v491
      %v637 = vpack.c.b16 %v502, %v497
      %v638 = vpack.c.b16 %v503, %v498
      %v639 = vpack.c.b16 %v504, %v499
      %v640 = vpack.c.b16 %v505, %v500
      %v641 = vpack.c.b16 %v506, %v501
      %v642 = vpack.c.b16 %v512, %v507
      %v643 = vpack.c.b16 %v513, %v508
      %v644 = vpack.c.b16 %v514, %v509
      %v645 = vpack.c.b16 %v515, %v510
      %v646 = vpack.c.b16 %v516, %v511
      %v647 = vpack.c.b16 %v522, %v517
      %v648 = vpack.c.b16 %v523, %v518
      %v649 = vpack.c.b16 %v524, %v519
      %v650 = vpack.c.b16 %v525, %v520
      %v651 = vpack.c.b16 %v526, %v521
      %v652 = vpack.c.b16 %v532, %v527
      %v653 = vpack.c.b16 %v533, %v528
      %v654 = vpack.c.b16 %v534, %v529
      %v655 = vpack.c.b16 %v535, %v530
      %v656 = vpack.c.b16 %v536, %v531
      %v657 = vpack.c.b16 %v542, %v537
      %v658 = vpack.c.b16 %v543, %v538
      %v659 = vpack.c.b16 %v544, %v539
      %v660 = vpack.c.b16 %v545, %v540
      %v661 = vpack.c.b16 %v546, %v541
      %v662 = vpack.c.b16 %v552, %v547
      %v663 = vpack.c.b16 %v553, %v548
      %v664 = vpack.c.b16 %v554, %v549
      %v665 = vpack.c.b16 %v555, %v550
      %v666 = vpack.c.b16 %v556, %v551
      %v667 = vpack.c.b16 %v562, %v557
      %v668 = vpack.c.b16 %v563, %v558
      %v669 = vpack.c.b16 %v564, %v559
      %v670 = vpack.c.b16 %v565, %v560
      %v671 = vpack.c.b16 %v566, %v561
      %v672 = vpack.c.b16 %v572, %v567
      %v673 = vpack.c.b16 %v573, %v568
      %v674 = vpack.c.b16 %v574, %v569
      %v675 = vpack.c.b16 %v575, %v570
      %v676 = vpack.c.b16 %v576, %v571
      %v677 = vpack.c.b16 %v582, %v577
      %v678 = vpack.c.b16 %v583, %v578
      %v679 = vpack.c.b16 %v584, %v579
      %v680 = vpack.c.b16 %v585, %v580
      %v681 = vpack.c.b16 %v586, %v581
      %v682 = vpack.c.b16 %v592, %v587
      %v683 = vpack.c.b16 %v593, %v588
      %v684 = vpack.c.b16 %v594, %v589
      %v685 = vpack.c.b16 %v595, %v590
      %v686 = vpack.c.b16 %v596, %v591
      %v687 = vpack.c.b16 %v602, %v597
      %v688 = vpack.c.b16 %v603, %v598
      %v689 = vpack.c.b16 %v604, %v599
      %v690 = vpack.c.b16 %v605, %v600
      %v691 = vpack.c.b16 %v606, %v601
      %v692 = vpack.c.b16 %v612, %v607
      %v693 = vpack.c.b16 %v613, %v608
      %v694 = vpack.c.b16 %v614, %v609
      %v695 = vpack.c.b16 %v615, %v610
      %v696 = vpack.c.b16 %v616, %v611
      %v857 = vunpack.c.l.b16 %v274
      %v858 = vunpack.c.l.b16 %v275
      %v859 = vunpack.c.l.b16 %v276
      %v860 = vunpack.c.l.b16 %v277
      %v861 = vunpack.c.l.b16 %v278
      %v862 = vunpack.c.l.b16 %v279
      %v863 = vunpack.c.l.b16 %v280
      %v864 = vunpack.c.l.b16 %v281
      %v865 = vunpack.c.l.b16 %v282
      %v866 = vunpack.c.l.b16 %v283
      %v867 = vunpack.c.l.b16 %v284
      %v868 = vunpack.c.l.b16 %v285
      %v869 = vunpack.c.l.b16 %v286
      %v870 = vunpack.c.l.b16 %v287
      %v871 = vunpack.c.l.b16 %v288
      %v872 = vunpack.c.l.b16 %v289
      %v873 = vunpack.c.l.b16 %v290
      %v874 = vunpack.c.l.b16 %v291
      %v875 = vunpack.c.l.b16 %v292
      %v876 = vunpack.c.l.b16 %v293
      %v877 = vunpack.c.l.b16 %v294
      %v878 = vunpack.c.l.b16 %v295
      %v879 = vunpack.c.l.b16 %v296
      %v880 = vunpack.c.l.b16 %v297
      %v881 = vunpack.c.l.b16 %v298
      %v882 = vunpack.c.l.b16 %v299
      %v883 = vunpack.c.l.b16 %v300
      %v884 = vunpack.c.l.b16 %v301
      %v885 = vunpack.c.l.b16 %v302
      %v886 = vunpack.c.l.b16 %v303
      %v887 = vunpack.c.l.b16 %v304
      %v888 = vunpack.c.l.b16 %v305
      %v889 = vunpack.c.l.b16 %v306
      %v890 = vunpack.c.l.b16 %v307
      %v891 = vunpack.c.l.b16 %v308
      %v892 = vunpack.c.l.b16 %v309
      %v893 = vunpack.c.l.b16 %v310
      %v894 = vunpack.c.l.b16 %v311
      %v895 = vunpack.c.l.b16 %v312
      %v896 = vunpack.c.l.b16 %v313
      %v897 = vunpack.c.l.b16 %v314
      %v898 = vunpack.c.l.b16 %v315
      %v899 = vunpack.c.l.b16 %v316
      %v900 = vunpack.c.l.b16 %v317
      %v901 = vunpack.c.l.b16 %v318
      %v902 = vunpack.c.l.b16 %v319
      %v903 = vunpack.c.l.b16 %v320
      %v904 = vunpack.c.l.b16 %v321
      %v905 = vunpack.c.l.b16 %v322
      %v906 = vunpack.c.l.b16 %v323
      %v907 = vunpack.c.l.b16 %v324
      %v908 = vunpack.c.l.b16 %v325
      %v909 = vunpack.c.l.b16 %v326
      %v910 = vunpack.c.l.b16 %v327
      %v911 = vunpack.c.l.b16 %v328
      %v912 = vunpack.c.l.b16 %v329
      %v913 = vunpack.c.l.b16 %v330
      %v914 = vunpack.c.l.b16 %v331
      %v915 = vunpack.c.l.b16 %v332
      %v916 = vunpack.c.l.b16 %v333
      %v917 = vunpack.c.l.b16 %v334
      %v918 = vunpack.c.l.b16 %v335
      %v919 = vunpack.c.l.b16 %v336
      %v920 = vunpack.c.l.b16 %v337
      %v921 = vunpack.c.l.b16 %v338
      %v922 = vunpack.c.l.b16 %v339
      %v923 = vunpack.c.l.b16 %v340
      %v924 = vunpack.c.l.b16 %v341
      %v925 = vunpack.c.l.b16 %v342
      %v926 = vunpack.c.l.b16 %v343
      %v927 = vunpack.c.l.b16 %v344
      %v928 = vunpack.c.l.b16 %v345
      %v929 = vunpack.c.l.b16 %v346
      %v930 = vunpack.c.l.b16 %v347
      %v931 = vunpack.c.l.b16 %v348
      %v932 = vunpack.c.l.b16 %v349
      %v933 = vunpack.c.l.b16 %v350
      %v934 = vunpack.c.l.b16 %v351
      %v935 = vunpack.c.l.b16 %v352
      %v936 = vunpack.c.l.b16 %v353
      %v937 = vpack.c.b16 %v858, %v857
      %v938 = vpack.c.b16 %v860, %v859
      %v939 = vpack.c.b16 %v862, %v861
      %v940 = vpack.c.b16 %v864, %v863
      %v941 = vpack.c.b16 %v866, %v865
      %v942 = vpack.c.b16 %v868, %v867
      %v943 = vpack.c.b16 %v870, %v869
      %v944 = vpack.c.b16 %v872, %v871
      %v945 = vpack.c.b16 %v874, %v873
      %v946 = vpack.c.b16 %v876, %v875
      %v947 = vpack.c.b16 %v878, %v877
      %v948 = vpack.c.b16 %v880, %v879
      %v949 = vpack.c.b16 %v882, %v881
      %v950 = vpack.c.b16 %v884, %v883
      %v951 = vpack.c.b16 %v886, %v885
      %v952 = vpack.c.b16 %v888, %v887
      %v953 = vpack.c.b16 %v890, %v889
      %v954 = vpack.c.b16 %v892, %v891
      %v955 = vpack.c.b16 %v894, %v893
      %v956 = vpack.c.b16 %v896, %v895
      %v957 = vpack.c.b16 %v898, %v897
      %v958 = vpack.c.b16 %v900, %v899
      %v959 = vpack.c.b16 %v902, %v901
      %v960 = vpack.c.b16 %v904, %v903
      %v961 = vpack.c.b16 %v906, %v905
      %v962 = vpack.c.b16 %v908, %v907
      %v963 = vpack.c.b16 %v910, %v909
      %v964 = vpack.c.b16 %v912, %v911
      %v965 = vpack.c.b16 %v914, %v913
      %v966 = vpack.c.b16 %v916, %v915
      %v967 = vpack.c.b16 %v918, %v917
      %v968 = vpack.c.b16 %v920, %v919
      %v969 = vpack.c.b16 %v922, %v921
      %v970 = vpack.c.b16 %v924, %v923
      %v971 = vpack.c.b16 %v926, %v925
      %v972 = vpack.c.b16 %v928, %v927
      %v973 = vpack.c.b16 %v930, %v929
      %v974 = vpack.c.b16 %v932, %v931
      %v975 = vpack.c.b16 %v934, %v933
      %v976 = vpack.c.b16 %v936, %v935
      %1017 = vmatprep.subr.bf16.mxu0 0
      %1018 = vmatpush1.bf16.msra.mxu0 %v937
      %1019 = vmatprep.subr.bf16.mxu0 0
      %1020 = vmatpush1.bf16.msra.mxu0 %v938
      %1021 = vmatprep.subr.bf16.mxu0 0
      %1022 = vmatpush1.bf16.msra.mxu0 %v939
      %1023 = vmatprep.subr.bf16.mxu0 0
      %1024 = vmatpush1.bf16.msra.mxu0 %v940
      %1025 = vmatprep.subr.bf16.mxu0 0
      %1026 = vmatpush1.bf16.msra.mxu0 %v941
      %1027 = vmatprep.subr.bf16.mxu0 0
      %1028 = vmatpush1.bf16.msra.mxu0 %v942
      %1029 = vmatprep.subr.bf16.mxu0 0
      %1030 = vmatpush1.bf16.msra.mxu0 %v943
      %1031 = vmatprep.subr.bf16.mxu0 0
      %1032 = vmatpush1.bf16.msra.mxu0 %v944
      %1033 = vmatprep.subr.bf16.mxu0 0
      %1034 = vmatpush1.bf16.msra.mxu0 %v945
      %1035 = vmatprep.subr.bf16.mxu0 0
      %1036 = vmatpush1.bf16.msra.mxu0 %v946
      %1037 = vmatprep.subr.bf16.mxu0 0
      %1038 = vmatpush1.bf16.msra.mxu0 %v947
      %1039 = vmatprep.subr.bf16.mxu0 0
      %1040 = vmatpush1.bf16.msra.mxu0 %v948
      %1041 = vmatprep.subr.bf16.mxu0 0
      %1042 = vmatpush1.bf16.msra.mxu0 %v949
      %1043 = vmatprep.subr.bf16.mxu0 0
      %1044 = vmatpush1.bf16.msra.mxu0 %v950
      %1045 = vmatprep.subr.bf16.mxu0 0
      %1046 = vmatpush1.bf16.msra.mxu0 %v951
      %1047 = vmatprep.subr.bf16.mxu0 0
      %1048 = vmatpush1.bf16.msra.mxu0 %v952
      %1049 = vmatprep.mubr.bf16.mxu0 %v618
      %1050 = vmatmul.mubr.bf16.gmra.mrb[0].mxu0 %v617
      %v1051 = vpop.f32.mrb[0].mxu0
      %v1052 = vadd.f32 %v359, %v1051
      %v1053 = vpop.f32.mrb[0].mxu0
      %v1054 = vpop.f32.mrb[0].mxu0
      %v1055 = vadd.f32 %v359, %v1054
      %v1056 = vpop.f32.mrb[0].mxu0
      %1057 = vmatprep.mubr.bf16.mxu0 %v623
      %1058 = vmatmul.mubr.bf16.gmra.mrb[0].mxu0 %v622
      %v1059 = vpop.f32.mrb[0].mxu0
      %v1060 = vadd.f32 %v359, %v1059
      %v1061 = vpop.f32.mrb[0].mxu0
      %v1062 = vpop.f32.mrb[0].mxu0
      %v1063 = vadd.f32 %v359, %v1062
      %v1064 = vpop.f32.mrb[0].mxu0
      %1065 = vmatprep.mubr.bf16.mxu0 %v628
      %1066 = vmatmul.mubr.bf16.gmra.mrb[0].mxu0 %v627
      %v1067 = vpop.f32.mrb[0].mxu0
      %v1068 = vadd.f32 %v359, %v1067
      %v1069 = vpop.f32.mrb[0].mxu0
      %v1070 = vpop.f32.mrb[0].mxu0
      %v1071 = vadd.f32 %v359, %v1070
      %v1072 = vpop.f32.mrb[0].mxu0
      %1073 = vmatprep.mubr.bf16.mxu0 %v633
      %1074 = vmatmul.mubr.bf16.gmra.mrb[0].mxu0 %v632
      %v1075 = vpop.f32.mrb[0].mxu0
      %v1076 = vadd.f32 %v359, %v1075
      %v1077 = vpop.f32.mrb[0].mxu0
      %v1078 = vpop.f32.mrb[0].mxu0
      %v1079 = vadd.f32 %v359, %v1078
      %v1080 = vpop.f32.mrb[0].mxu0
      %1081 = vmatprep.mubr.bf16.mxu0 %v638
      %1082 = vmatmul.mubr.bf16.gmra.mrb[0].mxu0 %v637
      %v1083 = vpop.f32.mrb[0].mxu0
      %v1084 = vadd.f32 %v359, %v1083
      %v1085 = vpop.f32.mrb[0].mxu0
      %v1086 = vpop.f32.mrb[0].mxu0
      %v1087 = vadd.f32 %v359, %v1086
      %v1088 = vpop.f32.mrb[0].mxu0
      %1089 = vmatprep.mubr.bf16.mxu0 %v643
      %1090 = vmatmul.mubr.bf16.gmra.mrb[0].mxu0 %v642
      %v1091 = vpop.f32.mrb[0].mxu0
      %v1092 = vadd.f32 %v359, %v1091
      %v1093 = vpop.f32.mrb[0].mxu0
      %v1094 = vpop.f32.mrb[0].mxu0
      %v1095 = vadd.f32 %v359, %v1094
      %v1096 = vpop.f32.mrb[0].mxu0
      %1097 = vmatprep.mubr.bf16.mxu0 %v648
      %1098 = vmatmul.mubr.bf16.gmra.mrb[0].mxu0 %v647
      %v1099 = vpop.f32.mrb[0].mxu0
      %v1100 = vadd.f32 %v359, %v1099
      %v1101 = vpop.f32.mrb[0].mxu0
      %v1102 = vpop.f32.mrb[0].mxu0
      %v1103 = vadd.f32 %v359, %v1102
      %v1104 = vpop.f32.mrb[0].mxu0
      %1105 = vmatprep.mubr.bf16.mxu0 %v653
      %1106 = vmatmul.mubr.bf16.gmra.mrb[0].mxu0 %v652
      %v1107 = vpop.f32.mrb[0].mxu0
      %v1108 = vadd.f32 %v359, %v1107
      %v1109 = vpop.f32.mrb[0].mxu0
      %v1110 = vpop.f32.mrb[0].mxu0
      %v1111 = vadd.f32 %v359, %v1110
      %v1112 = vpop.f32.mrb[0].mxu0
      %1113 = vmatprep.mubr.bf16.mxu0 %v658
      %1114 = vmatmul.mubr.bf16.gmra.mrb[0].mxu0 %v657
      %v1115 = vpop.f32.mrb[0].mxu0
      %v1116 = vadd.f32 %v359, %v1115
      %v1117 = vpop.f32.mrb[0].mxu0
      %v1118 = vpop.f32.mrb[0].mxu0
      %v1119 = vadd.f32 %v359, %v1118
      %v1120 = vpop.f32.mrb[0].mxu0
      %1121 = vmatprep.mubr.bf16.mxu0 %v663
      %1122 = vmatmul.mubr.bf16.gmra.mrb[0].mxu0 %v662
      %v1123 = vpop.f32.mrb[0].mxu0
      %v1124 = vadd.f32 %v359, %v1123
      %v1125 = vpop.f32.mrb[0].mxu0
      %v1126 = vpop.f32.mrb[0].mxu0
      %v1127 = vadd.f32 %v359, %v1126
      %v1128 = vpop.f32.mrb[0].mxu0
      %1129 = vmatprep.mubr.bf16.mxu0 %v668
      %1130 = vmatmul.mubr.bf16.gmra.mrb[0].mxu0 %v667
      %v1131 = vpop.f32.mrb[0].mxu0
      %v1132 = vadd.f32 %v359, %v1131
      %v1133 = vpop.f32.mrb[0].mxu0
      %v1134 = vpop.f32.mrb[0].mxu0
      %v1135 = vadd.f32 %v359, %v1134
      %v1136 = vpop.f32.mrb[0].mxu0
      %1137 = vmatprep.mubr.bf16.mxu0 %v673
      %1138 = vmatmul.mubr.bf16.gmra.mrb[0].mxu0 %v672
      %v1139 = vpop.f32.mrb[0].mxu0
      %v1140 = vadd.f32 %v359, %v1139
      %v1141 = vpop.f32.mrb[0].mxu0
      %v1142 = vpop.f32.mrb[0].mxu0
      %v1143 = vadd.f32 %v359, %v1142
      %v1144 = vpop.f32.mrb[0].mxu0
      %1145 = vmatprep.mubr.bf16.mxu0 %v678
      %1146 = vmatmul.mubr.bf16.gmra.mrb[0].mxu0 %v677
      %v1147 = vpop.f32.mrb[0].mxu0
      %v1148 = vadd.f32 %v359, %v1147
      %v1149 = vpop.f32.mrb[0].mxu0
      %v1150 = vpop.f32.mrb[0].mxu0
      %v1151 = vadd.f32 %v359, %v1150
      %v1152 = vpop.f32.mrb[0].mxu0
      %1153 = vmatprep.mubr.bf16.mxu0 %v683
      %1154 = vmatmul.mubr.bf16.gmra.mrb[0].mxu0 %v682
      %v1155 = vpop.f32.mrb[0].mxu0
      %v1156 = vadd.f32 %v359, %v1155
      %v1157 = vpop.f32.mrb[0].mxu0
      %v1158 = vpop.f32.mrb[0].mxu0
      %v1159 = vadd.f32 %v359, %v1158
      %v1160 = vpop.f32.mrb[0].mxu0
      %1161 = vmatprep.mubr.bf16.mxu0 %v688
      %1162 = vmatmul.mubr.bf16.gmra.mrb[0].mxu0 %v687
      %v1163 = vpop.f32.mrb[0].mxu0
      %v1164 = vadd.f32 %v359, %v1163
      %v1165 = vpop.f32.mrb[0].mxu0
      %v1166 = vpop.f32.mrb[0].mxu0
      %v1167 = vadd.f32 %v359, %v1166
      %v1168 = vpop.f32.mrb[0].mxu0
      %1169 = vmatprep.mubr.bf16.mxu0 %v693
      %1170 = vmatmul.mubr.bf16.gmra.mrb[0].mxu0 %v692
      %v1171 = vpop.f32.mrb[0].mxu0
      %v1172 = vadd.f32 %v359, %v1171
      %v1173 = vpop.f32.mrb[0].mxu0
      %v1174 = vpop.f32.mrb[0].mxu0
      %v1175 = vadd.f32 %v359, %v1174
      %v1176 = vpop.f32.mrb[0].mxu0
      %1177 = vdwg.mxu0
      %1178 = vmatprep.subr.bf16.mxu0 0
      %1179 = vmatpush1.bf16.msra.mxu0 %v953
      %1180 = vmatprep.subr.bf16.mxu0 0
      %1181 = vmatpush1.bf16.msra.mxu0 %v954
      %1182 = vmatprep.subr.bf16.mxu0 0
      %1183 = vmatpush1.bf16.msra.mxu0 %v955
      %1184 = vmatprep.subr.bf16.mxu0 0
      %1185 = vmatpush1.bf16.msra.mxu0 %v956
      %1186 = vmatprep.subr.bf16.mxu0 0
      %1187 = vmatpush1.bf16.msra.mxu0 %v957
      %1188 = vmatprep.subr.bf16.mxu0 0
      %1189 = vmatpush1.bf16.msra.mxu0 %v958
      %1190 = vmatprep.subr.bf16.mxu0 0
      %1191 = vmatpush1.bf16.msra.mxu0 %v959
      %1192 = vmatprep.subr.bf16.mxu0 0
      %1193 = vmatpush1.bf16.msra.mxu0 %v960
      %1194 = vmatprep.subr.bf16.mxu0 0
      %1195 = vmatpush1.bf16.msra.mxu0 %v961
      %1196 = vmatprep.subr.bf16.mxu0 0
      %1197 = vmatpush1.bf16.msra.mxu0 %v962
      %1198 = vmatprep.subr.bf16.mxu0 0
      %1199 = vmatpush1.bf16.msra.mxu0 %v963
      %1200 = vmatprep.subr.bf16.mxu0 0
      %1201 = vmatpush1.bf16.msra.mxu0 %v964
      %1202 = vmatprep.subr.bf16.mxu0 0
      %1203 = vmatpush1.bf16.msra.mxu0 %v965
      %1204 = vmatprep.subr.bf16.mxu0 0
      %1205 = vmatpush1.bf16.msra.mxu0 %v966
      %1206 = vmatprep.subr.bf16.mxu0 0
      %1207 = vmatpush1.bf16.msra.mxu0 %v967
      %1208 = vmatprep.subr.bf16.mxu0 0
      %1209 = vmatpush1.bf16.msra.mxu0 %v968
      %1210 = vmatprep.mubr.bf16.mxu0 %v620
      %1211 = vmatmul.mubr.bf16.gmra.mrb[0].mxu0 %v619
      %v1212 = vpop.f32.mrb[0].mxu0
      %v1213 = vadd.f32 %v1052, %v1212
      %v1214 = vpop.f32.mrb[0].mxu0
      %v1215 = vpop.f32.mrb[0].mxu0
      %v1216 = vadd.f32 %v1055, %v1215
      %v1217 = vpop.f32.mrb[0].mxu0
      %1218 = vmatprep.mubr.bf16.mxu0 %v625
      %1219 = vmatmul.mubr.bf16.gmra.mrb[0].mxu0 %v624
      %v1220 = vpop.f32.mrb[0].mxu0
      %v1221 = vadd.f32 %v1060, %v1220
      %v1222 = vpop.f32.mrb[0].mxu0
      %v1223 = vpop.f32.mrb[0].mxu0
      %v1224 = vadd.f32 %v1063, %v1223
      %v1225 = vpop.f32.mrb[0].mxu0
      %1226 = vmatprep.mubr.bf16.mxu0 %v630
      %1227 = vmatmul.mubr.bf16.gmra.mrb[0].mxu0 %v629
      %v1228 = vpop.f32.mrb[0].mxu0
      %v1229 = vadd.f32 %v1068, %v1228
      %v1230 = vpop.f32.mrb[0].mxu0
      %v1231 = vpop.f32.mrb[0].mxu0
      %v1232 = vadd.f32 %v1071, %v1231
      %v1233 = vpop.f32.mrb[0].mxu0
      %1234 = vmatprep.mubr.bf16.mxu0 %v635
      %1235 = vmatmul.mubr.bf16.gmra.mrb[0].mxu0 %v634
      %v1236 = vpop.f32.mrb[0].mxu0
      %v1237 = vadd.f32 %v1076, %v1236
      %v1238 = vpop.f32.mrb[0].mxu0
      %v1239 = vpop.f32.mrb[0].mxu0
      %v1240 = vadd.f32 %v1079, %v1239
      %v1241 = vpop.f32.mrb[0].mxu0
      %1242 = vmatprep.mubr.bf16.mxu0 %v640
      %1243 = vmatmul.mubr.bf16.gmra.mrb[0].mxu0 %v639
      %v1244 = vpop.f32.mrb[0].mxu0
      %v1245 = vadd.f32 %v1084, %v1244
      %v1246 = vpop.f32.mrb[0].mxu0
      %v1247 = vpop.f32.mrb[0].mxu0
      %v1248 = vadd.f32 %v1087, %v1247
      %v1249 = vpop.f32.mrb[0].mxu0
      %1250 = vmatprep.mubr.bf16.mxu0 %v645
      %1251 = vmatmul.mubr.bf16.gmra.mrb[0].mxu0 %v644
      %v1252 = vpop.f32.mrb[0].mxu0
      %v1253 = vadd.f32 %v1092, %v1252
      %v1254 = vpop.f32.mrb[0].mxu0
      %v1255 = vpop.f32.mrb[0].mxu0
      %v1256 = vadd.f32 %v1095, %v1255
      %v1257 = vpop.f32.mrb[0].mxu0
      %1258 = vmatprep.mubr.bf16.mxu0 %v650
      %1259 = vmatmul.mubr.bf16.gmra.mrb[0].mxu0 %v649
      %v1260 = vpop.f32.mrb[0].mxu0
      %v1261 = vadd.f32 %v1100, %v1260
      %v1262 = vpop.f32.mrb[0].mxu0
      %v1263 = vpop.f32.mrb[0].mxu0
      %v1264 = vadd.f32 %v1103, %v1263
      %v1265 = vpop.f32.mrb[0].mxu0
      %1266 = vmatprep.mubr.bf16.mxu0 %v655
      %1267 = vmatmul.mubr.bf16.gmra.mrb[0].mxu0 %v654
      %v1268 = vpop.f32.mrb[0].mxu0
      %v1269 = vadd.f32 %v1108, %v1268
      %v1270 = vpop.f32.mrb[0].mxu0
      %v1271 = vpop.f32.mrb[0].mxu0
      %v1272 = vadd.f32 %v1111, %v1271
      %v1273 = vpop.f32.mrb[0].mxu0
      %1274 = vmatprep.mubr.bf16.mxu0 %v660
      %1275 = vmatmul.mubr.bf16.gmra.mrb[0].mxu0 %v659
      %v1276 = vpop.f32.mrb[0].mxu0
      %v1277 = vadd.f32 %v1116, %v1276
      %v1278 = vpop.f32.mrb[0].mxu0
      %v1279 = vpop.f32.mrb[0].mxu0
      %v1280 = vadd.f32 %v1119, %v1279
      %v1281 = vpop.f32.mrb[0].mxu0
      %1282 = vmatprep.mubr.bf16.mxu0 %v665
      %1283 = vmatmul.mubr.bf16.gmra.mrb[0].mxu0 %v664
      %v1284 = vpop.f32.mrb[0].mxu0
      %v1285 = vadd.f32 %v1124, %v1284
      %v1286 = vpop.f32.mrb[0].mxu0
      %v1287 = vpop.f32.mrb[0].mxu0
      %v1288 = vadd.f32 %v1127, %v1287
      %v1289 = vpop.f32.mrb[0].mxu0
      %1290 = vmatprep.mubr.bf16.mxu0 %v670
      %1291 = vmatmul.mubr.bf16.gmra.mrb[0].mxu0 %v669
      %v1292 = vpop.f32.mrb[0].mxu0
      %v1293 = vadd.f32 %v1132, %v1292
      %v1294 = vpop.f32.mrb[0].mxu0
      %v1295 = vpop.f32.mrb[0].mxu0
      %v1296 = vadd.f32 %v1135, %v1295
      %v1297 = vpop.f32.mrb[0].mxu0
      %1298 = vmatprep.mubr.bf16.mxu0 %v675
      %1299 = vmatmul.mubr.bf16.gmra.mrb[0].mxu0 %v674
      %v1300 = vpop.f32.mrb[0].mxu0
      %v1301 = vadd.f32 %v1140, %v1300
      %v1302 = vpop.f32.mrb[0].mxu0
      %v1303 = vpop.f32.mrb[0].mxu0
      %v1304 = vadd.f32 %v1143, %v1303
      %v1305 = vpop.f32.mrb[0].mxu0
      %1306 = vmatprep.mubr.bf16.mxu0 %v680
      %1307 = vmatmul.mubr.bf16.gmra.mrb[0].mxu0 %v679
      %v1308 = vpop.f32.mrb[0].mxu0
      %v1309 = vadd.f32 %v1148, %v1308
      %v1310 = vpop.f32.mrb[0].mxu0
      %v1311 = vpop.f32.mrb[0].mxu0
      %v1312 = vadd.f32 %v1151, %v1311
      %v1313 = vpop.f32.mrb[0].mxu0
      %1314 = vmatprep.mubr.bf16.mxu0 %v685
      %1315 = vmatmul.mubr.bf16.gmra.mrb[0].mxu0 %v684
      %v1316 = vpop.f32.mrb[0].mxu0
      %v1317 = vadd.f32 %v1156, %v1316
      %v1318 = vpop.f32.mrb[0].mxu0
      %v1319 = vpop.f32.mrb[0].mxu0
      %v1320 = vadd.f32 %v1159, %v1319
      %v1321 = vpop.f32.mrb[0].mxu0
      %1322 = vmatprep.mubr.bf16.mxu0 %v690
      %1323 = vmatmul.mubr.bf16.gmra.mrb[0].mxu0 %v689
      %v1324 = vpop.f32.mrb[0].mxu0
      %v1325 = vadd.f32 %v1164, %v1324
      %v1326 = vpop.f32.mrb[0].mxu0
      %v1327 = vpop.f32.mrb[0].mxu0
      %v1328 = vadd.f32 %v1167, %v1327
      %v1329 = vpop.f32.mrb[0].mxu0
      %1330 = vmatprep.mubr.bf16.mxu0 %v695
      %1331 = vmatmul.mubr.bf16.gmra.mrb[0].mxu0 %v694
      %v1332 = vpop.f32.mrb[0].mxu0
      %v1333 = vadd.f32 %v1172, %v1332
      %v1334 = vpop.f32.mrb[0].mxu0
      %v1335 = vpop.f32.mrb[0].mxu0
      %v1336 = vadd.f32 %v1175, %v1335
      %v1337 = vpop.f32.mrb[0].mxu0
      %1338 = vdwg.mxu0
      %1339 = vmatprep.subr.bf16.mxu0 0
      %1340 = vmatpush1.bf16.msra.mxu0 %v969
      %1341 = vmatprep.subr.bf16.mxu0 0
      %1342 = vmatpush1.bf16.msra.mxu0 %v970
      %1343 = vmatprep.subr.bf16.mxu0 0
      %1344 = vmatpush1.bf16.msra.mxu0 %v971
      %1345 = vmatprep.subr.bf16.mxu0 0
      %1346 = vmatpush1.bf16.msra.mxu0 %v972
      %1347 = vmatprep.subr.bf16.mxu0 0
      %1348 = vmatpush1.bf16.msra.mxu0 %v973
      %1349 = vmatprep.subr.bf16.mxu0 0
      %1350 = vmatpush1.bf16.msra.mxu0 %v974
      %1351 = vmatprep.subr.bf16.mxu0 0
      %1352 = vmatpush1.bf16.msra.mxu0 %v975
      %1353 = vmatprep.subr.bf16.mxu0 0
      %1354 = vmatpush1.bf16.msra.mxu0 %v976
      %1355 = vmatprep.subr.bf16.mxu0 0
      %1356 = vmatpush1.bf16.msra.mxu0 0
      %1357 = vmatprep.subr.bf16.mxu0 0
      %1358 = vmatpush1.bf16.msra.mxu0 0
      %1359 = vmatprep.subr.bf16.mxu0 0
      %1360 = vmatpush1.bf16.msra.mxu0 0
      %1361 = vmatprep.subr.bf16.mxu0 0
      %1362 = vmatpush1.bf16.msra.mxu0 0
      %1363 = vmatprep.subr.bf16.mxu0 0
      %1364 = vmatpush1.bf16.msra.mxu0 0
      %1365 = vmatprep.subr.bf16.mxu0 0
      %1366 = vmatpush1.bf16.msra.mxu0 0
      %1367 = vmatprep.subr.bf16.mxu0 0
      %1368 = vmatpush1.bf16.msra.mxu0 0
      %1369 = vmatprep.subr.bf16.mxu0 0
      %1370 = vmatpush1.bf16.msra.mxu0 0
      %1371 = vmatprep.mubr.bf16.mxu0 0
      %1372 = vmatmul.mubr.bf16.gmra.mrb[0].mxu0 %v621
      %v1373 = vpop.f32.mrb[0].mxu0
      %v1374 = vadd.f32 %v1213, %v1373
      %v1375 = vpop.f32.mrb[0].mxu0
      %v1376 = vpop.f32.mrb[0].mxu0
      %v1377 = vadd.f32 %v1216, %v1376
      %v1378 = vpop.f32.mrb[0].mxu0
      %1379 = vmatprep.mubr.bf16.mxu0 0
      %1380 = vmatmul.mubr.bf16.gmra.mrb[0].mxu0 %v626
      %v1381 = vpop.f32.mrb[0].mxu0
      %v1382 = vadd.f32 %v1221, %v1381
      %v1383 = vpop.f32.mrb[0].mxu0
      %v1384 = vpop.f32.mrb[0].mxu0
      %v1385 = vadd.f32 %v1224, %v1384
      %v1386 = vpop.f32.mrb[0].mxu0
      %1387 = vmatprep.mubr.bf16.mxu0 0
      %1388 = vmatmul.mubr.bf16.gmra.mrb[0].mxu0 %v631
      %v1389 = vpop.f32.mrb[0].mxu0
      %v1390 = vadd.f32 %v1229, %v1389
      %v1391 = vpop.f32.mrb[0].mxu0
      %v1392 = vpop.f32.mrb[0].mxu0
      %v1393 = vadd.f32 %v1232, %v1392
      %v1394 = vpop.f32.mrb[0].mxu0
      %1395 = vmatprep.mubr.bf16.mxu0 0
      %1396 = vmatmul.mubr.bf16.gmra.mrb[0].mxu0 %v636
      %v1397 = vpop.f32.mrb[0].mxu0
      %v1398 = vadd.f32 %v1237, %v1397
      %v1399 = vpop.f32.mrb[0].mxu0
      %v1400 = vpop.f32.mrb[0].mxu0
      %v1401 = vadd.f32 %v1240, %v1400
      %v1402 = vpop.f32.mrb[0].mxu0
      %1403 = vmatprep.mubr.bf16.mxu0 0
      %1404 = vmatmul.mubr.bf16.gmra.mrb[0].mxu0 %v641
      %v1405 = vpop.f32.mrb[0].mxu0
      %v1406 = vadd.f32 %v1245, %v1405
      %v1407 = vpop.f32.mrb[0].mxu0
      %v1408 = vpop.f32.mrb[0].mxu0
      %v1409 = vadd.f32 %v1248, %v1408
      %v1410 = vpop.f32.mrb[0].mxu0
      %1411 = vmatprep.mubr.bf16.mxu0 0
      %1412 = vmatmul.mubr.bf16.gmra.mrb[0].mxu0 %v646
      %v1413 = vpop.f32.mrb[0].mxu0
      %v1414 = vadd.f32 %v1253, %v1413
      %v1415 = vpop.f32.mrb[0].mxu0
      %v1416 = vpop.f32.mrb[0].mxu0
      %v1417 = vadd.f32 %v1256, %v1416
      %v1418 = vpop.f32.mrb[0].mxu0
      %1419 = vmatprep.mubr.bf16.mxu0 0
      %1420 = vmatmul.mubr.bf16.gmra.mrb[0].mxu0 %v651
      %v1421 = vpop.f32.mrb[0].mxu0
      %v1422 = vadd.f32 %v1261, %v1421
      %v1423 = vpop.f32.mrb[0].mxu0
      %v1424 = vpop.f32.mrb[0].mxu0
      %v1425 = vadd.f32 %v1264, %v1424
      %v1426 = vpop.f32.mrb[0].mxu0
      %1427 = vmatprep.mubr.bf16.mxu0 0
      %1428 = vmatmul.mubr.bf16.gmra.mrb[0].mxu0 %v656
      %v1429 = vpop.f32.mrb[0].mxu0
      %v1430 = vadd.f32 %v1269, %v1429
      %v1431 = vpop.f32.mrb[0].mxu0
      %v1432 = vpop.f32.mrb[0].mxu0
      %v1433 = vadd.f32 %v1272, %v1432
      %v1434 = vpop.f32.mrb[0].mxu0
      %1435 = vmatprep.mubr.bf16.mxu0 0
      %1436 = vmatmul.mubr.bf16.gmra.mrb[0].mxu0 %v661
      %v1437 = vpop.f32.mrb[0].mxu0
      %v1438 = vadd.f32 %v1277, %v1437
      %v1439 = vpop.f32.mrb[0].mxu0
      %v1440 = vpop.f32.mrb[0].mxu0
      %v1441 = vadd.f32 %v1280, %v1440
      %v1442 = vpop.f32.mrb[0].mxu0
      %1443 = vmatprep.mubr.bf16.mxu0 0
      %1444 = vmatmul.mubr.bf16.gmra.mrb[0].mxu0 %v666
      %v1445 = vpop.f32.mrb[0].mxu0
      %v1446 = vadd.f32 %v1285, %v1445
      %v1447 = vpop.f32.mrb[0].mxu0
      %v1448 = vpop.f32.mrb[0].mxu0
      %v1449 = vadd.f32 %v1288, %v1448
      %v1450 = vpop.f32.mrb[0].mxu0
      %1451 = vmatprep.mubr.bf16.mxu0 0
      %1452 = vmatmul.mubr.bf16.gmra.mrb[0].mxu0 %v671
      %v1453 = vpop.f32.mrb[0].mxu0
      %v1454 = vadd.f32 %v1293, %v1453
      %v1455 = vpop.f32.mrb[0].mxu0
      %v1456 = vpop.f32.mrb[0].mxu0
      %v1457 = vadd.f32 %v1296, %v1456
      %v1458 = vpop.f32.mrb[0].mxu0
      %1459 = vmatprep.mubr.bf16.mxu0 0
      %1460 = vmatmul.mubr.bf16.gmra.mrb[0].mxu0 %v676
      %v1461 = vpop.f32.mrb[0].mxu0
      %v1462 = vadd.f32 %v1301, %v1461
      %v1463 = vpop.f32.mrb[0].mxu0
      %v1464 = vpop.f32.mrb[0].mxu0
      %v1465 = vadd.f32 %v1304, %v1464
      %v1466 = vpop.f32.mrb[0].mxu0
      %1467 = vmatprep.mubr.bf16.mxu0 0
      %1468 = vmatmul.mubr.bf16.gmra.mrb[0].mxu0 %v681
      %v1469 = vpop.f32.mrb[0].mxu0
      %v1470 = vadd.f32 %v1309, %v1469
      %v1471 = vpop.f32.mrb[0].mxu0
      %v1472 = vpop.f32.mrb[0].mxu0
      %v1473 = vadd.f32 %v1312, %v1472
      %v1474 = vpop.f32.mrb[0].mxu0
      %1475 = vmatprep.mubr.bf16.mxu0 0
      %1476 = vmatmul.mubr.bf16.gmra.mrb[0].mxu0 %v686
      %v1477 = vpop.f32.mrb[0].mxu0
      %v1478 = vadd.f32 %v1317, %v1477
      %v1479 = vpop.f32.mrb[0].mxu0
      %v1480 = vpop.f32.mrb[0].mxu0
      %v1481 = vadd.f32 %v1320, %v1480
      %v1482 = vpop.f32.mrb[0].mxu0
      %1483 = vmatprep.mubr.bf16.mxu0 0
      %1484 = vmatmul.mubr.bf16.gmra.mrb[0].mxu0 %v691
      %v1485 = vpop.f32.mrb[0].mxu0
      %v1486 = vadd.f32 %v1325, %v1485
      %v1487 = vpop.f32.mrb[0].mxu0
      %v1488 = vpop.f32.mrb[0].mxu0
      %v1489 = vadd.f32 %v1328, %v1488
      %v1490 = vpop.f32.mrb[0].mxu0
      %1491 = vmatprep.mubr.bf16.mxu0 0
      %1492 = vmatmul.mubr.bf16.gmra.mrb[0].mxu0 %v696
      %v1493 = vpop.f32.mrb[0].mxu0
      %v1494 = vadd.f32 %v1333, %v1493
      %v1495 = vpop.f32.mrb[0].mxu0
      %v1496 = vpop.f32.mrb[0].mxu0
      %v1497 = vadd.f32 %v1336, %v1496
      %v1498 = vpop.f32.mrb[0].mxu0
      %1499 = vdwg.mxu0
      %v1500 = vmul.f32 %v1374, 0.5
      %v1501 = vmul.f32 %v1377, 0.5
      %v1502 = vmul.f32 %v1382, 0.5
      %v1503 = vmul.f32 %v1385, 0.5
      %v1504 = vmul.f32 %v1390, 0.5
      %v1505 = vmul.f32 %v1393, 0.5
      %v1506 = vmul.f32 %v1398, 0.5
      %v1507 = vmul.f32 %v1401, 0.5
      %v1508 = vmul.f32 %v1406, 0.5
      %v1509 = vmul.f32 %v1409, 0.5
      %v1510 = vmul.f32 %v1414, 0.5
      %v1511 = vmul.f32 %v1417, 0.5
      %v1512 = vmul.f32 %v1422, 0.5
      %v1513 = vmul.f32 %v1425, 0.5
      %v1514 = vmul.f32 %v1430, 0.5
      %v1515 = vmul.f32 %v1433, 0.5
      %v1516 = vmul.f32 %v1438, 0.5
      %v1517 = vmul.f32 %v1441, 0.5
      %v1518 = vmul.f32 %v1446, 0.5
      %v1519 = vmul.f32 %v1449, 0.5
      %v1520 = vmul.f32 %v1454, 0.5
      %v1521 = vmul.f32 %v1457, 0.5
      %v1522 = vmul.f32 %v1462, 0.5
      %v1523 = vmul.f32 %v1465, 0.5
      %v1524 = vmul.f32 %v1470, 0.5
      %v1525 = vmul.f32 %v1473, 0.5
      %v1526 = vmul.f32 %v1478, 0.5
      %v1527 = vmul.f32 %v1481, 0.5
      %v1528 = vmul.f32 %v1486, 0.5
      %v1529 = vmul.f32 %v1489, 0.5
      %v1530 = vmul.f32 %v1494, 0.5
      %v1531 = vmul.f32 %v1497, 0.5
      %v1532 = vmul.f32 %v1374, 0.044715
      %v1533 = vmul.f32 %v1377, 0.044715
      %v1534 = vmul.f32 %v1382, 0.044715
      %v1535 = vmul.f32 %v1385, 0.044715
      %v1536 = vmul.f32 %v1390, 0.044715
      %v1537 = vmul.f32 %v1393, 0.044715
      %v1538 = vmul.f32 %v1398, 0.044715
      %v1539 = vmul.f32 %v1401, 0.044715
      %v1540 = vmul.f32 %v1406, 0.044715
      %v1541 = vmul.f32 %v1409, 0.044715
      %v1542 = vmul.f32 %v1414, 0.044715
      %v1543 = vmul.f32 %v1417, 0.044715
      %v1544 = vmul.f32 %v1422, 0.044715
      %v1545 = vmul.f32 %v1425, 0.044715
      %v1546 = vmul.f32 %v1430, 0.044715
      %v1547 = vmul.f32 %v1433, 0.044715
      %v1548 = vmul.f32 %v1438, 0.044715
      %v1549 = vmul.f32 %v1441, 0.044715
      %v1550 = vmul.f32 %v1446, 0.044715
      %v1551 = vmul.f32 %v1449, 0.044715
      %v1552 = vmul.f32 %v1454, 0.044715
      %v1553 = vmul.f32 %v1457, 0.044715
      %v1554 = vmul.f32 %v1462, 0.044715
      %v1555 = vmul.f32 %v1465, 0.044715
      %v1556 = vmul.f32 %v1470, 0.044715
      %v1557 = vmul.f32 %v1473, 0.044715
      %v1558 = vmul.f32 %v1478, 0.044715
      %v1559 = vmul.f32 %v1481, 0.044715
      %v1560 = vmul.f32 %v1486, 0.044715
      %v1561 = vmul.f32 %v1489, 0.044715
      %v1562 = vmul.f32 %v1494, 0.044715
      %v1563 = vmul.f32 %v1497, 0.044715
      %v1564 = vmul.f32 %v1532, %v1374
      %v1565 = vmul.f32 %v1533, %v1377
      %v1566 = vmul.f32 %v1534, %v1382
      %v1567 = vmul.f32 %v1535, %v1385
      %v1568 = vmul.f32 %v1536, %v1390
      %v1569 = vmul.f32 %v1537, %v1393
      %v1570 = vmul.f32 %v1538, %v1398
      %v1571 = vmul.f32 %v1539, %v1401
      %v1572 = vmul.f32 %v1540, %v1406
      %v1573 = vmul.f32 %v1541, %v1409
      %v1574 = vmul.f32 %v1542, %v1414
      %v1575 = vmul.f32 %v1543, %v1417
      %v1576 = vmul.f32 %v1544, %v1422
      %v1577 = vmul.f32 %v1545, %v1425
      %v1578 = vmul.f32 %v1546, %v1430
      %v1579 = vmul.f32 %v1547, %v1433
      %v1580 = vmul.f32 %v1548, %v1438
      %v1581 = vmul.f32 %v1549, %v1441
      %v1582 = vmul.f32 %v1550, %v1446
      %v1583 = vmul.f32 %v1551, %v1449
      %v1584 = vmul.f32 %v1552, %v1454
      %v1585 = vmul.f32 %v1553, %v1457
      %v1586 = vmul.f32 %v1554, %v1462
      %v1587 = vmul.f32 %v1555, %v1465
      %v1588 = vmul.f32 %v1556, %v1470
      %v1589 = vmul.f32 %v1557, %v1473
      %v1590 = vmul.f32 %v1558, %v1478
      %v1591 = vmul.f32 %v1559, %v1481
      %v1592 = vmul.f32 %v1560, %v1486
      %v1593 = vmul.f32 %v1561, %v1489
      %v1594 = vmul.f32 %v1562, %v1494
      %v1595 = vmul.f32 %v1563, %v1497
      %v1596 = vmul.f32 %v1564, %v1374
      %v1597 = vmul.f32 %v1565, %v1377
      %v1598 = vmul.f32 %v1566, %v1382
      %v1599 = vmul.f32 %v1567, %v1385
      %v1600 = vmul.f32 %v1568, %v1390
      %v1601 = vmul.f32 %v1569, %v1393
      %v1602 = vmul.f32 %v1570, %v1398
      %v1603 = vmul.f32 %v1571, %v1401
      %v1604 = vmul.f32 %v1572, %v1406
      %v1605 = vmul.f32 %v1573, %v1409
      %v1606 = vmul.f32 %v1574, %v1414
      %v1607 = vmul.f32 %v1575, %v1417
      %v1608 = vmul.f32 %v1576, %v1422
      %v1609 = vmul.f32 %v1577, %v1425
      %v1610 = vmul.f32 %v1578, %v1430
      %v1611 = vmul.f32 %v1579, %v1433
      %v1612 = vmul.f32 %v1580, %v1438
      %v1613 = vmul.f32 %v1581, %v1441
      %v1614 = vmul.f32 %v1582, %v1446
      %v1615 = vmul.f32 %v1583, %v1449
      %v1616 = vmul.f32 %v1584, %v1454
      %v1617 = vmul.f32 %v1585, %v1457
      %v1618 = vmul.f32 %v1586, %v1462
      %v1619 = vmul.f32 %v1587, %v1465
      %v1620 = vmul.f32 %v1588, %v1470
      %v1621 = vmul.f32 %v1589, %v1473
      %v1622 = vmul.f32 %v1590, %v1478
      %v1623 = vmul.f32 %v1591, %v1481
      %v1624 = vmul.f32 %v1592, %v1486
      %v1625 = vmul.f32 %v1593, %v1489
      %v1626 = vmul.f32 %v1594, %v1494
      %v1627 = vmul.f32 %v1595, %v1497
      %v1628 = vadd.f32 %v1374, %v1596
      %v1629 = vadd.f32 %v1377, %v1597
      %v1630 = vadd.f32 %v1382, %v1598
      %v1631 = vadd.f32 %v1385, %v1599
      %v1632 = vadd.f32 %v1390, %v1600
      %v1633 = vadd.f32 %v1393, %v1601
      %v1634 = vadd.f32 %v1398, %v1602
      %v1635 = vadd.f32 %v1401, %v1603
      %v1636 = vadd.f32 %v1406, %v1604
      %v1637 = vadd.f32 %v1409, %v1605
      %v1638 = vadd.f32 %v1414, %v1606
      %v1639 = vadd.f32 %v1417, %v1607
      %v1640 = vadd.f32 %v1422, %v1608
      %v1641 = vadd.f32 %v1425, %v1609
      %v1642 = vadd.f32 %v1430, %v1610
      %v1643 = vadd.f32 %v1433, %v1611
      %v1644 = vadd.f32 %v1438, %v1612
      %v1645 = vadd.f32 %v1441, %v1613
      %v1646 = vadd.f32 %v1446, %v1614
      %v1647 = vadd.f32 %v1449, %v1615
      %v1648 = vadd.f32 %v1454, %v1616
      %v1649 = vadd.f32 %v1457, %v1617
      %v1650 = vadd.f32 %v1462, %v1618
      %v1651 = vadd.f32 %v1465, %v1619
      %v1652 = vadd.f32 %v1470, %v1620
      %v1653 = vadd.f32 %v1473, %v1621
      %v1654 = vadd.f32 %v1478, %v1622
      %v1655 = vadd.f32 %v1481, %v1623
      %v1656 = vadd.f32 %v1486, %v1624
      %v1657 = vadd.f32 %v1489, %v1625
      %v1658 = vadd.f32 %v1494, %v1626
      %v1659 = vadd.f32 %v1497, %v1627
      %v1660 = vmul.f32 %v1628, 0.7978846
      %v1661 = vmul.f32 %v1629, 0.7978846
      %v1662 = vmul.f32 %v1630, 0.7978846
      %v1663 = vmul.f32 %v1631, 0.7978846
      %v1664 = vmul.f32 %v1632, 0.7978846
      %v1665 = vmul.f32 %v1633, 0.7978846
      %v1666 = vmul.f32 %v1634, 0.7978846
      %v1667 = vmul.f32 %v1635, 0.7978846
      %v1668 = vmul.f32 %v1636, 0.7978846
      %v1669 = vmul.f32 %v1637, 0.7978846
      %v1670 = vmul.f32 %v1638, 0.7978846
      %v1671 = vmul.f32 %v1639, 0.7978846
      %v1672 = vmul.f32 %v1640, 0.7978846
      %v1673 = vmul.f32 %v1641, 0.7978846
      %v1674 = vmul.f32 %v1642, 0.7978846
      %v1675 = vmul.f32 %v1643, 0.7978846
      %v1676 = vmul.f32 %v1644, 0.7978846
      %v1677 = vmul.f32 %v1645, 0.7978846
      %v1678 = vmul.f32 %v1646, 0.7978846
      %v1679 = vmul.f32 %v1647, 0.7978846
      %v1680 = vmul.f32 %v1648, 0.7978846
      %v1681 = vmul.f32 %v1649, 0.7978846
      %v1682 = vmul.f32 %v1650, 0.7978846
      %v1683 = vmul.f32 %v1651, 0.7978846
      %v1684 = vmul.f32 %v1652, 0.7978846
      %v1685 = vmul.f32 %v1653, 0.7978846
      %v1686 = vmul.f32 %v1654, 0.7978846
      %v1687 = vmul.f32 %v1655, 0.7978846
      %v1688 = vmul.f32 %v1656, 0.7978846
      %v1689 = vmul.f32 %v1657, 0.7978846
      %v1690 = vmul.f32 %v1658, 0.7978846
      %v1691 = vmul.f32 %v1659, 0.7978846
      %v1692 = vtanh.pop %v1660
      %v1693 = vtanh.pop %v1661
      %v1694 = vtanh.pop %v1662
      %v1695 = vtanh.pop %v1663
      %v1696 = vtanh.pop %v1664
      %v1697 = vtanh.pop %v1665
      %v1698 = vtanh.pop %v1666
      %v1699 = vtanh.pop %v1667
      %v1700 = vtanh.pop %v1668
      %v1701 = vtanh.pop %v1669
      %v1702 = vtanh.pop %v1670
      %v1703 = vtanh.pop %v1671
      %v1704 = vtanh.pop %v1672
      %v1705 = vtanh.pop %v1673
      %v1706 = vtanh.pop %v1674
      %v1707 = vtanh.pop %v1675
      %v1708 = vtanh.pop %v1676
      %v1709 = vtanh.pop %v1677
      %v1710 = vtanh.pop %v1678
      %v1711 = vtanh.pop %v1679
      %v1712 = vtanh.pop %v1680
      %v1713 = vtanh.pop %v1681
      %v1714 = vtanh.pop %v1682
      %v1715 = vtanh.pop %v1683
      %v1716 = vtanh.pop %v1684
      %v1717 = vtanh.pop %v1685
      %v1718 = vtanh.pop %v1686
      %v1719 = vtanh.pop %v1687
      %v1720 = vtanh.pop %v1688
      %v1721 = vtanh.pop %v1689
      %v1722 = vtanh.pop %v1690
      %v1723 = vtanh.pop %v1691
      %v1724 = vadd.f32 %v1692, 1.0
      %v1725 = vadd.f32 %v1693, 1.0
      %v1726 = vadd.f32 %v1694, 1.0
      %v1727 = vadd.f32 %v1695, 1.0
      %v1728 = vadd.f32 %v1696, 1.0
      %v1729 = vadd.f32 %v1697, 1.0
      %v1730 = vadd.f32 %v1698, 1.0
      %v1731 = vadd.f32 %v1699, 1.0
      %v1732 = vadd.f32 %v1700, 1.0
      %v1733 = vadd.f32 %v1701, 1.0
      %v1734 = vadd.f32 %v1702, 1.0
      %v1735 = vadd.f32 %v1703, 1.0
      %v1736 = vadd.f32 %v1704, 1.0
      %v1737 = vadd.f32 %v1705, 1.0
      %v1738 = vadd.f32 %v1706, 1.0
      %v1739 = vadd.f32 %v1707, 1.0
      %v1740 = vadd.f32 %v1708, 1.0
      %v1741 = vadd.f32 %v1709, 1.0
      %v1742 = vadd.f32 %v1710, 1.0
      %v1743 = vadd.f32 %v1711, 1.0
      %v1744 = vadd.f32 %v1712, 1.0
      %v1745 = vadd.f32 %v1713, 1.0
      %v1746 = vadd.f32 %v1714, 1.0
      %v1747 = vadd.f32 %v1715, 1.0
      %v1748 = vadd.f32 %v1716, 1.0
      %v1749 = vadd.f32 %v1717, 1.0
      %v1750 = vadd.f32 %v1718, 1.0
      %v1751 = vadd.f32 %v1719, 1.0
      %v1752 = vadd.f32 %v1720, 1.0
      %v1753 = vadd.f32 %v1721, 1.0
      %v1754 = vadd.f32 %v1722, 1.0
      %v1755 = vadd.f32 %v1723, 1.0
      %v1756 = vmul.f32 %v1500, %v1724
      %v1757 = vmul.f32 %v1501, %v1725
      %v1758 = vmul.f32 %v1502, %v1726
      %v1759 = vmul.f32 %v1503, %v1727
      %v1760 = vmul.f32 %v1504, %v1728
      %v1761 = vmul.f32 %v1505, %v1729
      %v1762 = vmul.f32 %v1506, %v1730
      %v1763 = vmul.f32 %v1507, %v1731
      %v1764 = vmul.f32 %v1508, %v1732
      %v1765 = vmul.f32 %v1509, %v1733
      %v1766 = vmul.f32 %v1510, %v1734
      %v1767 = vmul.f32 %v1511, %v1735
      %v1768 = vmul.f32 %v1512, %v1736
      %v1769 = vmul.f32 %v1513, %v1737
      %v1770 = vmul.f32 %v1514, %v1738
      %v1771 = vmul.f32 %v1515, %v1739
      %v1772 = vmul.f32 %v1516, %v1740
      %v1773 = vmul.f32 %v1517, %v1741
      %v1774 = vmul.f32 %v1518, %v1742
      %v1775 = vmul.f32 %v1519, %v1743
      %v1776 = vmul.f32 %v1520, %v1744
      %v1777 = vmul.f32 %v1521, %v1745
      %v1778 = vmul.f32 %v1522, %v1746
      %v1779 = vmul.f32 %v1523, %v1747
      %v1780 = vmul.f32 %v1524, %v1748
      %v1781 = vmul.f32 %v1525, %v1749
      %v1782 = vmul.f32 %v1526, %v1750
      %v1783 = vmul.f32 %v1527, %v1751
      %v1784 = vmul.f32 %v1528, %v1752
      %v1785 = vmul.f32 %v1529, %v1753
      %v1786 = vmul.f32 %v1530, %v1754
      %v1787 = vmul.f32 %v1531, %v1755
      %1788 = vst [vmem:[%s175] sm:$0xff] %v1756
      %1789 = vst [vmem:[%s175 + $0x8] sm:$0xff] %v1757
      %1790 = vst [vmem:[%s175 + $0x10] sm:$0xff] %v1758
      %1791 = vst [vmem:[%s175 + $0x18] sm:$0xff] %v1759
      %1792 = vst [vmem:[%s175 + $0x20] sm:$0xff] %v1760
      %1793 = vst [vmem:[%s175 + $0x28] sm:$0xff] %v1761
      %1794 = vst [vmem:[%s175 + $0x30] sm:$0xff] %v1762
      %1795 = vst [vmem:[%s175 + $0x38] sm:$0xff] %v1763
      %1796 = vst [vmem:[%s175 + $0x40] sm:$0xff] %v1764
      %1797 = vst [vmem:[%s175 + $0x48] sm:$0xff] %v1765
      %1798 = vst [vmem:[%s175 + $0x50] sm:$0xff] %v1766
      %1799 = vst [vmem:[%s175 + $0x58] sm:$0xff] %v1767
      %1800 = vst [vmem:[%s175 + $0x60] sm:$0xff] %v1768
      %1801 = vst [vmem:[%s175 + $0x68] sm:$0xff] %v1769
      %1802 = vst [vmem:[%s175 + $0x70] sm:$0xff] %v1770
      %1803 = vst [vmem:[%s175 + $0x78] sm:$0xff] %v1771
      %1804 = vst [vmem:[%s175 + $0x80] sm:$0xff] %v1772
      %1805 = vst [vmem:[%s175 + $0x88] sm:$0xff] %v1773
      %1806 = vst [vmem:[%s175 + $0x90] sm:$0xff] %v1774
      %1807 = vst [vmem:[%s175 + $0x98] sm:$0xff] %v1775
      %1808 = vst [vmem:[%s175 + $0xa0] sm:$0xff] %v1776
      %1809 = vst [vmem:[%s175 + $0xa8] sm:$0xff] %v1777
      %1810 = vst [vmem:[%s175 + $0xb0] sm:$0xff] %v1778
      %1811 = vst [vmem:[%s175 + $0xb8] sm:$0xff] %v1779
      %1812 = vst [vmem:[%s175 + $0xc0] sm:$0xff] %v1780
      %1813 = vst [vmem:[%s175 + $0xc8] sm:$0xff] %v1781
      %1814 = vst [vmem:[%s175 + $0xd0] sm:$0xff] %v1782
      %1815 = vst [vmem:[%s175 + $0xd8] sm:$0xff] %v1783
      %1816 = vst [vmem:[%s175 + $0xe0] sm:$0xff] %v1784
      %1817 = vst [vmem:[%s175 + $0xe8] sm:$0xff] %v1785
      %1818 = vst [vmem:[%s175 + $0xf0] sm:$0xff] %v1786
      %1819 = vst [vmem:[%s175 + $0xf8] sm:$0xff] %v1787
      %s1820 = smul.u32 32, %s14
      %p1821 = scmp.lt.s32.totalorder %s1820, 479
      %s1822 = scalar_select %p1821, %s1820, 479
      %s1823 = smul.addr %s1822, 8
      %s1824 = scalar_lea.vmem %s3, %s1823
      // Predicated region
      $region33: #{_lambda_.8} parent=31 // pred_check
        %p1825 = pneg %p100
      $region34: #{_lambda_.8} parent=31 // pred_check_branch
        %1827 = sbr.rel (%p1825) target = $region36
      $region35: #{_lambda_.8} parent=31 // pred_region
        %s1828 = smul.u32 32, %s14
      $region36: #{_lambda_.8} parent=31 // pred_fallthru
        _
    $region32: #{_lambda_.8} parent=5 // pred_fallthru
      _
    %p1829 = scmp.le.s32.totalorder 2, %s9
    // Predicated region
    $region37: #{_lambda_.8} parent=5 // pred_check
      %p1830 = pneg %p1829
    $region38: #{_lambda_.8} parent=5 // pred_check_branch
      %1832 = sbr.rel (%p1830) target = $region40
    $region39: #{_lambda_.8} parent=5 // pred_region
      %s1833 = ssub.s32 %s9, 2
      // Predicated region
      $region41: #{_lambda_.8} parent=39 // pred_check
        %p1834 = pneg %p106
      $region42: #{_lambda_.8} parent=39 // pred_check_branch
        %1836 = sbr.rel (%p1834) target = $region44
      $region43: #{_lambda_.8} parent=39 // pred_region
        %s1837 = smul.u32 32, %s15
        %p1838 = scmp.lt.s32.totalorder %s1837, 479
        %s1839 = scalar_select %p1838, %s1837, 479
        %s1840 = smul.addr %s1839, 8
        %s1841 = scalar_lea.vmem %s3, %s1840
      $region44: #{_lambda_.8} parent=39 // pred_fallthru
        _
    $region40: #{_lambda_.8} parent=5 // pred_fallthru
      _
  $region6: #{_lambda_.8} parent=0 // loop_footer
    %s13 = sadd.s32 1, %s9
  $region7: #{_lambda_.8} parent=0 // loop_footer_branch
    %8 = sbr.rel target = $region3
  $region8: #{_lambda_.8} parent=0 // loop_exit
    _

// kernel: _lambda_.9
$region0: #{_lambda_.9}
  #allocation0 [shape = 'u32[]', space=smem, size = 0x4, offset = 0x4, fixed_abs, tag = 'smem constant byte address 0x4 - core index']
  #allocation1 [shape = 'u32[144,128]{1,0:T(1,128)}', space=vmem, size = 0x12000, scoped, tag = 'internal scratch']
  %s0 = inlined_call_operand.vmem [shape: bf16[3328,1152], index: 0, kind: input, shape index: {}]
  %s1 = inlined_call_operand.vmem [shape: bf16[1152,128], index: 1, kind: input, shape index: {}]
  %s2 = inlined_call_operand.vmem [shape: f32[1,128], index: 2, kind: input, shape index: {}]
  %s3 = inlined_call_operand.vmem [shape: f32[3328,128], index: 3, kind: output, shape index: {}]
  %s4 = sld [smem:[#allocation0]]
  $region45: #{_lambda_.9} parent=0
    _
  %s6 = ssub.s32 1, %s4
  %s7 = scalar_select 0, %s6, %s4
  loop: start=0, step=1, limit=15
  $region2: #{_lambda_.9} parent=0 // loop_pre_header
    _
  $region3: #{_lambda_.9} parent=0 // loop_header
    %s9 = sphi 0, %s13
    %p10 = scmp.ge.s32.totalorder %s9, 15
    %s19 = sphi 0, %s21
    %s22 = sphi 0, %s19
    %s23 = sphi 0, %s22
    %s39 = sphi 0, %s23
    %s43 = sphi 0, %s43
    %s45 = sphi 0, %s43
    %s46 = sphi 0, %s45
    %s60 = sphi 0, %s46
    %s64 = sphi 0, %s64
    %s66 = sphi 0, %s64
    %s67 = sphi 0, %s66
    %s81 = sphi 0, %s67
    %s87 = sphi 0, %s89
    %s90 = sphi 0, %s87
    %s91 = sphi 0, %s90
    %s107 = sphi 0, %s91
  $region4: #{_lambda_.9} parent=0 // loop_header_branch
    %12 = sbr.rel (%p10) target = $region8
  $region5: #{_lambda_.9} parent=0 // loop_body
    %s14 = ssub.s32 %s9, 1
    %s15 = ssub.s32 %s9, 2
    %s16 = sadd.s32 %s9, 1
    %s17 = ssub.s32 %s9, %s16
    %p18 = scmp.eq.s32.totalorder %s17, 0
    %s20 = sadd.s32 %s19, 1
    %s21 = scalar_select %p18, %s19, %s20
    %p24 = pneg %p18
    %p25 = scmp.eq.s32.totalorder %s9, 12
    %p26 = por %p24, %p25
    %p27 = scmp.ne.s32.totalorder %s19, %s22
    %p28 = scmp.eq.s32.totalorder %s9, 0
    %p29 = por %p27, %p28
    %p30 = scmp.ne.s32.totalorder %s19, %s22
    %p31 = scmp.eq.s32.totalorder %s14, 12
    %p32 = por %p30, %p31
    %p33 = scmp.ne.s32.totalorder %s22, %s23
    %p34 = scmp.eq.s32.totalorder %s14, 0
    %p35 = por %p33, %p34
    %p36 = scmp.ne.s32.totalorder %s22, %s23
    %p37 = scmp.eq.s32.totalorder %s15, 12
    %p38 = por %p36, %p37
    %p40 = scmp.ne.s32.totalorder %s23, %s39
    %p41 = scmp.eq.s32.totalorder %s15, 0
    %p42 = por %p40, %p41
    %s44 = sadd.s32 %s43, 1
    %p47 = scmp.eq.s32.totalorder %s9, 12
    %p48 = scmp.ne.s32.totalorder %s43, %s45
    %p49 = scmp.eq.s32.totalorder %s9, 0
    %p50 = por %p48, %p49
    %p51 = scmp.ne.s32.totalorder %s43, %s45
    %p52 = scmp.eq.s32.totalorder %s14, 12
    %p53 = por %p51, %p52
    %p54 = scmp.ne.s32.totalorder %s45, %s46
    %p55 = scmp.eq.s32.totalorder %s14, 0
    %p56 = por %p54, %p55
    %p57 = scmp.ne.s32.totalorder %s45, %s46
    %p58 = scmp.eq.s32.totalorder %s15, 12
    %p59 = por %p57, %p58
    %p61 = scmp.ne.s32.totalorder %s46, %s60
    %p62 = scmp.eq.s32.totalorder %s15, 0
    %p63 = por %p61, %p62
    %s65 = sadd.s32 %s64, 1
    %p68 = scmp.eq.s32.totalorder %s9, 12
    %p69 = scmp.ne.s32.totalorder %s64, %s66
    %p70 = scmp.eq.s32.totalorder %s9, 0
    %p71 = por %p69, %p70
    %p72 = scmp.ne.s32.totalorder %s64, %s66
    %p73 = scmp.eq.s32.totalorder %s14, 12
    %p74 = por %p72, %p73
    %p75 = scmp.ne.s32.totalorder %s66, %s67
    %p76 = scmp.eq.s32.totalorder %s14, 0
    %p77 = por %p75, %p76
    %p78 = scmp.ne.s32.totalorder %s66, %s67
    %p79 = scmp.eq.s32.totalorder %s15, 12
    %p80 = por %p78, %p79
    %p82 = scmp.ne.s32.totalorder %s67, %s81
    %p83 = scmp.eq.s32.totalorder %s15, 0
    %p84 = por %p82, %p83
    %s85 = ssub.s32 %s9, %s16
    %p86 = scmp.eq.s32.totalorder %s85, 0
    %s88 = sadd.s32 %s87, 1
    %s89 = scalar_select %p86, %s87, %s88
    %p92 = pneg %p86
    %p93 = scmp.eq.s32.totalorder %s9, 12
    %p94 = por %p92, %p93
    %p95 = scmp.ne.s32.totalorder %s87, %s90
    %p96 = scmp.eq.s32.totalorder %s9, 0
    %p97 = por %p95, %p96
    %p98 = scmp.ne.s32.totalorder %s87, %s90
    %p99 = scmp.eq.s32.totalorder %s14, 12
    %p100 = por %p98, %p99
    %p101 = scmp.ne.s32.totalorder %s90, %s91
    %p102 = scmp.eq.s32.totalorder %s14, 0
    %p103 = por %p101, %p102
    %p104 = scmp.ne.s32.totalorder %s90, %s91
    %p105 = scmp.eq.s32.totalorder %s15, 12
    %p106 = por %p104, %p105
    %p108 = scmp.ne.s32.totalorder %s91, %s107
    %p109 = scmp.eq.s32.totalorder %s15, 0
    %p110 = por %p108, %p109
    %p111 = scmp.le.s32.totalorder 1, %s9
    %p112 = scmp.lt.s32.totalorder %s9, 14
    %p113 = pnand %p111, %p112
    %p114 = pneg %p113
    // Predicated region
    $region9: #{_lambda_.9} parent=5 // pred_check
      _
    $region10: #{_lambda_.9} parent=5 // pred_check_branch
      %116 = sbr.rel (%p113) target = $region12
    $region11: #{_lambda_.9} parent=5 // pred_region
      %s117 = ssub.s32 %s9, 1
      // Predicated region
      $region13: #{_lambda_.9} parent=11 // pred_check
        %p118 = pneg %p56
      $region14: #{_lambda_.9} parent=11 // pred_check_branch
        %120 = sbr.rel (%p118) target = $region16
      $region15: #{_lambda_.9} parent=11 // pred_region
        _
      $region16: #{_lambda_.9} parent=11 // pred_fallthru
        _
      // Predicated region
      $region17: #{_lambda_.9} parent=11 // pred_check
        %p121 = pneg %p77
      $region18: #{_lambda_.9} parent=11 // pred_check_branch
        %123 = sbr.rel (%p121) target = $region20
      $region19: #{_lambda_.9} parent=11 // pred_region
        _
      $region20: #{_lambda_.9} parent=11 // pred_fallthru
        _
    $region12: #{_lambda_.9} parent=5 // pred_fallthru
      _
    %p124 = scmp.lt.s32.totalorder %s9, 13
    // Predicated region
    $region21: #{_lambda_.9} parent=5 // pred_check
      %p125 = pneg %p124
    $region22: #{_lambda_.9} parent=5 // pred_check_branch
      %127 = sbr.rel (%p125) target = $region24
    $region23: #{_lambda_.9} parent=5 // pred_region
      // Predicated region
      $region25: #{_lambda_.9} parent=23 // pred_check
        %p128 = pneg %p29
      $region26: #{_lambda_.9} parent=23 // pred_check_branch
        %130 = sbr.rel (%p128) target = $region28
      $region27: #{_lambda_.9} parent=23 // pred_region
        %s131 = smul.u32 32, %s9
        %p132 = scmp.lt.s32.totalorder %s131, 415
        %s133 = scalar_select %p132, %s131, 415
        %s134 = smul.addr %s133, 9
        %s135 = smul.addr %s134, 4
        %s136 = scalar_lea.vmem %s0, %s135
        %s137 = smul.u32 32, %s9
      $region28: #{_lambda_.9} parent=23 // pred_fallthru
        _
    $region24: #{_lambda_.9} parent=5 // pred_fallthru
      _
    %p138 = scmp.le.s32.totalorder 1, %s9
    %p139 = scmp.lt.s32.totalorder %s9, 14
    %p140 = pnand %p138, %p139
    %p141 = pneg %p140
    // Predicated region
    $region29: #{_lambda_.9} parent=5 // pred_check
      _
    $region30: #{_lambda_.9} parent=5 // pred_check_branch
      %143 = sbr.rel (%p140) target = $region32
    $region31: #{_lambda_.9} parent=5 // pred_region
      %s144 = ssub.s32 %s9, 1
      %s145 = smul.u32 32, %s14
      %p146 = scmp.lt.s32.totalorder %s145, 415
      %s147 = scalar_select %p146, %s145, 415
      %s148 = smul.addr %s147, 9
      %s149 = smul.addr %s148, 4
      %s150 = scalar_lea.vmem %s0, %s149
      %p151 = pneg %p35
      %p152 = pneg %p32
      %p153 = pneg %p56
      %p154 = pneg %p53
      %p155 = pneg %p77
      %p156 = pneg %p74
      %p157 = pneg %p103
      %p158 = pneg %p100
      %s159 = smul.u32 32, %s14
      %p160 = scmp.lt.s32.totalorder %s159, 415
      %s161 = scalar_select %p160, %s159, 415
      %s162 = smul.addr %s161, 8
      %s163 = scalar_lea.vmem %s3, %s162
      %s164 = smul.u32 32, %s14
      %p165 = scmp.lt.s32.totalorder %s164, 415
      %s166 = scalar_select %p165, %s164, 415
      %s167 = smul.addr %s166, 9
      %s168 = smul.addr %s167, 4
      %s169 = scalar_lea.vmem %s0, %s168
      %s170 = smul.u32 32, %s14
      %s171 = smul.u32 32, %s14
      %p172 = scmp.lt.s32.totalorder %s171, 415
      %s173 = scalar_select %p172, %s171, 415
      %s174 = smul.addr %s173, 8
      %s175 = scalar_lea.vmem %s3, %s174
      %s176 = smul.u32 32, %s14
      %v178 = vld [vmem:[%s169] sm:$0xff]
      %v179 = vld [vmem:[%s169 + $0x8] sm:$0xff]
      %v180 = vld [vmem:[%s169 + $0x10] sm:$0xff]
      %v181 = vld [vmem:[%s169 + $0x18] sm:$0xff]
      %v182 = vld [vmem:[%s169 + $0x20] sm:$0xf]
      %v183 = vld [vmem:[%s169 + $0x24] sm:$0xff]
      %v184 = vld [vmem:[%s169 + $0x2c] sm:$0xff]
      %v185 = vld [vmem:[%s169 + $0x34] sm:$0xff]
      %v186 = vld [vmem:[%s169 + $0x3c] sm:$0xff]
      %v187 = vld [vmem:[%s169 + $0x44] sm:$0xf]
      %v188 = vld [vmem:[%s169 + $0x48] sm:$0xff]
      %v189 = vld [vmem:[%s169 + $0x50] sm:$0xff]
      %v190 = vld [vmem:[%s169 + $0x58] sm:$0xff]
      %v191 = vld [vmem:[%s169 + $0x60] sm:$0xff]
      %v192 = vld [vmem:[%s169 + $0x68] sm:$0xf]
      %v193 = vld [vmem:[%s169 + $0x6c] sm:$0xff]
      %v194 = vld [vmem:[%s169 + $0x74] sm:$0xff]
      %v195 = vld [vmem:[%s169 + $0x7c] sm:$0xff]
      %v196 = vld [vmem:[%s169 + $0x84] sm:$0xff]
      %v197 = vld [vmem:[%s169 + $0x8c] sm:$0xf]
      %v198 = vld [vmem:[%s169 + $0x90] sm:$0xff]
      %v199 = vld [vmem:[%s169 + $0x98] sm:$0xff]
      %v200 = vld [vmem:[%s169 + $0xa0] sm:$0xff]
      %v201 = vld [vmem:[%s169 + $0xa8] sm:$0xff]
      %v202 = vld [vmem:[%s169 + $0xb0] sm:$0xf]
      %v203 = vld [vmem:[%s169 + $0xb4] sm:$0xff]
      %v204 = vld [vmem:[%s169 + $0xbc] sm:$0xff]
      %v205 = vld [vmem:[%s169 + $0xc4] sm:$0xff]
      %v206 = vld [vmem:[%s169 + $0xcc] sm:$0xff]
      %v207 = vld [vmem:[%s169 + $0xd4] sm:$0xf]
      %v208 = vld [vmem:[%s169 + $0xd8] sm:$0xff]
      %v209 = vld [vmem:[%s169 + $0xe0] sm:$0xff]
      %v210 = vld [vmem:[%s169 + $0xe8] sm:$0xff]
      %v211 = vld [vmem:[%s169 + $0xf0] sm:$0xff]
      %v212 = vld [vmem:[%s169 + $0xf8] sm:$0xf]
      %v213 = vld [vmem:[%s169 + $0xfc] sm:$0xff]
      %v214 = vld [vmem:[%s169 + $0x104] sm:$0xff]
      %v215 = vld [vmem:[%s169 + $0x10c] sm:$0xff]
      %v216 = vld [vmem:[%s169 + $0x114] sm:$0xff]
      %v217 = vld [vmem:[%s169 + $0x11c] sm:$0xf]
      %v218 = vld [vmem:[%s169 + $0x120] sm:$0xff]
      %v219 = vld [vmem:[%s169 + $0x128] sm:$0xff]
      %v220 = vld [vmem:[%s169 + $0x130] sm:$0xff]
      %v221 = vld [vmem:[%s169 + $0x138] sm:$0xff]
      %v222 = vld [vmem:[%s169 + $0x140] sm:$0xf]
      %v223 = vld [vmem:[%s169 + $0x144] sm:$0xff]
      %v224 = vld [vmem:[%s169 + $0x14c] sm:$0xff]
      %v225 = vld [vmem:[%s169 + $0x154] sm:$0xff]
      %v226 = vld [vmem:[%s169 + $0x15c] sm:$0xff]
      %v227 = vld [vmem:[%s169 + $0x164] sm:$0xf]
      %v228 = vld [vmem:[%s169 + $0x168] sm:$0xff]
      %v229 = vld [vmem:[%s169 + $0x170] sm:$0xff]
      %v230 = vld [vmem:[%s169 + $0x178] sm:$0xff]
      %v231 = vld [vmem:[%s169 + $0x180] sm:$0xff]
      %v232 = vld [vmem:[%s169 + $0x188] sm:$0xf]
      %v233 = vld [vmem:[%s169 + $0x18c] sm:$0xff]
      %v234 = vld [vmem:[%s169 + $0x194] sm:$0xff]
      %v235 = vld [vmem:[%s169 + $0x19c] sm:$0xff]
      %v236 = vld [vmem:[%s169 + $0x1a4] sm:$0xff]
      %v237 = vld [vmem:[%s169 + $0x1ac] sm:$0xf]
      %v238 = vld [vmem:[%s169 + $0x1b0] sm:$0xff]
      %v239 = vld [vmem:[%s169 + $0x1b8] sm:$0xff]
      %v240 = vld [vmem:[%s169 + $0x1c0] sm:$0xff]
      %v241 = vld [vmem:[%s169 + $0x1c8] sm:$0xff]
      %v242 = vld [vmem:[%s169 + $0x1d0] sm:$0xf]
      %v243 = vld [vmem:[%s169 + $0x1d4] sm:$0xff]
      %v244 = vld [vmem:[%s169 + $0x1dc] sm:$0xff]
      %v245 = vld [vmem:[%s169 + $0x1e4] sm:$0xff]
      %v246 = vld [vmem:[%s169 + $0x1ec] sm:$0xff]
      %v247 = vld [vmem:[%s169 + $0x1f4] sm:$0xf]
      %v248 = vld [vmem:[%s169 + $0x1f8] sm:$0xff]
      %v249 = vld [vmem:[%s169 + $0x200] sm:$0xff]
      %v250 = vld [vmem:[%s169 + $0x208] sm:$0xff]
      %v251 = vld [vmem:[%s169 + $0x210] sm:$0xff]
      %v252 = vld [vmem:[%s169 + $0x218] sm:$0xf]
      %v253 = vld [vmem:[%s169 + $0x21c] sm:$0xff]
      %v254 = vld [vmem:[%s169 + $0x224] sm:$0xff]
      %v255 = vld [vmem:[%s169 + $0x22c] sm:$0xff]
      %v256 = vld [vmem:[%s169 + $0x234] sm:$0xff]
      %v257 = vld [vmem:[%s169 + $0x23c] sm:$0xf]
      %v258 = vld [vmem:[%s169 + $0x240] sm:$0xff]
      %v259 = vld [vmem:[%s169 + $0x248] sm:$0xff]
      %v260 = vld [vmem:[%s169 + $0x250] sm:$0xff]
      %v261 = vld [vmem:[%s169 + $0x258] sm:$0xff]
      %v262 = vld [vmem:[%s169 + $0x260] sm:$0xf]
      %v263 = vld [vmem:[%s169 + $0x264] sm:$0xff]
      %v264 = vld [vmem:[%s169 + $0x26c] sm:$0xff]
      %v265 = vld [vmem:[%s169 + $0x274] sm:$0xff]
      %v266 = vld [vmem:[%s169 + $0x27c] sm:$0xff]
      %v267 = vld [vmem:[%s169 + $0x284] sm:$0xf]
      %v268 = vld [vmem:[%s169 + $0x288] sm:$0xff]
      %v269 = vld [vmem:[%s169 + $0x290] sm:$0xff]
      %v270 = vld [vmem:[%s169 + $0x298] sm:$0xff]
      %v271 = vld [vmem:[%s169 + $0x2a0] sm:$0xff]
      %v272 = vld [vmem:[%s169 + $0x2a8] sm:$0xf]
      %v273 = vld [vmem:[%s169 + $0x2ac] sm:$0xff]
      %v274 = vld [vmem:[%s169 + $0x2b4] sm:$0xff]
      %v275 = vld [vmem:[%s169 + $0x2bc] sm:$0xff]
      %v276 = vld [vmem:[%s169 + $0x2c4] sm:$0xff]
      %v277 = vld [vmem:[%s169 + $0x2cc] sm:$0xf]
      %v278 = vld [vmem:[%s169 + $0x2d0] sm:$0xff]
      %v279 = vld [vmem:[%s169 + $0x2d8] sm:$0xff]
      %v280 = vld [vmem:[%s169 + $0x2e0] sm:$0xff]
      %v281 = vld [vmem:[%s169 + $0x2e8] sm:$0xff]
      %v282 = vld [vmem:[%s169 + $0x2f0] sm:$0xf]
      %v283 = vld [vmem:[%s169 + $0x2f4] sm:$0xff]
      %v284 = vld [vmem:[%s169 + $0x2fc] sm:$0xff]
      %v285 = vld [vmem:[%s169 + $0x304] sm:$0xff]
      %v286 = vld [vmem:[%s169 + $0x30c] sm:$0xff]
      %v287 = vld [vmem:[%s169 + $0x314] sm:$0xf]
      %v288 = vld [vmem:[%s169 + $0x318] sm:$0xff]
      %v289 = vld [vmem:[%s169 + $0x320] sm:$0xff]
      %v290 = vld [vmem:[%s169 + $0x328] sm:$0xff]
      %v291 = vld [vmem:[%s169 + $0x330] sm:$0xff]
      %v292 = vld [vmem:[%s169 + $0x338] sm:$0xf]
      %v293 = vld [vmem:[%s169 + $0x33c] sm:$0xff]
      %v294 = vld [vmem:[%s169 + $0x344] sm:$0xff]
      %v295 = vld [vmem:[%s169 + $0x34c] sm:$0xff]
      %v296 = vld [vmem:[%s169 + $0x354] sm:$0xff]
      %v297 = vld [vmem:[%s169 + $0x35c] sm:$0xf]
      %v298 = vld [vmem:[%s169 + $0x360] sm:$0xff]
      %v299 = vld [vmem:[%s169 + $0x368] sm:$0xff]
      %v300 = vld [vmem:[%s169 + $0x370] sm:$0xff]
      %v301 = vld [vmem:[%s169 + $0x378] sm:$0xff]
      %v302 = vld [vmem:[%s169 + $0x380] sm:$0xf]
      %v303 = vld [vmem:[%s169 + $0x384] sm:$0xff]
      %v304 = vld [vmem:[%s169 + $0x38c] sm:$0xff]
      %v305 = vld [vmem:[%s169 + $0x394] sm:$0xff]
      %v306 = vld [vmem:[%s169 + $0x39c] sm:$0xff]
      %v307 = vld [vmem:[%s169 + $0x3a4] sm:$0xf]
      %v308 = vld [vmem:[%s169 + $0x3a8] sm:$0xff]
      %v309 = vld [vmem:[%s169 + $0x3b0] sm:$0xff]
      %v310 = vld [vmem:[%s169 + $0x3b8] sm:$0xff]
      %v311 = vld [vmem:[%s169 + $0x3c0] sm:$0xff]
      %v312 = vld [vmem:[%s169 + $0x3c8] sm:$0xf]
      %v313 = vld [vmem:[%s169 + $0x3cc] sm:$0xff]
      %v314 = vld [vmem:[%s169 + $0x3d4] sm:$0xff]
      %v315 = vld [vmem:[%s169 + $0x3dc] sm:$0xff]
      %v316 = vld [vmem:[%s169 + $0x3e4] sm:$0xff]
      %v317 = vld [vmem:[%s169 + $0x3ec] sm:$0xf]
      %v318 = vld [vmem:[%s169 + $0x3f0] sm:$0xff]
      %v319 = vld [vmem:[%s169 + $0x3f8] sm:$0xff]
      %v320 = vld [vmem:[%s169 + $0x400] sm:$0xff]
      %v321 = vld [vmem:[%s169 + $0x408] sm:$0xff]
      %v322 = vld [vmem:[%s169 + $0x410] sm:$0xf]
      %v323 = vld [vmem:[%s169 + $0x414] sm:$0xff]
      %v324 = vld [vmem:[%s169 + $0x41c] sm:$0xff]
      %v325 = vld [vmem:[%s169 + $0x424] sm:$0xff]
      %v326 = vld [vmem:[%s169 + $0x42c] sm:$0xff]
      %v327 = vld [vmem:[%s169 + $0x434] sm:$0xf]
      %v328 = vld [vmem:[%s169 + $0x438] sm:$0xff]
      %v329 = vld [vmem:[%s169 + $0x440] sm:$0xff]
      %v330 = vld [vmem:[%s169 + $0x448] sm:$0xff]
      %v331 = vld [vmem:[%s169 + $0x450] sm:$0xff]
      %v332 = vld [vmem:[%s169 + $0x458] sm:$0xf]
      %v333 = vld [vmem:[%s169 + $0x45c] sm:$0xff]
      %v334 = vld [vmem:[%s169 + $0x464] sm:$0xff]
      %v335 = vld [vmem:[%s169 + $0x46c] sm:$0xff]
      %v336 = vld [vmem:[%s169 + $0x474] sm:$0xff]
      %v337 = vld [vmem:[%s169 + $0x47c] sm:$0xf]
      %v338 = vld [vmem:[%s1] sm:$0xf]
      %v339 = vld [vmem:[%s1 + $0x4] sm:$0xf]
      %v340 = vld [vmem:[%s1 + $0x8] sm:$0xf]
      %v341 = vld [vmem:[%s1 + $0xc] sm:$0xf]
      %v342 = vld [vmem:[%s1 + $0x10] sm:$0xf]
      %v343 = vld [vmem:[%s1 + $0x14] sm:$0xf]
      %v344 = vld [vmem:[%s1 + $0x18] sm:$0xf]
      %v345 = vld [vmem:[%s1 + $0x1c] sm:$0xf]
      %v346 = vld [vmem:[%s1 + $0x20] sm:$0xf]
      %v347 = vld [vmem:[%s1 + $0x24] sm:$0xf]
      %v348 = vld [vmem:[%s1 + $0x28] sm:$0xf]
      %v349 = vld [vmem:[%s1 + $0x2c] sm:$0xf]
      %v350 = vld [vmem:[%s1 + $0x30] sm:$0xf]
      %v351 = vld [vmem:[%s1 + $0x34] sm:$0xf]
      %v352 = vld [vmem:[%s1 + $0x38] sm:$0xf]
      %v353 = vld [vmem:[%s1 + $0x3c] sm:$0xf]
      %v354 = vld [vmem:[%s1 + $0x40] sm:$0xf]
      %v355 = vld [vmem:[%s1 + $0x44] sm:$0xf]
      %v356 = vld [vmem:[%s1 + $0x48] sm:$0xf]
      %v357 = vld [vmem:[%s1 + $0x4c] sm:$0xf]
      %v358 = vld [vmem:[%s1 + $0x50] sm:$0xf]
      %v359 = vld [vmem:[%s1 + $0x54] sm:$0xf]
      %v360 = vld [vmem:[%s1 + $0x58] sm:$0xf]
      %v361 = vld [vmem:[%s1 + $0x5c] sm:$0xf]
      %v362 = vld [vmem:[%s1 + $0x60] sm:$0xf]
      %v363 = vld [vmem:[%s1 + $0x64] sm:$0xf]
      %v364 = vld [vmem:[%s1 + $0x68] sm:$0xf]
      %v365 = vld [vmem:[%s1 + $0x6c] sm:$0xf]
      %v366 = vld [vmem:[%s1 + $0x70] sm:$0xf]
      %v367 = vld [vmem:[%s1 + $0x74] sm:$0xf]
      %v368 = vld [vmem:[%s1 + $0x78] sm:$0xf]
      %v369 = vld [vmem:[%s1 + $0x7c] sm:$0xf]
      %v370 = vld [vmem:[%s1 + $0x80] sm:$0xf]
      %v371 = vld [vmem:[%s1 + $0x84] sm:$0xf]
      %v372 = vld [vmem:[%s1 + $0x88] sm:$0xf]
      %v373 = vld [vmem:[%s1 + $0x8c] sm:$0xf]
      %v374 = vld [vmem:[%s1 + $0x90] sm:$0xf]
      %v375 = vld [vmem:[%s1 + $0x94] sm:$0xf]
      %v376 = vld [vmem:[%s1 + $0x98] sm:$0xf]
      %v377 = vld [vmem:[%s1 + $0x9c] sm:$0xf]
      %v378 = vld [vmem:[%s1 + $0xa0] sm:$0xf]
      %v379 = vld [vmem:[%s1 + $0xa4] sm:$0xf]
      %v380 = vld [vmem:[%s1 + $0xa8] sm:$0xf]
      %v381 = vld [vmem:[%s1 + $0xac] sm:$0xf]
      %v382 = vld [vmem:[%s1 + $0xb0] sm:$0xf]
      %v383 = vld [vmem:[%s1 + $0xb4] sm:$0xf]
      %v384 = vld [vmem:[%s1 + $0xb8] sm:$0xf]
      %v385 = vld [vmem:[%s1 + $0xbc] sm:$0xf]
      %v386 = vld [vmem:[%s1 + $0xc0] sm:$0xf]
      %v387 = vld [vmem:[%s1 + $0xc4] sm:$0xf]
      %v388 = vld [vmem:[%s1 + $0xc8] sm:$0xf]
      %v389 = vld [vmem:[%s1 + $0xcc] sm:$0xf]
      %v390 = vld [vmem:[%s1 + $0xd0] sm:$0xf]
      %v391 = vld [vmem:[%s1 + $0xd4] sm:$0xf]
      %v392 = vld [vmem:[%s1 + $0xd8] sm:$0xf]
      %v393 = vld [vmem:[%s1 + $0xdc] sm:$0xf]
      %v394 = vld [vmem:[%s1 + $0xe0] sm:$0xf]
      %v395 = vld [vmem:[%s1 + $0xe4] sm:$0xf]
      %v396 = vld [vmem:[%s1 + $0xe8] sm:$0xf]
      %v397 = vld [vmem:[%s1 + $0xec] sm:$0xf]
      %v398 = vld [vmem:[%s1 + $0xf0] sm:$0xf]
      %v399 = vld [vmem:[%s1 + $0xf4] sm:$0xf]
      %v400 = vld [vmem:[%s1 + $0xf8] sm:$0xf]
      %v401 = vld [vmem:[%s1 + $0xfc] sm:$0xf]
      %v402 = vld [vmem:[%s1 + $0x100] sm:$0xf]
      %v403 = vld [vmem:[%s1 + $0x104] sm:$0xf]
      %v404 = vld [vmem:[%s1 + $0x108] sm:$0xf]
      %v405 = vld [vmem:[%s1 + $0x10c] sm:$0xf]
      %v406 = vld [vmem:[%s1 + $0x110] sm:$0xf]
      %v407 = vld [vmem:[%s1 + $0x114] sm:$0xf]
      %v408 = vld [vmem:[%s1 + $0x118] sm:$0xf]
      %v409 = vld [vmem:[%s1 + $0x11c] sm:$0xf]
      %v410 = vld [vmem:[%s1 + $0x120] sm:$0xf]
      %v411 = vld [vmem:[%s1 + $0x124] sm:$0xf]
      %v412 = vld [vmem:[%s1 + $0x128] sm:$0xf]
      %v413 = vld [vmem:[%s1 + $0x12c] sm:$0xf]
      %v414 = vld [vmem:[%s1 + $0x130] sm:$0xf]
      %v415 = vld [vmem:[%s1 + $0x134] sm:$0xf]
      %v416 = vld [vmem:[%s1 + $0x138] sm:$0xf]
      %v417 = vld [vmem:[%s1 + $0x13c] sm:$0xf]
      %v418 = vld [vmem:[%s1 + $0x140] sm:$0xf]
      %v419 = vld [vmem:[%s1 + $0x144] sm:$0xf]
      %v420 = vld [vmem:[%s1 + $0x148] sm:$0xf]
      %v421 = vld [vmem:[%s1 + $0x14c] sm:$0xf]
      %v422 = vld [vmem:[%s1 + $0x150] sm:$0xf]
      %v423 = vld [vmem:[%s1 + $0x154] sm:$0xf]
      %v424 = vld [vmem:[%s1 + $0x158] sm:$0xf]
      %v425 = vld [vmem:[%s1 + $0x15c] sm:$0xf]
      %v426 = vld [vmem:[%s1 + $0x160] sm:$0xf]
      %v427 = vld [vmem:[%s1 + $0x164] sm:$0xf]
      %v428 = vld [vmem:[%s1 + $0x168] sm:$0xf]
      %v429 = vld [vmem:[%s1 + $0x16c] sm:$0xf]
      %v430 = vld [vmem:[%s1 + $0x170] sm:$0xf]
      %v431 = vld [vmem:[%s1 + $0x174] sm:$0xf]
      %v432 = vld [vmem:[%s1 + $0x178] sm:$0xf]
      %v433 = vld [vmem:[%s1 + $0x17c] sm:$0xf]
      %v434 = vld [vmem:[%s1 + $0x180] sm:$0xf]
      %v435 = vld [vmem:[%s1 + $0x184] sm:$0xf]
      %v436 = vld [vmem:[%s1 + $0x188] sm:$0xf]
      %v437 = vld [vmem:[%s1 + $0x18c] sm:$0xf]
      %v438 = vld [vmem:[%s1 + $0x190] sm:$0xf]
      %v439 = vld [vmem:[%s1 + $0x194] sm:$0xf]
      %v440 = vld [vmem:[%s1 + $0x198] sm:$0xf]
      %v441 = vld [vmem:[%s1 + $0x19c] sm:$0xf]
      %v442 = vld [vmem:[%s1 + $0x1a0] sm:$0xf]
      %v443 = vld [vmem:[%s1 + $0x1a4] sm:$0xf]
      %v444 = vld [vmem:[%s1 + $0x1a8] sm:$0xf]
      %v445 = vld [vmem:[%s1 + $0x1ac] sm:$0xf]
      %v446 = vld [vmem:[%s1 + $0x1b0] sm:$0xf]
      %v447 = vld [vmem:[%s1 + $0x1b4] sm:$0xf]
      %v448 = vld [vmem:[%s1 + $0x1b8] sm:$0xf]
      %v449 = vld [vmem:[%s1 + $0x1bc] sm:$0xf]
      %v450 = vld [vmem:[%s1 + $0x1c0] sm:$0xf]
      %v451 = vld [vmem:[%s1 + $0x1c4] sm:$0xf]
      %v452 = vld [vmem:[%s1 + $0x1c8] sm:$0xf]
      %v453 = vld [vmem:[%s1 + $0x1cc] sm:$0xf]
      %v454 = vld [vmem:[%s1 + $0x1d0] sm:$0xf]
      %v455 = vld [vmem:[%s1 + $0x1d4] sm:$0xf]
      %v456 = vld [vmem:[%s1 + $0x1d8] sm:$0xf]
      %v457 = vld [vmem:[%s1 + $0x1dc] sm:$0xf]
      %v458 = vld [vmem:[%s1 + $0x1e0] sm:$0xf]
      %v459 = vld [vmem:[%s1 + $0x1e4] sm:$0xf]
      %v460 = vld [vmem:[%s1 + $0x1e8] sm:$0xf]
      %v461 = vld [vmem:[%s1 + $0x1ec] sm:$0xf]
      %v462 = vld [vmem:[%s1 + $0x1f0] sm:$0xf]
      %v463 = vld [vmem:[%s1 + $0x1f4] sm:$0xf]
      %v464 = vld [vmem:[%s1 + $0x1f8] sm:$0xf]
      %v465 = vld [vmem:[%s1 + $0x1fc] sm:$0xf]
      %v466 = vld [vmem:[%s1 + $0x200] sm:$0xf]
      %v467 = vld [vmem:[%s1 + $0x204] sm:$0xf]
      %v468 = vld [vmem:[%s1 + $0x208] sm:$0xf]
      %v469 = vld [vmem:[%s1 + $0x20c] sm:$0xf]
      %v470 = vld [vmem:[%s1 + $0x210] sm:$0xf]
      %v471 = vld [vmem:[%s1 + $0x214] sm:$0xf]
      %v472 = vld [vmem:[%s1 + $0x218] sm:$0xf]
      %v473 = vld [vmem:[%s1 + $0x21c] sm:$0xf]
      %v474 = vld [vmem:[%s1 + $0x220] sm:$0xf]
      %v475 = vld [vmem:[%s1 + $0x224] sm:$0xf]
      %v476 = vld [vmem:[%s1 + $0x228] sm:$0xf]
      %v477 = vld [vmem:[%s1 + $0x22c] sm:$0xf]
      %v478 = vld [vmem:[%s1 + $0x230] sm:$0xf]
      %v479 = vld [vmem:[%s1 + $0x234] sm:$0xf]
      %v480 = vld [vmem:[%s1 + $0x238] sm:$0xf]
      %v481 = vld [vmem:[%s1 + $0x23c] sm:$0xf]
      %v482 = vld [vmem:[%s2] sm:$0x1]
      %v484 = vlaneseq
      %v485 = vshrl.u32 %v484, 7
      %v486 = vsub.s32 0, %v485
      %v487 = vrot.slane %v482, %v486
      %v649 = vunpack.c.l.b16 %v178
      %v650 = vunpack.c.h.b16 %v178
      %v651 = vunpack.c.l.b16 %v179
      %v652 = vunpack.c.h.b16 %v179
      %v653 = vunpack.c.l.b16 %v180
      %v654 = vunpack.c.h.b16 %v180
      %v655 = vunpack.c.l.b16 %v181
      %v656 = vunpack.c.h.b16 %v181
      %v657 = vunpack.c.l.b16 %v182
      %v658 = vunpack.c.l.b16 %v183
      %v659 = vunpack.c.h.b16 %v183
      %v660 = vunpack.c.l.b16 %v184
      %v661 = vunpack.c.h.b16 %v184
      %v662 = vunpack.c.l.b16 %v185
      %v663 = vunpack.c.h.b16 %v185
      %v664 = vunpack.c.l.b16 %v186
      %v665 = vunpack.c.h.b16 %v186
      %v666 = vunpack.c.l.b16 %v187
      %v667 = vunpack.c.l.b16 %v188
      %v668 = vunpack.c.h.b16 %v188
      %v669 = vunpack.c.l.b16 %v189
      %v670 = vunpack.c.h.b16 %v189
      %v671 = vunpack.c.l.b16 %v190
      %v672 = vunpack.c.h.b16 %v190
      %v673 = vunpack.c.l.b16 %v191
      %v674 = vunpack.c.h.b16 %v191
      %v675 = vunpack.c.l.b16 %v192
      %v676 = vunpack.c.l.b16 %v193
      %v677 = vunpack.c.h.b16 %v193
      %v678 = vunpack.c.l.b16 %v194
      %v679 = vunpack.c.h.b16 %v194
      %v680 = vunpack.c.l.b16 %v195
      %v681 = vunpack.c.h.b16 %v195
      %v682 = vunpack.c.l.b16 %v196
      %v683 = vunpack.c.h.b16 %v196
      %v684 = vunpack.c.l.b16 %v197
      %v685 = vunpack.c.l.b16 %v198
      %v686 = vunpack.c.h.b16 %v198
      %v687 = vunpack.c.l.b16 %v199
      %v688 = vunpack.c.h.b16 %v199
      %v689 = vunpack.c.l.b16 %v200
      %v690 = vunpack.c.h.b16 %v200
      %v691 = vunpack.c.l.b16 %v201
      %v692 = vunpack.c.h.b16 %v201
      %v693 = vunpack.c.l.b16 %v202
      %v694 = vunpack.c.l.b16 %v203
      %v695 = vunpack.c.h.b16 %v203
      %v696 = vunpack.c.l.b16 %v204
      %v697 = vunpack.c.h.b16 %v204
      %v698 = vunpack.c.l.b16 %v205
      %v699 = vunpack.c.h.b16 %v205
      %v700 = vunpack.c.l.b16 %v206
      %v701 = vunpack.c.h.b16 %v206
      %v702 = vunpack.c.l.b16 %v207
      %v703 = vunpack.c.l.b16 %v208
      %v704 = vunpack.c.h.b16 %v208
      %v705 = vunpack.c.l.b16 %v209
      %v706 = vunpack.c.h.b16 %v209
      %v707 = vunpack.c.l.b16 %v210
      %v708 = vunpack.c.h.b16 %v210
      %v709 = vunpack.c.l.b16 %v211
      %v710 = vunpack.c.h.b16 %v211
      %v711 = vunpack.c.l.b16 %v212
      %v712 = vunpack.c.l.b16 %v213
      %v713 = vunpack.c.h.b16 %v213
      %v714 = vunpack.c.l.b16 %v214
      %v715 = vunpack.c.h.b16 %v214
      %v716 = vunpack.c.l.b16 %v215
      %v717 = vunpack.c.h.b16 %v215
      %v718 = vunpack.c.l.b16 %v216
      %v719 = vunpack.c.h.b16 %v216
      %v720 = vunpack.c.l.b16 %v217
      %v721 = vunpack.c.l.b16 %v218
      %v722 = vunpack.c.h.b16 %v218
      %v723 = vunpack.c.l.b16 %v219
      %v724 = vunpack.c.h.b16 %v219
      %v725 = vunpack.c.l.b16 %v220
      %v726 = vunpack.c.h.b16 %v220
      %v727 = vunpack.c.l.b16 %v221
      %v728 = vunpack.c.h.b16 %v221
      %v729 = vunpack.c.l.b16 %v222
      %v730 = vunpack.c.l.b16 %v223
      %v731 = vunpack.c.h.b16 %v223
      %v732 = vunpack.c.l.b16 %v224
      %v733 = vunpack.c.h.b16 %v224
      %v734 = vunpack.c.l.b16 %v225
      %v735 = vunpack.c.h.b16 %v225
      %v736 = vunpack.c.l.b16 %v226
      %v737 = vunpack.c.h.b16 %v226
      %v738 = vunpack.c.l.b16 %v227
      %v739 = vunpack.c.l.b16 %v228
      %v740 = vunpack.c.h.b16 %v228
      %v741 = vunpack.c.l.b16 %v229
      %v742 = vunpack.c.h.b16 %v229
      %v743 = vunpack.c.l.b16 %v230
      %v744 = vunpack.c.h.b16 %v230
      %v745 = vunpack.c.l.b16 %v231
      %v746 = vunpack.c.h.b16 %v231
      %v747 = vunpack.c.l.b16 %v232
      %v748 = vunpack.c.l.b16 %v233
      %v749 = vunpack.c.h.b16 %v233
      %v750 = vunpack.c.l.b16 %v234
      %v751 = vunpack.c.h.b16 %v234
      %v752 = vunpack.c.l.b16 %v235
      %v753 = vunpack.c.h.b16 %v235
      %v754 = vunpack.c.l.b16 %v236
      %v755 = vunpack.c.h.b16 %v236
      %v756 = vunpack.c.l.b16 %v237
      %v757 = vunpack.c.l.b16 %v238
      %v758 = vunpack.c.h.b16 %v238
      %v759 = vunpack.c.l.b16 %v239
      %v760 = vunpack.c.h.b16 %v239
      %v761 = vunpack.c.l.b16 %v240
      %v762 = vunpack.c.h.b16 %v240
      %v763 = vunpack.c.l.b16 %v241
      %v764 = vunpack.c.h.b16 %v241
      %v765 = vunpack.c.l.b16 %v242
      %v766 = vunpack.c.l.b16 %v243
      %v767 = vunpack.c.h.b16 %v243
      %v768 = vunpack.c.l.b16 %v244
      %v769 = vunpack.c.h.b16 %v244
      %v770 = vunpack.c.l.b16 %v245
      %v771 = vunpack.c.h.b16 %v245
      %v772 = vunpack.c.l.b16 %v246
      %v773 = vunpack.c.h.b16 %v246
      %v774 = vunpack.c.l.b16 %v247
      %v775 = vunpack.c.l.b16 %v248
      %v776 = vunpack.c.h.b16 %v248
      %v777 = vunpack.c.l.b16 %v249
      %v778 = vunpack.c.h.b16 %v249
      %v779 = vunpack.c.l.b16 %v250
      %v780 = vunpack.c.h.b16 %v250
      %v781 = vunpack.c.l.b16 %v251
      %v782 = vunpack.c.h.b16 %v251
      %v783 = vunpack.c.l.b16 %v252
      %v784 = vunpack.c.l.b16 %v253
      %v785 = vunpack.c.h.b16 %v253
      %v786 = vunpack.c.l.b16 %v254
      %v787 = vunpack.c.h.b16 %v254
      %v788 = vunpack.c.l.b16 %v255
      %v789 = vunpack.c.h.b16 %v255
      %v790 = vunpack.c.l.b16 %v256
      %v791 = vunpack.c.h.b16 %v256
      %v792 = vunpack.c.l.b16 %v257
      %v793 = vunpack.c.l.b16 %v258
      %v794 = vunpack.c.h.b16 %v258
      %v795 = vunpack.c.l.b16 %v259
      %v796 = vunpack.c.h.b16 %v259
      %v797 = vunpack.c.l.b16 %v260
      %v798 = vunpack.c.h.b16 %v260
      %v799 = vunpack.c.l.b16 %v261
      %v800 = vunpack.c.h.b16 %v261
      %v801 = vunpack.c.l.b16 %v262
      %v802 = vunpack.c.l.b16 %v263
      %v803 = vunpack.c.h.b16 %v263
      %v804 = vunpack.c.l.b16 %v264
      %v805 = vunpack.c.h.b16 %v264
      %v806 = vunpack.c.l.b16 %v265
      %v807 = vunpack.c.h.b16 %v265
      %v808 = vunpack.c.l.b16 %v266
      %v809 = vunpack.c.h.b16 %v266
      %v810 = vunpack.c.l.b16 %v267
      %v811 = vunpack.c.l.b16 %v268
      %v812 = vunpack.c.h.b16 %v268
      %v813 = vunpack.c.l.b16 %v269
      %v814 = vunpack.c.h.b16 %v269
      %v815 = vunpack.c.l.b16 %v270
      %v816 = vunpack.c.h.b16 %v270
      %v817 = vunpack.c.l.b16 %v271
      %v818 = vunpack.c.h.b16 %v271
      %v819 = vunpack.c.l.b16 %v272
      %v820 = vunpack.c.l.b16 %v273
      %v821 = vunpack.c.h.b16 %v273
      %v822 = vunpack.c.l.b16 %v274
      %v823 = vunpack.c.h.b16 %v274
      %v824 = vunpack.c.l.b16 %v275
      %v825 = vunpack.c.h.b16 %v275
      %v826 = vunpack.c.l.b16 %v276
      %v827 = vunpack.c.h.b16 %v276
      %v828 = vunpack.c.l.b16 %v277
      %v829 = vunpack.c.l.b16 %v278
      %v830 = vunpack.c.h.b16 %v278
      %v831 = vunpack.c.l.b16 %v279
      %v832 = vunpack.c.h.b16 %v279
      %v833 = vunpack.c.l.b16 %v280
      %v834 = vunpack.c.h.b16 %v280
      %v835 = vunpack.c.l.b16 %v281
      %v836 = vunpack.c.h.b16 %v281
      %v837 = vunpack.c.l.b16 %v282
      %v838 = vunpack.c.l.b16 %v283
      %v839 = vunpack.c.h.b16 %v283
      %v840 = vunpack.c.l.b16 %v284
      %v841 = vunpack.c.h.b16 %v284
      %v842 = vunpack.c.l.b16 %v285
      %v843 = vunpack.c.h.b16 %v285
      %v844 = vunpack.c.l.b16 %v286
      %v845 = vunpack.c.h.b16 %v286
      %v846 = vunpack.c.l.b16 %v287
      %v847 = vunpack.c.l.b16 %v288
      %v848 = vunpack.c.h.b16 %v288
      %v849 = vunpack.c.l.b16 %v289
      %v850 = vunpack.c.h.b16 %v289
      %v851 = vunpack.c.l.b16 %v290
      %v852 = vunpack.c.h.b16 %v290
      %v853 = vunpack.c.l.b16 %v291
      %v854 = vunpack.c.h.b16 %v291
      %v855 = vunpack.c.l.b16 %v292
      %v856 = vunpack.c.l.b16 %v293
      %v857 = vunpack.c.h.b16 %v293
      %v858 = vunpack.c.l.b16 %v294
      %v859 = vunpack.c.h.b16 %v294
      %v860 = vunpack.c.l.b16 %v295
      %v861 = vunpack.c.h.b16 %v295
      %v862 = vunpack.c.l.b16 %v296
      %v863 = vunpack.c.h.b16 %v296
      %v864 = vunpack.c.l.b16 %v297
      %v865 = vunpack.c.l.b16 %v298
      %v866 = vunpack.c.h.b16 %v298
      %v867 = vunpack.c.l.b16 %v299
      %v868 = vunpack.c.h.b16 %v299
      %v869 = vunpack.c.l.b16 %v300
      %v870 = vunpack.c.h.b16 %v300
      %v871 = vunpack.c.l.b16 %v301
      %v872 = vunpack.c.h.b16 %v301
      %v873 = vunpack.c.l.b16 %v302
      %v874 = vunpack.c.l.b16 %v303
      %v875 = vunpack.c.h.b16 %v303
      %v876 = vunpack.c.l.b16 %v304
      %v877 = vunpack.c.h.b16 %v304
      %v878 = vunpack.c.l.b16 %v305
      %v879 = vunpack.c.h.b16 %v305
      %v880 = vunpack.c.l.b16 %v306
      %v881 = vunpack.c.h.b16 %v306
      %v882 = vunpack.c.l.b16 %v307
      %v883 = vunpack.c.l.b16 %v308
      %v884 = vunpack.c.h.b16 %v308
      %v885 = vunpack.c.l.b16 %v309
      %v886 = vunpack.c.h.b16 %v309
      %v887 = vunpack.c.l.b16 %v310
      %v888 = vunpack.c.h.b16 %v310
      %v889 = vunpack.c.l.b16 %v311
      %v890 = vunpack.c.h.b16 %v311
      %v891 = vunpack.c.l.b16 %v312
      %v892 = vunpack.c.l.b16 %v313
      %v893 = vunpack.c.h.b16 %v313
      %v894 = vunpack.c.l.b16 %v314
      %v895 = vunpack.c.h.b16 %v314
      %v896 = vunpack.c.l.b16 %v315
      %v897 = vunpack.c.h.b16 %v315
      %v898 = vunpack.c.l.b16 %v316
      %v899 = vunpack.c.h.b16 %v316
      %v900 = vunpack.c.l.b16 %v317
      %v901 = vunpack.c.l.b16 %v318
      %v902 = vunpack.c.h.b16 %v318
      %v903 = vunpack.c.l.b16 %v319
      %v904 = vunpack.c.h.b16 %v319
      %v905 = vunpack.c.l.b16 %v320
      %v906 = vunpack.c.h.b16 %v320
      %v907 = vunpack.c.l.b16 %v321
      %v908 = vunpack.c.h.b16 %v321
      %v909 = vunpack.c.l.b16 %v322
      %v910 = vunpack.c.l.b16 %v323
      %v911 = vunpack.c.h.b16 %v323
      %v912 = vunpack.c.l.b16 %v324
      %v913 = vunpack.c.h.b16 %v324
      %v914 = vunpack.c.l.b16 %v325
      %v915 = vunpack.c.h.b16 %v325
      %v916 = vunpack.c.l.b16 %v326
      %v917 = vunpack.c.h.b16 %v326
      %v918 = vunpack.c.l.b16 %v327
      %v919 = vunpack.c.l.b16 %v328
      %v920 = vunpack.c.h.b16 %v328
      %v921 = vunpack.c.l.b16 %v329
      %v922 = vunpack.c.h.b16 %v329
      %v923 = vunpack.c.l.b16 %v330
      %v924 = vunpack.c.h.b16 %v330
      %v925 = vunpack.c.l.b16 %v331
      %v926 = vunpack.c.h.b16 %v331
      %v927 = vunpack.c.l.b16 %v332
      %v928 = vunpack.c.l.b16 %v333
      %v929 = vunpack.c.h.b16 %v333
      %v930 = vunpack.c.l.b16 %v334
      %v931 = vunpack.c.h.b16 %v334
      %v932 = vunpack.c.l.b16 %v335
      %v933 = vunpack.c.h.b16 %v335
      %v934 = vunpack.c.l.b16 %v336
      %v935 = vunpack.c.h.b16 %v336
      %v936 = vunpack.c.l.b16 %v337
      %v937 = vpack.c.b16 %v658, %v649
      %v938 = vpack.c.b16 %v659, %v650
      %v939 = vpack.c.b16 %v660, %v651
      %v940 = vpack.c.b16 %v661, %v652
      %v941 = vpack.c.b16 %v662, %v653
      %v942 = vpack.c.b16 %v663, %v654
      %v943 = vpack.c.b16 %v664, %v655
      %v944 = vpack.c.b16 %v665, %v656
      %v945 = vpack.c.b16 %v666, %v657
      %v946 = vpack.c.b16 %v676, %v667
      %v947 = vpack.c.b16 %v677, %v668
      %v948 = vpack.c.b16 %v678, %v669
      %v949 = vpack.c.b16 %v679, %v670
      %v950 = vpack.c.b16 %v680, %v671
      %v951 = vpack.c.b16 %v681, %v672
      %v952 = vpack.c.b16 %v682, %v673
      %v953 = vpack.c.b16 %v683, %v674
      %v954 = vpack.c.b16 %v684, %v675
      %v955 = vpack.c.b16 %v694, %v685
      %v956 = vpack.c.b16 %v695, %v686
      %v957 = vpack.c.b16 %v696, %v687
      %v958 = vpack.c.b16 %v697, %v688
      %v959 = vpack.c.b16 %v698, %v689
      %v960 = vpack.c.b16 %v699, %v690
      %v961 = vpack.c.b16 %v700, %v691
      %v962 = vpack.c.b16 %v701, %v692
      %v963 = vpack.c.b16 %v702, %v693
      %v964 = vpack.c.b16 %v712, %v703
      %v965 = vpack.c.b16 %v713, %v704
      %v966 = vpack.c.b16 %v714, %v705
      %v967 = vpack.c.b16 %v715, %v706
      %v968 = vpack.c.b16 %v716, %v707
      %v969 = vpack.c.b16 %v717, %v708
      %v970 = vpack.c.b16 %v718, %v709
      %v971 = vpack.c.b16 %v719, %v710
      %v972 = vpack.c.b16 %v720, %v711
      %v973 = vpack.c.b16 %v730, %v721
      %v974 = vpack.c.b16 %v731, %v722
      %v975 = vpack.c.b16 %v732, %v723
      %v976 = vpack.c.b16 %v733, %v724
      %v977 = vpack.c.b16 %v734, %v725
      %v978 = vpack.c.b16 %v735, %v726
      %v979 = vpack.c.b16 %v736, %v727
      %v980 = vpack.c.b16 %v737, %v728
      %v981 = vpack.c.b16 %v738, %v729
      %v982 = vpack.c.b16 %v748, %v739
      %v983 = vpack.c.b16 %v749, %v740
      %v984 = vpack.c.b16 %v750, %v741
      %v985 = vpack.c.b16 %v751, %v742
      %v986 = vpack.c.b16 %v752, %v743
      %v987 = vpack.c.b16 %v753, %v744
      %v988 = vpack.c.b16 %v754, %v745
      %v989 = vpack.c.b16 %v755, %v746
      %v990 = vpack.c.b16 %v756, %v747
      %v991 = vpack.c.b16 %v766, %v757
      %v992 = vpack.c.b16 %v767, %v758
      %v993 = vpack.c.b16 %v768, %v759
      %v994 = vpack.c.b16 %v769, %v760
      %v995 = vpack.c.b16 %v770, %v761
      %v996 = vpack.c.b16 %v771, %v762
      %v997 = vpack.c.b16 %v772, %v763
      %v998 = vpack.c.b16 %v773, %v764
      %v999 = vpack.c.b16 %v774, %v765
      %v1000 = vpack.c.b16 %v784, %v775
      %v1001 = vpack.c.b16 %v785, %v776
      %v1002 = vpack.c.b16 %v786, %v777
      %v1003 = vpack.c.b16 %v787, %v778
      %v1004 = vpack.c.b16 %v788, %v779
      %v1005 = vpack.c.b16 %v789, %v780
      %v1006 = vpack.c.b16 %v790, %v781
      %v1007 = vpack.c.b16 %v791, %v782
      %v1008 = vpack.c.b16 %v792, %v783
      %v1009 = vpack.c.b16 %v802, %v793
      %v1010 = vpack.c.b16 %v803, %v794
      %v1011 = vpack.c.b16 %v804, %v795
      %v1012 = vpack.c.b16 %v805, %v796
      %v1013 = vpack.c.b16 %v806, %v797
      %v1014 = vpack.c.b16 %v807, %v798
      %v1015 = vpack.c.b16 %v808, %v799
      %v1016 = vpack.c.b16 %v809, %v800
      %v1017 = vpack.c.b16 %v810, %v801
      %v1018 = vpack.c.b16 %v820, %v811
      %v1019 = vpack.c.b16 %v821, %v812
      %v1020 = vpack.c.b16 %v822, %v813
      %v1021 = vpack.c.b16 %v823, %v814
      %v1022 = vpack.c.b16 %v824, %v815
      %v1023 = vpack.c.b16 %v825, %v816
      %v1024 = vpack.c.b16 %v826, %v817
      %v1025 = vpack.c.b16 %v827, %v818
      %v1026 = vpack.c.b16 %v828, %v819
      %v1027 = vpack.c.b16 %v838, %v829
      %v1028 = vpack.c.b16 %v839, %v830
      %v1029 = vpack.c.b16 %v840, %v831
      %v1030 = vpack.c.b16 %v841, %v832
      %v1031 = vpack.c.b16 %v842, %v833
      %v1032 = vpack.c.b16 %v843, %v834
      %v1033 = vpack.c.b16 %v844, %v835
      %v1034 = vpack.c.b16 %v845, %v836
      %v1035 = vpack.c.b16 %v846, %v837
      %v1036 = vpack.c.b16 %v856, %v847
      %v1037 = vpack.c.b16 %v857, %v848
      %v1038 = vpack.c.b16 %v858, %v849
      %v1039 = vpack.c.b16 %v859, %v850
      %v1040 = vpack.c.b16 %v860, %v851
      %v1041 = vpack.c.b16 %v861, %v852
      %v1042 = vpack.c.b16 %v862, %v853
      %v1043 = vpack.c.b16 %v863, %v854
      %v1044 = vpack.c.b16 %v864, %v855
      %v1045 = vpack.c.b16 %v874, %v865
      %v1046 = vpack.c.b16 %v875, %v866
      %v1047 = vpack.c.b16 %v876, %v867
      %v1048 = vpack.c.b16 %v877, %v868
      %v1049 = vpack.c.b16 %v878, %v869
      %v1050 = vpack.c.b16 %v879, %v870
      %v1051 = vpack.c.b16 %v880, %v871
      %v1052 = vpack.c.b16 %v881, %v872
      %v1053 = vpack.c.b16 %v882, %v873
      %v1054 = vpack.c.b16 %v892, %v883
      %v1055 = vpack.c.b16 %v893, %v884
      %v1056 = vpack.c.b16 %v894, %v885
      %v1057 = vpack.c.b16 %v895, %v886
      %v1058 = vpack.c.b16 %v896, %v887
      %v1059 = vpack.c.b16 %v897, %v888
      %v1060 = vpack.c.b16 %v898, %v889
      %v1061 = vpack.c.b16 %v899, %v890
      %v1062 = vpack.c.b16 %v900, %v891
      %v1063 = vpack.c.b16 %v910, %v901
      %v1064 = vpack.c.b16 %v911, %v902
      %v1065 = vpack.c.b16 %v912, %v903
      %v1066 = vpack.c.b16 %v913, %v904
      %v1067 = vpack.c.b16 %v914, %v905
      %v1068 = vpack.c.b16 %v915, %v906
      %v1069 = vpack.c.b16 %v916, %v907
      %v1070 = vpack.c.b16 %v917, %v908
      %v1071 = vpack.c.b16 %v918, %v909
      %v1072 = vpack.c.b16 %v928, %v919
      %v1073 = vpack.c.b16 %v929, %v920
      %v1074 = vpack.c.b16 %v930, %v921
      %v1075 = vpack.c.b16 %v931, %v922
      %v1076 = vpack.c.b16 %v932, %v923
      %v1077 = vpack.c.b16 %v933, %v924
      %v1078 = vpack.c.b16 %v934, %v925
      %v1079 = vpack.c.b16 %v935, %v926
      %v1080 = vpack.c.b16 %v936, %v927
      %v1369 = vunpack.c.l.b16 %v338
      %v1370 = vunpack.c.l.b16 %v339
      %v1371 = vunpack.c.l.b16 %v340
      %v1372 = vunpack.c.l.b16 %v341
      %v1373 = vunpack.c.l.b16 %v342
      %v1374 = vunpack.c.l.b16 %v343
      %v1375 = vunpack.c.l.b16 %v344
      %v1376 = vunpack.c.l.b16 %v345
      %v1377 = vunpack.c.l.b16 %v346
      %v1378 = vunpack.c.l.b16 %v347
      %v1379 = vunpack.c.l.b16 %v348
      %v1380 = vunpack.c.l.b16 %v349
      %v1381 = vunpack.c.l.b16 %v350
      %v1382 = vunpack.c.l.b16 %v351
      %v1383 = vunpack.c.l.b16 %v352
      %v1384 = vunpack.c.l.b16 %v353
      %v1385 = vunpack.c.l.b16 %v354
      %v1386 = vunpack.c.l.b16 %v355
      %v1387 = vunpack.c.l.b16 %v356
      %v1388 = vunpack.c.l.b16 %v357
      %v1389 = vunpack.c.l.b16 %v358
      %v1390 = vunpack.c.l.b16 %v359
      %v1391 = vunpack.c.l.b16 %v360
      %v1392 = vunpack.c.l.b16 %v361
      %v1393 = vunpack.c.l.b16 %v362
      %v1394 = vunpack.c.l.b16 %v363
      %v1395 = vunpack.c.l.b16 %v364
      %v1396 = vunpack.c.l.b16 %v365
      %v1397 = vunpack.c.l.b16 %v366
      %v1398 = vunpack.c.l.b16 %v367
      %v1399 = vunpack.c.l.b16 %v368
      %v1400 = vunpack.c.l.b16 %v369
      %v1401 = vunpack.c.l.b16 %v370
      %v1402 = vunpack.c.l.b16 %v371
      %v1403 = vunpack.c.l.b16 %v372
      %v1404 = vunpack.c.l.b16 %v373
      %v1405 = vunpack.c.l.b16 %v374
      %v1406 = vunpack.c.l.b16 %v375
      %v1407 = vunpack.c.l.b16 %v376
      %v1408 = vunpack.c.l.b16 %v377
      %v1409 = vunpack.c.l.b16 %v378
      %v1410 = vunpack.c.l.b16 %v379
      %v1411 = vunpack.c.l.b16 %v380
      %v1412 = vunpack.c.l.b16 %v381
      %v1413 = vunpack.c.l.b16 %v382
      %v1414 = vunpack.c.l.b16 %v383
      %v1415 = vunpack.c.l.b16 %v384
      %v1416 = vunpack.c.l.b16 %v385
      %v1417 = vunpack.c.l.b16 %v386
      %v1418 = vunpack.c.l.b16 %v387
      %v1419 = vunpack.c.l.b16 %v388
      %v1420 = vunpack.c.l.b16 %v389
      %v1421 = vunpack.c.l.b16 %v390
      %v1422 = vunpack.c.l.b16 %v391
      %v1423 = vunpack.c.l.b16 %v392
      %v1424 = vunpack.c.l.b16 %v393
      %v1425 = vunpack.c.l.b16 %v394
      %v1426 = vunpack.c.l.b16 %v395
      %v1427 = vunpack.c.l.b16 %v396
      %v1428 = vunpack.c.l.b16 %v397
      %v1429 = vunpack.c.l.b16 %v398
      %v1430 = vunpack.c.l.b16 %v399
      %v1431 = vunpack.c.l.b16 %v400
      %v1432 = vunpack.c.l.b16 %v401
      %v1433 = vunpack.c.l.b16 %v402
      %v1434 = vunpack.c.l.b16 %v403
      %v1435 = vunpack.c.l.b16 %v404
      %v1436 = vunpack.c.l.b16 %v405
      %v1437 = vunpack.c.l.b16 %v406
      %v1438 = vunpack.c.l.b16 %v407
      %v1439 = vunpack.c.l.b16 %v408
      %v1440 = vunpack.c.l.b16 %v409
      %v1441 = vunpack.c.l.b16 %v410
      %v1442 = vunpack.c.l.b16 %v411
      %v1443 = vunpack.c.l.b16 %v412
      %v1444 = vunpack.c.l.b16 %v413
      %v1445 = vunpack.c.l.b16 %v414
      %v1446 = vunpack.c.l.b16 %v415
      %v1447 = vunpack.c.l.b16 %v416
      %v1448 = vunpack.c.l.b16 %v417
      %v1449 = vunpack.c.l.b16 %v418
      %v1450 = vunpack.c.l.b16 %v419
      %v1451 = vunpack.c.l.b16 %v420
      %v1452 = vunpack.c.l.b16 %v421
      %v1453 = vunpack.c.l.b16 %v422
      %v1454 = vunpack.c.l.b16 %v423
      %v1455 = vunpack.c.l.b16 %v424
      %v1456 = vunpack.c.l.b16 %v425
      %v1457 = vunpack.c.l.b16 %v426
      %v1458 = vunpack.c.l.b16 %v427
      %v1459 = vunpack.c.l.b16 %v428
      %v1460 = vunpack.c.l.b16 %v429
      %v1461 = vunpack.c.l.b16 %v430
      %v1462 = vunpack.c.l.b16 %v431
      %v1463 = vunpack.c.l.b16 %v432
      %v1464 = vunpack.c.l.b16 %v433
      %v1465 = vunpack.c.l.b16 %v434
      %v1466 = vunpack.c.l.b16 %v435
      %v1467 = vunpack.c.l.b16 %v436
      %v1468 = vunpack.c.l.b16 %v437
      %v1469 = vunpack.c.l.b16 %v438
      %v1470 = vunpack.c.l.b16 %v439
      %v1471 = vunpack.c.l.b16 %v440
      %v1472 = vunpack.c.l.b16 %v441
      %v1473 = vunpack.c.l.b16 %v442
      %v1474 = vunpack.c.l.b16 %v443
      %v1475 = vunpack.c.l.b16 %v444
      %v1476 = vunpack.c.l.b16 %v445
      %v1477 = vunpack.c.l.b16 %v446
      %v1478 = vunpack.c.l.b16 %v447
      %v1479 = vunpack.c.l.b16 %v448
      %v1480 = vunpack.c.l.b16 %v449
      %v1481 = vunpack.c.l.b16 %v450
      %v1482 = vunpack.c.l.b16 %v451
      %v1483 = vunpack.c.l.b16 %v452
      %v1484 = vunpack.c.l.b16 %v453
      %v1485 = vunpack.c.l.b16 %v454
      %v1486 = vunpack.c.l.b16 %v455
      %v1487 = vunpack.c.l.b16 %v456
      %v1488 = vunpack.c.l.b16 %v457
      %v1489 = vunpack.c.l.b16 %v458
      %v1490 = vunpack.c.l.b16 %v459
      %v1491 = vunpack.c.l.b16 %v460
      %v1492 = vunpack.c.l.b16 %v461
      %v1493 = vunpack.c.l.b16 %v462
      %v1494 = vunpack.c.l.b16 %v463
      %v1495 = vunpack.c.l.b16 %v464
      %v1496 = vunpack.c.l.b16 %v465
      %v1497 = vunpack.c.l.b16 %v466
      %v1498 = vunpack.c.l.b16 %v467
      %v1499 = vunpack.c.l.b16 %v468
      %v1500 = vunpack.c.l.b16 %v469
      %v1501 = vunpack.c.l.b16 %v470
      %v1502 = vunpack.c.l.b16 %v471
      %v1503 = vunpack.c.l.b16 %v472
      %v1504 = vunpack.c.l.b16 %v473
      %v1505 = vunpack.c.l.b16 %v474
      %v1506 = vunpack.c.l.b16 %v475
      %v1507 = vunpack.c.l.b16 %v476
      %v1508 = vunpack.c.l.b16 %v477
      %v1509 = vunpack.c.l.b16 %v478
      %v1510 = vunpack.c.l.b16 %v479
      %v1511 = vunpack.c.l.b16 %v480
      %v1512 = vunpack.c.l.b16 %v481
      %v1513 = vpack.c.b16 %v1370, %v1369
      %v1514 = vpack.c.b16 %v1372, %v1371
      %v1515 = vpack.c.b16 %v1374, %v1373
      %v1516 = vpack.c.b16 %v1376, %v1375
      %v1517 = vpack.c.b16 %v1378, %v1377
      %v1518 = vpack.c.b16 %v1380, %v1379
      %v1519 = vpack.c.b16 %v1382, %v1381
      %v1520 = vpack.c.b16 %v1384, %v1383
      %v1521 = vpack.c.b16 %v1386, %v1385
      %v1522 = vpack.c.b16 %v1388, %v1387
      %v1523 = vpack.c.b16 %v1390, %v1389
      %v1524 = vpack.c.b16 %v1392, %v1391
      %v1525 = vpack.c.b16 %v1394, %v1393
      %v1526 = vpack.c.b16 %v1396, %v1395
      %v1527 = vpack.c.b16 %v1398, %v1397
      %v1528 = vpack.c.b16 %v1400, %v1399
      %v1529 = vpack.c.b16 %v1402, %v1401
      %v1530 = vpack.c.b16 %v1404, %v1403
      %v1531 = vpack.c.b16 %v1406, %v1405
      %v1532 = vpack.c.b16 %v1408, %v1407
      %v1533 = vpack.c.b16 %v1410, %v1409
      %v1534 = vpack.c.b16 %v1412, %v1411
      %v1535 = vpack.c.b16 %v1414, %v1413
      %v1536 = vpack.c.b16 %v1416, %v1415
      %v1537 = vpack.c.b16 %v1418, %v1417
      %v1538 = vpack.c.b16 %v1420, %v1419
      %v1539 = vpack.c.b16 %v1422, %v1421
      %v1540 = vpack.c.b16 %v1424, %v1423
      %v1541 = vpack.c.b16 %v1426, %v1425
      %v1542 = vpack.c.b16 %v1428, %v1427
      %v1543 = vpack.c.b16 %v1430, %v1429
      %v1544 = vpack.c.b16 %v1432, %v1431
      %v1545 = vpack.c.b16 %v1434, %v1433
      %v1546 = vpack.c.b16 %v1436, %v1435
      %v1547 = vpack.c.b16 %v1438, %v1437
      %v1548 = vpack.c.b16 %v1440, %v1439
      %v1549 = vpack.c.b16 %v1442, %v1441
      %v1550 = vpack.c.b16 %v1444, %v1443
      %v1551 = vpack.c.b16 %v1446, %v1445
      %v1552 = vpack.c.b16 %v1448, %v1447
      %v1553 = vpack.c.b16 %v1450, %v1449
      %v1554 = vpack.c.b16 %v1452, %v1451
      %v1555 = vpack.c.b16 %v1454, %v1453
      %v1556 = vpack.c.b16 %v1456, %v1455
      %v1557 = vpack.c.b16 %v1458, %v1457
      %v1558 = vpack.c.b16 %v1460, %v1459
      %v1559 = vpack.c.b16 %v1462, %v1461
      %v1560 = vpack.c.b16 %v1464, %v1463
      %v1561 = vpack.c.b16 %v1466, %v1465
      %v1562 = vpack.c.b16 %v1468, %v1467
      %v1563 = vpack.c.b16 %v1470, %v1469
      %v1564 = vpack.c.b16 %v1472, %v1471
      %v1565 = vpack.c.b16 %v1474, %v1473
      %v1566 = vpack.c.b16 %v1476, %v1475
      %v1567 = vpack.c.b16 %v1478, %v1477
      %v1568 = vpack.c.b16 %v1480, %v1479
      %v1569 = vpack.c.b16 %v1482, %v1481
      %v1570 = vpack.c.b16 %v1484, %v1483
      %v1571 = vpack.c.b16 %v1486, %v1485
      %v1572 = vpack.c.b16 %v1488, %v1487
      %v1573 = vpack.c.b16 %v1490, %v1489
      %v1574 = vpack.c.b16 %v1492, %v1491
      %v1575 = vpack.c.b16 %v1494, %v1493
      %v1576 = vpack.c.b16 %v1496, %v1495
      %v1577 = vpack.c.b16 %v1498, %v1497
      %v1578 = vpack.c.b16 %v1500, %v1499
      %v1579 = vpack.c.b16 %v1502, %v1501
      %v1580 = vpack.c.b16 %v1504, %v1503
      %v1581 = vpack.c.b16 %v1506, %v1505
      %v1582 = vpack.c.b16 %v1508, %v1507
      %v1583 = vpack.c.b16 %v1510, %v1509
      %v1584 = vpack.c.b16 %v1512, %v1511
      %1657 = vmatprep.subr.bf16.mxu0 0
      %1658 = vmatpush1.bf16.msra.mxu0 %v1513
      %1659 = vmatprep.subr.bf16.mxu0 0
      %1660 = vmatpush1.bf16.msra.mxu0 %v1514
      %1661 = vmatprep.subr.bf16.mxu0 0
      %1662 = vmatpush1.bf16.msra.mxu0 %v1515
      %1663 = vmatprep.subr.bf16.mxu0 0
      %1664 = vmatpush1.bf16.msra.mxu0 %v1516
      %1665 = vmatprep.subr.bf16.mxu0 0
      %1666 = vmatpush1.bf16.msra.mxu0 %v1517
      %1667 = vmatprep.subr.bf16.mxu0 0
      %1668 = vmatpush1.bf16.msra.mxu0 %v1518
      %1669 = vmatprep.subr.bf16.mxu0 0
      %1670 = vmatpush1.bf16.msra.mxu0 %v1519
      %1671 = vmatprep.subr.bf16.mxu0 0
      %1672 = vmatpush1.bf16.msra.mxu0 %v1520
      %1673 = vmatprep.subr.bf16.mxu0 0
      %1674 = vmatpush1.bf16.msra.mxu0 %v1521
      %1675 = vmatprep.subr.bf16.mxu0 0
      %1676 = vmatpush1.bf16.msra.mxu0 %v1522
      %1677 = vmatprep.subr.bf16.mxu0 0
      %1678 = vmatpush1.bf16.msra.mxu0 %v1523
      %1679 = vmatprep.subr.bf16.mxu0 0
      %1680 = vmatpush1.bf16.msra.mxu0 %v1524
      %1681 = vmatprep.subr.bf16.mxu0 0
      %1682 = vmatpush1.bf16.msra.mxu0 %v1525
      %1683 = vmatprep.subr.bf16.mxu0 0
      %1684 = vmatpush1.bf16.msra.mxu0 %v1526
      %1685 = vmatprep.subr.bf16.mxu0 0
      %1686 = vmatpush1.bf16.msra.mxu0 %v1527
      %1687 = vmatprep.subr.bf16.mxu0 0
      %1688 = vmatpush1.bf16.msra.mxu0 %v1528
      %1689 = vmatprep.mubr.bf16.mxu0 %v938
      %1690 = vmatmul.mubr.bf16.gmra.mrb[0].mxu0 %v937
      %v1691 = vpop.f32.mrb[0].mxu0
      %v1692 = vadd.f32 %v487, %v1691
      %v1693 = vpop.f32.mrb[0].mxu0
      %v1694 = vpop.f32.mrb[0].mxu0
      %v1695 = vadd.f32 %v487, %v1694
      %v1696 = vpop.f32.mrb[0].mxu0
      %1697 = vmatprep.mubr.bf16.mxu0 %v947
      %1698 = vmatmul.mubr.bf16.gmra.mrb[0].mxu0 %v946
      %v1699 = vpop.f32.mrb[0].mxu0
      %v1700 = vadd.f32 %v487, %v1699
      %v1701 = vpop.f32.mrb[0].mxu0
      %v1702 = vpop.f32.mrb[0].mxu0
      %v1703 = vadd.f32 %v487, %v1702
      %v1704 = vpop.f32.mrb[0].mxu0
      %1705 = vmatprep.mubr.bf16.mxu0 %v956
      %1706 = vmatmul.mubr.bf16.gmra.mrb[0].mxu0 %v955
      %v1707 = vpop.f32.mrb[0].mxu0
      %v1708 = vadd.f32 %v487, %v1707
      %v1709 = vpop.f32.mrb[0].mxu0
      %v1710 = vpop.f32.mrb[0].mxu0
      %v1711 = vadd.f32 %v487, %v1710
      %v1712 = vpop.f32.mrb[0].mxu0
      %1713 = vmatprep.mubr.bf16.mxu0 %v965
      %1714 = vmatmul.mubr.bf16.gmra.mrb[0].mxu0 %v964
      %v1715 = vpop.f32.mrb[0].mxu0
      %v1716 = vadd.f32 %v487, %v1715
      %v1717 = vpop.f32.mrb[0].mxu0
      %v1718 = vpop.f32.mrb[0].mxu0
      %v1719 = vadd.f32 %v487, %v1718
      %v1720 = vpop.f32.mrb[0].mxu0
      %1721 = vmatprep.mubr.bf16.mxu0 %v974
      %1722 = vmatmul.mubr.bf16.gmra.mrb[0].mxu0 %v973
      %v1723 = vpop.f32.mrb[0].mxu0
      %v1724 = vadd.f32 %v487, %v1723
      %v1725 = vpop.f32.mrb[0].mxu0
      %v1726 = vpop.f32.mrb[0].mxu0
      %v1727 = vadd.f32 %v487, %v1726
      %v1728 = vpop.f32.mrb[0].mxu0
      %1729 = vmatprep.mubr.bf16.mxu0 %v983
      %1730 = vmatmul.mubr.bf16.gmra.mrb[0].mxu0 %v982
      %v1731 = vpop.f32.mrb[0].mxu0
      %v1732 = vadd.f32 %v487, %v1731
      %v1733 = vpop.f32.mrb[0].mxu0
      %v1734 = vpop.f32.mrb[0].mxu0
      %v1735 = vadd.f32 %v487, %v1734
      %v1736 = vpop.f32.mrb[0].mxu0
      %1737 = vmatprep.mubr.bf16.mxu0 %v992
      %1738 = vmatmul.mubr.bf16.gmra.mrb[0].mxu0 %v991
      %v1739 = vpop.f32.mrb[0].mxu0
      %v1740 = vadd.f32 %v487, %v1739
      %v1741 = vpop.f32.mrb[0].mxu0
      %v1742 = vpop.f32.mrb[0].mxu0
      %v1743 = vadd.f32 %v487, %v1742
      %v1744 = vpop.f32.mrb[0].mxu0
      %1745 = vmatprep.mubr.bf16.mxu0 %v1001
      %1746 = vmatmul.mubr.bf16.gmra.mrb[0].mxu0 %v1000
      %v1747 = vpop.f32.mrb[0].mxu0
      %v1748 = vadd.f32 %v487, %v1747
      %v1749 = vpop.f32.mrb[0].mxu0
      %v1750 = vpop.f32.mrb[0].mxu0
      %v1751 = vadd.f32 %v487, %v1750
      %v1752 = vpop.f32.mrb[0].mxu0
      %1753 = vmatprep.mubr.bf16.mxu0 %v1010
      %1754 = vmatmul.mubr.bf16.gmra.mrb[0].mxu0 %v1009
      %v1755 = vpop.f32.mrb[0].mxu0
      %v1756 = vadd.f32 %v487, %v1755
      %v1757 = vpop.f32.mrb[0].mxu0
      %v1758 = vpop.f32.mrb[0].mxu0
      %v1759 = vadd.f32 %v487, %v1758
      %v1760 = vpop.f32.mrb[0].mxu0
      %1761 = vmatprep.mubr.bf16.mxu0 %v1019
      %1762 = vmatmul.mubr.bf16.gmra.mrb[0].mxu0 %v1018
      %v1763 = vpop.f32.mrb[0].mxu0
      %v1764 = vadd.f32 %v487, %v1763
      %v1765 = vpop.f32.mrb[0].mxu0
      %v1766 = vpop.f32.mrb[0].mxu0
      %v1767 = vadd.f32 %v487, %v1766
      %v1768 = vpop.f32.mrb[0].mxu0
      %1769 = vmatprep.mubr.bf16.mxu0 %v1028
      %1770 = vmatmul.mubr.bf16.gmra.mrb[0].mxu0 %v1027
      %v1771 = vpop.f32.mrb[0].mxu0
      %v1772 = vadd.f32 %v487, %v1771
      %v1773 = vpop.f32.mrb[0].mxu0
      %v1774 = vpop.f32.mrb[0].mxu0
      %v1775 = vadd.f32 %v487, %v1774
      %v1776 = vpop.f32.mrb[0].mxu0
      %1777 = vmatprep.mubr.bf16.mxu0 %v1037
      %1778 = vmatmul.mubr.bf16.gmra.mrb[0].mxu0 %v1036
      %v1779 = vpop.f32.mrb[0].mxu0
      %v1780 = vadd.f32 %v487, %v1779
      %v1781 = vpop.f32.mrb[0].mxu0
      %v1782 = vpop.f32.mrb[0].mxu0
      %v1783 = vadd.f32 %v487, %v1782
      %v1784 = vpop.f32.mrb[0].mxu0
      %1785 = vmatprep.mubr.bf16.mxu0 %v1046
      %1786 = vmatmul.mubr.bf16.gmra.mrb[0].mxu0 %v1045
      %v1787 = vpop.f32.mrb[0].mxu0
      %v1788 = vadd.f32 %v487, %v1787
      %v1789 = vpop.f32.mrb[0].mxu0
      %v1790 = vpop.f32.mrb[0].mxu0
      %v1791 = vadd.f32 %v487, %v1790
      %v1792 = vpop.f32.mrb[0].mxu0
      %1793 = vmatprep.mubr.bf16.mxu0 %v1055
      %1794 = vmatmul.mubr.bf16.gmra.mrb[0].mxu0 %v1054
      %v1795 = vpop.f32.mrb[0].mxu0
      %v1796 = vadd.f32 %v487, %v1795
      %v1797 = vpop.f32.mrb[0].mxu0
      %v1798 = vpop.f32.mrb[0].mxu0
      %v1799 = vadd.f32 %v487, %v1798
      %v1800 = vpop.f32.mrb[0].mxu0
      %1801 = vmatprep.mubr.bf16.mxu0 %v1064
      %1802 = vmatmul.mubr.bf16.gmra.mrb[0].mxu0 %v1063
      %v1803 = vpop.f32.mrb[0].mxu0
      %v1804 = vadd.f32 %v487, %v1803
      %v1805 = vpop.f32.mrb[0].mxu0
      %v1806 = vpop.f32.mrb[0].mxu0
      %v1807 = vadd.f32 %v487, %v1806
      %v1808 = vpop.f32.mrb[0].mxu0
      %1809 = vmatprep.mubr.bf16.mxu0 %v1073
      %1810 = vmatmul.mubr.bf16.gmra.mrb[0].mxu0 %v1072
      %v1811 = vpop.f32.mrb[0].mxu0
      %v1812 = vadd.f32 %v487, %v1811
      %v1813 = vpop.f32.mrb[0].mxu0
      %v1814 = vpop.f32.mrb[0].mxu0
      %v1815 = vadd.f32 %v487, %v1814
      %v1816 = vpop.f32.mrb[0].mxu0
      %1817 = vdwg.mxu0
      %1818 = vmatprep.subr.bf16.mxu0 0
      %1819 = vmatpush1.bf16.msra.mxu0 %v1529
      %1820 = vmatprep.subr.bf16.mxu0 0
      %1821 = vmatpush1.bf16.msra.mxu0 %v1530
      %1822 = vmatprep.subr.bf16.mxu0 0
      %1823 = vmatpush1.bf16.msra.mxu0 %v1531
      %1824 = vmatprep.subr.bf16.mxu0 0
      %1825 = vmatpush1.bf16.msra.mxu0 %v1532
      %1826 = vmatprep.subr.bf16.mxu0 0
      %1827 = vmatpush1.bf16.msra.mxu0 %v1533
      %1828 = vmatprep.subr.bf16.mxu0 0
      %1829 = vmatpush1.bf16.msra.mxu0 %v1534
      %1830 = vmatprep.subr.bf16.mxu0 0
      %1831 = vmatpush1.bf16.msra.mxu0 %v1535
      %1832 = vmatprep.subr.bf16.mxu0 0
      %1833 = vmatpush1.bf16.msra.mxu0 %v1536
      %1834 = vmatprep.subr.bf16.mxu0 0
      %1835 = vmatpush1.bf16.msra.mxu0 %v1537
      %1836 = vmatprep.subr.bf16.mxu0 0
      %1837 = vmatpush1.bf16.msra.mxu0 %v1538
      %1838 = vmatprep.subr.bf16.mxu0 0
      %1839 = vmatpush1.bf16.msra.mxu0 %v1539
      %1840 = vmatprep.subr.bf16.mxu0 0
      %1841 = vmatpush1.bf16.msra.mxu0 %v1540
      %1842 = vmatprep.subr.bf16.mxu0 0
      %1843 = vmatpush1.bf16.msra.mxu0 %v1541
      %1844 = vmatprep.subr.bf16.mxu0 0
      %1845 = vmatpush1.bf16.msra.mxu0 %v1542
      %1846 = vmatprep.subr.bf16.mxu0 0
      %1847 = vmatpush1.bf16.msra.mxu0 %v1543
      %1848 = vmatprep.subr.bf16.mxu0 0
      %1849 = vmatpush1.bf16.msra.mxu0 %v1544
      %1850 = vmatprep.mubr.bf16.mxu0 %v940
      %1851 = vmatmul.mubr.bf16.gmra.mrb[0].mxu0 %v939
      %v1852 = vpop.f32.mrb[0].mxu0
      %v1853 = vadd.f32 %v1692, %v1852
      %v1854 = vpop.f32.mrb[0].mxu0
      %v1855 = vpop.f32.mrb[0].mxu0
      %v1856 = vadd.f32 %v1695, %v1855
      %v1857 = vpop.f32.mrb[0].mxu0
      %1858 = vmatprep.mubr.bf16.mxu0 %v949
      %1859 = vmatmul.mubr.bf16.gmra.mrb[0].mxu0 %v948
      %v1860 = vpop.f32.mrb[0].mxu0
      %v1861 = vadd.f32 %v1700, %v1860
      %v1862 = vpop.f32.mrb[0].mxu0
      %v1863 = vpop.f32.mrb[0].mxu0
      %v1864 = vadd.f32 %v1703, %v1863
      %v1865 = vpop.f32.mrb[0].mxu0
      %1866 = vmatprep.mubr.bf16.mxu0 %v958
      %1867 = vmatmul.mubr.bf16.gmra.mrb[0].mxu0 %v957
      %v1868 = vpop.f32.mrb[0].mxu0
      %v1869 = vadd.f32 %v1708, %v1868
      %v1870 = vpop.f32.mrb[0].mxu0
      %v1871 = vpop.f32.mrb[0].mxu0
      %v1872 = vadd.f32 %v1711, %v1871
      %v1873 = vpop.f32.mrb[0].mxu0
      %1874 = vmatprep.mubr.bf16.mxu0 %v967
      %1875 = vmatmul.mubr.bf16.gmra.mrb[0].mxu0 %v966
      %v1876 = vpop.f32.mrb[0].mxu0
      %v1877 = vadd.f32 %v1716, %v1876
      %v1878 = vpop.f32.mrb[0].mxu0
      %v1879 = vpop.f32.mrb[0].mxu0
      %v1880 = vadd.f32 %v1719, %v1879
      %v1881 = vpop.f32.mrb[0].mxu0
      %1882 = vmatprep.mubr.bf16.mxu0 %v976
      %1883 = vmatmul.mubr.bf16.gmra.mrb[0].mxu0 %v975
      %v1884 = vpop.f32.mrb[0].mxu0
      %v1885 = vadd.f32 %v1724, %v1884
      %v1886 = vpop.f32.mrb[0].mxu0
      %v1887 = vpop.f32.mrb[0].mxu0
      %v1888 = vadd.f32 %v1727, %v1887
      %v1889 = vpop.f32.mrb[0].mxu0
      %1890 = vmatprep.mubr.bf16.mxu0 %v985
      %1891 = vmatmul.mubr.bf16.gmra.mrb[0].mxu0 %v984
      %v1892 = vpop.f32.mrb[0].mxu0
      %v1893 = vadd.f32 %v1732, %v1892
      %v1894 = vpop.f32.mrb[0].mxu0
      %v1895 = vpop.f32.mrb[0].mxu0
      %v1896 = vadd.f32 %v1735, %v1895
      %v1897 = vpop.f32.mrb[0].mxu0
      %1898 = vmatprep.mubr.bf16.mxu0 %v994
      %1899 = vmatmul.mubr.bf16.gmra.mrb[0].mxu0 %v993
      %v1900 = vpop.f32.mrb[0].mxu0
      %v1901 = vadd.f32 %v1740, %v1900
      %v1902 = vpop.f32.mrb[0].mxu0
      %v1903 = vpop.f32.mrb[0].mxu0
      %v1904 = vadd.f32 %v1743, %v1903
      %v1905 = vpop.f32.mrb[0].mxu0
      %1906 = vmatprep.mubr.bf16.mxu0 %v1003
      %1907 = vmatmul.mubr.bf16.gmra.mrb[0].mxu0 %v1002
      %v1908 = vpop.f32.mrb[0].mxu0
      %v1909 = vadd.f32 %v1748, %v1908
      %v1910 = vpop.f32.mrb[0].mxu0
      %v1911 = vpop.f32.mrb[0].mxu0
      %v1912 = vadd.f32 %v1751, %v1911
      %v1913 = vpop.f32.mrb[0].mxu0
      %1914 = vmatprep.mubr.bf16.mxu0 %v1012
      %1915 = vmatmul.mubr.bf16.gmra.mrb[0].mxu0 %v1011
      %v1916 = vpop.f32.mrb[0].mxu0
      %v1917 = vadd.f32 %v1756, %v1916
      %v1918 = vpop.f32.mrb[0].mxu0
      %v1919 = vpop.f32.mrb[0].mxu0
      %v1920 = vadd.f32 %v1759, %v1919
      %v1921 = vpop.f32.mrb[0].mxu0
      %1922 = vmatprep.mubr.bf16.mxu0 %v1021
      %1923 = vmatmul.mubr.bf16.gmra.mrb[0].mxu0 %v1020
      %v1924 = vpop.f32.mrb[0].mxu0
      %v1925 = vadd.f32 %v1764, %v1924
      %v1926 = vpop.f32.mrb[0].mxu0
      %v1927 = vpop.f32.mrb[0].mxu0
      %v1928 = vadd.f32 %v1767, %v1927
      %v1929 = vpop.f32.mrb[0].mxu0
      %1930 = vmatprep.mubr.bf16.mxu0 %v1030
      %1931 = vmatmul.mubr.bf16.gmra.mrb[0].mxu0 %v1029
      %v1932 = vpop.f32.mrb[0].mxu0
      %v1933 = vadd.f32 %v1772, %v1932
      %v1934 = vpop.f32.mrb[0].mxu0
      %v1935 = vpop.f32.mrb[0].mxu0
      %v1936 = vadd.f32 %v1775, %v1935
      %v1937 = vpop.f32.mrb[0].mxu0
      %1938 = vmatprep.mubr.bf16.mxu0 %v1039
      %1939 = vmatmul.mubr.bf16.gmra.mrb[0].mxu0 %v1038
      %v1940 = vpop.f32.mrb[0].mxu0
      %v1941 = vadd.f32 %v1780, %v1940
      %v1942 = vpop.f32.mrb[0].mxu0
      %v1943 = vpop.f32.mrb[0].mxu0
      %v1944 = vadd.f32 %v1783, %v1943
      %v1945 = vpop.f32.mrb[0].mxu0
      %1946 = vmatprep.mubr.bf16.mxu0 %v1048
      %1947 = vmatmul.mubr.bf16.gmra.mrb[0].mxu0 %v1047
      %v1948 = vpop.f32.mrb[0].mxu0
      %v1949 = vadd.f32 %v1788, %v1948
      %v1950 = vpop.f32.mrb[0].mxu0
      %v1951 = vpop.f32.mrb[0].mxu0
      %v1952 = vadd.f32 %v1791, %v1951
      %v1953 = vpop.f32.mrb[0].mxu0
      %1954 = vmatprep.mubr.bf16.mxu0 %v1057
      %1955 = vmatmul.mubr.bf16.gmra.mrb[0].mxu0 %v1056
      %v1956 = vpop.f32.mrb[0].mxu0
      %v1957 = vadd.f32 %v1796, %v1956
      %v1958 = vpop.f32.mrb[0].mxu0
      %v1959 = vpop.f32.mrb[0].mxu0
      %v1960 = vadd.f32 %v1799, %v1959
      %v1961 = vpop.f32.mrb[0].mxu0
      %1962 = vmatprep.mubr.bf16.mxu0 %v1066
      %1963 = vmatmul.mubr.bf16.gmra.mrb[0].mxu0 %v1065
      %v1964 = vpop.f32.mrb[0].mxu0
      %v1965 = vadd.f32 %v1804, %v1964
      %v1966 = vpop.f32.mrb[0].mxu0
      %v1967 = vpop.f32.mrb[0].mxu0
      %v1968 = vadd.f32 %v1807, %v1967
      %v1969 = vpop.f32.mrb[0].mxu0
      %1970 = vmatprep.mubr.bf16.mxu0 %v1075
      %1971 = vmatmul.mubr.bf16.gmra.mrb[0].mxu0 %v1074
      %v1972 = vpop.f32.mrb[0].mxu0
      %v1973 = vadd.f32 %v1812, %v1972
      %v1974 = vpop.f32.mrb[0].mxu0
      %v1975 = vpop.f32.mrb[0].mxu0
      %v1976 = vadd.f32 %v1815, %v1975
      %v1977 = vpop.f32.mrb[0].mxu0
      %1978 = vdwg.mxu0
      %1979 = vmatprep.subr.bf16.mxu0 0
      %1980 = vmatpush1.bf16.msra.mxu0 %v1545
      %1981 = vmatprep.subr.bf16.mxu0 0
      %1982 = vmatpush1.bf16.msra.mxu0 %v1546
      %1983 = vmatprep.subr.bf16.mxu0 0
      %1984 = vmatpush1.bf16.msra.mxu0 %v1547
      %1985 = vmatprep.subr.bf16.mxu0 0
      %1986 = vmatpush1.bf16.msra.mxu0 %v1548
      %1987 = vmatprep.subr.bf16.mxu0 0
      %1988 = vmatpush1.bf16.msra.mxu0 %v1549
      %1989 = vmatprep.subr.bf16.mxu0 0
      %1990 = vmatpush1.bf16.msra.mxu0 %v1550
      %1991 = vmatprep.subr.bf16.mxu0 0
      %1992 = vmatpush1.bf16.msra.mxu0 %v1551
      %1993 = vmatprep.subr.bf16.mxu0 0
      %1994 = vmatpush1.bf16.msra.mxu0 %v1552
      %1995 = vmatprep.subr.bf16.mxu0 0
      %1996 = vmatpush1.bf16.msra.mxu0 %v1553
      %1997 = vmatprep.subr.bf16.mxu0 0
      %1998 = vmatpush1.bf16.msra.mxu0 %v1554
      %1999 = vmatprep.subr.bf16.mxu0 0
      %2000 = vmatpush1.bf16.msra.mxu0 %v1555
      %2001 = vmatprep.subr.bf16.mxu0 0
      %2002 = vmatpush1.bf16.msra.mxu0 %v1556
      %2003 = vmatprep.subr.bf16.mxu0 0
      %2004 = vmatpush1.bf16.msra.mxu0 %v1557
      %2005 = vmatprep.subr.bf16.mxu0 0
      %2006 = vmatpush1.bf16.msra.mxu0 %v1558
      %2007 = vmatprep.subr.bf16.mxu0 0
      %2008 = vmatpush1.bf16.msra.mxu0 %v1559
      %2009 = vmatprep.subr.bf16.mxu0 0
      %2010 = vmatpush1.bf16.msra.mxu0 %v1560
      %2011 = vmatprep.mubr.bf16.mxu0 %v942
      %2012 = vmatmul.mubr.bf16.gmra.mrb[0].mxu0 %v941
      %v2013 = vpop.f32.mrb[0].mxu0
      %v2014 = vadd.f32 %v1853, %v2013
      %v2015 = vpop.f32.mrb[0].mxu0
      %v2016 = vpop.f32.mrb[0].mxu0
      %v2017 = vadd.f32 %v1856, %v2016
      %v2018 = vpop.f32.mrb[0].mxu0
      %2019 = vmatprep.mubr.bf16.mxu0 %v951
      %2020 = vmatmul.mubr.bf16.gmra.mrb[0].mxu0 %v950
      %v2021 = vpop.f32.mrb[0].mxu0
      %v2022 = vadd.f32 %v1861, %v2021
      %v2023 = vpop.f32.mrb[0].mxu0
      %v2024 = vpop.f32.mrb[0].mxu0
      %v2025 = vadd.f32 %v1864, %v2024
      %v2026 = vpop.f32.mrb[0].mxu0
      %2027 = vmatprep.mubr.bf16.mxu0 %v960
      %2028 = vmatmul.mubr.bf16.gmra.mrb[0].mxu0 %v959
      %v2029 = vpop.f32.mrb[0].mxu0
      %v2030 = vadd.f32 %v1869, %v2029
      %v2031 = vpop.f32.mrb[0].mxu0
      %v2032 = vpop.f32.mrb[0].mxu0
      %v2033 = vadd.f32 %v1872, %v2032
      %v2034 = vpop.f32.mrb[0].mxu0
      %2035 = vmatprep.mubr.bf16.mxu0 %v969
      %2036 = vmatmul.mubr.bf16.gmra.mrb[0].mxu0 %v968
      %v2037 = vpop.f32.mrb[0].mxu0
      %v2038 = vadd.f32 %v1877, %v2037
      %v2039 = vpop.f32.mrb[0].mxu0
      %v2040 = vpop.f32.mrb[0].mxu0
      %v2041 = vadd.f32 %v1880, %v2040
      %v2042 = vpop.f32.mrb[0].mxu0
      %2043 = vmatprep.mubr.bf16.mxu0 %v978
      %2044 = vmatmul.mubr.bf16.gmra.mrb[0].mxu0 %v977
      %v2045 = vpop.f32.mrb[0].mxu0
      %v2046 = vadd.f32 %v1885, %v2045
      %v2047 = vpop.f32.mrb[0].mxu0
      %v2048 = vpop.f32.mrb[0].mxu0
      %v2049 = vadd.f32 %v1888, %v2048
      %v2050 = vpop.f32.mrb[0].mxu0
      %2051 = vmatprep.mubr.bf16.mxu0 %v987
      %2052 = vmatmul.mubr.bf16.gmra.mrb[0].mxu0 %v986
      %v2053 = vpop.f32.mrb[0].mxu0
      %v2054 = vadd.f32 %v1893, %v2053
      %v2055 = vpop.f32.mrb[0].mxu0
      %v2056 = vpop.f32.mrb[0].mxu0
      %v2057 = vadd.f32 %v1896, %v2056
      %v2058 = vpop.f32.mrb[0].mxu0
      %2059 = vmatprep.mubr.bf16.mxu0 %v996
      %2060 = vmatmul.mubr.bf16.gmra.mrb[0].mxu0 %v995
      %v2061 = vpop.f32.mrb[0].mxu0
      %v2062 = vadd.f32 %v1901, %v2061
      %v2063 = vpop.f32.mrb[0].mxu0
      %v2064 = vpop.f32.mrb[0].mxu0
      %v2065 = vadd.f32 %v1904, %v2064
      %v2066 = vpop.f32.mrb[0].mxu0
      %2067 = vmatprep.mubr.bf16.mxu0 %v1005
      %2068 = vmatmul.mubr.bf16.gmra.mrb[0].mxu0 %v1004
      %v2069 = vpop.f32.mrb[0].mxu0
      %v2070 = vadd.f32 %v1909, %v2069
      %v2071 = vpop.f32.mrb[0].mxu0
      %v2072 = vpop.f32.mrb[0].mxu0
      %v2073 = vadd.f32 %v1912, %v2072
      %v2074 = vpop.f32.mrb[0].mxu0
      %2075 = vmatprep.mubr.bf16.mxu0 %v1014
      %2076 = vmatmul.mubr.bf16.gmra.mrb[0].mxu0 %v1013
      %v2077 = vpop.f32.mrb[0].mxu0
      %v2078 = vadd.f32 %v1917, %v2077
      %v2079 = vpop.f32.mrb[0].mxu0
      %v2080 = vpop.f32.mrb[0].mxu0
      %v2081 = vadd.f32 %v1920, %v2080
      %v2082 = vpop.f32.mrb[0].mxu0
      %2083 = vmatprep.mubr.bf16.mxu0 %v1023
      %2084 = vmatmul.mubr.bf16.gmra.mrb[0].mxu0 %v1022
      %v2085 = vpop.f32.mrb[0].mxu0
      %v2086 = vadd.f32 %v1925, %v2085
      %v2087 = vpop.f32.mrb[0].mxu0
      %v2088 = vpop.f32.mrb[0].mxu0
      %v2089 = vadd.f32 %v1928, %v2088
      %v2090 = vpop.f32.mrb[0].mxu0
      %2091 = vmatprep.mubr.bf16.mxu0 %v1032
      %2092 = vmatmul.mubr.bf16.gmra.mrb[0].mxu0 %v1031
      %v2093 = vpop.f32.mrb[0].mxu0
      %v2094 = vadd.f32 %v1933, %v2093
      %v2095 = vpop.f32.mrb[0].mxu0
      %v2096 = vpop.f32.mrb[0].mxu0
      %v2097 = vadd.f32 %v1936, %v2096
      %v2098 = vpop.f32.mrb[0].mxu0
      %2099 = vmatprep.mubr.bf16.mxu0 %v1041
      %2100 = vmatmul.mubr.bf16.gmra.mrb[0].mxu0 %v1040
      %v2101 = vpop.f32.mrb[0].mxu0
      %v2102 = vadd.f32 %v1941, %v2101
      %v2103 = vpop.f32.mrb[0].mxu0
      %v2104 = vpop.f32.mrb[0].mxu0
      %v2105 = vadd.f32 %v1944, %v2104
      %v2106 = vpop.f32.mrb[0].mxu0
      %2107 = vmatprep.mubr.bf16.mxu0 %v1050
      %2108 = vmatmul.mubr.bf16.gmra.mrb[0].mxu0 %v1049
      %v2109 = vpop.f32.mrb[0].mxu0
      %v2110 = vadd.f32 %v1949, %v2109
      %v2111 = vpop.f32.mrb[0].mxu0
      %v2112 = vpop.f32.mrb[0].mxu0
      %v2113 = vadd.f32 %v1952, %v2112
      %v2114 = vpop.f32.mrb[0].mxu0
      %2115 = vmatprep.mubr.bf16.mxu0 %v1059
      %2116 = vmatmul.mubr.bf16.gmra.mrb[0].mxu0 %v1058
      %v2117 = vpop.f32.mrb[0].mxu0
      %v2118 = vadd.f32 %v1957, %v2117
      %v2119 = vpop.f32.mrb[0].mxu0
      %v2120 = vpop.f32.mrb[0].mxu0
      %v2121 = vadd.f32 %v1960, %v2120
      %v2122 = vpop.f32.mrb[0].mxu0
      %2123 = vmatprep.mubr.bf16.mxu0 %v1068
      %2124 = vmatmul.mubr.bf16.gmra.mrb[0].mxu0 %v1067
      %v2125 = vpop.f32.mrb[0].mxu0
      %v2126 = vadd.f32 %v1965, %v2125
      %v2127 = vpop.f32.mrb[0].mxu0
      %v2128 = vpop.f32.mrb[0].mxu0
      %v2129 = vadd.f32 %v1968, %v2128
      %v2130 = vpop.f32.mrb[0].mxu0
      %2131 = vmatprep.mubr.bf16.mxu0 %v1077
      %2132 = vmatmul.mubr.bf16.gmra.mrb[0].mxu0 %v1076
      %v2133 = vpop.f32.mrb[0].mxu0
      %v2134 = vadd.f32 %v1973, %v2133
      %v2135 = vpop.f32.mrb[0].mxu0
      %v2136 = vpop.f32.mrb[0].mxu0
      %v2137 = vadd.f32 %v1976, %v2136
      %v2138 = vpop.f32.mrb[0].mxu0
      %2139 = vdwg.mxu0
      %2140 = vmatprep.subr.bf16.mxu0 0
      %2141 = vmatpush1.bf16.msra.mxu0 %v1561
      %2142 = vmatprep.subr.bf16.mxu0 0
      %2143 = vmatpush1.bf16.msra.mxu0 %v1562
      %2144 = vmatprep.subr.bf16.mxu0 0
      %2145 = vmatpush1.bf16.msra.mxu0 %v1563
      %2146 = vmatprep.subr.bf16.mxu0 0
      %2147 = vmatpush1.bf16.msra.mxu0 %v1564
      %2148 = vmatprep.subr.bf16.mxu0 0
      %2149 = vmatpush1.bf16.msra.mxu0 %v1565
      %2150 = vmatprep.subr.bf16.mxu0 0
      %2151 = vmatpush1.bf16.msra.mxu0 %v1566
      %2152 = vmatprep.subr.bf16.mxu0 0
      %2153 = vmatpush1.bf16.msra.mxu0 %v1567
      %2154 = vmatprep.subr.bf16.mxu0 0
      %2155 = vmatpush1.bf16.msra.mxu0 %v1568
      %2156 = vmatprep.subr.bf16.mxu0 0
      %2157 = vmatpush1.bf16.msra.mxu0 %v1569
      %2158 = vmatprep.subr.bf16.mxu0 0
      %2159 = vmatpush1.bf16.msra.mxu0 %v1570
      %2160 = vmatprep.subr.bf16.mxu0 0
      %2161 = vmatpush1.bf16.msra.mxu0 %v1571
      %2162 = vmatprep.subr.bf16.mxu0 0
      %2163 = vmatpush1.bf16.msra.mxu0 %v1572
      %2164 = vmatprep.subr.bf16.mxu0 0
      %2165 = vmatpush1.bf16.msra.mxu0 %v1573
      %2166 = vmatprep.subr.bf16.mxu0 0
      %2167 = vmatpush1.bf16.msra.mxu0 %v1574
      %2168 = vmatprep.subr.bf16.mxu0 0
      %2169 = vmatpush1.bf16.msra.mxu0 %v1575
      %2170 = vmatprep.subr.bf16.mxu0 0
      %2171 = vmatpush1.bf16.msra.mxu0 %v1576
      %2172 = vmatprep.mubr.bf16.mxu0 %v944
      %2173 = vmatmul.mubr.bf16.gmra.mrb[0].mxu0 %v943
      %v2174 = vpop.f32.mrb[0].mxu0
      %v2175 = vadd.f32 %v2014, %v2174
      %v2176 = vpop.f32.mrb[0].mxu0
      %v2177 = vpop.f32.mrb[0].mxu0
      %v2178 = vadd.f32 %v2017, %v2177
      %v2179 = vpop.f32.mrb[0].mxu0
      %2180 = vmatprep.mubr.bf16.mxu0 %v953
      %2181 = vmatmul.mubr.bf16.gmra.mrb[0].mxu0 %v952
      %v2182 = vpop.f32.mrb[0].mxu0
      %v2183 = vadd.f32 %v2022, %v2182
      %v2184 = vpop.f32.mrb[0].mxu0
      %v2185 = vpop.f32.mrb[0].mxu0
      %v2186 = vadd.f32 %v2025, %v2185
      %v2187 = vpop.f32.mrb[0].mxu0
      %2188 = vmatprep.mubr.bf16.mxu0 %v962
      %2189 = vmatmul.mubr.bf16.gmra.mrb[0].mxu0 %v961
      %v2190 = vpop.f32.mrb[0].mxu0
      %v2191 = vadd.f32 %v2030, %v2190
      %v2192 = vpop.f32.mrb[0].mxu0
      %v2193 = vpop.f32.mrb[0].mxu0
      %v2194 = vadd.f32 %v2033, %v2193
      %v2195 = vpop.f32.mrb[0].mxu0
      %2196 = vmatprep.mubr.bf16.mxu0 %v971
      %2197 = vmatmul.mubr.bf16.gmra.mrb[0].mxu0 %v970
      %v2198 = vpop.f32.mrb[0].mxu0
      %v2199 = vadd.f32 %v2038, %v2198
      %v2200 = vpop.f32.mrb[0].mxu0
      %v2201 = vpop.f32.mrb[0].mxu0
      %v2202 = vadd.f32 %v2041, %v2201
      %v2203 = vpop.f32.mrb[0].mxu0
      %2204 = vmatprep.mubr.bf16.mxu0 %v980
      %2205 = vmatmul.mubr.bf16.gmra.mrb[0].mxu0 %v979
      %v2206 = vpop.f32.mrb[0].mxu0
      %v2207 = vadd.f32 %v2046, %v2206
      %v2208 = vpop.f32.mrb[0].mxu0
      %v2209 = vpop.f32.mrb[0].mxu0
      %v2210 = vadd.f32 %v2049, %v2209
      %v2211 = vpop.f32.mrb[0].mxu0
      %2212 = vmatprep.mubr.bf16.mxu0 %v989
      %2213 = vmatmul.mubr.bf16.gmra.mrb[0].mxu0 %v988
      %v2214 = vpop.f32.mrb[0].mxu0
      %v2215 = vadd.f32 %v2054, %v2214
      %v2216 = vpop.f32.mrb[0].mxu0
      %v2217 = vpop.f32.mrb[0].mxu0
      %v2218 = vadd.f32 %v2057, %v2217
      %v2219 = vpop.f32.mrb[0].mxu0
      %2220 = vmatprep.mubr.bf16.mxu0 %v998
      %2221 = vmatmul.mubr.bf16.gmra.mrb[0].mxu0 %v997
      %v2222 = vpop.f32.mrb[0].mxu0
      %v2223 = vadd.f32 %v2062, %v2222
      %v2224 = vpop.f32.mrb[0].mxu0
      %v2225 = vpop.f32.mrb[0].mxu0
      %v2226 = vadd.f32 %v2065, %v2225
      %v2227 = vpop.f32.mrb[0].mxu0
      %2228 = vmatprep.mubr.bf16.mxu0 %v1007
      %2229 = vmatmul.mubr.bf16.gmra.mrb[0].mxu0 %v1006
      %v2230 = vpop.f32.mrb[0].mxu0
      %v2231 = vadd.f32 %v2070, %v2230
      %v2232 = vpop.f32.mrb[0].mxu0
      %v2233 = vpop.f32.mrb[0].mxu0
      %v2234 = vadd.f32 %v2073, %v2233
      %v2235 = vpop.f32.mrb[0].mxu0
      %2236 = vmatprep.mubr.bf16.mxu0 %v1016
      %2237 = vmatmul.mubr.bf16.gmra.mrb[0].mxu0 %v1015
      %v2238 = vpop.f32.mrb[0].mxu0
      %v2239 = vadd.f32 %v2078, %v2238
      %v2240 = vpop.f32.mrb[0].mxu0
      %v2241 = vpop.f32.mrb[0].mxu0
      %v2242 = vadd.f32 %v2081, %v2241
      %v2243 = vpop.f32.mrb[0].mxu0
      %2244 = vmatprep.mubr.bf16.mxu0 %v1025
      %2245 = vmatmul.mubr.bf16.gmra.mrb[0].mxu0 %v1024
      %v2246 = vpop.f32.mrb[0].mxu0
      %v2247 = vadd.f32 %v2086, %v2246
      %v2248 = vpop.f32.mrb[0].mxu0
      %v2249 = vpop.f32.mrb[0].mxu0
      %v2250 = vadd.f32 %v2089, %v2249
      %v2251 = vpop.f32.mrb[0].mxu0
      %2252 = vmatprep.mubr.bf16.mxu0 %v1034
      %2253 = vmatmul.mubr.bf16.gmra.mrb[0].mxu0 %v1033
      %v2254 = vpop.f32.mrb[0].mxu0
      %v2255 = vadd.f32 %v2094, %v2254
      %v2256 = vpop.f32.mrb[0].mxu0
      %v2257 = vpop.f32.mrb[0].mxu0
      %v2258 = vadd.f32 %v2097, %v2257
      %v2259 = vpop.f32.mrb[0].mxu0
      %2260 = vmatprep.mubr.bf16.mxu0 %v1043
      %2261 = vmatmul.mubr.bf16.gmra.mrb[0].mxu0 %v1042
      %v2262 = vpop.f32.mrb[0].mxu0
      %v2263 = vadd.f32 %v2102, %v2262
      %v2264 = vpop.f32.mrb[0].mxu0
      %v2265 = vpop.f32.mrb[0].mxu0
      %v2266 = vadd.f32 %v2105, %v2265
      %v2267 = vpop.f32.mrb[0].mxu0
      %2268 = vmatprep.mubr.bf16.mxu0 %v1052
      %2269 = vmatmul.mubr.bf16.gmra.mrb[0].mxu0 %v1051
      %v2270 = vpop.f32.mrb[0].mxu0
      %v2271 = vadd.f32 %v2110, %v2270
      %v2272 = vpop.f32.mrb[0].mxu0
      %v2273 = vpop.f32.mrb[0].mxu0
      %v2274 = vadd.f32 %v2113, %v2273
      %v2275 = vpop.f32.mrb[0].mxu0
      %2276 = vmatprep.mubr.bf16.mxu0 %v1061
      %2277 = vmatmul.mubr.bf16.gmra.mrb[0].mxu0 %v1060
      %v2278 = vpop.f32.mrb[0].mxu0
      %v2279 = vadd.f32 %v2118, %v2278
      %v2280 = vpop.f32.mrb[0].mxu0
      %v2281 = vpop.f32.mrb[0].mxu0
      %v2282 = vadd.f32 %v2121, %v2281
      %v2283 = vpop.f32.mrb[0].mxu0
      %2284 = vmatprep.mubr.bf16.mxu0 %v1070
      %2285 = vmatmul.mubr.bf16.gmra.mrb[0].mxu0 %v1069
      %v2286 = vpop.f32.mrb[0].mxu0
      %v2287 = vadd.f32 %v2126, %v2286
      %v2288 = vpop.f32.mrb[0].mxu0
      %v2289 = vpop.f32.mrb[0].mxu0
      %v2290 = vadd.f32 %v2129, %v2289
      %v2291 = vpop.f32.mrb[0].mxu0
      %2292 = vmatprep.mubr.bf16.mxu0 %v1079
      %2293 = vmatmul.mubr.bf16.gmra.mrb[0].mxu0 %v1078
      %v2294 = vpop.f32.mrb[0].mxu0
      %v2295 = vadd.f32 %v2134, %v2294
      %v2296 = vpop.f32.mrb[0].mxu0
      %v2297 = vpop.f32.mrb[0].mxu0
      %v2298 = vadd.f32 %v2137, %v2297
      %v2299 = vpop.f32.mrb[0].mxu0
      %2300 = vdwg.mxu0
      %2301 = vmatprep.subr.bf16.mxu0 0
      %2302 = vmatpush1.bf16.msra.mxu0 %v1577
      %2303 = vmatprep.subr.bf16.mxu0 0
      %2304 = vmatpush1.bf16.msra.mxu0 %v1578
      %2305 = vmatprep.subr.bf16.mxu0 0
      %2306 = vmatpush1.bf16.msra.mxu0 %v1579
      %2307 = vmatprep.subr.bf16.mxu0 0
      %2308 = vmatpush1.bf16.msra.mxu0 %v1580
      %2309 = vmatprep.subr.bf16.mxu0 0
      %2310 = vmatpush1.bf16.msra.mxu0 %v1581
      %2311 = vmatprep.subr.bf16.mxu0 0
      %2312 = vmatpush1.bf16.msra.mxu0 %v1582
      %2313 = vmatprep.subr.bf16.mxu0 0
      %2314 = vmatpush1.bf16.msra.mxu0 %v1583
      %2315 = vmatprep.subr.bf16.mxu0 0
      %2316 = vmatpush1.bf16.msra.mxu0 %v1584
      %2317 = vmatprep.subr.bf16.mxu0 0
      %2318 = vmatpush1.bf16.msra.mxu0 0
      %2319 = vmatprep.subr.bf16.mxu0 0
      %2320 = vmatpush1.bf16.msra.mxu0 0
      %2321 = vmatprep.subr.bf16.mxu0 0
      %2322 = vmatpush1.bf16.msra.mxu0 0
      %2323 = vmatprep.subr.bf16.mxu0 0
      %2324 = vmatpush1.bf16.msra.mxu0 0
      %2325 = vmatprep.subr.bf16.mxu0 0
      %2326 = vmatpush1.bf16.msra.mxu0 0
      %2327 = vmatprep.subr.bf16.mxu0 0
      %2328 = vmatpush1.bf16.msra.mxu0 0
      %2329 = vmatprep.subr.bf16.mxu0 0
      %2330 = vmatpush1.bf16.msra.mxu0 0
      %2331 = vmatprep.subr.bf16.mxu0 0
      %2332 = vmatpush1.bf16.msra.mxu0 0
      %2333 = vmatprep.mubr.bf16.mxu0 0
      %2334 = vmatmul.mubr.bf16.gmra.mrb[0].mxu0 %v945
      %v2335 = vpop.f32.mrb[0].mxu0
      %v2336 = vadd.f32 %v2175, %v2335
      %v2337 = vpop.f32.mrb[0].mxu0
      %v2338 = vpop.f32.mrb[0].mxu0
      %v2339 = vadd.f32 %v2178, %v2338
      %v2340 = vpop.f32.mrb[0].mxu0
      %2341 = vmatprep.mubr.bf16.mxu0 0
      %2342 = vmatmul.mubr.bf16.gmra.mrb[0].mxu0 %v954
      %v2343 = vpop.f32.mrb[0].mxu0
      %v2344 = vadd.f32 %v2183, %v2343
      %v2345 = vpop.f32.mrb[0].mxu0
      %v2346 = vpop.f32.mrb[0].mxu0
      %v2347 = vadd.f32 %v2186, %v2346
      %v2348 = vpop.f32.mrb[0].mxu0
      %2349 = vmatprep.mubr.bf16.mxu0 0
      %2350 = vmatmul.mubr.bf16.gmra.mrb[0].mxu0 %v963
      %v2351 = vpop.f32.mrb[0].mxu0
      %v2352 = vadd.f32 %v2191, %v2351
      %v2353 = vpop.f32.mrb[0].mxu0
      %v2354 = vpop.f32.mrb[0].mxu0
      %v2355 = vadd.f32 %v2194, %v2354
      %v2356 = vpop.f32.mrb[0].mxu0
      %2357 = vmatprep.mubr.bf16.mxu0 0
      %2358 = vmatmul.mubr.bf16.gmra.mrb[0].mxu0 %v972
      %v2359 = vpop.f32.mrb[0].mxu0
      %v2360 = vadd.f32 %v2199, %v2359
      %v2361 = vpop.f32.mrb[0].mxu0
      %v2362 = vpop.f32.mrb[0].mxu0
      %v2363 = vadd.f32 %v2202, %v2362
      %v2364 = vpop.f32.mrb[0].mxu0
      %2365 = vmatprep.mubr.bf16.mxu0 0
      %2366 = vmatmul.mubr.bf16.gmra.mrb[0].mxu0 %v981
      %v2367 = vpop.f32.mrb[0].mxu0
      %v2368 = vadd.f32 %v2207, %v2367
      %v2369 = vpop.f32.mrb[0].mxu0
      %v2370 = vpop.f32.mrb[0].mxu0
      %v2371 = vadd.f32 %v2210, %v2370
      %v2372 = vpop.f32.mrb[0].mxu0
      %2373 = vmatprep.mubr.bf16.mxu0 0
      %2374 = vmatmul.mubr.bf16.gmra.mrb[0].mxu0 %v990
      %v2375 = vpop.f32.mrb[0].mxu0
      %v2376 = vadd.f32 %v2215, %v2375
      %v2377 = vpop.f32.mrb[0].mxu0
      %v2378 = vpop.f32.mrb[0].mxu0
      %v2379 = vadd.f32 %v2218, %v2378
      %v2380 = vpop.f32.mrb[0].mxu0
      %2381 = vmatprep.mubr.bf16.mxu0 0
      %2382 = vmatmul.mubr.bf16.gmra.mrb[0].mxu0 %v999
      %v2383 = vpop.f32.mrb[0].mxu0
      %v2384 = vadd.f32 %v2223, %v2383
      %v2385 = vpop.f32.mrb[0].mxu0
      %v2386 = vpop.f32.mrb[0].mxu0
      %v2387 = vadd.f32 %v2226, %v2386
      %v2388 = vpop.f32.mrb[0].mxu0
      %2389 = vmatprep.mubr.bf16.mxu0 0
      %2390 = vmatmul.mubr.bf16.gmra.mrb[0].mxu0 %v1008
      %v2391 = vpop.f32.mrb[0].mxu0
      %v2392 = vadd.f32 %v2231, %v2391
      %v2393 = vpop.f32.mrb[0].mxu0
      %v2394 = vpop.f32.mrb[0].mxu0
      %v2395 = vadd.f32 %v2234, %v2394
      %v2396 = vpop.f32.mrb[0].mxu0
      %2397 = vmatprep.mubr.bf16.mxu0 0
      %2398 = vmatmul.mubr.bf16.gmra.mrb[0].mxu0 %v1017
      %v2399 = vpop.f32.mrb[0].mxu0
      %v2400 = vadd.f32 %v2239, %v2399
      %v2401 = vpop.f32.mrb[0].mxu0
      %v2402 = vpop.f32.mrb[0].mxu0
      %v2403 = vadd.f32 %v2242, %v2402
      %v2404 = vpop.f32.mrb[0].mxu0
      %2405 = vmatprep.mubr.bf16.mxu0 0
      %2406 = vmatmul.mubr.bf16.gmra.mrb[0].mxu0 %v1026
      %v2407 = vpop.f32.mrb[0].mxu0
      %v2408 = vadd.f32 %v2247, %v2407
      %v2409 = vpop.f32.mrb[0].mxu0
      %v2410 = vpop.f32.mrb[0].mxu0
      %v2411 = vadd.f32 %v2250, %v2410
      %v2412 = vpop.f32.mrb[0].mxu0
      %2413 = vmatprep.mubr.bf16.mxu0 0
      %2414 = vmatmul.mubr.bf16.gmra.mrb[0].mxu0 %v1035
      %v2415 = vpop.f32.mrb[0].mxu0
      %v2416 = vadd.f32 %v2255, %v2415
      %v2417 = vpop.f32.mrb[0].mxu0
      %v2418 = vpop.f32.mrb[0].mxu0
      %v2419 = vadd.f32 %v2258, %v2418
      %v2420 = vpop.f32.mrb[0].mxu0
      %2421 = vmatprep.mubr.bf16.mxu0 0
      %2422 = vmatmul.mubr.bf16.gmra.mrb[0].mxu0 %v1044
      %v2423 = vpop.f32.mrb[0].mxu0
      %v2424 = vadd.f32 %v2263, %v2423
      %v2425 = vpop.f32.mrb[0].mxu0
      %v2426 = vpop.f32.mrb[0].mxu0
      %v2427 = vadd.f32 %v2266, %v2426
      %v2428 = vpop.f32.mrb[0].mxu0
      %2429 = vmatprep.mubr.bf16.mxu0 0
      %2430 = vmatmul.mubr.bf16.gmra.mrb[0].mxu0 %v1053
      %v2431 = vpop.f32.mrb[0].mxu0
      %v2432 = vadd.f32 %v2271, %v2431
      %v2433 = vpop.f32.mrb[0].mxu0
      %v2434 = vpop.f32.mrb[0].mxu0
      %v2435 = vadd.f32 %v2274, %v2434
      %v2436 = vpop.f32.mrb[0].mxu0
      %2437 = vmatprep.mubr.bf16.mxu0 0
      %2438 = vmatmul.mubr.bf16.gmra.mrb[0].mxu0 %v1062
      %v2439 = vpop.f32.mrb[0].mxu0
      %v2440 = vadd.f32 %v2279, %v2439
      %v2441 = vpop.f32.mrb[0].mxu0
      %v2442 = vpop.f32.mrb[0].mxu0
      %v2443 = vadd.f32 %v2282, %v2442
      %v2444 = vpop.f32.mrb[0].mxu0
      %2445 = vmatprep.mubr.bf16.mxu0 0
      %2446 = vmatmul.mubr.bf16.gmra.mrb[0].mxu0 %v1071
      %v2447 = vpop.f32.mrb[0].mxu0
      %v2448 = vadd.f32 %v2287, %v2447
      %v2449 = vpop.f32.mrb[0].mxu0
      %v2450 = vpop.f32.mrb[0].mxu0
      %v2451 = vadd.f32 %v2290, %v2450
      %v2452 = vpop.f32.mrb[0].mxu0
      %2453 = vmatprep.mubr.bf16.mxu0 0
      %2454 = vmatmul.mubr.bf16.gmra.mrb[0].mxu0 %v1080
      %v2455 = vpop.f32.mrb[0].mxu0
      %v2456 = vadd.f32 %v2295, %v2455
      %v2457 = vpop.f32.mrb[0].mxu0
      %v2458 = vpop.f32.mrb[0].mxu0
      %v2459 = vadd.f32 %v2298, %v2458
      %v2460 = vpop.f32.mrb[0].mxu0
      %2461 = vdwg.mxu0
      %v2462 = vmul.f32 %v2336, 0.5
      %v2463 = vmul.f32 %v2339, 0.5
      %v2464 = vmul.f32 %v2344, 0.5
      %v2465 = vmul.f32 %v2347, 0.5
      %v2466 = vmul.f32 %v2352, 0.5
      %v2467 = vmul.f32 %v2355, 0.5
      %v2468 = vmul.f32 %v2360, 0.5
      %v2469 = vmul.f32 %v2363, 0.5
      %v2470 = vmul.f32 %v2368, 0.5
      %v2471 = vmul.f32 %v2371, 0.5
      %v2472 = vmul.f32 %v2376, 0.5
      %v2473 = vmul.f32 %v2379, 0.5
      %v2474 = vmul.f32 %v2384, 0.5
      %v2475 = vmul.f32 %v2387, 0.5
      %v2476 = vmul.f32 %v2392, 0.5
      %v2477 = vmul.f32 %v2395, 0.5
      %v2478 = vmul.f32 %v2400, 0.5
      %v2479 = vmul.f32 %v2403, 0.5
      %v2480 = vmul.f32 %v2408, 0.5
      %v2481 = vmul.f32 %v2411, 0.5
      %v2482 = vmul.f32 %v2416, 0.5
      %v2483 = vmul.f32 %v2419, 0.5
      %v2484 = vmul.f32 %v2424, 0.5
      %v2485 = vmul.f32 %v2427, 0.5
      %v2486 = vmul.f32 %v2432, 0.5
      %v2487 = vmul.f32 %v2435, 0.5
      %v2488 = vmul.f32 %v2440, 0.5
      %v2489 = vmul.f32 %v2443, 0.5
      %v2490 = vmul.f32 %v2448, 0.5
      %v2491 = vmul.f32 %v2451, 0.5
      %v2492 = vmul.f32 %v2456, 0.5
      %v2493 = vmul.f32 %v2459, 0.5
      %v2494 = vmul.f32 %v2336, 0.044715
      %v2495 = vmul.f32 %v2339, 0.044715
      %v2496 = vmul.f32 %v2344, 0.044715
      %v2497 = vmul.f32 %v2347, 0.044715
      %v2498 = vmul.f32 %v2352, 0.044715
      %v2499 = vmul.f32 %v2355, 0.044715
      %v2500 = vmul.f32 %v2360, 0.044715
      %v2501 = vmul.f32 %v2363, 0.044715
      %v2502 = vmul.f32 %v2368, 0.044715
      %v2503 = vmul.f32 %v2371, 0.044715
      %v2504 = vmul.f32 %v2376, 0.044715
      %v2505 = vmul.f32 %v2379, 0.044715
      %v2506 = vmul.f32 %v2384, 0.044715
      %v2507 = vmul.f32 %v2387, 0.044715
      %v2508 = vmul.f32 %v2392, 0.044715
      %v2509 = vmul.f32 %v2395, 0.044715
      %v2510 = vmul.f32 %v2400, 0.044715
      %v2511 = vmul.f32 %v2403, 0.044715
      %v2512 = vmul.f32 %v2408, 0.044715
      %v2513 = vmul.f32 %v2411, 0.044715
      %v2514 = vmul.f32 %v2416, 0.044715
      %v2515 = vmul.f32 %v2419, 0.044715
      %v2516 = vmul.f32 %v2424, 0.044715
      %v2517 = vmul.f32 %v2427, 0.044715
      %v2518 = vmul.f32 %v2432, 0.044715
      %v2519 = vmul.f32 %v2435, 0.044715
      %v2520 = vmul.f32 %v2440, 0.044715
      %v2521 = vmul.f32 %v2443, 0.044715
      %v2522 = vmul.f32 %v2448, 0.044715
      %v2523 = vmul.f32 %v2451, 0.044715
      %v2524 = vmul.f32 %v2456, 0.044715
      %v2525 = vmul.f32 %v2459, 0.044715
      %v2526 = vmul.f32 %v2494, %v2336
      %v2527 = vmul.f32 %v2495, %v2339
      %v2528 = vmul.f32 %v2496, %v2344
      %v2529 = vmul.f32 %v2497, %v2347
      %v2530 = vmul.f32 %v2498, %v2352
      %v2531 = vmul.f32 %v2499, %v2355
      %v2532 = vmul.f32 %v2500, %v2360
      %v2533 = vmul.f32 %v2501, %v2363
      %v2534 = vmul.f32 %v2502, %v2368
      %v2535 = vmul.f32 %v2503, %v2371
      %v2536 = vmul.f32 %v2504, %v2376
      %v2537 = vmul.f32 %v2505, %v2379
      %v2538 = vmul.f32 %v2506, %v2384
      %v2539 = vmul.f32 %v2507, %v2387
      %v2540 = vmul.f32 %v2508, %v2392
      %v2541 = vmul.f32 %v2509, %v2395
      %v2542 = vmul.f32 %v2510, %v2400
      %v2543 = vmul.f32 %v2511, %v2403
      %v2544 = vmul.f32 %v2512, %v2408
      %v2545 = vmul.f32 %v2513, %v2411
      %v2546 = vmul.f32 %v2514, %v2416
      %v2547 = vmul.f32 %v2515, %v2419
      %v2548 = vmul.f32 %v2516, %v2424
      %v2549 = vmul.f32 %v2517, %v2427
      %v2550 = vmul.f32 %v2518, %v2432
      %v2551 = vmul.f32 %v2519, %v2435
      %v2552 = vmul.f32 %v2520, %v2440
      %v2553 = vmul.f32 %v2521, %v2443
      %v2554 = vmul.f32 %v2522, %v2448
      %v2555 = vmul.f32 %v2523, %v2451
      %v2556 = vmul.f32 %v2524, %v2456
      %v2557 = vmul.f32 %v2525, %v2459
      %v2558 = vmul.f32 %v2526, %v2336
      %v2559 = vmul.f32 %v2527, %v2339
      %v2560 = vmul.f32 %v2528, %v2344
      %v2561 = vmul.f32 %v2529, %v2347
      %v2562 = vmul.f32 %v2530, %v2352
      %v2563 = vmul.f32 %v2531, %v2355
      %v2564 = vmul.f32 %v2532, %v2360
      %v2565 = vmul.f32 %v2533, %v2363
      %v2566 = vmul.f32 %v2534, %v2368
      %v2567 = vmul.f32 %v2535, %v2371
      %v2568 = vmul.f32 %v2536, %v2376
      %v2569 = vmul.f32 %v2537, %v2379
      %v2570 = vmul.f32 %v2538, %v2384
      %v2571 = vmul.f32 %v2539, %v2387
      %v2572 = vmul.f32 %v2540, %v2392
      %v2573 = vmul.f32 %v2541, %v2395
      %v2574 = vmul.f32 %v2542, %v2400
      %v2575 = vmul.f32 %v2543, %v2403
      %v2576 = vmul.f32 %v2544, %v2408
      %v2577 = vmul.f32 %v2545, %v2411
      %v2578 = vmul.f32 %v2546, %v2416
      %v2579 = vmul.f32 %v2547, %v2419
      %v2580 = vmul.f32 %v2548, %v2424
      %v2581 = vmul.f32 %v2549, %v2427
      %v2582 = vmul.f32 %v2550, %v2432
      %v2583 = vmul.f32 %v2551, %v2435
      %v2584 = vmul.f32 %v2552, %v2440
      %v2585 = vmul.f32 %v2553, %v2443
      %v2586 = vmul.f32 %v2554, %v2448
      %v2587 = vmul.f32 %v2555, %v2451
      %v2588 = vmul.f32 %v2556, %v2456
      %v2589 = vmul.f32 %v2557, %v2459
      %v2590 = vadd.f32 %v2336, %v2558
      %v2591 = vadd.f32 %v2339, %v2559
      %v2592 = vadd.f32 %v2344, %v2560
      %v2593 = vadd.f32 %v2347, %v2561
      %v2594 = vadd.f32 %v2352, %v2562
      %v2595 = vadd.f32 %v2355, %v2563
      %v2596 = vadd.f32 %v2360, %v2564
      %v2597 = vadd.f32 %v2363, %v2565
      %v2598 = vadd.f32 %v2368, %v2566
      %v2599 = vadd.f32 %v2371, %v2567
      %v2600 = vadd.f32 %v2376, %v2568
      %v2601 = vadd.f32 %v2379, %v2569
      %v2602 = vadd.f32 %v2384, %v2570
      %v2603 = vadd.f32 %v2387, %v2571
      %v2604 = vadd.f32 %v2392, %v2572
      %v2605 = vadd.f32 %v2395, %v2573
      %v2606 = vadd.f32 %v2400, %v2574
      %v2607 = vadd.f32 %v2403, %v2575
      %v2608 = vadd.f32 %v2408, %v2576
      %v2609 = vadd.f32 %v2411, %v2577
      %v2610 = vadd.f32 %v2416, %v2578
      %v2611 = vadd.f32 %v2419, %v2579
      %v2612 = vadd.f32 %v2424, %v2580
      %v2613 = vadd.f32 %v2427, %v2581
      %v2614 = vadd.f32 %v2432, %v2582
      %v2615 = vadd.f32 %v2435, %v2583
      %v2616 = vadd.f32 %v2440, %v2584
      %v2617 = vadd.f32 %v2443, %v2585
      %v2618 = vadd.f32 %v2448, %v2586
      %v2619 = vadd.f32 %v2451, %v2587
      %v2620 = vadd.f32 %v2456, %v2588
      %v2621 = vadd.f32 %v2459, %v2589
      %v2622 = vmul.f32 %v2590, 0.7978846
      %v2623 = vmul.f32 %v2591, 0.7978846
      %v2624 = vmul.f32 %v2592, 0.7978846
      %v2625 = vmul.f32 %v2593, 0.7978846
      %v2626 = vmul.f32 %v2594, 0.7978846
      %v2627 = vmul.f32 %v2595, 0.7978846
      %v2628 = vmul.f32 %v2596, 0.7978846
      %v2629 = vmul.f32 %v2597, 0.7978846
      %v2630 = vmul.f32 %v2598, 0.7978846
      %v2631 = vmul.f32 %v2599, 0.7978846
      %v2632 = vmul.f32 %v2600, 0.7978846
      %v2633 = vmul.f32 %v2601, 0.7978846
      %v2634 = vmul.f32 %v2602, 0.7978846
      %v2635 = vmul.f32 %v2603, 0.7978846
      %v2636 = vmul.f32 %v2604, 0.7978846
      %v2637 = vmul.f32 %v2605, 0.7978846
      %v2638 = vmul.f32 %v2606, 0.7978846
      %v2639 = vmul.f32 %v2607, 0.7978846
      %v2640 = vmul.f32 %v2608, 0.7978846
      %v2641 = vmul.f32 %v2609, 0.7978846
      %v2642 = vmul.f32 %v2610, 0.7978846
      %v2643 = vmul.f32 %v2611, 0.7978846
      %v2644 = vmul.f32 %v2612, 0.7978846
      %v2645 = vmul.f32 %v2613, 0.7978846
      %v2646 = vmul.f32 %v2614, 0.7978846
      %v2647 = vmul.f32 %v2615, 0.7978846
      %v2648 = vmul.f32 %v2616, 0.7978846
      %v2649 = vmul.f32 %v2617, 0.7978846
      %v2650 = vmul.f32 %v2618, 0.7978846
      %v2651 = vmul.f32 %v2619, 0.7978846
      %v2652 = vmul.f32 %v2620, 0.7978846
      %v2653 = vmul.f32 %v2621, 0.7978846
      %v2654 = vtanh.pop %v2622
      %v2655 = vtanh.pop %v2623
      %v2656 = vtanh.pop %v2624
      %v2657 = vtanh.pop %v2625
      %v2658 = vtanh.pop %v2626
      %v2659 = vtanh.pop %v2627
      %v2660 = vtanh.pop %v2628
      %v2661 = vtanh.pop %v2629
      %v2662 = vtanh.pop %v2630
      %v2663 = vtanh.pop %v2631
      %v2664 = vtanh.pop %v2632
      %v2665 = vtanh.pop %v2633
      %v2666 = vtanh.pop %v2634
      %v2667 = vtanh.pop %v2635
      %v2668 = vtanh.pop %v2636
      %v2669 = vtanh.pop %v2637
      %v2670 = vtanh.pop %v2638
      %v2671 = vtanh.pop %v2639
      %v2672 = vtanh.pop %v2640
      %v2673 = vtanh.pop %v2641
      %v2674 = vtanh.pop %v2642
      %v2675 = vtanh.pop %v2643
      %v2676 = vtanh.pop %v2644
      %v2677 = vtanh.pop %v2645
      %v2678 = vtanh.pop %v2646
      %v2679 = vtanh.pop %v2647
      %v2680 = vtanh.pop %v2648
      %v2681 = vtanh.pop %v2649
      %v2682 = vtanh.pop %v2650
      %v2683 = vtanh.pop %v2651
      %v2684 = vtanh.pop %v2652
      %v2685 = vtanh.pop %v2653
      %v2686 = vadd.f32 %v2654, 1.0
      %v2687 = vadd.f32 %v2655, 1.0
      %v2688 = vadd.f32 %v2656, 1.0
      %v2689 = vadd.f32 %v2657, 1.0
      %v2690 = vadd.f32 %v2658, 1.0
      %v2691 = vadd.f32 %v2659, 1.0
      %v2692 = vadd.f32 %v2660, 1.0
      %v2693 = vadd.f32 %v2661, 1.0
      %v2694 = vadd.f32 %v2662, 1.0
      %v2695 = vadd.f32 %v2663, 1.0
      %v2696 = vadd.f32 %v2664, 1.0
      %v2697 = vadd.f32 %v2665, 1.0
      %v2698 = vadd.f32 %v2666, 1.0
      %v2699 = vadd.f32 %v2667, 1.0
      %v2700 = vadd.f32 %v2668, 1.0
      %v2701 = vadd.f32 %v2669, 1.0
      %v2702 = vadd.f32 %v2670, 1.0
      %v2703 = vadd.f32 %v2671, 1.0
      %v2704 = vadd.f32 %v2672, 1.0
      %v2705 = vadd.f32 %v2673, 1.0
      %v2706 = vadd.f32 %v2674, 1.0
      %v2707 = vadd.f32 %v2675, 1.0
      %v2708 = vadd.f32 %v2676, 1.0
      %v2709 = vadd.f32 %v2677, 1.0
      %v2710 = vadd.f32 %v2678, 1.0
      %v2711 = vadd.f32 %v2679, 1.0
      %v2712 = vadd.f32 %v2680, 1.0
      %v2713 = vadd.f32 %v2681, 1.0
      %v2714 = vadd.f32 %v2682, 1.0
      %v2715 = vadd.f32 %v2683, 1.0
      %v2716 = vadd.f32 %v2684, 1.0
      %v2717 = vadd.f32 %v2685, 1.0
      %v2718 = vmul.f32 %v2462, %v2686
      %v2719 = vmul.f32 %v2463, %v2687
      %v2720 = vmul.f32 %v2464, %v2688
      %v2721 = vmul.f32 %v2465, %v2689
      %v2722 = vmul.f32 %v2466, %v2690
      %v2723 = vmul.f32 %v2467, %v2691
      %v2724 = vmul.f32 %v2468, %v2692
      %v2725 = vmul.f32 %v2469, %v2693
      %v2726 = vmul.f32 %v2470, %v2694
      %v2727 = vmul.f32 %v2471, %v2695
      %v2728 = vmul.f32 %v2472, %v2696
      %v2729 = vmul.f32 %v2473, %v2697
      %v2730 = vmul.f32 %v2474, %v2698
      %v2731 = vmul.f32 %v2475, %v2699
      %v2732 = vmul.f32 %v2476, %v2700
      %v2733 = vmul.f32 %v2477, %v2701
      %v2734 = vmul.f32 %v2478, %v2702
      %v2735 = vmul.f32 %v2479, %v2703
      %v2736 = vmul.f32 %v2480, %v2704
      %v2737 = vmul.f32 %v2481, %v2705
      %v2738 = vmul.f32 %v2482, %v2706
      %v2739 = vmul.f32 %v2483, %v2707
      %v2740 = vmul.f32 %v2484, %v2708
      %v2741 = vmul.f32 %v2485, %v2709
      %v2742 = vmul.f32 %v2486, %v2710
      %v2743 = vmul.f32 %v2487, %v2711
      %v2744 = vmul.f32 %v2488, %v2712
      %v2745 = vmul.f32 %v2489, %v2713
      %v2746 = vmul.f32 %v2490, %v2714
      %v2747 = vmul.f32 %v2491, %v2715
      %v2748 = vmul.f32 %v2492, %v2716
      %v2749 = vmul.f32 %v2493, %v2717
      %2750 = vst [vmem:[%s175] sm:$0xff] %v2718
      %2751 = vst [vmem:[%s175 + $0x8] sm:$0xff] %v2719
      %2752 = vst [vmem:[%s175 + $0x10] sm:$0xff] %v2720
      %2753 = vst [vmem:[%s175 + $0x18] sm:$0xff] %v2721
      %2754 = vst [vmem:[%s175 + $0x20] sm:$0xff] %v2722
      %2755 = vst [vmem:[%s175 + $0x28] sm:$0xff] %v2723
      %2756 = vst [vmem:[%s175 + $0x30] sm:$0xff] %v2724
      %2757 = vst [vmem:[%s175 + $0x38] sm:$0xff] %v2725
      %2758 = vst [vmem:[%s175 + $0x40] sm:$0xff] %v2726
      %2759 = vst [vmem:[%s175 + $0x48] sm:$0xff] %v2727
      %2760 = vst [vmem:[%s175 + $0x50] sm:$0xff] %v2728
      %2761 = vst [vmem:[%s175 + $0x58] sm:$0xff] %v2729
      %2762 = vst [vmem:[%s175 + $0x60] sm:$0xff] %v2730
      %2763 = vst [vmem:[%s175 + $0x68] sm:$0xff] %v2731
      %2764 = vst [vmem:[%s175 + $0x70] sm:$0xff] %v2732
      %2765 = vst [vmem:[%s175 + $0x78] sm:$0xff] %v2733
      %2766 = vst [vmem:[%s175 + $0x80] sm:$0xff] %v2734
      %2767 = vst [vmem:[%s175 + $0x88] sm:$0xff] %v2735
      %2768 = vst [vmem:[%s175 + $0x90] sm:$0xff] %v2736
      %2769 = vst [vmem:[%s175 + $0x98] sm:$0xff] %v2737
      %2770 = vst [vmem:[%s175 + $0xa0] sm:$0xff] %v2738
      %2771 = vst [vmem:[%s175 + $0xa8] sm:$0xff] %v2739
      %2772 = vst [vmem:[%s175 + $0xb0] sm:$0xff] %v2740
      %2773 = vst [vmem:[%s175 + $0xb8] sm:$0xff] %v2741
      %2774 = vst [vmem:[%s175 + $0xc0] sm:$0xff] %v2742
      %2775 = vst [vmem:[%s175 + $0xc8] sm:$0xff] %v2743
      %2776 = vst [vmem:[%s175 + $0xd0] sm:$0xff] %v2744
      %2777 = vst [vmem:[%s175 + $0xd8] sm:$0xff] %v2745
      %2778 = vst [vmem:[%s175 + $0xe0] sm:$0xff] %v2746
      %2779 = vst [vmem:[%s175 + $0xe8] sm:$0xff] %v2747
      %2780 = vst [vmem:[%s175 + $0xf0] sm:$0xff] %v2748
      %2781 = vst [vmem:[%s175 + $0xf8] sm:$0xff] %v2749
      %s2782 = smul.u32 32, %s14
      %p2783 = scmp.lt.s32.totalorder %s2782, 415
      %s2784 = scalar_select %p2783, %s2782, 415
      %s2785 = smul.addr %s2784, 8
      %s2786 = scalar_lea.vmem %s3, %s2785
      // Predicated region
      $region33: #{_lambda_.9} parent=31 // pred_check
        %p2787 = pneg %p100
      $region34: #{_lambda_.9} parent=31 // pred_check_branch
        %2789 = sbr.rel (%p2787) target = $region36
      $region35: #{_lambda_.9} parent=31 // pred_region
        %s2790 = smul.u32 32, %s14
      $region36: #{_lambda_.9} parent=31 // pred_fallthru
        _
    $region32: #{_lambda_.9} parent=5 // pred_fallthru
      _
    %p2791 = scmp.le.s32.totalorder 2, %s9
    // Predicated region
    $region37: #{_lambda_.9} parent=5 // pred_check
      %p2792 = pneg %p2791
    $region38: #{_lambda_.9} parent=5 // pred_check_branch
      %2794 = sbr.rel (%p2792) target = $region40
    $region39: #{_lambda_.9} parent=5 // pred_region
      %s2795 = ssub.s32 %s9, 2
      // Predicated region
      $region41: #{_lambda_.9} parent=39 // pred_check
        %p2796 = pneg %p106
      $region42: #{_lambda_.9} parent=39 // pred_check_branch
        %2798 = sbr.rel (%p2796) target = $region44
      $region43: #{_lambda_.9} parent=39 // pred_region
        %s2799 = smul.u32 32, %s15
        %p2800 = scmp.lt.s32.totalorder %s2799, 415
        %s2801 = scalar_select %p2800, %s2799, 415
        %s2802 = smul.addr %s2801, 8
        %s2803 = scalar_lea.vmem %s3, %s2802
      $region44: #{_lambda_.9} parent=39 // pred_fallthru
        _
    $region40: #{_lambda_.9} parent=5 // pred_fallthru
      _
  $region6: #{_lambda_.9} parent=0 // loop_footer
    %s13 = sadd.s32 1, %s9
  $region7: #{_lambda_.9} parent=0 // loop_footer_branch
    %8 = sbr.rel target = $region3
  $region8: #{_lambda_.9} parent=0 // loop_exit
    _

// kernel: _lambda_.10
$region0: #{_lambda_.10}
  #allocation0 [shape = 'u32[]', space=smem, size = 0x4, offset = 0x4, fixed_abs, tag = 'smem constant byte address 0x4 - core index']
  #allocation1 [shape = 'u32[144,128]{1,0:T(1,128)}', space=vmem, size = 0x12000, scoped, tag = 'internal scratch']
  %s0 = inlined_call_operand.vmem [shape: bf16[768,640], index: 0, kind: input, shape index: {}]
  %s1 = inlined_call_operand.vmem [shape: bf16[640,128], index: 1, kind: input, shape index: {}]
  %s2 = inlined_call_operand.vmem [shape: f32[1,128], index: 2, kind: input, shape index: {}]
  %s3 = inlined_call_operand.vmem [shape: f32[768,128], index: 3, kind: output, shape index: {}]
  %s4 = sld [smem:[#allocation0]]
  $region45: #{_lambda_.10} parent=0
    _
  %s6 = ssub.s32 1, %s4
  %s7 = scalar_select 0, %s6, %s4
  loop: start=0, step=1, limit=5
  $region2: #{_lambda_.10} parent=0 // loop_pre_header
    _
  $region3: #{_lambda_.10} parent=0 // loop_header
    %s9 = sphi 0, %s13
    %p10 = scmp.ge.s32.totalorder %s9, 5
    %s19 = sphi 0, %s21
    %s22 = sphi 0, %s19
    %s23 = sphi 0, %s22
    %s39 = sphi 0, %s23
    %s43 = sphi 0, %s43
    %s45 = sphi 0, %s43
    %s46 = sphi 0, %s45
    %s60 = sphi 0, %s46
    %s64 = sphi 0, %s64
    %s66 = sphi 0, %s64
    %s67 = sphi 0, %s66
    %s81 = sphi 0, %s67
    %s87 = sphi 0, %s89
    %s90 = sphi 0, %s87
    %s91 = sphi 0, %s90
    %s107 = sphi 0, %s91
  $region4: #{_lambda_.10} parent=0 // loop_header_branch
    %12 = sbr.rel (%p10) target = $region8
  $region5: #{_lambda_.10} parent=0 // loop_body
    %s14 = ssub.s32 %s9, 1
    %s15 = ssub.s32 %s9, 2
    %s16 = sadd.s32 %s9, 1
    %s17 = ssub.s32 %s9, %s16
    %p18 = scmp.eq.s32.totalorder %s17, 0
    %s20 = sadd.s32 %s19, 1
    %s21 = scalar_select %p18, %s19, %s20
    %p24 = pneg %p18
    %p25 = scmp.eq.s32.totalorder %s9, 2
    %p26 = por %p24, %p25
    %p27 = scmp.ne.s32.totalorder %s19, %s22
    %p28 = scmp.eq.s32.totalorder %s9, 0
    %p29 = por %p27, %p28
    %p30 = scmp.ne.s32.totalorder %s19, %s22
    %p31 = scmp.eq.s32.totalorder %s14, 2
    %p32 = por %p30, %p31
    %p33 = scmp.ne.s32.totalorder %s22, %s23
    %p34 = scmp.eq.s32.totalorder %s14, 0
    %p35 = por %p33, %p34
    %p36 = scmp.ne.s32.totalorder %s22, %s23
    %p37 = scmp.eq.s32.totalorder %s15, 2
    %p38 = por %p36, %p37
    %p40 = scmp.ne.s32.totalorder %s23, %s39
    %p41 = scmp.eq.s32.totalorder %s15, 0
    %p42 = por %p40, %p41
    %s44 = sadd.s32 %s43, 1
    %p47 = scmp.eq.s32.totalorder %s9, 2
    %p48 = scmp.ne.s32.totalorder %s43, %s45
    %p49 = scmp.eq.s32.totalorder %s9, 0
    %p50 = por %p48, %p49
    %p51 = scmp.ne.s32.totalorder %s43, %s45
    %p52 = scmp.eq.s32.totalorder %s14, 2
    %p53 = por %p51, %p52
    %p54 = scmp.ne.s32.totalorder %s45, %s46
    %p55 = scmp.eq.s32.totalorder %s14, 0
    %p56 = por %p54, %p55
    %p57 = scmp.ne.s32.totalorder %s45, %s46
    %p58 = scmp.eq.s32.totalorder %s15, 2
    %p59 = por %p57, %p58
    %p61 = scmp.ne.s32.totalorder %s46, %s60
    %p62 = scmp.eq.s32.totalorder %s15, 0
    %p63 = por %p61, %p62
    %s65 = sadd.s32 %s64, 1
    %p68 = scmp.eq.s32.totalorder %s9, 2
    %p69 = scmp.ne.s32.totalorder %s64, %s66
    %p70 = scmp.eq.s32.totalorder %s9, 0
    %p71 = por %p69, %p70
    %p72 = scmp.ne.s32.totalorder %s64, %s66
    %p73 = scmp.eq.s32.totalorder %s14, 2
    %p74 = por %p72, %p73
    %p75 = scmp.ne.s32.totalorder %s66, %s67
    %p76 = scmp.eq.s32.totalorder %s14, 0
    %p77 = por %p75, %p76
    %p78 = scmp.ne.s32.totalorder %s66, %s67
    %p79 = scmp.eq.s32.totalorder %s15, 2
    %p80 = por %p78, %p79
    %p82 = scmp.ne.s32.totalorder %s67, %s81
    %p83 = scmp.eq.s32.totalorder %s15, 0
    %p84 = por %p82, %p83
    %s85 = ssub.s32 %s9, %s16
    %p86 = scmp.eq.s32.totalorder %s85, 0
    %s88 = sadd.s32 %s87, 1
    %s89 = scalar_select %p86, %s87, %s88
    %p92 = pneg %p86
    %p93 = scmp.eq.s32.totalorder %s9, 2
    %p94 = por %p92, %p93
    %p95 = scmp.ne.s32.totalorder %s87, %s90
    %p96 = scmp.eq.s32.totalorder %s9, 0
    %p97 = por %p95, %p96
    %p98 = scmp.ne.s32.totalorder %s87, %s90
    %p99 = scmp.eq.s32.totalorder %s14, 2
    %p100 = por %p98, %p99
    %p101 = scmp.ne.s32.totalorder %s90, %s91
    %p102 = scmp.eq.s32.totalorder %s14, 0
    %p103 = por %p101, %p102
    %p104 = scmp.ne.s32.totalorder %s90, %s91
    %p105 = scmp.eq.s32.totalorder %s15, 2
    %p106 = por %p104, %p105
    %p108 = scmp.ne.s32.totalorder %s91, %s107
    %p109 = scmp.eq.s32.totalorder %s15, 0
    %p110 = por %p108, %p109
    %p111 = scmp.le.s32.totalorder 1, %s9
    %p112 = scmp.lt.s32.totalorder %s9, 4
    %p113 = pnand %p111, %p112
    %p114 = pneg %p113
    // Predicated region
    $region9: #{_lambda_.10} parent=5 // pred_check
      _
    $region10: #{_lambda_.10} parent=5 // pred_check_branch
      %116 = sbr.rel (%p113) target = $region12
    $region11: #{_lambda_.10} parent=5 // pred_region
      %s117 = ssub.s32 %s9, 1
      // Predicated region
      $region13: #{_lambda_.10} parent=11 // pred_check
        %p118 = pneg %p56
      $region14: #{_lambda_.10} parent=11 // pred_check_branch
        %120 = sbr.rel (%p118) target = $region16
      $region15: #{_lambda_.10} parent=11 // pred_region
        _
      $region16: #{_lambda_.10} parent=11 // pred_fallthru
        _
      // Predicated region
      $region17: #{_lambda_.10} parent=11 // pred_check
        %p121 = pneg %p77
      $region18: #{_lambda_.10} parent=11 // pred_check_branch
        %123 = sbr.rel (%p121) target = $region20
      $region19: #{_lambda_.10} parent=11 // pred_region
        _
      $region20: #{_lambda_.10} parent=11 // pred_fallthru
        _
    $region12: #{_lambda_.10} parent=5 // pred_fallthru
      _
    %p124 = scmp.lt.s32.totalorder %s9, 3
    // Predicated region
    $region21: #{_lambda_.10} parent=5 // pred_check
      %p125 = pneg %p124
    $region22: #{_lambda_.10} parent=5 // pred_check_branch
      %127 = sbr.rel (%p125) target = $region24
    $region23: #{_lambda_.10} parent=5 // pred_region
      // Predicated region
      $region25: #{_lambda_.10} parent=23 // pred_check
        %p128 = pneg %p29
      $region26: #{_lambda_.10} parent=23 // pred_check_branch
        %130 = sbr.rel (%p128) target = $region28
      $region27: #{_lambda_.10} parent=23 // pred_region
        %s131 = smul.u32 32, %s9
        %p132 = scmp.lt.s32.totalorder %s131, 95
        %s133 = scalar_select %p132, %s131, 95
        %s134 = smul.addr %s133, 5
        %s135 = smul.addr %s134, 4
        %s136 = scalar_lea.vmem %s0, %s135
        %s137 = smul.u32 32, %s9
      $region28: #{_lambda_.10} parent=23 // pred_fallthru
        _
    $region24: #{_lambda_.10} parent=5 // pred_fallthru
      _
    %p138 = scmp.le.s32.totalorder 1, %s9
    %p139 = scmp.lt.s32.totalorder %s9, 4
    %p140 = pnand %p138, %p139
    %p141 = pneg %p140
    // Predicated region
    $region29: #{_lambda_.10} parent=5 // pred_check
      _
    $region30: #{_lambda_.10} parent=5 // pred_check_branch
      %143 = sbr.rel (%p140) target = $region32
    $region31: #{_lambda_.10} parent=5 // pred_region
      %s144 = ssub.s32 %s9, 1
      %s145 = smul.u32 32, %s14
      %p146 = scmp.lt.s32.totalorder %s145, 95
      %s147 = scalar_select %p146, %s145, 95
      %s148 = smul.addr %s147, 5
      %s149 = smul.addr %s148, 4
      %s150 = scalar_lea.vmem %s0, %s149
      %p151 = pneg %p35
      %p152 = pneg %p32
      %p153 = pneg %p56
      %p154 = pneg %p53
      %p155 = pneg %p77
      %p156 = pneg %p74
      %p157 = pneg %p103
      %p158 = pneg %p100
      %s159 = smul.u32 32, %s14
      %p160 = scmp.lt.s32.totalorder %s159, 95
      %s161 = scalar_select %p160, %s159, 95
      %s162 = smul.addr %s161, 8
      %s163 = scalar_lea.vmem %s3, %s162
      %s164 = smul.u32 32, %s14
      %p165 = scmp.lt.s32.totalorder %s164, 95
      %s166 = scalar_select %p165, %s164, 95
      %s167 = smul.addr %s166, 5
      %s168 = smul.addr %s167, 4
      %s169 = scalar_lea.vmem %s0, %s168
      %s170 = smul.u32 32, %s14
      %s171 = smul.u32 32, %s14
      %p172 = scmp.lt.s32.totalorder %s171, 95
      %s173 = scalar_select %p172, %s171, 95
      %s174 = smul.addr %s173, 8
      %s175 = scalar_lea.vmem %s3, %s174
      %s176 = smul.u32 32, %s14
      %v178 = vld [vmem:[%s169] sm:$0xff]
      %v179 = vld [vmem:[%s169 + $0x8] sm:$0xff]
      %v180 = vld [vmem:[%s169 + $0x10] sm:$0xf]
      %v181 = vld [vmem:[%s169 + $0x14] sm:$0xff]
      %v182 = vld [vmem:[%s169 + $0x1c] sm:$0xff]
      %v183 = vld [vmem:[%s169 + $0x24] sm:$0xf]
      %v184 = vld [vmem:[%s169 + $0x28] sm:$0xff]
      %v185 = vld [vmem:[%s169 + $0x30] sm:$0xff]
      %v186 = vld [vmem:[%s169 + $0x38] sm:$0xf]
      %v187 = vld [vmem:[%s169 + $0x3c] sm:$0xff]
      %v188 = vld [vmem:[%s169 + $0x44] sm:$0xff]
      %v189 = vld [vmem:[%s169 + $0x4c] sm:$0xf]
      %v190 = vld [vmem:[%s169 + $0x50] sm:$0xff]
      %v191 = vld [vmem:[%s169 + $0x58] sm:$0xff]
      %v192 = vld [vmem:[%s169 + $0x60] sm:$0xf]
      %v193 = vld [vmem:[%s169 + $0x64] sm:$0xff]
      %v194 = vld [vmem:[%s169 + $0x6c] sm:$0xff]
      %v195 = vld [vmem:[%s169 + $0x74] sm:$0xf]
      %v196 = vld [vmem:[%s169 + $0x78] sm:$0xff]
      %v197 = vld [vmem:[%s169 + $0x80] sm:$0xff]
      %v198 = vld [vmem:[%s169 + $0x88] sm:$0xf]
      %v199 = vld [vmem:[%s169 + $0x8c] sm:$0xff]
      %v200 = vld [vmem:[%s169 + $0x94] sm:$0xff]
      %v201 = vld [vmem:[%s169 + $0x9c] sm:$0xf]
      %v202 = vld [vmem:[%s169 + $0xa0] sm:$0xff]
      %v203 = vld [vmem:[%s169 + $0xa8] sm:$0xff]
      %v204 = vld [vmem:[%s169 + $0xb0] sm:$0xf]
      %v205 = vld [vmem:[%s169 + $0xb4] sm:$0xff]
      %v206 = vld [vmem:[%s169 + $0xbc] sm:$0xff]
      %v207 = vld [vmem:[%s169 + $0xc4] sm:$0xf]
      %v208 = vld [vmem:[%s169 + $0xc8] sm:$0xff]
      %v209 = vld [vmem:[%s169 + $0xd0] sm:$0xff]
      %v210 = vld [vmem:[%s169 + $0xd8] sm:$0xf]
      %v211 = vld [vmem:[%s169 + $0xdc] sm:$0xff]
      %v212 = vld [vmem:[%s169 + $0xe4] sm:$0xff]
      %v213 = vld [vmem:[%s169 + $0xec] sm:$0xf]
      %v214 = vld [vmem:[%s169 + $0xf0] sm:$0xff]
      %v215 = vld [vmem:[%s169 + $0xf8] sm:$0xff]
      %v216 = vld [vmem:[%s169 + $0x100] sm:$0xf]
      %v217 = vld [vmem:[%s169 + $0x104] sm:$0xff]
      %v218 = vld [vmem:[%s169 + $0x10c] sm:$0xff]
      %v219 = vld [vmem:[%s169 + $0x114] sm:$0xf]
      %v220 = vld [vmem:[%s169 + $0x118] sm:$0xff]
      %v221 = vld [vmem:[%s169 + $0x120] sm:$0xff]
      %v222 = vld [vmem:[%s169 + $0x128] sm:$0xf]
      %v223 = vld [vmem:[%s169 + $0x12c] sm:$0xff]
      %v224 = vld [vmem:[%s169 + $0x134] sm:$0xff]
      %v225 = vld [vmem:[%s169 + $0x13c] sm:$0xf]
      %v226 = vld [vmem:[%s169 + $0x140] sm:$0xff]
      %v227 = vld [vmem:[%s169 + $0x148] sm:$0xff]
      %v228 = vld [vmem:[%s169 + $0x150] sm:$0xf]
      %v229 = vld [vmem:[%s169 + $0x154] sm:$0xff]
      %v230 = vld [vmem:[%s169 + $0x15c] sm:$0xff]
      %v231 = vld [vmem:[%s169 + $0x164] sm:$0xf]
      %v232 = vld [vmem:[%s169 + $0x168] sm:$0xff]
      %v233 = vld [vmem:[%s169 + $0x170] sm:$0xff]
      %v234 = vld [vmem:[%s169 + $0x178] sm:$0xf]
      %v235 = vld [vmem:[%s169 + $0x17c] sm:$0xff]
      %v236 = vld [vmem:[%s169 + $0x184] sm:$0xff]
      %v237 = vld [vmem:[%s169 + $0x18c] sm:$0xf]
      %v238 = vld [vmem:[%s169 + $0x190] sm:$0xff]
      %v239 = vld [vmem:[%s169 + $0x198] sm:$0xff]
      %v240 = vld [vmem:[%s169 + $0x1a0] sm:$0xf]
      %v241 = vld [vmem:[%s169 + $0x1a4] sm:$0xff]
      %v242 = vld [vmem:[%s169 + $0x1ac] sm:$0xff]
      %v243 = vld [vmem:[%s169 + $0x1b4] sm:$0xf]
      %v244 = vld [vmem:[%s169 + $0x1b8] sm:$0xff]
      %v245 = vld [vmem:[%s169 + $0x1c0] sm:$0xff]
      %v246 = vld [vmem:[%s169 + $0x1c8] sm:$0xf]
      %v247 = vld [vmem:[%s169 + $0x1cc] sm:$0xff]
      %v248 = vld [vmem:[%s169 + $0x1d4] sm:$0xff]
      %v249 = vld [vmem:[%s169 + $0x1dc] sm:$0xf]
      %v250 = vld [vmem:[%s169 + $0x1e0] sm:$0xff]
      %v251 = vld [vmem:[%s169 + $0x1e8] sm:$0xff]
      %v252 = vld [vmem:[%s169 + $0x1f0] sm:$0xf]
      %v253 = vld [vmem:[%s169 + $0x1f4] sm:$0xff]
      %v254 = vld [vmem:[%s169 + $0x1fc] sm:$0xff]
      %v255 = vld [vmem:[%s169 + $0x204] sm:$0xf]
      %v256 = vld [vmem:[%s169 + $0x208] sm:$0xff]
      %v257 = vld [vmem:[%s169 + $0x210] sm:$0xff]
      %v258 = vld [vmem:[%s169 + $0x218] sm:$0xf]
      %v259 = vld [vmem:[%s169 + $0x21c] sm:$0xff]
      %v260 = vld [vmem:[%s169 + $0x224] sm:$0xff]
      %v261 = vld [vmem:[%s169 + $0x22c] sm:$0xf]
      %v262 = vld [vmem:[%s169 + $0x230] sm:$0xff]
      %v263 = vld [vmem:[%s169 + $0x238] sm:$0xff]
      %v264 = vld [vmem:[%s169 + $0x240] sm:$0xf]
      %v265 = vld [vmem:[%s169 + $0x244] sm:$0xff]
      %v266 = vld [vmem:[%s169 + $0x24c] sm:$0xff]
      %v267 = vld [vmem:[%s169 + $0x254] sm:$0xf]
      %v268 = vld [vmem:[%s169 + $0x258] sm:$0xff]
      %v269 = vld [vmem:[%s169 + $0x260] sm:$0xff]
      %v270 = vld [vmem:[%s169 + $0x268] sm:$0xf]
      %v271 = vld [vmem:[%s169 + $0x26c] sm:$0xff]
      %v272 = vld [vmem:[%s169 + $0x274] sm:$0xff]
      %v273 = vld [vmem:[%s169 + $0x27c] sm:$0xf]
      %v274 = vld [vmem:[%s1] sm:$0xf]
      %v275 = vld [vmem:[%s1 + $0x4] sm:$0xf]
      %v276 = vld [vmem:[%s1 + $0x8] sm:$0xf]
      %v277 = vld [vmem:[%s1 + $0xc] sm:$0xf]
      %v278 = vld [vmem:[%s1 + $0x10] sm:$0xf]
      %v279 = vld [vmem:[%s1 + $0x14] sm:$0xf]
      %v280 = vld [vmem:[%s1 + $0x18] sm:$0xf]
      %v281 = vld [vmem:[%s1 + $0x1c] sm:$0xf]
      %v282 = vld [vmem:[%s1 + $0x20] sm:$0xf]
      %v283 = vld [vmem:[%s1 + $0x24] sm:$0xf]
      %v284 = vld [vmem:[%s1 + $0x28] sm:$0xf]
      %v285 = vld [vmem:[%s1 + $0x2c] sm:$0xf]
      %v286 = vld [vmem:[%s1 + $0x30] sm:$0xf]
      %v287 = vld [vmem:[%s1 + $0x34] sm:$0xf]
      %v288 = vld [vmem:[%s1 + $0x38] sm:$0xf]
      %v289 = vld [vmem:[%s1 + $0x3c] sm:$0xf]
      %v290 = vld [vmem:[%s1 + $0x40] sm:$0xf]
      %v291 = vld [vmem:[%s1 + $0x44] sm:$0xf]
      %v292 = vld [vmem:[%s1 + $0x48] sm:$0xf]
      %v293 = vld [vmem:[%s1 + $0x4c] sm:$0xf]
      %v294 = vld [vmem:[%s1 + $0x50] sm:$0xf]
      %v295 = vld [vmem:[%s1 + $0x54] sm:$0xf]
      %v296 = vld [vmem:[%s1 + $0x58] sm:$0xf]
      %v297 = vld [vmem:[%s1 + $0x5c] sm:$0xf]
      %v298 = vld [vmem:[%s1 + $0x60] sm:$0xf]
      %v299 = vld [vmem:[%s1 + $0x64] sm:$0xf]
      %v300 = vld [vmem:[%s1 + $0x68] sm:$0xf]
      %v301 = vld [vmem:[%s1 + $0x6c] sm:$0xf]
      %v302 = vld [vmem:[%s1 + $0x70] sm:$0xf]
      %v303 = vld [vmem:[%s1 + $0x74] sm:$0xf]
      %v304 = vld [vmem:[%s1 + $0x78] sm:$0xf]
      %v305 = vld [vmem:[%s1 + $0x7c] sm:$0xf]
      %v306 = vld [vmem:[%s1 + $0x80] sm:$0xf]
      %v307 = vld [vmem:[%s1 + $0x84] sm:$0xf]
      %v308 = vld [vmem:[%s1 + $0x88] sm:$0xf]
      %v309 = vld [vmem:[%s1 + $0x8c] sm:$0xf]
      %v310 = vld [vmem:[%s1 + $0x90] sm:$0xf]
      %v311 = vld [vmem:[%s1 + $0x94] sm:$0xf]
      %v312 = vld [vmem:[%s1 + $0x98] sm:$0xf]
      %v313 = vld [vmem:[%s1 + $0x9c] sm:$0xf]
      %v314 = vld [vmem:[%s1 + $0xa0] sm:$0xf]
      %v315 = vld [vmem:[%s1 + $0xa4] sm:$0xf]
      %v316 = vld [vmem:[%s1 + $0xa8] sm:$0xf]
      %v317 = vld [vmem:[%s1 + $0xac] sm:$0xf]
      %v318 = vld [vmem:[%s1 + $0xb0] sm:$0xf]
      %v319 = vld [vmem:[%s1 + $0xb4] sm:$0xf]
      %v320 = vld [vmem:[%s1 + $0xb8] sm:$0xf]
      %v321 = vld [vmem:[%s1 + $0xbc] sm:$0xf]
      %v322 = vld [vmem:[%s1 + $0xc0] sm:$0xf]
      %v323 = vld [vmem:[%s1 + $0xc4] sm:$0xf]
      %v324 = vld [vmem:[%s1 + $0xc8] sm:$0xf]
      %v325 = vld [vmem:[%s1 + $0xcc] sm:$0xf]
      %v326 = vld [vmem:[%s1 + $0xd0] sm:$0xf]
      %v327 = vld [vmem:[%s1 + $0xd4] sm:$0xf]
      %v328 = vld [vmem:[%s1 + $0xd8] sm:$0xf]
      %v329 = vld [vmem:[%s1 + $0xdc] sm:$0xf]
      %v330 = vld [vmem:[%s1 + $0xe0] sm:$0xf]
      %v331 = vld [vmem:[%s1 + $0xe4] sm:$0xf]
      %v332 = vld [vmem:[%s1 + $0xe8] sm:$0xf]
      %v333 = vld [vmem:[%s1 + $0xec] sm:$0xf]
      %v334 = vld [vmem:[%s1 + $0xf0] sm:$0xf]
      %v335 = vld [vmem:[%s1 + $0xf4] sm:$0xf]
      %v336 = vld [vmem:[%s1 + $0xf8] sm:$0xf]
      %v337 = vld [vmem:[%s1 + $0xfc] sm:$0xf]
      %v338 = vld [vmem:[%s1 + $0x100] sm:$0xf]
      %v339 = vld [vmem:[%s1 + $0x104] sm:$0xf]
      %v340 = vld [vmem:[%s1 + $0x108] sm:$0xf]
      %v341 = vld [vmem:[%s1 + $0x10c] sm:$0xf]
      %v342 = vld [vmem:[%s1 + $0x110] sm:$0xf]
      %v343 = vld [vmem:[%s1 + $0x114] sm:$0xf]
      %v344 = vld [vmem:[%s1 + $0x118] sm:$0xf]
      %v345 = vld [vmem:[%s1 + $0x11c] sm:$0xf]
      %v346 = vld [vmem:[%s1 + $0x120] sm:$0xf]
      %v347 = vld [vmem:[%s1 + $0x124] sm:$0xf]
      %v348 = vld [vmem:[%s1 + $0x128] sm:$0xf]
      %v349 = vld [vmem:[%s1 + $0x12c] sm:$0xf]
      %v350 = vld [vmem:[%s1 + $0x130] sm:$0xf]
      %v351 = vld [vmem:[%s1 + $0x134] sm:$0xf]
      %v352 = vld [vmem:[%s1 + $0x138] sm:$0xf]
      %v353 = vld [vmem:[%s1 + $0x13c] sm:$0xf]
      %v354 = vld [vmem:[%s2] sm:$0x1]
      %v356 = vlaneseq
      %v357 = vshrl.u32 %v356, 7
      %v358 = vsub.s32 0, %v357
      %v359 = vrot.slane %v354, %v358
      %v457 = vunpack.c.l.b16 %v178
      %v458 = vunpack.c.h.b16 %v178
      %v459 = vunpack.c.l.b16 %v179
      %v460 = vunpack.c.h.b16 %v179
      %v461 = vunpack.c.l.b16 %v180
      %v462 = vunpack.c.l.b16 %v181
      %v463 = vunpack.c.h.b16 %v181
      %v464 = vunpack.c.l.b16 %v182
      %v465 = vunpack.c.h.b16 %v182
      %v466 = vunpack.c.l.b16 %v183
      %v467 = vunpack.c.l.b16 %v184
      %v468 = vunpack.c.h.b16 %v184
      %v469 = vunpack.c.l.b16 %v185
      %v470 = vunpack.c.h.b16 %v185
      %v471 = vunpack.c.l.b16 %v186
      %v472 = vunpack.c.l.b16 %v187
      %v473 = vunpack.c.h.b16 %v187
      %v474 = vunpack.c.l.b16 %v188
      %v475 = vunpack.c.h.b16 %v188
      %v476 = vunpack.c.l.b16 %v189
      %v477 = vunpack.c.l.b16 %v190
      %v478 = vunpack.c.h.b16 %v190
      %v479 = vunpack.c.l.b16 %v191
      %v480 = vunpack.c.h.b16 %v191
      %v481 = vunpack.c.l.b16 %v192
      %v482 = vunpack.c.l.b16 %v193
      %v483 = vunpack.c.h.b16 %v193
      %v484 = vunpack.c.l.b16 %v194
      %v485 = vunpack.c.h.b16 %v194
      %v486 = vunpack.c.l.b16 %v195
      %v487 = vunpack.c.l.b16 %v196
      %v488 = vunpack.c.h.b16 %v196
      %v489 = vunpack.c.l.b16 %v197
      %v490 = vunpack.c.h.b16 %v197
      %v491 = vunpack.c.l.b16 %v198
      %v492 = vunpack.c.l.b16 %v199
      %v493 = vunpack.c.h.b16 %v199
      %v494 = vunpack.c.l.b16 %v200
      %v495 = vunpack.c.h.b16 %v200
      %v496 = vunpack.c.l.b16 %v201
      %v497 = vunpack.c.l.b16 %v202
      %v498 = vunpack.c.h.b16 %v202
      %v499 = vunpack.c.l.b16 %v203
      %v500 = vunpack.c.h.b16 %v203
      %v501 = vunpack.c.l.b16 %v204
      %v502 = vunpack.c.l.b16 %v205
      %v503 = vunpack.c.h.b16 %v205
      %v504 = vunpack.c.l.b16 %v206
      %v505 = vunpack.c.h.b16 %v206
      %v506 = vunpack.c.l.b16 %v207
      %v507 = vunpack.c.l.b16 %v208
      %v508 = vunpack.c.h.b16 %v208
      %v509 = vunpack.c.l.b16 %v209
      %v510 = vunpack.c.h.b16 %v209
      %v511 = vunpack.c.l.b16 %v210
      %v512 = vunpack.c.l.b16 %v211
      %v513 = vunpack.c.h.b16 %v211
      %v514 = vunpack.c.l.b16 %v212
      %v515 = vunpack.c.h.b16 %v212
      %v516 = vunpack.c.l.b16 %v213
      %v517 = vunpack.c.l.b16 %v214
      %v518 = vunpack.c.h.b16 %v214
      %v519 = vunpack.c.l.b16 %v215
      %v520 = vunpack.c.h.b16 %v215
      %v521 = vunpack.c.l.b16 %v216
      %v522 = vunpack.c.l.b16 %v217
      %v523 = vunpack.c.h.b16 %v217
      %v524 = vunpack.c.l.b16 %v218
      %v525 = vunpack.c.h.b16 %v218
      %v526 = vunpack.c.l.b16 %v219
      %v527 = vunpack.c.l.b16 %v220
      %v528 = vunpack.c.h.b16 %v220
      %v529 = vunpack.c.l.b16 %v221
      %v530 = vunpack.c.h.b16 %v221
      %v531 = vunpack.c.l.b16 %v222
      %v532 = vunpack.c.l.b16 %v223
      %v533 = vunpack.c.h.b16 %v223
      %v534 = vunpack.c.l.b16 %v224
      %v535 = vunpack.c.h.b16 %v224
      %v536 = vunpack.c.l.b16 %v225
      %v537 = vunpack.c.l.b16 %v226
      %v538 = vunpack.c.h.b16 %v226
      %v539 = vunpack.c.l.b16 %v227
      %v540 = vunpack.c.h.b16 %v227
      %v541 = vunpack.c.l.b16 %v228
      %v542 = vunpack.c.l.b16 %v229
      %v543 = vunpack.c.h.b16 %v229
      %v544 = vunpack.c.l.b16 %v230
      %v545 = vunpack.c.h.b16 %v230
      %v546 = vunpack.c.l.b16 %v231
      %v547 = vunpack.c.l.b16 %v232
      %v548 = vunpack.c.h.b16 %v232
      %v549 = vunpack.c.l.b16 %v233
      %v550 = vunpack.c.h.b16 %v233
      %v551 = vunpack.c.l.b16 %v234
      %v552 = vunpack.c.l.b16 %v235
      %v553 = vunpack.c.h.b16 %v235
      %v554 = vunpack.c.l.b16 %v236
      %v555 = vunpack.c.h.b16 %v236
      %v556 = vunpack.c.l.b16 %v237
      %v557 = vunpack.c.l.b16 %v238
      %v558 = vunpack.c.h.b16 %v238
      %v559 = vunpack.c.l.b16 %v239
      %v560 = vunpack.c.h.b16 %v239
      %v561 = vunpack.c.l.b16 %v240
      %v562 = vunpack.c.l.b16 %v241
      %v563 = vunpack.c.h.b16 %v241
      %v564 = vunpack.c.l.b16 %v242
      %v565 = vunpack.c.h.b16 %v242
      %v566 = vunpack.c.l.b16 %v243
      %v567 = vunpack.c.l.b16 %v244
      %v568 = vunpack.c.h.b16 %v244
      %v569 = vunpack.c.l.b16 %v245
      %v570 = vunpack.c.h.b16 %v245
      %v571 = vunpack.c.l.b16 %v246
      %v572 = vunpack.c.l.b16 %v247
      %v573 = vunpack.c.h.b16 %v247
      %v574 = vunpack.c.l.b16 %v248
      %v575 = vunpack.c.h.b16 %v248
      %v576 = vunpack.c.l.b16 %v249
      %v577 = vunpack.c.l.b16 %v250
      %v578 = vunpack.c.h.b16 %v250
      %v579 = vunpack.c.l.b16 %v251
      %v580 = vunpack.c.h.b16 %v251
      %v581 = vunpack.c.l.b16 %v252
      %v582 = vunpack.c.l.b16 %v253
      %v583 = vunpack.c.h.b16 %v253
      %v584 = vunpack.c.l.b16 %v254
      %v585 = vunpack.c.h.b16 %v254
      %v586 = vunpack.c.l.b16 %v255
      %v587 = vunpack.c.l.b16 %v256
      %v588 = vunpack.c.h.b16 %v256
      %v589 = vunpack.c.l.b16 %v257
      %v590 = vunpack.c.h.b16 %v257
      %v591 = vunpack.c.l.b16 %v258
      %v592 = vunpack.c.l.b16 %v259
      %v593 = vunpack.c.h.b16 %v259
      %v594 = vunpack.c.l.b16 %v260
      %v595 = vunpack.c.h.b16 %v260
      %v596 = vunpack.c.l.b16 %v261
      %v597 = vunpack.c.l.b16 %v262
      %v598 = vunpack.c.h.b16 %v262
      %v599 = vunpack.c.l.b16 %v263
      %v600 = vunpack.c.h.b16 %v263
      %v601 = vunpack.c.l.b16 %v264
      %v602 = vunpack.c.l.b16 %v265
      %v603 = vunpack.c.h.b16 %v265
      %v604 = vunpack.c.l.b16 %v266
      %v605 = vunpack.c.h.b16 %v266
      %v606 = vunpack.c.l.b16 %v267
      %v607 = vunpack.c.l.b16 %v268
      %v608 = vunpack.c.h.b16 %v268
      %v609 = vunpack.c.l.b16 %v269
      %v610 = vunpack.c.h.b16 %v269
      %v611 = vunpack.c.l.b16 %v270
      %v612 = vunpack.c.l.b16 %v271
      %v613 = vunpack.c.h.b16 %v271
      %v614 = vunpack.c.l.b16 %v272
      %v615 = vunpack.c.h.b16 %v272
      %v616 = vunpack.c.l.b16 %v273
      %v617 = vpack.c.b16 %v462, %v457
      %v618 = vpack.c.b16 %v463, %v458
      %v619 = vpack.c.b16 %v464, %v459
      %v620 = vpack.c.b16 %v465, %v460
      %v621 = vpack.c.b16 %v466, %v461
      %v622 = vpack.c.b16 %v472, %v467
      %v623 = vpack.c.b16 %v473, %v468
      %v624 = vpack.c.b16 %v474, %v469
      %v625 = vpack.c.b16 %v475, %v470
      %v626 = vpack.c.b16 %v476, %v471
      %v627 = vpack.c.b16 %v482, %v477
      %v628 = vpack.c.b16 %v483, %v478
      %v629 = vpack.c.b16 %v484, %v479
      %v630 = vpack.c.b16 %v485, %v480
      %v631 = vpack.c.b16 %v486, %v481
      %v632 = vpack.c.b16 %v492, %v487
      %v633 = vpack.c.b16 %v493, %v488
      %v634 = vpack.c.b16 %v494, %v489
      %v635 = vpack.c.b16 %v495, %v490
      %v636 = vpack.c.b16 %v496, %v491
      %v637 = vpack.c.b16 %v502, %v497
      %v638 = vpack.c.b16 %v503, %v498
      %v639 = vpack.c.b16 %v504, %v499
      %v640 = vpack.c.b16 %v505, %v500
      %v641 = vpack.c.b16 %v506, %v501
      %v642 = vpack.c.b16 %v512, %v507
      %v643 = vpack.c.b16 %v513, %v508
      %v644 = vpack.c.b16 %v514, %v509
      %v645 = vpack.c.b16 %v515, %v510
      %v646 = vpack.c.b16 %v516, %v511
      %v647 = vpack.c.b16 %v522, %v517
      %v648 = vpack.c.b16 %v523, %v518
      %v649 = vpack.c.b16 %v524, %v519
      %v650 = vpack.c.b16 %v525, %v520
      %v651 = vpack.c.b16 %v526, %v521
      %v652 = vpack.c.b16 %v532, %v527
      %v653 = vpack.c.b16 %v533, %v528
      %v654 = vpack.c.b16 %v534, %v529
      %v655 = vpack.c.b16 %v535, %v530
      %v656 = vpack.c.b16 %v536, %v531
      %v657 = vpack.c.b16 %v542, %v537
      %v658 = vpack.c.b16 %v543, %v538
      %v659 = vpack.c.b16 %v544, %v539
      %v660 = vpack.c.b16 %v545, %v540
      %v661 = vpack.c.b16 %v546, %v541
      %v662 = vpack.c.b16 %v552, %v547
      %v663 = vpack.c.b16 %v553, %v548
      %v664 = vpack.c.b16 %v554, %v549
      %v665 = vpack.c.b16 %v555, %v550
      %v666 = vpack.c.b16 %v556, %v551
      %v667 = vpack.c.b16 %v562, %v557
      %v668 = vpack.c.b16 %v563, %v558
      %v669 = vpack.c.b16 %v564, %v559
      %v670 = vpack.c.b16 %v565, %v560
      %v671 = vpack.c.b16 %v566, %v561
      %v672 = vpack.c.b16 %v572, %v567
      %v673 = vpack.c.b16 %v573, %v568
      %v674 = vpack.c.b16 %v574, %v569
      %v675 = vpack.c.b16 %v575, %v570
      %v676 = vpack.c.b16 %v576, %v571
      %v677 = vpack.c.b16 %v582, %v577
      %v678 = vpack.c.b16 %v583, %v578
      %v679 = vpack.c.b16 %v584, %v579
      %v680 = vpack.c.b16 %v585, %v580
      %v681 = vpack.c.b16 %v586, %v581
      %v682 = vpack.c.b16 %v592, %v587
      %v683 = vpack.c.b16 %v593, %v588
      %v684 = vpack.c.b16 %v594, %v589
      %v685 = vpack.c.b16 %v595, %v590
      %v686 = vpack.c.b16 %v596, %v591
      %v687 = vpack.c.b16 %v602, %v597
      %v688 = vpack.c.b16 %v603, %v598
      %v689 = vpack.c.b16 %v604, %v599
      %v690 = vpack.c.b16 %v605, %v600
      %v691 = vpack.c.b16 %v606, %v601
      %v692 = vpack.c.b16 %v612, %v607
      %v693 = vpack.c.b16 %v613, %v608
      %v694 = vpack.c.b16 %v614, %v609
      %v695 = vpack.c.b16 %v615, %v610
      %v696 = vpack.c.b16 %v616, %v611
      %v857 = vunpack.c.l.b16 %v274
      %v858 = vunpack.c.l.b16 %v275
      %v859 = vunpack.c.l.b16 %v276
      %v860 = vunpack.c.l.b16 %v277
      %v861 = vunpack.c.l.b16 %v278
      %v862 = vunpack.c.l.b16 %v279
      %v863 = vunpack.c.l.b16 %v280
      %v864 = vunpack.c.l.b16 %v281
      %v865 = vunpack.c.l.b16 %v282
      %v866 = vunpack.c.l.b16 %v283
      %v867 = vunpack.c.l.b16 %v284
      %v868 = vunpack.c.l.b16 %v285
      %v869 = vunpack.c.l.b16 %v286
      %v870 = vunpack.c.l.b16 %v287
      %v871 = vunpack.c.l.b16 %v288
      %v872 = vunpack.c.l.b16 %v289
      %v873 = vunpack.c.l.b16 %v290
      %v874 = vunpack.c.l.b16 %v291
      %v875 = vunpack.c.l.b16 %v292
      %v876 = vunpack.c.l.b16 %v293
      %v877 = vunpack.c.l.b16 %v294
      %v878 = vunpack.c.l.b16 %v295
      %v879 = vunpack.c.l.b16 %v296
      %v880 = vunpack.c.l.b16 %v297
      %v881 = vunpack.c.l.b16 %v298
      %v882 = vunpack.c.l.b16 %v299
      %v883 = vunpack.c.l.b16 %v300
      %v884 = vunpack.c.l.b16 %v301
      %v885 = vunpack.c.l.b16 %v302
      %v886 = vunpack.c.l.b16 %v303
      %v887 = vunpack.c.l.b16 %v304
      %v888 = vunpack.c.l.b16 %v305
      %v889 = vunpack.c.l.b16 %v306
      %v890 = vunpack.c.l.b16 %v307
      %v891 = vunpack.c.l.b16 %v308
      %v892 = vunpack.c.l.b16 %v309
      %v893 = vunpack.c.l.b16 %v310
      %v894 = vunpack.c.l.b16 %v311
      %v895 = vunpack.c.l.b16 %v312
      %v896 = vunpack.c.l.b16 %v313
      %v897 = vunpack.c.l.b16 %v314
      %v898 = vunpack.c.l.b16 %v315
      %v899 = vunpack.c.l.b16 %v316
      %v900 = vunpack.c.l.b16 %v317
      %v901 = vunpack.c.l.b16 %v318
      %v902 = vunpack.c.l.b16 %v319
      %v903 = vunpack.c.l.b16 %v320
      %v904 = vunpack.c.l.b16 %v321
      %v905 = vunpack.c.l.b16 %v322
      %v906 = vunpack.c.l.b16 %v323
      %v907 = vunpack.c.l.b16 %v324
      %v908 = vunpack.c.l.b16 %v325
      %v909 = vunpack.c.l.b16 %v326
      %v910 = vunpack.c.l.b16 %v327
      %v911 = vunpack.c.l.b16 %v328
      %v912 = vunpack.c.l.b16 %v329
      %v913 = vunpack.c.l.b16 %v330
      %v914 = vunpack.c.l.b16 %v331
      %v915 = vunpack.c.l.b16 %v332
      %v916 = vunpack.c.l.b16 %v333
      %v917 = vunpack.c.l.b16 %v334
      %v918 = vunpack.c.l.b16 %v335
      %v919 = vunpack.c.l.b16 %v336
      %v920 = vunpack.c.l.b16 %v337
      %v921 = vunpack.c.l.b16 %v338
      %v922 = vunpack.c.l.b16 %v339
      %v923 = vunpack.c.l.b16 %v340
      %v924 = vunpack.c.l.b16 %v341
      %v925 = vunpack.c.l.b16 %v342
      %v926 = vunpack.c.l.b16 %v343
      %v927 = vunpack.c.l.b16 %v344
      %v928 = vunpack.c.l.b16 %v345
      %v929 = vunpack.c.l.b16 %v346
      %v930 = vunpack.c.l.b16 %v347
      %v931 = vunpack.c.l.b16 %v348
      %v932 = vunpack.c.l.b16 %v349
      %v933 = vunpack.c.l.b16 %v350
      %v934 = vunpack.c.l.b16 %v351
      %v935 = vunpack.c.l.b16 %v352
      %v936 = vunpack.c.l.b16 %v353
      %v937 = vpack.c.b16 %v858, %v857
      %v938 = vpack.c.b16 %v860, %v859
      %v939 = vpack.c.b16 %v862, %v861
      %v940 = vpack.c.b16 %v864, %v863
      %v941 = vpack.c.b16 %v866, %v865
      %v942 = vpack.c.b16 %v868, %v867
      %v943 = vpack.c.b16 %v870, %v869
      %v944 = vpack.c.b16 %v872, %v871
      %v945 = vpack.c.b16 %v874, %v873
      %v946 = vpack.c.b16 %v876, %v875
      %v947 = vpack.c.b16 %v878, %v877
      %v948 = vpack.c.b16 %v880, %v879
      %v949 = vpack.c.b16 %v882, %v881
      %v950 = vpack.c.b16 %v884, %v883
      %v951 = vpack.c.b16 %v886, %v885
      %v952 = vpack.c.b16 %v888, %v887
      %v953 = vpack.c.b16 %v890, %v889
      %v954 = vpack.c.b16 %v892, %v891
      %v955 = vpack.c.b16 %v894, %v893
      %v956 = vpack.c.b16 %v896, %v895
      %v957 = vpack.c.b16 %v898, %v897
      %v958 = vpack.c.b16 %v900, %v899
      %v959 = vpack.c.b16 %v902, %v901
      %v960 = vpack.c.b16 %v904, %v903
      %v961 = vpack.c.b16 %v906, %v905
      %v962 = vpack.c.b16 %v908, %v907
      %v963 = vpack.c.b16 %v910, %v909
      %v964 = vpack.c.b16 %v912, %v911
      %v965 = vpack.c.b16 %v914, %v913
      %v966 = vpack.c.b16 %v916, %v915
      %v967 = vpack.c.b16 %v918, %v917
      %v968 = vpack.c.b16 %v920, %v919
      %v969 = vpack.c.b16 %v922, %v921
      %v970 = vpack.c.b16 %v924, %v923
      %v971 = vpack.c.b16 %v926, %v925
      %v972 = vpack.c.b16 %v928, %v927
      %v973 = vpack.c.b16 %v930, %v929
      %v974 = vpack.c.b16 %v932, %v931
      %v975 = vpack.c.b16 %v934, %v933
      %v976 = vpack.c.b16 %v936, %v935
      %1017 = vmatprep.subr.bf16.mxu0 0
      %1018 = vmatpush1.bf16.msra.mxu0 %v937
      %1019 = vmatprep.subr.bf16.mxu0 0
      %1020 = vmatpush1.bf16.msra.mxu0 %v938
      %1021 = vmatprep.subr.bf16.mxu0 0
      %1022 = vmatpush1.bf16.msra.mxu0 %v939
      %1023 = vmatprep.subr.bf16.mxu0 0
      %1024 = vmatpush1.bf16.msra.mxu0 %v940
      %1025 = vmatprep.subr.bf16.mxu0 0
      %1026 = vmatpush1.bf16.msra.mxu0 %v941
      %1027 = vmatprep.subr.bf16.mxu0 0
      %1028 = vmatpush1.bf16.msra.mxu0 %v942
      %1029 = vmatprep.subr.bf16.mxu0 0
      %1030 = vmatpush1.bf16.msra.mxu0 %v943
      %1031 = vmatprep.subr.bf16.mxu0 0
      %1032 = vmatpush1.bf16.msra.mxu0 %v944
      %1033 = vmatprep.subr.bf16.mxu0 0
      %1034 = vmatpush1.bf16.msra.mxu0 %v945
      %1035 = vmatprep.subr.bf16.mxu0 0
      %1036 = vmatpush1.bf16.msra.mxu0 %v946
      %1037 = vmatprep.subr.bf16.mxu0 0
      %1038 = vmatpush1.bf16.msra.mxu0 %v947
      %1039 = vmatprep.subr.bf16.mxu0 0
      %1040 = vmatpush1.bf16.msra.mxu0 %v948
      %1041 = vmatprep.subr.bf16.mxu0 0
      %1042 = vmatpush1.bf16.msra.mxu0 %v949
      %1043 = vmatprep.subr.bf16.mxu0 0
      %1044 = vmatpush1.bf16.msra.mxu0 %v950
      %1045 = vmatprep.subr.bf16.mxu0 0
      %1046 = vmatpush1.bf16.msra.mxu0 %v951
      %1047 = vmatprep.subr.bf16.mxu0 0
      %1048 = vmatpush1.bf16.msra.mxu0 %v952
      %1049 = vmatprep.mubr.bf16.mxu0 %v618
      %1050 = vmatmul.mubr.bf16.gmra.mrb[0].mxu0 %v617
      %v1051 = vpop.f32.mrb[0].mxu0
      %v1052 = vadd.f32 %v359, %v1051
      %v1053 = vpop.f32.mrb[0].mxu0
      %v1054 = vpop.f32.mrb[0].mxu0
      %v1055 = vadd.f32 %v359, %v1054
      %v1056 = vpop.f32.mrb[0].mxu0
      %1057 = vmatprep.mubr.bf16.mxu0 %v623
      %1058 = vmatmul.mubr.bf16.gmra.mrb[0].mxu0 %v622
      %v1059 = vpop.f32.mrb[0].mxu0
      %v1060 = vadd.f32 %v359, %v1059
      %v1061 = vpop.f32.mrb[0].mxu0
      %v1062 = vpop.f32.mrb[0].mxu0
      %v1063 = vadd.f32 %v359, %v1062
      %v1064 = vpop.f32.mrb[0].mxu0
      %1065 = vmatprep.mubr.bf16.mxu0 %v628
      %1066 = vmatmul.mubr.bf16.gmra.mrb[0].mxu0 %v627
      %v1067 = vpop.f32.mrb[0].mxu0
      %v1068 = vadd.f32 %v359, %v1067
      %v1069 = vpop.f32.mrb[0].mxu0
      %v1070 = vpop.f32.mrb[0].mxu0
      %v1071 = vadd.f32 %v359, %v1070
      %v1072 = vpop.f32.mrb[0].mxu0
      %1073 = vmatprep.mubr.bf16.mxu0 %v633
      %1074 = vmatmul.mubr.bf16.gmra.mrb[0].mxu0 %v632
      %v1075 = vpop.f32.mrb[0].mxu0
      %v1076 = vadd.f32 %v359, %v1075
      %v1077 = vpop.f32.mrb[0].mxu0
      %v1078 = vpop.f32.mrb[0].mxu0
      %v1079 = vadd.f32 %v359, %v1078
      %v1080 = vpop.f32.mrb[0].mxu0
      %1081 = vmatprep.mubr.bf16.mxu0 %v638
      %1082 = vmatmul.mubr.bf16.gmra.mrb[0].mxu0 %v637
      %v1083 = vpop.f32.mrb[0].mxu0
      %v1084 = vadd.f32 %v359, %v1083
      %v1085 = vpop.f32.mrb[0].mxu0
      %v1086 = vpop.f32.mrb[0].mxu0
      %v1087 = vadd.f32 %v359, %v1086
      %v1088 = vpop.f32.mrb[0].mxu0
      %1089 = vmatprep.mubr.bf16.mxu0 %v643
      %1090 = vmatmul.mubr.bf16.gmra.mrb[0].mxu0 %v642
      %v1091 = vpop.f32.mrb[0].mxu0
      %v1092 = vadd.f32 %v359, %v1091
      %v1093 = vpop.f32.mrb[0].mxu0
      %v1094 = vpop.f32.mrb[0].mxu0
      %v1095 = vadd.f32 %v359, %v1094
      %v1096 = vpop.f32.mrb[0].mxu0
      %1097 = vmatprep.mubr.bf16.mxu0 %v648
      %1098 = vmatmul.mubr.bf16.gmra.mrb[0].mxu0 %v647
      %v1099 = vpop.f32.mrb[0].mxu0
      %v1100 = vadd.f32 %v359, %v1099
      %v1101 = vpop.f32.mrb[0].mxu0
      %v1102 = vpop.f32.mrb[0].mxu0
      %v1103 = vadd.f32 %v359, %v1102
      %v1104 = vpop.f32.mrb[0].mxu0
      %1105 = vmatprep.mubr.bf16.mxu0 %v653
      %1106 = vmatmul.mubr.bf16.gmra.mrb[0].mxu0 %v652
      %v1107 = vpop.f32.mrb[0].mxu0
      %v1108 = vadd.f32 %v359, %v1107
      %v1109 = vpop.f32.mrb[0].mxu0
      %v1110 = vpop.f32.mrb[0].mxu0
      %v1111 = vadd.f32 %v359, %v1110
      %v1112 = vpop.f32.mrb[0].mxu0
      %1113 = vmatprep.mubr.bf16.mxu0 %v658
      %1114 = vmatmul.mubr.bf16.gmra.mrb[0].mxu0 %v657
      %v1115 = vpop.f32.mrb[0].mxu0
      %v1116 = vadd.f32 %v359, %v1115
      %v1117 = vpop.f32.mrb[0].mxu0
      %v1118 = vpop.f32.mrb[0].mxu0
      %v1119 = vadd.f32 %v359, %v1118
      %v1120 = vpop.f32.mrb[0].mxu0
      %1121 = vmatprep.mubr.bf16.mxu0 %v663
      %1122 = vmatmul.mubr.bf16.gmra.mrb[0].mxu0 %v662
      %v1123 = vpop.f32.mrb[0].mxu0
      %v1124 = vadd.f32 %v359, %v1123
      %v1125 = vpop.f32.mrb[0].mxu0
      %v1126 = vpop.f32.mrb[0].mxu0
      %v1127 = vadd.f32 %v359, %v1126
      %v1128 = vpop.f32.mrb[0].mxu0
      %1129 = vmatprep.mubr.bf16.mxu0 %v668
      %1130 = vmatmul.mubr.bf16.gmra.mrb[0].mxu0 %v667
      %v1131 = vpop.f32.mrb[0].mxu0
      %v1132 = vadd.f32 %v359, %v1131
      %v1133 = vpop.f32.mrb[0].mxu0
      %v1134 = vpop.f32.mrb[0].mxu0
      %v1135 = vadd.f32 %v359, %v1134
      %v1136 = vpop.f32.mrb[0].mxu0
      %1137 = vmatprep.mubr.bf16.mxu0 %v673
      %1138 = vmatmul.mubr.bf16.gmra.mrb[0].mxu0 %v672
      %v1139 = vpop.f32.mrb[0].mxu0
      %v1140 = vadd.f32 %v359, %v1139
      %v1141 = vpop.f32.mrb[0].mxu0
      %v1142 = vpop.f32.mrb[0].mxu0
      %v1143 = vadd.f32 %v359, %v1142
      %v1144 = vpop.f32.mrb[0].mxu0
      %1145 = vmatprep.mubr.bf16.mxu0 %v678
      %1146 = vmatmul.mubr.bf16.gmra.mrb[0].mxu0 %v677
      %v1147 = vpop.f32.mrb[0].mxu0
      %v1148 = vadd.f32 %v359, %v1147
      %v1149 = vpop.f32.mrb[0].mxu0
      %v1150 = vpop.f32.mrb[0].mxu0
      %v1151 = vadd.f32 %v359, %v1150
      %v1152 = vpop.f32.mrb[0].mxu0
      %1153 = vmatprep.mubr.bf16.mxu0 %v683
      %1154 = vmatmul.mubr.bf16.gmra.mrb[0].mxu0 %v682
      %v1155 = vpop.f32.mrb[0].mxu0
      %v1156 = vadd.f32 %v359, %v1155
      %v1157 = vpop.f32.mrb[0].mxu0
      %v1158 = vpop.f32.mrb[0].mxu0
      %v1159 = vadd.f32 %v359, %v1158
      %v1160 = vpop.f32.mrb[0].mxu0
      %1161 = vmatprep.mubr.bf16.mxu0 %v688
      %1162 = vmatmul.mubr.bf16.gmra.mrb[0].mxu0 %v687
      %v1163 = vpop.f32.mrb[0].mxu0
      %v1164 = vadd.f32 %v359, %v1163
      %v1165 = vpop.f32.mrb[0].mxu0
      %v1166 = vpop.f32.mrb[0].mxu0
      %v1167 = vadd.f32 %v359, %v1166
      %v1168 = vpop.f32.mrb[0].mxu0
      %1169 = vmatprep.mubr.bf16.mxu0 %v693
      %1170 = vmatmul.mubr.bf16.gmra.mrb[0].mxu0 %v692
      %v1171 = vpop.f32.mrb[0].mxu0
      %v1172 = vadd.f32 %v359, %v1171
      %v1173 = vpop.f32.mrb[0].mxu0
      %v1174 = vpop.f32.mrb[0].mxu0
      %v1175 = vadd.f32 %v359, %v1174
      %v1176 = vpop.f32.mrb[0].mxu0
      %1177 = vdwg.mxu0
      %1178 = vmatprep.subr.bf16.mxu0 0
      %1179 = vmatpush1.bf16.msra.mxu0 %v953
      %1180 = vmatprep.subr.bf16.mxu0 0
      %1181 = vmatpush1.bf16.msra.mxu0 %v954
      %1182 = vmatprep.subr.bf16.mxu0 0
      %1183 = vmatpush1.bf16.msra.mxu0 %v955
      %1184 = vmatprep.subr.bf16.mxu0 0
      %1185 = vmatpush1.bf16.msra.mxu0 %v956
      %1186 = vmatprep.subr.bf16.mxu0 0
      %1187 = vmatpush1.bf16.msra.mxu0 %v957
      %1188 = vmatprep.subr.bf16.mxu0 0
      %1189 = vmatpush1.bf16.msra.mxu0 %v958
      %1190 = vmatprep.subr.bf16.mxu0 0
      %1191 = vmatpush1.bf16.msra.mxu0 %v959
      %1192 = vmatprep.subr.bf16.mxu0 0
      %1193 = vmatpush1.bf16.msra.mxu0 %v960
      %1194 = vmatprep.subr.bf16.mxu0 0
      %1195 = vmatpush1.bf16.msra.mxu0 %v961
      %1196 = vmatprep.subr.bf16.mxu0 0
      %1197 = vmatpush1.bf16.msra.mxu0 %v962
      %1198 = vmatprep.subr.bf16.mxu0 0
      %1199 = vmatpush1.bf16.msra.mxu0 %v963
      %1200 = vmatprep.subr.bf16.mxu0 0
      %1201 = vmatpush1.bf16.msra.mxu0 %v964
      %1202 = vmatprep.subr.bf16.mxu0 0
      %1203 = vmatpush1.bf16.msra.mxu0 %v965
      %1204 = vmatprep.subr.bf16.mxu0 0
      %1205 = vmatpush1.bf16.msra.mxu0 %v966
      %1206 = vmatprep.subr.bf16.mxu0 0
      %1207 = vmatpush1.bf16.msra.mxu0 %v967
      %1208 = vmatprep.subr.bf16.mxu0 0
      %1209 = vmatpush1.bf16.msra.mxu0 %v968
      %1210 = vmatprep.mubr.bf16.mxu0 %v620
      %1211 = vmatmul.mubr.bf16.gmra.mrb[0].mxu0 %v619
      %v1212 = vpop.f32.mrb[0].mxu0
      %v1213 = vadd.f32 %v1052, %v1212
      %v1214 = vpop.f32.mrb[0].mxu0
      %v1215 = vpop.f32.mrb[0].mxu0
      %v1216 = vadd.f32 %v1055, %v1215
      %v1217 = vpop.f32.mrb[0].mxu0
      %1218 = vmatprep.mubr.bf16.mxu0 %v625
      %1219 = vmatmul.mubr.bf16.gmra.mrb[0].mxu0 %v624
      %v1220 = vpop.f32.mrb[0].mxu0
      %v1221 = vadd.f32 %v1060, %v1220
      %v1222 = vpop.f32.mrb[0].mxu0
      %v1223 = vpop.f32.mrb[0].mxu0
      %v1224 = vadd.f32 %v1063, %v1223
      %v1225 = vpop.f32.mrb[0].mxu0
      %1226 = vmatprep.mubr.bf16.mxu0 %v630
      %1227 = vmatmul.mubr.bf16.gmra.mrb[0].mxu0 %v629
      %v1228 = vpop.f32.mrb[0].mxu0
      %v1229 = vadd.f32 %v1068, %v1228
      %v1230 = vpop.f32.mrb[0].mxu0
      %v1231 = vpop.f32.mrb[0].mxu0
      %v1232 = vadd.f32 %v1071, %v1231
      %v1233 = vpop.f32.mrb[0].mxu0
      %1234 = vmatprep.mubr.bf16.mxu0 %v635
      %1235 = vmatmul.mubr.bf16.gmra.mrb[0].mxu0 %v634
      %v1236 = vpop.f32.mrb[0].mxu0
      %v1237 = vadd.f32 %v1076, %v1236
      %v1238 = vpop.f32.mrb[0].mxu0
      %v1239 = vpop.f32.mrb[0].mxu0
      %v1240 = vadd.f32 %v1079, %v1239
      %v1241 = vpop.f32.mrb[0].mxu0
      %1242 = vmatprep.mubr.bf16.mxu0 %v640
      %1243 = vmatmul.mubr.bf16.gmra.mrb[0].mxu0 %v639
      %v1244 = vpop.f32.mrb[0].mxu0
      %v1245 = vadd.f32 %v1084, %v1244
      %v1246 = vpop.f32.mrb[0].mxu0
      %v1247 = vpop.f32.mrb[0].mxu0
      %v1248 = vadd.f32 %v1087, %v1247
      %v1249 = vpop.f32.mrb[0].mxu0
      %1250 = vmatprep.mubr.bf16.mxu0 %v645
      %1251 = vmatmul.mubr.bf16.gmra.mrb[0].mxu0 %v644
      %v1252 = vpop.f32.mrb[0].mxu0
      %v1253 = vadd.f32 %v1092, %v1252
      %v1254 = vpop.f32.mrb[0].mxu0
      %v1255 = vpop.f32.mrb[0].mxu0
      %v1256 = vadd.f32 %v1095, %v1255
      %v1257 = vpop.f32.mrb[0].mxu0
      %1258 = vmatprep.mubr.bf16.mxu0 %v650
      %1259 = vmatmul.mubr.bf16.gmra.mrb[0].mxu0 %v649
      %v1260 = vpop.f32.mrb[0].mxu0
      %v1261 = vadd.f32 %v1100, %v1260
      %v1262 = vpop.f32.mrb[0].mxu0
      %v1263 = vpop.f32.mrb[0].mxu0
      %v1264 = vadd.f32 %v1103, %v1263
      %v1265 = vpop.f32.mrb[0].mxu0
      %1266 = vmatprep.mubr.bf16.mxu0 %v655
      %1267 = vmatmul.mubr.bf16.gmra.mrb[0].mxu0 %v654
      %v1268 = vpop.f32.mrb[0].mxu0
      %v1269 = vadd.f32 %v1108, %v1268
      %v1270 = vpop.f32.mrb[0].mxu0
      %v1271 = vpop.f32.mrb[0].mxu0
      %v1272 = vadd.f32 %v1111, %v1271
      %v1273 = vpop.f32.mrb[0].mxu0
      %1274 = vmatprep.mubr.bf16.mxu0 %v660
      %1275 = vmatmul.mubr.bf16.gmra.mrb[0].mxu0 %v659
      %v1276 = vpop.f32.mrb[0].mxu0
      %v1277 = vadd.f32 %v1116, %v1276
      %v1278 = vpop.f32.mrb[0].mxu0
      %v1279 = vpop.f32.mrb[0].mxu0
      %v1280 = vadd.f32 %v1119, %v1279
      %v1281 = vpop.f32.mrb[0].mxu0
      %1282 = vmatprep.mubr.bf16.mxu0 %v665
      %1283 = vmatmul.mubr.bf16.gmra.mrb[0].mxu0 %v664
      %v1284 = vpop.f32.mrb[0].mxu0
      %v1285 = vadd.f32 %v1124, %v1284
      %v1286 = vpop.f32.mrb[0].mxu0
      %v1287 = vpop.f32.mrb[0].mxu0
      %v1288 = vadd.f32 %v1127, %v1287
      %v1289 = vpop.f32.mrb[0].mxu0
      %1290 = vmatprep.mubr.bf16.mxu0 %v670
      %1291 = vmatmul.mubr.bf16.gmra.mrb[0].mxu0 %v669
      %v1292 = vpop.f32.mrb[0].mxu0
      %v1293 = vadd.f32 %v1132, %v1292
      %v1294 = vpop.f32.mrb[0].mxu0
      %v1295 = vpop.f32.mrb[0].mxu0
      %v1296 = vadd.f32 %v1135, %v1295
      %v1297 = vpop.f32.mrb[0].mxu0
      %1298 = vmatprep.mubr.bf16.mxu0 %v675
      %1299 = vmatmul.mubr.bf16.gmra.mrb[0].mxu0 %v674
      %v1300 = vpop.f32.mrb[0].mxu0
      %v1301 = vadd.f32 %v1140, %v1300
      %v1302 = vpop.f32.mrb[0].mxu0
      %v1303 = vpop.f32.mrb[0].mxu0
      %v1304 = vadd.f32 %v1143, %v1303
      %v1305 = vpop.f32.mrb[0].mxu0
      %1306 = vmatprep.mubr.bf16.mxu0 %v680
      %1307 = vmatmul.mubr.bf16.gmra.mrb[0].mxu0 %v679
      %v1308 = vpop.f32.mrb[0].mxu0
      %v1309 = vadd.f32 %v1148, %v1308
      %v1310 = vpop.f32.mrb[0].mxu0
      %v1311 = vpop.f32.mrb[0].mxu0
      %v1312 = vadd.f32 %v1151, %v1311
      %v1313 = vpop.f32.mrb[0].mxu0
      %1314 = vmatprep.mubr.bf16.mxu0 %v685
      %1315 = vmatmul.mubr.bf16.gmra.mrb[0].mxu0 %v684
      %v1316 = vpop.f32.mrb[0].mxu0
      %v1317 = vadd.f32 %v1156, %v1316
      %v1318 = vpop.f32.mrb[0].mxu0
      %v1319 = vpop.f32.mrb[0].mxu0
      %v1320 = vadd.f32 %v1159, %v1319
      %v1321 = vpop.f32.mrb[0].mxu0
      %1322 = vmatprep.mubr.bf16.mxu0 %v690
      %1323 = vmatmul.mubr.bf16.gmra.mrb[0].mxu0 %v689
      %v1324 = vpop.f32.mrb[0].mxu0
      %v1325 = vadd.f32 %v1164, %v1324
      %v1326 = vpop.f32.mrb[0].mxu0
      %v1327 = vpop.f32.mrb[0].mxu0
      %v1328 = vadd.f32 %v1167, %v1327
      %v1329 = vpop.f32.mrb[0].mxu0
      %1330 = vmatprep.mubr.bf16.mxu0 %v695
      %1331 = vmatmul.mubr.bf16.gmra.mrb[0].mxu0 %v694
      %v1332 = vpop.f32.mrb[0].mxu0
      %v1333 = vadd.f32 %v1172, %v1332
      %v1334 = vpop.f32.mrb[0].mxu0
      %v1335 = vpop.f32.mrb[0].mxu0
      %v1336 = vadd.f32 %v1175, %v1335
      %v1337 = vpop.f32.mrb[0].mxu0
      %1338 = vdwg.mxu0
      %1339 = vmatprep.subr.bf16.mxu0 0
      %1340 = vmatpush1.bf16.msra.mxu0 %v969
      %1341 = vmatprep.subr.bf16.mxu0 0
      %1342 = vmatpush1.bf16.msra.mxu0 %v970
      %1343 = vmatprep.subr.bf16.mxu0 0
      %1344 = vmatpush1.bf16.msra.mxu0 %v971
      %1345 = vmatprep.subr.bf16.mxu0 0
      %1346 = vmatpush1.bf16.msra.mxu0 %v972
      %1347 = vmatprep.subr.bf16.mxu0 0
      %1348 = vmatpush1.bf16.msra.mxu0 %v973
      %1349 = vmatprep.subr.bf16.mxu0 0
      %1350 = vmatpush1.bf16.msra.mxu0 %v974
      %1351 = vmatprep.subr.bf16.mxu0 0
      %1352 = vmatpush1.bf16.msra.mxu0 %v975
      %1353 = vmatprep.subr.bf16.mxu0 0
      %1354 = vmatpush1.bf16.msra.mxu0 %v976
      %1355 = vmatprep.subr.bf16.mxu0 0
      %1356 = vmatpush1.bf16.msra.mxu0 0
      %1357 = vmatprep.subr.bf16.mxu0 0
      %1358 = vmatpush1.bf16.msra.mxu0 0
      %1359 = vmatprep.subr.bf16.mxu0 0
      %1360 = vmatpush1.bf16.msra.mxu0 0
      %1361 = vmatprep.subr.bf16.mxu0 0
      %1362 = vmatpush1.bf16.msra.mxu0 0
      %1363 = vmatprep.subr.bf16.mxu0 0
      %1364 = vmatpush1.bf16.msra.mxu0 0
      %1365 = vmatprep.subr.bf16.mxu0 0
      %1366 = vmatpush1.bf16.msra.mxu0 0
      %1367 = vmatprep.subr.bf16.mxu0 0
      %1368 = vmatpush1.bf16.msra.mxu0 0
      %1369 = vmatprep.subr.bf16.mxu0 0
      %1370 = vmatpush1.bf16.msra.mxu0 0
      %1371 = vmatprep.mubr.bf16.mxu0 0
      %1372 = vmatmul.mubr.bf16.gmra.mrb[0].mxu0 %v621
      %v1373 = vpop.f32.mrb[0].mxu0
      %v1374 = vadd.f32 %v1213, %v1373
      %v1375 = vpop.f32.mrb[0].mxu0
      %v1376 = vpop.f32.mrb[0].mxu0
      %v1377 = vadd.f32 %v1216, %v1376
      %v1378 = vpop.f32.mrb[0].mxu0
      %1379 = vmatprep.mubr.bf16.mxu0 0
      %1380 = vmatmul.mubr.bf16.gmra.mrb[0].mxu0 %v626
      %v1381 = vpop.f32.mrb[0].mxu0
      %v1382 = vadd.f32 %v1221, %v1381
      %v1383 = vpop.f32.mrb[0].mxu0
      %v1384 = vpop.f32.mrb[0].mxu0
      %v1385 = vadd.f32 %v1224, %v1384
      %v1386 = vpop.f32.mrb[0].mxu0
      %1387 = vmatprep.mubr.bf16.mxu0 0
      %1388 = vmatmul.mubr.bf16.gmra.mrb[0].mxu0 %v631
      %v1389 = vpop.f32.mrb[0].mxu0
      %v1390 = vadd.f32 %v1229, %v1389
      %v1391 = vpop.f32.mrb[0].mxu0
      %v1392 = vpop.f32.mrb[0].mxu0
      %v1393 = vadd.f32 %v1232, %v1392
      %v1394 = vpop.f32.mrb[0].mxu0
      %1395 = vmatprep.mubr.bf16.mxu0 0
      %1396 = vmatmul.mubr.bf16.gmra.mrb[0].mxu0 %v636
      %v1397 = vpop.f32.mrb[0].mxu0
      %v1398 = vadd.f32 %v1237, %v1397
      %v1399 = vpop.f32.mrb[0].mxu0
      %v1400 = vpop.f32.mrb[0].mxu0
      %v1401 = vadd.f32 %v1240, %v1400
      %v1402 = vpop.f32.mrb[0].mxu0
      %1403 = vmatprep.mubr.bf16.mxu0 0
      %1404 = vmatmul.mubr.bf16.gmra.mrb[0].mxu0 %v641
      %v1405 = vpop.f32.mrb[0].mxu0
      %v1406 = vadd.f32 %v1245, %v1405
      %v1407 = vpop.f32.mrb[0].mxu0
      %v1408 = vpop.f32.mrb[0].mxu0
      %v1409 = vadd.f32 %v1248, %v1408
      %v1410 = vpop.f32.mrb[0].mxu0
      %1411 = vmatprep.mubr.bf16.mxu0 0
      %1412 = vmatmul.mubr.bf16.gmra.mrb[0].mxu0 %v646
      %v1413 = vpop.f32.mrb[0].mxu0
      %v1414 = vadd.f32 %v1253, %v1413
      %v1415 = vpop.f32.mrb[0].mxu0
      %v1416 = vpop.f32.mrb[0].mxu0
      %v1417 = vadd.f32 %v1256, %v1416
      %v1418 = vpop.f32.mrb[0].mxu0
      %1419 = vmatprep.mubr.bf16.mxu0 0
      %1420 = vmatmul.mubr.bf16.gmra.mrb[0].mxu0 %v651
      %v1421 = vpop.f32.mrb[0].mxu0
      %v1422 = vadd.f32 %v1261, %v1421
      %v1423 = vpop.f32.mrb[0].mxu0
      %v1424 = vpop.f32.mrb[0].mxu0
      %v1425 = vadd.f32 %v1264, %v1424
      %v1426 = vpop.f32.mrb[0].mxu0
      %1427 = vmatprep.mubr.bf16.mxu0 0
      %1428 = vmatmul.mubr.bf16.gmra.mrb[0].mxu0 %v656
      %v1429 = vpop.f32.mrb[0].mxu0
      %v1430 = vadd.f32 %v1269, %v1429
      %v1431 = vpop.f32.mrb[0].mxu0
      %v1432 = vpop.f32.mrb[0].mxu0
      %v1433 = vadd.f32 %v1272, %v1432
      %v1434 = vpop.f32.mrb[0].mxu0
      %1435 = vmatprep.mubr.bf16.mxu0 0
      %1436 = vmatmul.mubr.bf16.gmra.mrb[0].mxu0 %v661
      %v1437 = vpop.f32.mrb[0].mxu0
      %v1438 = vadd.f32 %v1277, %v1437
      %v1439 = vpop.f32.mrb[0].mxu0
      %v1440 = vpop.f32.mrb[0].mxu0
      %v1441 = vadd.f32 %v1280, %v1440
      %v1442 = vpop.f32.mrb[0].mxu0
      %1443 = vmatprep.mubr.bf16.mxu0 0
      %1444 = vmatmul.mubr.bf16.gmra.mrb[0].mxu0 %v666
      %v1445 = vpop.f32.mrb[0].mxu0
      %v1446 = vadd.f32 %v1285, %v1445
      %v1447 = vpop.f32.mrb[0].mxu0
      %v1448 = vpop.f32.mrb[0].mxu0
      %v1449 = vadd.f32 %v1288, %v1448
      %v1450 = vpop.f32.mrb[0].mxu0
      %1451 = vmatprep.mubr.bf16.mxu0 0
      %1452 = vmatmul.mubr.bf16.gmra.mrb[0].mxu0 %v671
      %v1453 = vpop.f32.mrb[0].mxu0
      %v1454 = vadd.f32 %v1293, %v1453
      %v1455 = vpop.f32.mrb[0].mxu0
      %v1456 = vpop.f32.mrb[0].mxu0
      %v1457 = vadd.f32 %v1296, %v1456
      %v1458 = vpop.f32.mrb[0].mxu0
      %1459 = vmatprep.mubr.bf16.mxu0 0
      %1460 = vmatmul.mubr.bf16.gmra.mrb[0].mxu0 %v676
      %v1461 = vpop.f32.mrb[0].mxu0
      %v1462 = vadd.f32 %v1301, %v1461
      %v1463 = vpop.f32.mrb[0].mxu0
      %v1464 = vpop.f32.mrb[0].mxu0
      %v1465 = vadd.f32 %v1304, %v1464
      %v1466 = vpop.f32.mrb[0].mxu0
      %1467 = vmatprep.mubr.bf16.mxu0 0
      %1468 = vmatmul.mubr.bf16.gmra.mrb[0].mxu0 %v681
      %v1469 = vpop.f32.mrb[0].mxu0
      %v1470 = vadd.f32 %v1309, %v1469
      %v1471 = vpop.f32.mrb[0].mxu0
      %v1472 = vpop.f32.mrb[0].mxu0
      %v1473 = vadd.f32 %v1312, %v1472
      %v1474 = vpop.f32.mrb[0].mxu0
      %1475 = vmatprep.mubr.bf16.mxu0 0
      %1476 = vmatmul.mubr.bf16.gmra.mrb[0].mxu0 %v686
      %v1477 = vpop.f32.mrb[0].mxu0
      %v1478 = vadd.f32 %v1317, %v1477
      %v1479 = vpop.f32.mrb[0].mxu0
      %v1480 = vpop.f32.mrb[0].mxu0
      %v1481 = vadd.f32 %v1320, %v1480
      %v1482 = vpop.f32.mrb[0].mxu0
      %1483 = vmatprep.mubr.bf16.mxu0 0
      %1484 = vmatmul.mubr.bf16.gmra.mrb[0].mxu0 %v691
      %v1485 = vpop.f32.mrb[0].mxu0
      %v1486 = vadd.f32 %v1325, %v1485
      %v1487 = vpop.f32.mrb[0].mxu0
      %v1488 = vpop.f32.mrb[0].mxu0
      %v1489 = vadd.f32 %v1328, %v1488
      %v1490 = vpop.f32.mrb[0].mxu0
      %1491 = vmatprep.mubr.bf16.mxu0 0
      %1492 = vmatmul.mubr.bf16.gmra.mrb[0].mxu0 %v696
      %v1493 = vpop.f32.mrb[0].mxu0
      %v1494 = vadd.f32 %v1333, %v1493
      %v1495 = vpop.f32.mrb[0].mxu0
      %v1496 = vpop.f32.mrb[0].mxu0
      %v1497 = vadd.f32 %v1336, %v1496
      %v1498 = vpop.f32.mrb[0].mxu0
      %1499 = vdwg.mxu0
      %v1500 = vmul.f32 %v1374, 0.5
      %v1501 = vmul.f32 %v1377, 0.5
      %v1502 = vmul.f32 %v1382, 0.5
      %v1503 = vmul.f32 %v1385, 0.5
      %v1504 = vmul.f32 %v1390, 0.5
      %v1505 = vmul.f32 %v1393, 0.5
      %v1506 = vmul.f32 %v1398, 0.5
      %v1507 = vmul.f32 %v1401, 0.5
      %v1508 = vmul.f32 %v1406, 0.5
      %v1509 = vmul.f32 %v1409, 0.5
      %v1510 = vmul.f32 %v1414, 0.5
      %v1511 = vmul.f32 %v1417, 0.5
      %v1512 = vmul.f32 %v1422, 0.5
      %v1513 = vmul.f32 %v1425, 0.5
      %v1514 = vmul.f32 %v1430, 0.5
      %v1515 = vmul.f32 %v1433, 0.5
      %v1516 = vmul.f32 %v1438, 0.5
      %v1517 = vmul.f32 %v1441, 0.5
      %v1518 = vmul.f32 %v1446, 0.5
      %v1519 = vmul.f32 %v1449, 0.5
      %v1520 = vmul.f32 %v1454, 0.5
      %v1521 = vmul.f32 %v1457, 0.5
      %v1522 = vmul.f32 %v1462, 0.5
      %v1523 = vmul.f32 %v1465, 0.5
      %v1524 = vmul.f32 %v1470, 0.5
      %v1525 = vmul.f32 %v1473, 0.5
      %v1526 = vmul.f32 %v1478, 0.5
      %v1527 = vmul.f32 %v1481, 0.5
      %v1528 = vmul.f32 %v1486, 0.5
      %v1529 = vmul.f32 %v1489, 0.5
      %v1530 = vmul.f32 %v1494, 0.5
      %v1531 = vmul.f32 %v1497, 0.5
      %v1532 = vmul.f32 %v1374, 0.044715
      %v1533 = vmul.f32 %v1377, 0.044715
      %v1534 = vmul.f32 %v1382, 0.044715
      %v1535 = vmul.f32 %v1385, 0.044715
      %v1536 = vmul.f32 %v1390, 0.044715
      %v1537 = vmul.f32 %v1393, 0.044715
      %v1538 = vmul.f32 %v1398, 0.044715
      %v1539 = vmul.f32 %v1401, 0.044715
      %v1540 = vmul.f32 %v1406, 0.044715
      %v1541 = vmul.f32 %v1409, 0.044715
      %v1542 = vmul.f32 %v1414, 0.044715
      %v1543 = vmul.f32 %v1417, 0.044715
      %v1544 = vmul.f32 %v1422, 0.044715
      %v1545 = vmul.f32 %v1425, 0.044715
      %v1546 = vmul.f32 %v1430, 0.044715
      %v1547 = vmul.f32 %v1433, 0.044715
      %v1548 = vmul.f32 %v1438, 0.044715
      %v1549 = vmul.f32 %v1441, 0.044715
      %v1550 = vmul.f32 %v1446, 0.044715
      %v1551 = vmul.f32 %v1449, 0.044715
      %v1552 = vmul.f32 %v1454, 0.044715
      %v1553 = vmul.f32 %v1457, 0.044715
      %v1554 = vmul.f32 %v1462, 0.044715
      %v1555 = vmul.f32 %v1465, 0.044715
      %v1556 = vmul.f32 %v1470, 0.044715
      %v1557 = vmul.f32 %v1473, 0.044715
      %v1558 = vmul.f32 %v1478, 0.044715
      %v1559 = vmul.f32 %v1481, 0.044715
      %v1560 = vmul.f32 %v1486, 0.044715
      %v1561 = vmul.f32 %v1489, 0.044715
      %v1562 = vmul.f32 %v1494, 0.044715
      %v1563 = vmul.f32 %v1497, 0.044715
      %v1564 = vmul.f32 %v1532, %v1374
      %v1565 = vmul.f32 %v1533, %v1377
      %v1566 = vmul.f32 %v1534, %v1382
      %v1567 = vmul.f32 %v1535, %v1385
      %v1568 = vmul.f32 %v1536, %v1390
      %v1569 = vmul.f32 %v1537, %v1393
      %v1570 = vmul.f32 %v1538, %v1398
      %v1571 = vmul.f32 %v1539, %v1401
      %v1572 = vmul.f32 %v1540, %v1406
      %v1573 = vmul.f32 %v1541, %v1409
      %v1574 = vmul.f32 %v1542, %v1414
      %v1575 = vmul.f32 %v1543, %v1417
      %v1576 = vmul.f32 %v1544, %v1422
      %v1577 = vmul.f32 %v1545, %v1425
      %v1578 = vmul.f32 %v1546, %v1430
      %v1579 = vmul.f32 %v1547, %v1433
      %v1580 = vmul.f32 %v1548, %v1438
      %v1581 = vmul.f32 %v1549, %v1441
      %v1582 = vmul.f32 %v1550, %v1446
      %v1583 = vmul.f32 %v1551, %v1449
      %v1584 = vmul.f32 %v1552, %v1454
      %v1585 = vmul.f32 %v1553, %v1457
      %v1586 = vmul.f32 %v1554, %v1462
      %v1587 = vmul.f32 %v1555, %v1465
      %v1588 = vmul.f32 %v1556, %v1470
      %v1589 = vmul.f32 %v1557, %v1473
      %v1590 = vmul.f32 %v1558, %v1478
      %v1591 = vmul.f32 %v1559, %v1481
      %v1592 = vmul.f32 %v1560, %v1486
      %v1593 = vmul.f32 %v1561, %v1489
      %v1594 = vmul.f32 %v1562, %v1494
      %v1595 = vmul.f32 %v1563, %v1497
      %v1596 = vmul.f32 %v1564, %v1374
      %v1597 = vmul.f32 %v1565, %v1377
      %v1598 = vmul.f32 %v1566, %v1382
      %v1599 = vmul.f32 %v1567, %v1385
      %v1600 = vmul.f32 %v1568, %v1390
      %v1601 = vmul.f32 %v1569, %v1393
      %v1602 = vmul.f32 %v1570, %v1398
      %v1603 = vmul.f32 %v1571, %v1401
      %v1604 = vmul.f32 %v1572, %v1406
      %v1605 = vmul.f32 %v1573, %v1409
      %v1606 = vmul.f32 %v1574, %v1414
      %v1607 = vmul.f32 %v1575, %v1417
      %v1608 = vmul.f32 %v1576, %v1422
      %v1609 = vmul.f32 %v1577, %v1425
      %v1610 = vmul.f32 %v1578, %v1430
      %v1611 = vmul.f32 %v1579, %v1433
      %v1612 = vmul.f32 %v1580, %v1438
      %v1613 = vmul.f32 %v1581, %v1441
      %v1614 = vmul.f32 %v1582, %v1446
      %v1615 = vmul.f32 %v1583, %v1449
      %v1616 = vmul.f32 %v1584, %v1454
      %v1617 = vmul.f32 %v1585, %v1457
      %v1618 = vmul.f32 %v1586, %v1462
      %v1619 = vmul.f32 %v1587, %v1465
      %v1620 = vmul.f32 %v1588, %v1470
      %v1621 = vmul.f32 %v1589, %v1473
      %v1622 = vmul.f32 %v1590, %v1478
      %v1623 = vmul.f32 %v1591, %v1481
      %v1624 = vmul.f32 %v1592, %v1486
      %v1625 = vmul.f32 %v1593, %v1489
      %v1626 = vmul.f32 %v1594, %v1494
      %v1627 = vmul.f32 %v1595, %v1497
      %v1628 = vadd.f32 %v1374, %v1596
      %v1629 = vadd.f32 %v1377, %v1597
      %v1630 = vadd.f32 %v1382, %v1598
      %v1631 = vadd.f32 %v1385, %v1599
      %v1632 = vadd.f32 %v1390, %v1600
      %v1633 = vadd.f32 %v1393, %v1601
      %v1634 = vadd.f32 %v1398, %v1602
      %v1635 = vadd.f32 %v1401, %v1603
      %v1636 = vadd.f32 %v1406, %v1604
      %v1637 = vadd.f32 %v1409, %v1605
      %v1638 = vadd.f32 %v1414, %v1606
      %v1639 = vadd.f32 %v1417, %v1607
      %v1640 = vadd.f32 %v1422, %v1608
      %v1641 = vadd.f32 %v1425, %v1609
      %v1642 = vadd.f32 %v1430, %v1610
      %v1643 = vadd.f32 %v1433, %v1611
      %v1644 = vadd.f32 %v1438, %v1612
      %v1645 = vadd.f32 %v1441, %v1613
      %v1646 = vadd.f32 %v1446, %v1614
      %v1647 = vadd.f32 %v1449, %v1615
      %v1648 = vadd.f32 %v1454, %v1616
      %v1649 = vadd.f32 %v1457, %v1617
      %v1650 = vadd.f32 %v1462, %v1618
      %v1651 = vadd.f32 %v1465, %v1619
      %v1652 = vadd.f32 %v1470, %v1620
      %v1653 = vadd.f32 %v1473, %v1621
      %v1654 = vadd.f32 %v1478, %v1622
      %v1655 = vadd.f32 %v1481, %v1623
      %v1656 = vadd.f32 %v1486, %v1624
      %v1657 = vadd.f32 %v1489, %v1625
      %v1658 = vadd.f32 %v1494, %v1626
      %v1659 = vadd.f32 %v1497, %v1627
      %v1660 = vmul.f32 %v1628, 0.7978846
      %v1661 = vmul.f32 %v1629, 0.7978846
      %v1662 = vmul.f32 %v1630, 0.7978846
      %v1663 = vmul.f32 %v1631, 0.7978846
      %v1664 = vmul.f32 %v1632, 0.7978846
      %v1665 = vmul.f32 %v1633, 0.7978846
      %v1666 = vmul.f32 %v1634, 0.7978846
      %v1667 = vmul.f32 %v1635, 0.7978846
      %v1668 = vmul.f32 %v1636, 0.7978846
      %v1669 = vmul.f32 %v1637, 0.7978846
      %v1670 = vmul.f32 %v1638, 0.7978846
      %v1671 = vmul.f32 %v1639, 0.7978846
      %v1672 = vmul.f32 %v1640, 0.7978846
      %v1673 = vmul.f32 %v1641, 0.7978846
      %v1674 = vmul.f32 %v1642, 0.7978846
      %v1675 = vmul.f32 %v1643, 0.7978846
      %v1676 = vmul.f32 %v1644, 0.7978846
      %v1677 = vmul.f32 %v1645, 0.7978846
      %v1678 = vmul.f32 %v1646, 0.7978846
      %v1679 = vmul.f32 %v1647, 0.7978846
      %v1680 = vmul.f32 %v1648, 0.7978846
      %v1681 = vmul.f32 %v1649, 0.7978846
      %v1682 = vmul.f32 %v1650, 0.7978846
      %v1683 = vmul.f32 %v1651, 0.7978846
      %v1684 = vmul.f32 %v1652, 0.7978846
      %v1685 = vmul.f32 %v1653, 0.7978846
      %v1686 = vmul.f32 %v1654, 0.7978846
      %v1687 = vmul.f32 %v1655, 0.7978846
      %v1688 = vmul.f32 %v1656, 0.7978846
      %v1689 = vmul.f32 %v1657, 0.7978846
      %v1690 = vmul.f32 %v1658, 0.7978846
      %v1691 = vmul.f32 %v1659, 0.7978846
      %v1692 = vtanh.pop %v1660
      %v1693 = vtanh.pop %v1661
      %v1694 = vtanh.pop %v1662
      %v1695 = vtanh.pop %v1663
      %v1696 = vtanh.pop %v1664
      %v1697 = vtanh.pop %v1665
      %v1698 = vtanh.pop %v1666
      %v1699 = vtanh.pop %v1667
      %v1700 = vtanh.pop %v1668
      %v1701 = vtanh.pop %v1669
      %v1702 = vtanh.pop %v1670
      %v1703 = vtanh.pop %v1671
      %v1704 = vtanh.pop %v1672
      %v1705 = vtanh.pop %v1673
      %v1706 = vtanh.pop %v1674
      %v1707 = vtanh.pop %v1675
      %v1708 = vtanh.pop %v1676
      %v1709 = vtanh.pop %v1677
      %v1710 = vtanh.pop %v1678
      %v1711 = vtanh.pop %v1679
      %v1712 = vtanh.pop %v1680
      %v1713 = vtanh.pop %v1681
      %v1714 = vtanh.pop %v1682
      %v1715 = vtanh.pop %v1683
      %v1716 = vtanh.pop %v1684
      %v1717 = vtanh.pop %v1685
      %v1718 = vtanh.pop %v1686
      %v1719 = vtanh.pop %v1687
      %v1720 = vtanh.pop %v1688
      %v1721 = vtanh.pop %v1689
      %v1722 = vtanh.pop %v1690
      %v1723 = vtanh.pop %v1691
      %v1724 = vadd.f32 %v1692, 1.0
      %v1725 = vadd.f32 %v1693, 1.0
      %v1726 = vadd.f32 %v1694, 1.0
      %v1727 = vadd.f32 %v1695, 1.0
      %v1728 = vadd.f32 %v1696, 1.0
      %v1729 = vadd.f32 %v1697, 1.0
      %v1730 = vadd.f32 %v1698, 1.0
      %v1731 = vadd.f32 %v1699, 1.0
      %v1732 = vadd.f32 %v1700, 1.0
      %v1733 = vadd.f32 %v1701, 1.0
      %v1734 = vadd.f32 %v1702, 1.0
      %v1735 = vadd.f32 %v1703, 1.0
      %v1736 = vadd.f32 %v1704, 1.0
      %v1737 = vadd.f32 %v1705, 1.0
      %v1738 = vadd.f32 %v1706, 1.0
      %v1739 = vadd.f32 %v1707, 1.0
      %v1740 = vadd.f32 %v1708, 1.0
      %v1741 = vadd.f32 %v1709, 1.0
      %v1742 = vadd.f32 %v1710, 1.0
      %v1743 = vadd.f32 %v1711, 1.0
      %v1744 = vadd.f32 %v1712, 1.0
      %v1745 = vadd.f32 %v1713, 1.0
      %v1746 = vadd.f32 %v1714, 1.0
      %v1747 = vadd.f32 %v1715, 1.0
      %v1748 = vadd.f32 %v1716, 1.0
      %v1749 = vadd.f32 %v1717, 1.0
      %v1750 = vadd.f32 %v1718, 1.0
      %v1751 = vadd.f32 %v1719, 1.0
      %v1752 = vadd.f32 %v1720, 1.0
      %v1753 = vadd.f32 %v1721, 1.0
      %v1754 = vadd.f32 %v1722, 1.0
      %v1755 = vadd.f32 %v1723, 1.0
      %v1756 = vmul.f32 %v1500, %v1724
      %v1757 = vmul.f32 %v1501, %v1725
      %v1758 = vmul.f32 %v1502, %v1726
      %v1759 = vmul.f32 %v1503, %v1727
      %v1760 = vmul.f32 %v1504, %v1728
      %v1761 = vmul.f32 %v1505, %v1729
      %v1762 = vmul.f32 %v1506, %v1730
      %v1763 = vmul.f32 %v1507, %v1731
      %v1764 = vmul.f32 %v1508, %v1732
      %v1765 = vmul.f32 %v1509, %v1733
      %v1766 = vmul.f32 %v1510, %v1734
      %v1767 = vmul.f32 %v1511, %v1735
      %v1768 = vmul.f32 %v1512, %v1736
      %v1769 = vmul.f32 %v1513, %v1737
      %v1770 = vmul.f32 %v1514, %v1738
      %v1771 = vmul.f32 %v1515, %v1739
      %v1772 = vmul.f32 %v1516, %v1740
      %v1773 = vmul.f32 %v1517, %v1741
      %v1774 = vmul.f32 %v1518, %v1742
      %v1775 = vmul.f32 %v1519, %v1743
      %v1776 = vmul.f32 %v1520, %v1744
      %v1777 = vmul.f32 %v1521, %v1745
      %v1778 = vmul.f32 %v1522, %v1746
      %v1779 = vmul.f32 %v1523, %v1747
      %v1780 = vmul.f32 %v1524, %v1748
      %v1781 = vmul.f32 %v1525, %v1749
      %v1782 = vmul.f32 %v1526, %v1750
      %v1783 = vmul.f32 %v1527, %v1751
      %v1784 = vmul.f32 %v1528, %v1752
      %v1785 = vmul.f32 %v1529, %v1753
      %v1786 = vmul.f32 %v1530, %v1754
      %v1787 = vmul.f32 %v1531, %v1755
      %1788 = vst [vmem:[%s175] sm:$0xff] %v1756
      %1789 = vst [vmem:[%s175 + $0x8] sm:$0xff] %v1757
      %1790 = vst [vmem:[%s175 + $0x10] sm:$0xff] %v1758
      %1791 = vst [vmem:[%s175 + $0x18] sm:$0xff] %v1759
      %1792 = vst [vmem:[%s175 + $0x20] sm:$0xff] %v1760
      %1793 = vst [vmem:[%s175 + $0x28] sm:$0xff] %v1761
      %1794 = vst [vmem:[%s175 + $0x30] sm:$0xff] %v1762
      %1795 = vst [vmem:[%s175 + $0x38] sm:$0xff] %v1763
      %1796 = vst [vmem:[%s175 + $0x40] sm:$0xff] %v1764
      %1797 = vst [vmem:[%s175 + $0x48] sm:$0xff] %v1765
      %1798 = vst [vmem:[%s175 + $0x50] sm:$0xff] %v1766
      %1799 = vst [vmem:[%s175 + $0x58] sm:$0xff] %v1767
      %1800 = vst [vmem:[%s175 + $0x60] sm:$0xff] %v1768
      %1801 = vst [vmem:[%s175 + $0x68] sm:$0xff] %v1769
      %1802 = vst [vmem:[%s175 + $0x70] sm:$0xff] %v1770
      %1803 = vst [vmem:[%s175 + $0x78] sm:$0xff] %v1771
      %1804 = vst [vmem:[%s175 + $0x80] sm:$0xff] %v1772
      %1805 = vst [vmem:[%s175 + $0x88] sm:$0xff] %v1773
      %1806 = vst [vmem:[%s175 + $0x90] sm:$0xff] %v1774
      %1807 = vst [vmem:[%s175 + $0x98] sm:$0xff] %v1775
      %1808 = vst [vmem:[%s175 + $0xa0] sm:$0xff] %v1776
      %1809 = vst [vmem:[%s175 + $0xa8] sm:$0xff] %v1777
      %1810 = vst [vmem:[%s175 + $0xb0] sm:$0xff] %v1778
      %1811 = vst [vmem:[%s175 + $0xb8] sm:$0xff] %v1779
      %1812 = vst [vmem:[%s175 + $0xc0] sm:$0xff] %v1780
      %1813 = vst [vmem:[%s175 + $0xc8] sm:$0xff] %v1781
      %1814 = vst [vmem:[%s175 + $0xd0] sm:$0xff] %v1782
      %1815 = vst [vmem:[%s175 + $0xd8] sm:$0xff] %v1783
      %1816 = vst [vmem:[%s175 + $0xe0] sm:$0xff] %v1784
      %1817 = vst [vmem:[%s175 + $0xe8] sm:$0xff] %v1785
      %1818 = vst [vmem:[%s175 + $0xf0] sm:$0xff] %v1786
      %1819 = vst [vmem:[%s175 + $0xf8] sm:$0xff] %v1787
      %s1820 = smul.u32 32, %s14
      %p1821 = scmp.lt.s32.totalorder %s1820, 95
      %s1822 = scalar_select %p1821, %s1820, 95
      %s1823 = smul.addr %s1822, 8
      %s1824 = scalar_lea.vmem %s3, %s1823
      // Predicated region
      $region33: #{_lambda_.10} parent=31 // pred_check
        %p1825 = pneg %p100
      $region34: #{_lambda_.10} parent=31 // pred_check_branch
        %1827 = sbr.rel (%p1825) target = $region36
      $region35: #{_lambda_.10} parent=31 // pred_region
        %s1828 = smul.u32 32, %s14
      $region36: #{_lambda_.10} parent=31 // pred_fallthru
        _
    $region32: #{_lambda_.10} parent=5 // pred_fallthru
      _
    %p1829 = scmp.le.s32.totalorder 2, %s9
    // Predicated region
    $region37: #{_lambda_.10} parent=5 // pred_check
      %p1830 = pneg %p1829
    $region38: #{_lambda_.10} parent=5 // pred_check_branch
      %1832 = sbr.rel (%p1830) target = $region40
    $region39: #{_lambda_.10} parent=5 // pred_region
      %s1833 = ssub.s32 %s9, 2
      // Predicated region
      $region41: #{_lambda_.10} parent=39 // pred_check
        %p1834 = pneg %p106
      $region42: #{_lambda_.10} parent=39 // pred_check_branch
        %1836 = sbr.rel (%p1834) target = $region44
      $region43: #{_lambda_.10} parent=39 // pred_region
        %s1837 = smul.u32 32, %s15
        %p1838 = scmp.lt.s32.totalorder %s1837, 95
        %s1839 = scalar_select %p1838, %s1837, 95
        %s1840 = smul.addr %s1839, 8
        %s1841 = scalar_lea.vmem %s3, %s1840
      $region44: #{_lambda_.10} parent=39 // pred_fallthru
        _
    $region40: #{_lambda_.10} parent=5 // pred_fallthru
      _
  $region6: #{_lambda_.10} parent=0 // loop_footer
    %s13 = sadd.s32 1, %s9
  $region7: #{_lambda_.10} parent=0 // loop_footer_branch
    %8 = sbr.rel target = $region3
  $region8: #{_lambda_.10} parent=0 // loop_exit
    _

// kernel: _lambda_.11
$region0: #{_lambda_.11}
  #allocation0 [shape = 'u32[]', space=smem, size = 0x4, offset = 0x4, fixed_abs, tag = 'smem constant byte address 0x4 - core index']
  #allocation1 [shape = 'u32[144,128]{1,0:T(1,128)}', space=vmem, size = 0x12000, scoped, tag = 'internal scratch']
  %s0 = inlined_call_operand.vmem [shape: bf16[64,384], index: 0, kind: input, shape index: {}]
  %s1 = inlined_call_operand.vmem [shape: bf16[384,128], index: 1, kind: input, shape index: {}]
  %s2 = inlined_call_operand.vmem [shape: f32[1,128], index: 2, kind: input, shape index: {}]
  %s3 = inlined_call_operand.vmem [shape: f32[64,128], index: 3, kind: output, shape index: {}]
  %s4 = sld [smem:[#allocation0]]
  $region22: #{_lambda_.11} parent=0
    _
  %s6 = ssub.s32 1, %s4
  %s7 = scalar_select 0, %s6, %s4
  // Predicated region
  $region2: #{_lambda_.11} parent=0 // pred_check
    _
  $region3: #{_lambda_.11} parent=0 // pred_check_branch
    %9 = sbr.rel (0) target = $region5
  $region4: #{_lambda_.11} parent=0 // pred_region
    _
  $region5: #{_lambda_.11} parent=0 // pred_fallthru
    _
  // Predicated region
  $region6: #{_lambda_.11} parent=0 // pred_check
    _
  $region7: #{_lambda_.11} parent=0 // pred_check_branch
    %11 = sbr.rel (0) target = $region9
  $region8: #{_lambda_.11} parent=0 // pred_region
    _
  $region9: #{_lambda_.11} parent=0 // pred_fallthru
    _
  // Predicated region
  $region10: #{_lambda_.11} parent=0 // pred_check
    _
  $region11: #{_lambda_.11} parent=0 // pred_check_branch
    %13 = sbr.rel (0) target = $region13
  $region12: #{_lambda_.11} parent=0 // pred_region
    _
  $region13: #{_lambda_.11} parent=0 // pred_fallthru
    _
  %v15 = vld [vmem:[%s0] sm:$0xff]
  %v16 = vld [vmem:[%s0 + $0x8] sm:$0xf]
  %v17 = vld [vmem:[%s0 + $0xc] sm:$0xff]
  %v18 = vld [vmem:[%s0 + $0x14] sm:$0xf]
  %v19 = vld [vmem:[%s0 + $0x18] sm:$0xff]
  %v20 = vld [vmem:[%s0 + $0x20] sm:$0xf]
  %v21 = vld [vmem:[%s0 + $0x24] sm:$0xff]
  %v22 = vld [vmem:[%s0 + $0x2c] sm:$0xf]
  %v23 = vld [vmem:[%s0 + $0x30] sm:$0xff]
  %v24 = vld [vmem:[%s0 + $0x38] sm:$0xf]
  %v25 = vld [vmem:[%s0 + $0x3c] sm:$0xff]
  %v26 = vld [vmem:[%s0 + $0x44] sm:$0xf]
  %v27 = vld [vmem:[%s0 + $0x48] sm:$0xff]
  %v28 = vld [vmem:[%s0 + $0x50] sm:$0xf]
  %v29 = vld [vmem:[%s0 + $0x54] sm:$0xff]
  %v30 = vld [vmem:[%s0 + $0x5c] sm:$0xf]
  %v31 = vld [vmem:[%s1] sm:$0xf]
  %v32 = vld [vmem:[%s1 + $0x4] sm:$0xf]
  %v33 = vld [vmem:[%s1 + $0x8] sm:$0xf]
  %v34 = vld [vmem:[%s1 + $0xc] sm:$0xf]
  %v35 = vld [vmem:[%s1 + $0x10] sm:$0xf]
  %v36 = vld [vmem:[%s1 + $0x14] sm:$0xf]
  %v37 = vld [vmem:[%s1 + $0x18] sm:$0xf]
  %v38 = vld [vmem:[%s1 + $0x1c] sm:$0xf]
  %v39 = vld [vmem:[%s1 + $0x20] sm:$0xf]
  %v40 = vld [vmem:[%s1 + $0x24] sm:$0xf]
  %v41 = vld [vmem:[%s1 + $0x28] sm:$0xf]
  %v42 = vld [vmem:[%s1 + $0x2c] sm:$0xf]
  %v43 = vld [vmem:[%s1 + $0x30] sm:$0xf]
  %v44 = vld [vmem:[%s1 + $0x34] sm:$0xf]
  %v45 = vld [vmem:[%s1 + $0x38] sm:$0xf]
  %v46 = vld [vmem:[%s1 + $0x3c] sm:$0xf]
  %v47 = vld [vmem:[%s1 + $0x40] sm:$0xf]
  %v48 = vld [vmem:[%s1 + $0x44] sm:$0xf]
  %v49 = vld [vmem:[%s1 + $0x48] sm:$0xf]
  %v50 = vld [vmem:[%s1 + $0x4c] sm:$0xf]
  %v51 = vld [vmem:[%s1 + $0x50] sm:$0xf]
  %v52 = vld [vmem:[%s1 + $0x54] sm:$0xf]
  %v53 = vld [vmem:[%s1 + $0x58] sm:$0xf]
  %v54 = vld [vmem:[%s1 + $0x5c] sm:$0xf]
  %v55 = vld [vmem:[%s1 + $0x60] sm:$0xf]
  %v56 = vld [vmem:[%s1 + $0x64] sm:$0xf]
  %v57 = vld [vmem:[%s1 + $0x68] sm:$0xf]
  %v58 = vld [vmem:[%s1 + $0x6c] sm:$0xf]
  %v59 = vld [vmem:[%s1 + $0x70] sm:$0xf]
  %v60 = vld [vmem:[%s1 + $0x74] sm:$0xf]
  %v61 = vld [vmem:[%s1 + $0x78] sm:$0xf]
  %v62 = vld [vmem:[%s1 + $0x7c] sm:$0xf]
  %v63 = vld [vmem:[%s1 + $0x80] sm:$0xf]
  %v64 = vld [vmem:[%s1 + $0x84] sm:$0xf]
  %v65 = vld [vmem:[%s1 + $0x88] sm:$0xf]
  %v66 = vld [vmem:[%s1 + $0x8c] sm:$0xf]
  %v67 = vld [vmem:[%s1 + $0x90] sm:$0xf]
  %v68 = vld [vmem:[%s1 + $0x94] sm:$0xf]
  %v69 = vld [vmem:[%s1 + $0x98] sm:$0xf]
  %v70 = vld [vmem:[%s1 + $0x9c] sm:$0xf]
  %v71 = vld [vmem:[%s1 + $0xa0] sm:$0xf]
  %v72 = vld [vmem:[%s1 + $0xa4] sm:$0xf]
  %v73 = vld [vmem:[%s1 + $0xa8] sm:$0xf]
  %v74 = vld [vmem:[%s1 + $0xac] sm:$0xf]
  %v75 = vld [vmem:[%s1 + $0xb0] sm:$0xf]
  %v76 = vld [vmem:[%s1 + $0xb4] sm:$0xf]
  %v77 = vld [vmem:[%s1 + $0xb8] sm:$0xf]
  %v78 = vld [vmem:[%s1 + $0xbc] sm:$0xf]
  %v79 = vld [vmem:[%s2] sm:$0x1]
  %v81 = vlaneseq
  %v82 = vshrl.u32 %v81, 7
  %v83 = vsub.s32 0, %v82
  %v84 = vrot.slane %v79, %v83
  %v102 = vunpack.c.l.b16 %v15
  %v103 = vunpack.c.h.b16 %v15
  %v104 = vunpack.c.l.b16 %v16
  %v105 = vunpack.c.l.b16 %v17
  %v106 = vunpack.c.h.b16 %v17
  %v107 = vunpack.c.l.b16 %v18
  %v108 = vunpack.c.l.b16 %v19
  %v109 = vunpack.c.h.b16 %v19
  %v110 = vunpack.c.l.b16 %v20
  %v111 = vunpack.c.l.b16 %v21
  %v112 = vunpack.c.h.b16 %v21
  %v113 = vunpack.c.l.b16 %v22
  %v114 = vunpack.c.l.b16 %v23
  %v115 = vunpack.c.h.b16 %v23
  %v116 = vunpack.c.l.b16 %v24
  %v117 = vunpack.c.l.b16 %v25
  %v118 = vunpack.c.h.b16 %v25
  %v119 = vunpack.c.l.b16 %v26
  %v120 = vunpack.c.l.b16 %v27
  %v121 = vunpack.c.h.b16 %v27
  %v122 = vunpack.c.l.b16 %v28
  %v123 = vunpack.c.l.b16 %v29
  %v124 = vunpack.c.h.b16 %v29
  %v125 = vunpack.c.l.b16 %v30
  %v126 = vpack.c.b16 %v105, %v102
  %v127 = vpack.c.b16 %v106, %v103
  %v128 = vpack.c.b16 %v107, %v104
  %v129 = vpack.c.b16 %v111, %v108
  %v130 = vpack.c.b16 %v112, %v109
  %v131 = vpack.c.b16 %v113, %v110
  %v132 = vpack.c.b16 %v117, %v114
  %v133 = vpack.c.b16 %v118, %v115
  %v134 = vpack.c.b16 %v119, %v116
  %v135 = vpack.c.b16 %v123, %v120
  %v136 = vpack.c.b16 %v124, %v121
  %v137 = vpack.c.b16 %v125, %v122
  %v198 = vunpack.c.l.b16 %v31
  %v199 = vunpack.c.l.b16 %v32
  %v200 = vunpack.c.l.b16 %v33
  %v201 = vunpack.c.l.b16 %v34
  %v202 = vunpack.c.l.b16 %v35
  %v203 = vunpack.c.l.b16 %v36
  %v204 = vunpack.c.l.b16 %v37
  %v205 = vunpack.c.l.b16 %v38
  %v206 = vunpack.c.l.b16 %v39
  %v207 = vunpack.c.l.b16 %v40
  %v208 = vunpack.c.l.b16 %v41
  %v209 = vunpack.c.l.b16 %v42
  %v210 = vunpack.c.l.b16 %v43
  %v211 = vunpack.c.l.b16 %v44
  %v212 = vunpack.c.l.b16 %v45
  %v213 = vunpack.c.l.b16 %v46
  %v214 = vunpack.c.l.b16 %v47
  %v215 = vunpack.c.l.b16 %v48
  %v216 = vunpack.c.l.b16 %v49
  %v217 = vunpack.c.l.b16 %v50
  %v218 = vunpack.c.l.b16 %v51
  %v219 = vunpack.c.l.b16 %v52
  %v220 = vunpack.c.l.b16 %v53
  %v221 = vunpack.c.l.b16 %v54
  %v222 = vunpack.c.l.b16 %v55
  %v223 = vunpack.c.l.b16 %v56
  %v224 = vunpack.c.l.b16 %v57
  %v225 = vunpack.c.l.b16 %v58
  %v226 = vunpack.c.l.b16 %v59
  %v227 = vunpack.c.l.b16 %v60
  %v228 = vunpack.c.l.b16 %v61
  %v229 = vunpack.c.l.b16 %v62
  %v230 = vunpack.c.l.b16 %v63
  %v231 = vunpack.c.l.b16 %v64
  %v232 = vunpack.c.l.b16 %v65
  %v233 = vunpack.c.l.b16 %v66
  %v234 = vunpack.c.l.b16 %v67
  %v235 = vunpack.c.l.b16 %v68
  %v236 = vunpack.c.l.b16 %v69
  %v237 = vunpack.c.l.b16 %v70
  %v238 = vunpack.c.l.b16 %v71
  %v239 = vunpack.c.l.b16 %v72
  %v240 = vunpack.c.l.b16 %v73
  %v241 = vunpack.c.l.b16 %v74
  %v242 = vunpack.c.l.b16 %v75
  %v243 = vunpack.c.l.b16 %v76
  %v244 = vunpack.c.l.b16 %v77
  %v245 = vunpack.c.l.b16 %v78
  %v246 = vpack.c.b16 %v199, %v198
  %v247 = vpack.c.b16 %v201, %v200
  %v248 = vpack.c.b16 %v203, %v202
  %v249 = vpack.c.b16 %v205, %v204
  %v250 = vpack.c.b16 %v207, %v206
  %v251 = vpack.c.b16 %v209, %v208
  %v252 = vpack.c.b16 %v211, %v210
  %v253 = vpack.c.b16 %v213, %v212
  %v254 = vpack.c.b16 %v215, %v214
  %v255 = vpack.c.b16 %v217, %v216
  %v256 = vpack.c.b16 %v219, %v218
  %v257 = vpack.c.b16 %v221, %v220
  %v258 = vpack.c.b16 %v223, %v222
  %v259 = vpack.c.b16 %v225, %v224
  %v260 = vpack.c.b16 %v227, %v226
  %v261 = vpack.c.b16 %v229, %v228
  %v262 = vpack.c.b16 %v231, %v230
  %v263 = vpack.c.b16 %v233, %v232
  %v264 = vpack.c.b16 %v235, %v234
  %v265 = vpack.c.b16 %v237, %v236
  %v266 = vpack.c.b16 %v239, %v238
  %v267 = vpack.c.b16 %v241, %v240
  %v268 = vpack.c.b16 %v243, %v242
  %v269 = vpack.c.b16 %v245, %v244
  %294 = vmatprep.subr.bf16.mxu0 0
  %295 = vmatpush1.bf16.msra.mxu0 %v246
  %296 = vmatprep.subr.bf16.mxu0 0
  %297 = vmatpush1.bf16.msra.mxu0 %v247
  %298 = vmatprep.subr.bf16.mxu0 0
  %299 = vmatpush1.bf16.msra.mxu0 %v248
  %300 = vmatprep.subr.bf16.mxu0 0
  %301 = vmatpush1.bf16.msra.mxu0 %v249
  %302 = vmatprep.subr.bf16.mxu0 0
  %303 = vmatpush1.bf16.msra.mxu0 %v250
  %304 = vmatprep.subr.bf16.mxu0 0
  %305 = vmatpush1.bf16.msra.mxu0 %v251
  %306 = vmatprep.subr.bf16.mxu0 0
  %307 = vmatpush1.bf16.msra.mxu0 %v252
  %308 = vmatprep.subr.bf16.mxu0 0
  %309 = vmatpush1.bf16.msra.mxu0 %v253
  %310 = vmatprep.subr.bf16.mxu0 0
  %311 = vmatpush1.bf16.msra.mxu0 %v254
  %312 = vmatprep.subr.bf16.mxu0 0
  %313 = vmatpush1.bf16.msra.mxu0 %v255
  %314 = vmatprep.subr.bf16.mxu0 0
  %315 = vmatpush1.bf16.msra.mxu0 %v256
  %316 = vmatprep.subr.bf16.mxu0 0
  %317 = vmatpush1.bf16.msra.mxu0 %v257
  %318 = vmatprep.subr.bf16.mxu0 0
  %319 = vmatpush1.bf16.msra.mxu0 %v258
  %320 = vmatprep.subr.bf16.mxu0 0
  %321 = vmatpush1.bf16.msra.mxu0 %v259
  %322 = vmatprep.subr.bf16.mxu0 0
  %323 = vmatpush1.bf16.msra.mxu0 %v260
  %324 = vmatprep.subr.bf16.mxu0 0
  %325 = vmatpush1.bf16.msra.mxu0 %v261
  %326 = vmatprep.mubr.bf16.mxu0 %v127
  %327 = vmatmul.mubr.bf16.gmra.mrb[0].mxu0 %v126
  %v328 = vpop.f32.mrb[0].mxu0
  %v329 = vadd.f32 %v84, %v328
  %v330 = vpop.f32.mrb[0].mxu0
  %v331 = vpop.f32.mrb[0].mxu0
  %v332 = vadd.f32 %v84, %v331
  %v333 = vpop.f32.mrb[0].mxu0
  %334 = vmatprep.mubr.bf16.mxu0 %v130
  %335 = vmatmul.mubr.bf16.gmra.mrb[0].mxu0 %v129
  %v336 = vpop.f32.mrb[0].mxu0
  %v337 = vadd.f32 %v84, %v336
  %v338 = vpop.f32.mrb[0].mxu0
  %v339 = vpop.f32.mrb[0].mxu0
  %v340 = vadd.f32 %v84, %v339
  %v341 = vpop.f32.mrb[0].mxu0
  %342 = vmatprep.mubr.bf16.mxu0 %v133
  %343 = vmatmul.mubr.bf16.gmra.mrb[0].mxu0 %v132
  %v344 = vpop.f32.mrb[0].mxu0
  %v345 = vadd.f32 %v84, %v344
  %v346 = vpop.f32.mrb[0].mxu0
  %v347 = vpop.f32.mrb[0].mxu0
  %v348 = vadd.f32 %v84, %v347
  %v349 = vpop.f32.mrb[0].mxu0
  %350 = vmatprep.mubr.bf16.mxu0 %v136
  %351 = vmatmul.mubr.bf16.gmra.mrb[0].mxu0 %v135
  %v352 = vpop.f32.mrb[0].mxu0
  %v353 = vadd.f32 %v84, %v352
  %v354 = vpop.f32.mrb[0].mxu0
  %v355 = vpop.f32.mrb[0].mxu0
  %v356 = vadd.f32 %v84, %v355
  %v357 = vpop.f32.mrb[0].mxu0
  %358 = vdwg.mxu0
  %359 = vmatprep.subr.bf16.mxu0 0
  %360 = vmatpush1.bf16.msra.mxu0 %v262
  %361 = vmatprep.subr.bf16.mxu0 0
  %362 = vmatpush1.bf16.msra.mxu0 %v263
  %363 = vmatprep.subr.bf16.mxu0 0
  %364 = vmatpush1.bf16.msra.mxu0 %v264
  %365 = vmatprep.subr.bf16.mxu0 0
  %366 = vmatpush1.bf16.msra.mxu0 %v265
  %367 = vmatprep.subr.bf16.mxu0 0
  %368 = vmatpush1.bf16.msra.mxu0 %v266
  %369 = vmatprep.subr.bf16.mxu0 0
  %370 = vmatpush1.bf16.msra.mxu0 %v267
  %371 = vmatprep.subr.bf16.mxu0 0
  %372 = vmatpush1.bf16.msra.mxu0 %v268
  %373 = vmatprep.subr.bf16.mxu0 0
  %374 = vmatpush1.bf16.msra.mxu0 %v269
  %375 = vmatprep.subr.bf16.mxu0 0
  %376 = vmatpush1.bf16.msra.mxu0 0
  %377 = vmatprep.subr.bf16.mxu0 0
  %378 = vmatpush1.bf16.msra.mxu0 0
  %379 = vmatprep.subr.bf16.mxu0 0
  %380 = vmatpush1.bf16.msra.mxu0 0
  %381 = vmatprep.subr.bf16.mxu0 0
  %382 = vmatpush1.bf16.msra.mxu0 0
  %383 = vmatprep.subr.bf16.mxu0 0
  %384 = vmatpush1.bf16.msra.mxu0 0
  %385 = vmatprep.subr.bf16.mxu0 0
  %386 = vmatpush1.bf16.msra.mxu0 0
  %387 = vmatprep.subr.bf16.mxu0 0
  %388 = vmatpush1.bf16.msra.mxu0 0
  %389 = vmatprep.subr.bf16.mxu0 0
  %390 = vmatpush1.bf16.msra.mxu0 0
  %391 = vmatprep.mubr.bf16.mxu0 0
  %392 = vmatmul.mubr.bf16.gmra.mrb[0].mxu0 %v128
  %v393 = vpop.f32.mrb[0].mxu0
  %v394 = vadd.f32 %v329, %v393
  %v395 = vpop.f32.mrb[0].mxu0
  %v396 = vpop.f32.mrb[0].mxu0
  %v397 = vadd.f32 %v332, %v396
  %v398 = vpop.f32.mrb[0].mxu0
  %399 = vmatprep.mubr.bf16.mxu0 0
  %400 = vmatmul.mubr.bf16.gmra.mrb[0].mxu0 %v131
  %v401 = vpop.f32.mrb[0].mxu0
  %v402 = vadd.f32 %v337, %v401
  %v403 = vpop.f32.mrb[0].mxu0
  %v404 = vpop.f32.mrb[0].mxu0
  %v405 = vadd.f32 %v340, %v404
  %v406 = vpop.f32.mrb[0].mxu0
  %407 = vmatprep.mubr.bf16.mxu0 0
  %408 = vmatmul.mubr.bf16.gmra.mrb[0].mxu0 %v134
  %v409 = vpop.f32.mrb[0].mxu0
  %v410 = vadd.f32 %v345, %v409
  %v411 = vpop.f32.mrb[0].mxu0
  %v412 = vpop.f32.mrb[0].mxu0
  %v413 = vadd.f32 %v348, %v412
  %v414 = vpop.f32.mrb[0].mxu0
  %415 = vmatprep.mubr.bf16.mxu0 0
  %416 = vmatmul.mubr.bf16.gmra.mrb[0].mxu0 %v137
  %v417 = vpop.f32.mrb[0].mxu0
  %v418 = vadd.f32 %v353, %v417
  %v419 = vpop.f32.mrb[0].mxu0
  %v420 = vpop.f32.mrb[0].mxu0
  %v421 = vadd.f32 %v356, %v420
  %v422 = vpop.f32.mrb[0].mxu0
  %423 = vdwg.mxu0
  %v424 = vmul.f32 %v394, 0.5
  %v425 = vmul.f32 %v397, 0.5
  %v426 = vmul.f32 %v402, 0.5
  %v427 = vmul.f32 %v405, 0.5
  %v428 = vmul.f32 %v410, 0.5
  %v429 = vmul.f32 %v413, 0.5
  %v430 = vmul.f32 %v418, 0.5
  %v431 = vmul.f32 %v421, 0.5
  %v432 = vmul.f32 %v394, 0.044715
  %v433 = vmul.f32 %v397, 0.044715
  %v434 = vmul.f32 %v402, 0.044715
  %v435 = vmul.f32 %v405, 0.044715
  %v436 = vmul.f32 %v410, 0.044715
  %v437 = vmul.f32 %v413, 0.044715
  %v438 = vmul.f32 %v418, 0.044715
  %v439 = vmul.f32 %v421, 0.044715
  %v440 = vmul.f32 %v432, %v394
  %v441 = vmul.f32 %v433, %v397
  %v442 = vmul.f32 %v434, %v402
  %v443 = vmul.f32 %v435, %v405
  %v444 = vmul.f32 %v436, %v410
  %v445 = vmul.f32 %v437, %v413
  %v446 = vmul.f32 %v438, %v418
  %v447 = vmul.f32 %v439, %v421
  %v448 = vmul.f32 %v440, %v394
  %v449 = vmul.f32 %v441, %v397
  %v450 = vmul.f32 %v442, %v402
  %v451 = vmul.f32 %v443, %v405
  %v452 = vmul.f32 %v444, %v410
  %v453 = vmul.f32 %v445, %v413
  %v454 = vmul.f32 %v446, %v418
  %v455 = vmul.f32 %v447, %v421
  %v456 = vadd.f32 %v394, %v448
  %v457 = vadd.f32 %v397, %v449
  %v458 = vadd.f32 %v402, %v450
  %v459 = vadd.f32 %v405, %v451
  %v460 = vadd.f32 %v410, %v452
  %v461 = vadd.f32 %v413, %v453
  %v462 = vadd.f32 %v418, %v454
  %v463 = vadd.f32 %v421, %v455
  %v464 = vmul.f32 %v456, 0.7978846
  %v465 = vmul.f32 %v457, 0.7978846
  %v466 = vmul.f32 %v458, 0.7978846
  %v467 = vmul.f32 %v459, 0.7978846
  %v468 = vmul.f32 %v460, 0.7978846
  %v469 = vmul.f32 %v461, 0.7978846
  %v470 = vmul.f32 %v462, 0.7978846
  %v471 = vmul.f32 %v463, 0.7978846
  %v472 = vtanh.pop %v464
  %v473 = vtanh.pop %v465
  %v474 = vtanh.pop %v466
  %v475 = vtanh.pop %v467
  %v476 = vtanh.pop %v468
  %v477 = vtanh.pop %v469
  %v478 = vtanh.pop %v470
  %v479 = vtanh.pop %v471
  %v480 = vadd.f32 %v472, 1.0
  %v481 = vadd.f32 %v473, 1.0
  %v482 = vadd.f32 %v474, 1.0
  %v483 = vadd.f32 %v475, 1.0
  %v484 = vadd.f32 %v476, 1.0
  %v485 = vadd.f32 %v477, 1.0
  %v486 = vadd.f32 %v478, 1.0
  %v487 = vadd.f32 %v479, 1.0
  %v488 = vmul.f32 %v424, %v480
  %v489 = vmul.f32 %v425, %v481
  %v490 = vmul.f32 %v426, %v482
  %v491 = vmul.f32 %v427, %v483
  %v492 = vmul.f32 %v428, %v484
  %v493 = vmul.f32 %v429, %v485
  %v494 = vmul.f32 %v430, %v486
  %v495 = vmul.f32 %v431, %v487
  %496 = vst [vmem:[%s3] sm:$0xff] %v488
  %497 = vst [vmem:[%s3 + $0x8] sm:$0xff] %v489
  %498 = vst [vmem:[%s3 + $0x10] sm:$0xff] %v490
  %499 = vst [vmem:[%s3 + $0x18] sm:$0xff] %v491
  %500 = vst [vmem:[%s3 + $0x20] sm:$0xff] %v492
  %501 = vst [vmem:[%s3 + $0x28] sm:$0xff] %v493
  %502 = vst [vmem:[%s3 + $0x30] sm:$0xff] %v494
  %503 = vst [vmem:[%s3 + $0x38] sm:$0xff] %v495
  // Predicated region
  $region14: #{_lambda_.11} parent=0 // pred_check
    _
  $region15: #{_lambda_.11} parent=0 // pred_check_branch
    %505 = sbr.rel (0) target = $region17
  $region16: #{_lambda_.11} parent=0 // pred_region
    _
  $region17: #{_lambda_.11} parent=0 // pred_fallthru
    _
  // Predicated region
  $region18: #{_lambda_.11} parent=0 // pred_check
    _
  $region19: #{_lambda_.11} parent=0 // pred_check_branch
    %507 = sbr.rel (0) target = $region21
  $region20: #{_lambda_.11} parent=0 // pred_region
    _
  $region21: #{_lambda_.11} parent=0 // pred_fallthru
    _

// kernel: _lambda_.12
$region0: #{_lambda_.12}
  #allocation0 [shape = 'u32[]', space=smem, size = 0x4, offset = 0x4, fixed_abs, tag = 'smem constant byte address 0x4 - core index']
  #allocation1 [shape = 'u32[144,128]{1,0:T(1,128)}', space=vmem, size = 0x12000, scoped, tag = 'internal scratch']
  %s0 = inlined_call_operand.vmem [shape: bf16[8,256], index: 0, kind: input, shape index: {}]
  %s1 = inlined_call_operand.vmem [shape: bf16[256,128], index: 1, kind: input, shape index: {}]
  %s2 = inlined_call_operand.vmem [shape: f32[1,128], index: 2, kind: input, shape index: {}]
  %s3 = inlined_call_operand.vmem [shape: f32[8,128], index: 3, kind: output, shape index: {}]
  %s4 = sld [smem:[#allocation0]]
  $region22: #{_lambda_.12} parent=0
    _
  %s6 = ssub.s32 1, %s4
  %s7 = scalar_select 0, %s6, %s4
  // Predicated region
  $region2: #{_lambda_.12} parent=0 // pred_check
    _
  $region3: #{_lambda_.12} parent=0 // pred_check_branch
    %9 = sbr.rel (0) target = $region5
  $region4: #{_lambda_.12} parent=0 // pred_region
    _
  $region5: #{_lambda_.12} parent=0 // pred_fallthru
    _
  // Predicated region
  $region6: #{_lambda_.12} parent=0 // pred_check
    _
  $region7: #{_lambda_.12} parent=0 // pred_check_branch
    %11 = sbr.rel (0) target = $region9
  $region8: #{_lambda_.12} parent=0 // pred_region
    _
  $region9: #{_lambda_.12} parent=0 // pred_fallthru
    _
  // Predicated region
  $region10: #{_lambda_.12} parent=0 // pred_check
    _
  $region11: #{_lambda_.12} parent=0 // pred_check_branch
    %13 = sbr.rel (0) target = $region13
  $region12: #{_lambda_.12} parent=0 // pred_region
    _
  $region13: #{_lambda_.12} parent=0 // pred_fallthru
    _
  %v15 = vld [vmem:[%s0] sm:$0xff]
  %v16 = vld [vmem:[%s1] sm:$0xf]
  %v17 = vld [vmem:[%s1 + $0x4] sm:$0xf]
  %v18 = vld [vmem:[%s1 + $0x8] sm:$0xf]
  %v19 = vld [vmem:[%s1 + $0xc] sm:$0xf]
  %v20 = vld [vmem:[%s1 + $0x10] sm:$0xf]
  %v21 = vld [vmem:[%s1 + $0x14] sm:$0xf]
  %v22 = vld [vmem:[%s1 + $0x18] sm:$0xf]
  %v23 = vld [vmem:[%s1 + $0x1c] sm:$0xf]
  %v24 = vld [vmem:[%s1 + $0x20] sm:$0xf]
  %v25 = vld [vmem:[%s1 + $0x24] sm:$0xf]
  %v26 = vld [vmem:[%s1 + $0x28] sm:$0xf]
  %v27 = vld [vmem:[%s1 + $0x2c] sm:$0xf]
  %v28 = vld [vmem:[%s1 + $0x30] sm:$0xf]
  %v29 = vld [vmem:[%s1 + $0x34] sm:$0xf]
  %v30 = vld [vmem:[%s1 + $0x38] sm:$0xf]
  %v31 = vld [vmem:[%s1 + $0x3c] sm:$0xf]
  %v32 = vld [vmem:[%s1 + $0x40] sm:$0xf]
  %v33 = vld [vmem:[%s1 + $0x44] sm:$0xf]
  %v34 = vld [vmem:[%s1 + $0x48] sm:$0xf]
  %v35 = vld [vmem:[%s1 + $0x4c] sm:$0xf]
  %v36 = vld [vmem:[%s1 + $0x50] sm:$0xf]
  %v37 = vld [vmem:[%s1 + $0x54] sm:$0xf]
  %v38 = vld [vmem:[%s1 + $0x58] sm:$0xf]
  %v39 = vld [vmem:[%s1 + $0x5c] sm:$0xf]
  %v40 = vld [vmem:[%s1 + $0x60] sm:$0xf]
  %v41 = vld [vmem:[%s1 + $0x64] sm:$0xf]
  %v42 = vld [vmem:[%s1 + $0x68] sm:$0xf]
  %v43 = vld [vmem:[%s1 + $0x6c] sm:$0xf]
  %v44 = vld [vmem:[%s1 + $0x70] sm:$0xf]
  %v45 = vld [vmem:[%s1 + $0x74] sm:$0xf]
  %v46 = vld [vmem:[%s1 + $0x78] sm:$0xf]
  %v47 = vld [vmem:[%s1 + $0x7c] sm:$0xf]
  %v48 = vld [vmem:[%s2] sm:$0x1]
  %v50 = vlaneseq
  %v51 = vshrl.u32 %v50, 7
  %v52 = vsub.s32 0, %v51
  %v53 = vrot.slane %v48, %v52
  %v56 = vunpack.c.l.b16 %v15
  %v57 = vunpack.c.h.b16 %v15
  %v58 = vpack.c.b16 %v56, %v56
  %v59 = vpack.c.b16 %v57, %v57
  %v94 = vunpack.c.l.b16 %v16
  %v95 = vunpack.c.l.b16 %v17
  %v96 = vunpack.c.l.b16 %v18
  %v97 = vunpack.c.l.b16 %v19
  %v98 = vunpack.c.l.b16 %v20
  %v99 = vunpack.c.l.b16 %v21
  %v100 = vunpack.c.l.b16 %v22
  %v101 = vunpack.c.l.b16 %v23
  %v102 = vunpack.c.l.b16 %v24
  %v103 = vunpack.c.l.b16 %v25
  %v104 = vunpack.c.l.b16 %v26
  %v105 = vunpack.c.l.b16 %v27
  %v106 = vunpack.c.l.b16 %v28
  %v107 = vunpack.c.l.b16 %v29
  %v108 = vunpack.c.l.b16 %v30
  %v109 = vunpack.c.l.b16 %v31
  %v110 = vunpack.c.l.b16 %v32
  %v111 = vunpack.c.l.b16 %v33
  %v112 = vunpack.c.l.b16 %v34
  %v113 = vunpack.c.l.b16 %v35
  %v114 = vunpack.c.l.b16 %v36
  %v115 = vunpack.c.l.b16 %v37
  %v116 = vunpack.c.l.b16 %v38
  %v117 = vunpack.c.l.b16 %v39
  %v118 = vunpack.c.l.b16 %v40
  %v119 = vunpack.c.l.b16 %v41
  %v120 = vunpack.c.l.b16 %v42
  %v121 = vunpack.c.l.b16 %v43
  %v122 = vunpack.c.l.b16 %v44
  %v123 = vunpack.c.l.b16 %v45
  %v124 = vunpack.c.l.b16 %v46
  %v125 = vunpack.c.l.b16 %v47
  %v126 = vpack.c.b16 %v95, %v94
  %v127 = vpack.c.b16 %v97, %v96
  %v128 = vpack.c.b16 %v99, %v98
  %v129 = vpack.c.b16 %v101, %v100
  %v130 = vpack.c.b16 %v103, %v102
  %v131 = vpack.c.b16 %v105, %v104
  %v132 = vpack.c.b16 %v107, %v106
  %v133 = vpack.c.b16 %v109, %v108
  %v134 = vpack.c.b16 %v111, %v110
  %v135 = vpack.c.b16 %v113, %v112
  %v136 = vpack.c.b16 %v115, %v114
  %v137 = vpack.c.b16 %v117, %v116
  %v138 = vpack.c.b16 %v119, %v118
  %v139 = vpack.c.b16 %v121, %v120
  %v140 = vpack.c.b16 %v123, %v122
  %v141 = vpack.c.b16 %v125, %v124
  %158 = vmatprep.subr.bf16.mxu0 0
  %159 = vmatpush1.bf16.msra.mxu0 %v126
  %160 = vmatprep.subr.bf16.mxu0 0
  %161 = vmatpush1.bf16.msra.mxu0 %v127
  %162 = vmatprep.subr.bf16.mxu0 0
  %163 = vmatpush1.bf16.msra.mxu0 %v128
  %164 = vmatprep.subr.bf16.mxu0 0
  %165 = vmatpush1.bf16.msra.mxu0 %v129
  %166 = vmatprep.subr.bf16.mxu0 0
  %167 = vmatpush1.bf16.msra.mxu0 %v130
  %168 = vmatprep.subr.bf16.mxu0 0
  %169 = vmatpush1.bf16.msra.mxu0 %v131
  %170 = vmatprep.subr.bf16.mxu0 0
  %171 = vmatpush1.bf16.msra.mxu0 %v132
  %172 = vmatprep.subr.bf16.mxu0 0
  %173 = vmatpush1.bf16.msra.mxu0 %v133
  %174 = vmatprep.subr.bf16.mxu0 0
  %175 = vmatpush1.bf16.msra.mxu0 %v134
  %176 = vmatprep.subr.bf16.mxu0 0
  %177 = vmatpush1.bf16.msra.mxu0 %v135
  %178 = vmatprep.subr.bf16.mxu0 0
  %179 = vmatpush1.bf16.msra.mxu0 %v136
  %180 = vmatprep.subr.bf16.mxu0 0
  %181 = vmatpush1.bf16.msra.mxu0 %v137
  %182 = vmatprep.subr.bf16.mxu0 0
  %183 = vmatpush1.bf16.msra.mxu0 %v138
  %184 = vmatprep.subr.bf16.mxu0 0
  %185 = vmatpush1.bf16.msra.mxu0 %v139
  %186 = vmatprep.subr.bf16.mxu0 0
  %187 = vmatpush1.bf16.msra.mxu0 %v140
  %188 = vmatprep.subr.bf16.mxu0 0
  %189 = vmatpush1.bf16.msra.mxu0 %v141
  %190 = vmatprep.mubr.bf16.mxu0 %v59
  %191 = vmatmul.mubr.bf16.gmra.mrb[0].mxu0 %v58
  %v192 = vpop.f32.mrb[0].mxu0
  %v193 = vadd.f32 %v53, %v192
  %v194 = vpop.f32.mrb[0].mxu0
  %v195 = vpop.f32.mrb[0].mxu0
  %v196 = vpop.f32.mrb[0].mxu0
  %197 = vdwg.mxu0
  %198 = vst [vmem:[%s3] sm:$0xff] %v193
  // Predicated region
  $region14: #{_lambda_.12} parent=0 // pred_check
    _
  $region15: #{_lambda_.12} parent=0 // pred_check_branch
    %200 = sbr.rel (0) target = $region17
  $region16: #{_lambda_.12} parent=0 // pred_region
    _
  $region17: #{_lambda_.12} parent=0 // pred_fallthru
    _
  // Predicated region
  $region18: #{_lambda_.12} parent=0 // pred_check
    _
  $region19: #{_lambda_.12} parent=0 // pred_check_branch
    %202 = sbr.rel (0) target = $region21
  $region20: #{_lambda_.12} parent=0 // pred_region
    _
  $region21: #{_lambda_.12} parent=0 // pred_fallthru
    _

// kernel: _lambda_.13
$region0: #{_lambda_.13}
  #allocation0 [shape = 'u32[]', space=smem, size = 0x4, offset = 0x4, fixed_abs, tag = 'smem constant byte address 0x4 - core index']
  #allocation1 [shape = 'u32[144,128]{1,0:T(1,128)}', space=vmem, size = 0x12000, scoped, tag = 'internal scratch']
  %s0 = inlined_call_operand.vmem [shape: bf16[8,128], index: 0, kind: input, shape index: {}]
  %s1 = inlined_call_operand.vmem [shape: bf16[128,256], index: 1, kind: input, shape index: {}]
  %s2 = inlined_call_operand.vmem [shape: f32[1,256], index: 2, kind: input, shape index: {}]
  %s3 = inlined_call_operand.vmem [shape: f32[8,256], index: 3, kind: output, shape index: {}]
  %s4 = sld [smem:[#allocation0]]
  $region22: #{_lambda_.13} parent=0
    _
  %s6 = ssub.s32 1, %s4
  %s7 = scalar_select 0, %s6, %s4
  // Predicated region
  $region2: #{_lambda_.13} parent=0 // pred_check
    _
  $region3: #{_lambda_.13} parent=0 // pred_check_branch
    %9 = sbr.rel (0) target = $region5
  $region4: #{_lambda_.13} parent=0 // pred_region
    _
  $region5: #{_lambda_.13} parent=0 // pred_fallthru
    _
  // Predicated region
  $region6: #{_lambda_.13} parent=0 // pred_check
    _
  $region7: #{_lambda_.13} parent=0 // pred_check_branch
    %11 = sbr.rel (0) target = $region9
  $region8: #{_lambda_.13} parent=0 // pred_region
    _
  $region9: #{_lambda_.13} parent=0 // pred_fallthru
    _
  // Predicated region
  $region10: #{_lambda_.13} parent=0 // pred_check
    _
  $region11: #{_lambda_.13} parent=0 // pred_check_branch
    %13 = sbr.rel (0) target = $region13
  $region12: #{_lambda_.13} parent=0 // pred_region
    _
  $region13: #{_lambda_.13} parent=0 // pred_fallthru
    _
  %v15 = vld [vmem:[%s0] sm:$0xf]
  %v16 = vld [vmem:[%s1] sm:$0xff]
  %v17 = vld [vmem:[%s1 + $0x8] sm:$0xff]
  %v18 = vld [vmem:[%s1 + $0x10] sm:$0xff]
  %v19 = vld [vmem:[%s1 + $0x18] sm:$0xff]
  %v20 = vld [vmem:[%s1 + $0x20] sm:$0xff]
  %v21 = vld [vmem:[%s1 + $0x28] sm:$0xff]
  %v22 = vld [vmem:[%s1 + $0x30] sm:$0xff]
  %v23 = vld [vmem:[%s1 + $0x38] sm:$0xff]
  %v24 = vld [vmem:[%s1 + $0x40] sm:$0xff]
  %v25 = vld [vmem:[%s1 + $0x48] sm:$0xff]
  %v26 = vld [vmem:[%s1 + $0x50] sm:$0xff]
  %v27 = vld [vmem:[%s1 + $0x58] sm:$0xff]
  %v28 = vld [vmem:[%s1 + $0x60] sm:$0xff]
  %v29 = vld [vmem:[%s1 + $0x68] sm:$0xff]
  %v30 = vld [vmem:[%s1 + $0x70] sm:$0xff]
  %v31 = vld [vmem:[%s1 + $0x78] sm:$0xff]
  %v32 = vld [vmem:[%s2] sm:$0x3]
  %v34 = vlaneseq
  %v35 = vshrl.u32 %v34, 7
  %v36 = vsub.s32 0, %v35
  %v37 = vrot.slane %v32, %v36
  %v38 = vlaneseq
  %v39 = vshrl.u32 %v38, 7
  %v40 = vsub.s32 1, %v39
  %v41 = vrot.slane %v32, %v40
  %v60 = vunpack.c.l.b16 %v16
  %v61 = vunpack.c.h.b16 %v16
  %v62 = vunpack.c.l.b16 %v17
  %v63 = vunpack.c.h.b16 %v17
  %v64 = vunpack.c.l.b16 %v18
  %v65 = vunpack.c.h.b16 %v18
  %v66 = vunpack.c.l.b16 %v19
  %v67 = vunpack.c.h.b16 %v19
  %v68 = vunpack.c.l.b16 %v20
  %v69 = vunpack.c.h.b16 %v20
  %v70 = vunpack.c.l.b16 %v21
  %v71 = vunpack.c.h.b16 %v21
  %v72 = vunpack.c.l.b16 %v22
  %v73 = vunpack.c.h.b16 %v22
  %v74 = vunpack.c.l.b16 %v23
  %v75 = vunpack.c.h.b16 %v23
  %v76 = vunpack.c.l.b16 %v24
  %v77 = vunpack.c.h.b16 %v24
  %v78 = vunpack.c.l.b16 %v25
  %v79 = vunpack.c.h.b16 %v25
  %v80 = vunpack.c.l.b16 %v26
  %v81 = vunpack.c.h.b16 %v26
  %v82 = vunpack.c.l.b16 %v27
  %v83 = vunpack.c.h.b16 %v27
  %v84 = vunpack.c.l.b16 %v28
  %v85 = vunpack.c.h.b16 %v28
  %v86 = vunpack.c.l.b16 %v29
  %v87 = vunpack.c.h.b16 %v29
  %v88 = vunpack.c.l.b16 %v30
  %v89 = vunpack.c.h.b16 %v30
  %v90 = vunpack.c.l.b16 %v31
  %v91 = vunpack.c.h.b16 %v31
  %v92 = vpack.c.b16 %v62, %v60
  %v93 = vpack.c.b16 %v63, %v61
  %v94 = vpack.c.b16 %v66, %v64
  %v95 = vpack.c.b16 %v67, %v65
  %v96 = vpack.c.b16 %v70, %v68
  %v97 = vpack.c.b16 %v71, %v69
  %v98 = vpack.c.b16 %v74, %v72
  %v99 = vpack.c.b16 %v75, %v73
  %v100 = vpack.c.b16 %v78, %v76
  %v101 = vpack.c.b16 %v79, %v77
  %v102 = vpack.c.b16 %v82, %v80
  %v103 = vpack.c.b16 %v83, %v81
  %v104 = vpack.c.b16 %v86, %v84
  %v105 = vpack.c.b16 %v87, %v85
  %v106 = vpack.c.b16 %v90, %v88
  %v107 = vpack.c.b16 %v91, %v89
  %124 = vmatprep.subr.bf16.mxu0 %v93
  %125 = vmatpush1.bf16.msra.mxu0 %v92
  %126 = vmatprep.subr.bf16.mxu0 %v95
  %127 = vmatpush1.bf16.msra.mxu0 %v94
  %128 = vmatprep.subr.bf16.mxu0 %v97
  %129 = vmatpush1.bf16.msra.mxu0 %v96
  %130 = vmatprep.subr.bf16.mxu0 %v99
  %131 = vmatpush1.bf16.msra.mxu0 %v98
  %132 = vmatprep.subr.bf16.mxu0 %v101
  %133 = vmatpush1.bf16.msra.mxu0 %v100
  %134 = vmatprep.subr.bf16.mxu0 %v103
  %135 = vmatpush1.bf16.msra.mxu0 %v102
  %136 = vmatprep.subr.bf16.mxu0 %v105
  %137 = vmatpush1.bf16.msra.mxu0 %v104
  %138 = vmatprep.subr.bf16.mxu0 %v107
  %139 = vmatpush1.bf16.msra.mxu0 %v106
  %140 = vmatprep.subr.bf16.mxu0 0
  %141 = vmatpush1.bf16.msra.mxu0 0
  %142 = vmatprep.subr.bf16.mxu0 0
  %143 = vmatpush1.bf16.msra.mxu0 0
  %144 = vmatprep.subr.bf16.mxu0 0
  %145 = vmatpush1.bf16.msra.mxu0 0
  %146 = vmatprep.subr.bf16.mxu0 0
  %147 = vmatpush1.bf16.msra.mxu0 0
  %148 = vmatprep.subr.bf16.mxu0 0
  %149 = vmatpush1.bf16.msra.mxu0 0
  %150 = vmatprep.subr.bf16.mxu0 0
  %151 = vmatpush1.bf16.msra.mxu0 0
  %152 = vmatprep.subr.bf16.mxu0 0
  %153 = vmatpush1.bf16.msra.mxu0 0
  %154 = vmatprep.subr.bf16.mxu0 0
  %155 = vmatpush1.bf16.msra.mxu0 0
  %156 = vmatprep.mubr.bf16.mxu0 0
  %157 = vmatmul.mubr.bf16.gmra.mrb[0].mxu0 %v15
  %v158 = vpop.f32.mrb[0].mxu0
  %v159 = vadd.f32 %v37, %v158
  %v160 = vpop.f32.mrb[0].mxu0
  %v161 = vadd.f32 %v41, %v160
  %v162 = vpop.f32.mrb[0].mxu0
  %v163 = vpop.f32.mrb[0].mxu0
  %164 = vdwg.mxu0
  %vm165 = vcmp.ge.f32.partialorder %v159, 0.0
  %vm166 = vcmp.ge.f32.partialorder %v161, 0.0
  %v167 = vmul.f32 %v159, 0.01
  %v168 = vmul.f32 %v161, 0.01
  %v169 = vsel %vm165, %v159, %v167
  %v170 = vsel %vm166, %v161, %v168
  %171 = vst [vmem:[%s3] sm:$0xff] %v169
  %172 = vst [vmem:[%s3 + $0x8] sm:$0xff] %v170
  // Predicated region
  $region14: #{_lambda_.13} parent=0 // pred_check
    _
  $region15: #{_lambda_.13} parent=0 // pred_check_branch
    %174 = sbr.rel (0) target = $region17
  $region16: #{_lambda_.13} parent=0 // pred_region
    _
  $region17: #{_lambda_.13} parent=0 // pred_fallthru
    _
  // Predicated region
  $region18: #{_lambda_.13} parent=0 // pred_check
    _
  $region19: #{_lambda_.13} parent=0 // pred_check_branch
    %176 = sbr.rel (0) target = $region21
  $region20: #{_lambda_.13} parent=0 // pred_region
    _
  $region21: #{_lambda_.13} parent=0 // pred_fallthru
    _

// kernel: _lambda_.15
$region0: #{_lambda_.15}
  #allocation0 [shape = 'u32[]', space=smem, size = 0x4, offset = 0x4, fixed_abs, tag = 'smem constant byte address 0x4 - core index']
  #allocation1 [shape = 'u32[144,128]{1,0:T(1,128)}', space=vmem, size = 0x12000, scoped, tag = 'internal scratch']
  %s0 = inlined_call_operand.vmem [shape: bf16[8,128], index: 0, kind: input, shape index: {}]
  %s1 = inlined_call_operand.vmem [shape: bf16[128,128], index: 1, kind: input, shape index: {}]
  %s2 = inlined_call_operand.vmem [shape: f32[1,128], index: 2, kind: input, shape index: {}]
  %s3 = inlined_call_operand.vmem [shape: f32[8,128], index: 3, kind: output, shape index: {}]
  %s4 = sld [smem:[#allocation0]]
  $region22: #{_lambda_.15} parent=0
    _
  %s6 = ssub.s32 1, %s4
  %s7 = scalar_select 0, %s6, %s4
  // Predicated region
  $region2: #{_lambda_.15} parent=0 // pred_check
    _
  $region3: #{_lambda_.15} parent=0 // pred_check_branch
    %9 = sbr.rel (0) target = $region5
  $region4: #{_lambda_.15} parent=0 // pred_region
    _
  $region5: #{_lambda_.15} parent=0 // pred_fallthru
    _
  // Predicated region
  $region6: #{_lambda_.15} parent=0 // pred_check
    _
  $region7: #{_lambda_.15} parent=0 // pred_check_branch
    %11 = sbr.rel (0) target = $region9
  $region8: #{_lambda_.15} parent=0 // pred_region
    _
  $region9: #{_lambda_.15} parent=0 // pred_fallthru
    _
  // Predicated region
  $region10: #{_lambda_.15} parent=0 // pred_check
    _
  $region11: #{_lambda_.15} parent=0 // pred_check_branch
    %13 = sbr.rel (0) target = $region13
  $region12: #{_lambda_.15} parent=0 // pred_region
    _
  $region13: #{_lambda_.15} parent=0 // pred_fallthru
    _
  %v15 = vld [vmem:[%s0] sm:$0xf]
  %v16 = vld [vmem:[%s1] sm:$0xf]
  %v17 = vld [vmem:[%s1 + $0x4] sm:$0xf]
  %v18 = vld [vmem:[%s1 + $0x8] sm:$0xf]
  %v19 = vld [vmem:[%s1 + $0xc] sm:$0xf]
  %v20 = vld [vmem:[%s1 + $0x10] sm:$0xf]
  %v21 = vld [vmem:[%s1 + $0x14] sm:$0xf]
  %v22 = vld [vmem:[%s1 + $0x18] sm:$0xf]
  %v23 = vld [vmem:[%s1 + $0x1c] sm:$0xf]
  %v24 = vld [vmem:[%s1 + $0x20] sm:$0xf]
  %v25 = vld [vmem:[%s1 + $0x24] sm:$0xf]
  %v26 = vld [vmem:[%s1 + $0x28] sm:$0xf]
  %v27 = vld [vmem:[%s1 + $0x2c] sm:$0xf]
  %v28 = vld [vmem:[%s1 + $0x30] sm:$0xf]
  %v29 = vld [vmem:[%s1 + $0x34] sm:$0xf]
  %v30 = vld [vmem:[%s1 + $0x38] sm:$0xf]
  %v31 = vld [vmem:[%s1 + $0x3c] sm:$0xf]
  %v32 = vld [vmem:[%s2] sm:$0x1]
  %v34 = vlaneseq
  %v35 = vshrl.u32 %v34, 7
  %v36 = vsub.s32 0, %v35
  %v37 = vrot.slane %v32, %v36
  %v55 = vunpack.c.l.b16 %v16
  %v56 = vunpack.c.l.b16 %v17
  %v57 = vunpack.c.l.b16 %v18
  %v58 = vunpack.c.l.b16 %v19
  %v59 = vunpack.c.l.b16 %v20
  %v60 = vunpack.c.l.b16 %v21
  %v61 = vunpack.c.l.b16 %v22
  %v62 = vunpack.c.l.b16 %v23
  %v63 = vunpack.c.l.b16 %v24
  %v64 = vunpack.c.l.b16 %v25
  %v65 = vunpack.c.l.b16 %v26
  %v66 = vunpack.c.l.b16 %v27
  %v67 = vunpack.c.l.b16 %v28
  %v68 = vunpack.c.l.b16 %v29
  %v69 = vunpack.c.l.b16 %v30
  %v70 = vunpack.c.l.b16 %v31
  %v71 = vpack.c.b16 %v56, %v55
  %v72 = vpack.c.b16 %v58, %v57
  %v73 = vpack.c.b16 %v60, %v59
  %v74 = vpack.c.b16 %v62, %v61
  %v75 = vpack.c.b16 %v64, %v63
  %v76 = vpack.c.b16 %v66, %v65
  %v77 = vpack.c.b16 %v68, %v67
  %v78 = vpack.c.b16 %v70, %v69
  %87 = vmatprep.subr.bf16.mxu0 0
  %88 = vmatpush1.bf16.msra.mxu0 %v71
  %89 = vmatprep.subr.bf16.mxu0 0
  %90 = vmatpush1.bf16.msra.mxu0 %v72
  %91 = vmatprep.subr.bf16.mxu0 0
  %92 = vmatpush1.bf16.msra.mxu0 %v73
  %93 = vmatprep.subr.bf16.mxu0 0
  %94 = vmatpush1.bf16.msra.mxu0 %v74
  %95 = vmatprep.subr.bf16.mxu0 0
  %96 = vmatpush1.bf16.msra.mxu0 %v75
  %97 = vmatprep.subr.bf16.mxu0 0
  %98 = vmatpush1.bf16.msra.mxu0 %v76
  %99 = vmatprep.subr.bf16.mxu0 0
  %100 = vmatpush1.bf16.msra.mxu0 %v77
  %101 = vmatprep.subr.bf16.mxu0 0
  %102 = vmatpush1.bf16.msra.mxu0 %v78
  %103 = vmatprep.subr.bf16.mxu0 0
  %104 = vmatpush1.bf16.msra.mxu0 0
  %105 = vmatprep.subr.bf16.mxu0 0
  %106 = vmatpush1.bf16.msra.mxu0 0
  %107 = vmatprep.subr.bf16.mxu0 0
  %108 = vmatpush1.bf16.msra.mxu0 0
  %109 = vmatprep.subr.bf16.mxu0 0
  %110 = vmatpush1.bf16.msra.mxu0 0
  %111 = vmatprep.subr.bf16.mxu0 0
  %112 = vmatpush1.bf16.msra.mxu0 0
  %113 = vmatprep.subr.bf16.mxu0 0
  %114 = vmatpush1.bf16.msra.mxu0 0
  %115 = vmatprep.subr.bf16.mxu0 0
  %116 = vmatpush1.bf16.msra.mxu0 0
  %117 = vmatprep.subr.bf16.mxu0 0
  %118 = vmatpush1.bf16.msra.mxu0 0
  %119 = vmatprep.mubr.bf16.mxu0 0
  %120 = vmatmul.mubr.bf16.gmra.mrb[0].mxu0 %v15
  %v121 = vpop.f32.mrb[0].mxu0
  %v122 = vadd.f32 %v37, %v121
  %v123 = vpop.f32.mrb[0].mxu0
  %v124 = vpop.f32.mrb[0].mxu0
  %v125 = vpop.f32.mrb[0].mxu0
  %126 = vdwg.mxu0
  %v127 = vsub.f32 0.0, %v122
  %v128 = vmul.f32 %v127, 1.442695
  %v129 = vpow.pop %v128
  %v130 = vadd.f32 %v129, 1.0
  %v131 = vrcp.pop %v130
  %v132 = vmul.f32 1.0, %v131
  %133 = vst [vmem:[%s3] sm:$0xff] %v132
  // Predicated region
  $region14: #{_lambda_.15} parent=0 // pred_check
    _
  $region15: #{_lambda_.15} parent=0 // pred_check_branch
    %135 = sbr.rel (0) target = $region17
  $region16: #{_lambda_.15} parent=0 // pred_region
    _
  $region17: #{_lambda_.15} parent=0 // pred_fallthru
    _
  // Predicated region
  $region18: #{_lambda_.15} parent=0 // pred_check
    _
  $region19: #{_lambda_.15} parent=0 // pred_check_branch
    %137 = sbr.rel (0) target = $region21
  $region20: #{_lambda_.15} parent=0 // pred_region
    _
  $region21: #{_lambda_.15} parent=0 // pred_fallthru
    _

// kernel: _lambda_.14
$region0: #{_lambda_.14}
  #allocation0 [shape = 'u32[]', space=smem, size = 0x4, offset = 0x4, fixed_abs, tag = 'smem constant byte address 0x4 - core index']
  #allocation1 [shape = 'u32[144,128]{1,0:T(1,128)}', space=vmem, size = 0x12000, scoped, tag = 'internal scratch']
  %s0 = inlined_call_operand.vmem [shape: bf16[8,256], index: 0, kind: input, shape index: {}]
  %s1 = inlined_call_operand.vmem [shape: bf16[256,128], index: 1, kind: input, shape index: {}]
  %s2 = inlined_call_operand.vmem [shape: f32[1,128], index: 2, kind: input, shape index: {}]
  %s3 = inlined_call_operand.vmem [shape: f32[8,128], index: 3, kind: output, shape index: {}]
  %s4 = sld [smem:[#allocation0]]
  $region22: #{_lambda_.14} parent=0
    _
  %s6 = ssub.s32 1, %s4
  %s7 = scalar_select 0, %s6, %s4
  // Predicated region
  $region2: #{_lambda_.14} parent=0 // pred_check
    _
  $region3: #{_lambda_.14} parent=0 // pred_check_branch
    %9 = sbr.rel (0) target = $region5
  $region4: #{_lambda_.14} parent=0 // pred_region
    _
  $region5: #{_lambda_.14} parent=0 // pred_fallthru
    _
  // Predicated region
  $region6: #{_lambda_.14} parent=0 // pred_check
    _
  $region7: #{_lambda_.14} parent=0 // pred_check_branch
    %11 = sbr.rel (0) target = $region9
  $region8: #{_lambda_.14} parent=0 // pred_region
    _
  $region9: #{_lambda_.14} parent=0 // pred_fallthru
    _
  // Predicated region
  $region10: #{_lambda_.14} parent=0 // pred_check
    _
  $region11: #{_lambda_.14} parent=0 // pred_check_branch
    %13 = sbr.rel (0) target = $region13
  $region12: #{_lambda_.14} parent=0 // pred_region
    _
  $region13: #{_lambda_.14} parent=0 // pred_fallthru
    _
  %v15 = vld [vmem:[%s0] sm:$0xff]
  %v16 = vld [vmem:[%s1] sm:$0xf]
  %v17 = vld [vmem:[%s1 + $0x4] sm:$0xf]
  %v18 = vld [vmem:[%s1 + $0x8] sm:$0xf]
  %v19 = vld [vmem:[%s1 + $0xc] sm:$0xf]
  %v20 = vld [vmem:[%s1 + $0x10] sm:$0xf]
  %v21 = vld [vmem:[%s1 + $0x14] sm:$0xf]
  %v22 = vld [vmem:[%s1 + $0x18] sm:$0xf]
  %v23 = vld [vmem:[%s1 + $0x1c] sm:$0xf]
  %v24 = vld [vmem:[%s1 + $0x20] sm:$0xf]
  %v25 = vld [vmem:[%s1 + $0x24] sm:$0xf]
  %v26 = vld [vmem:[%s1 + $0x28] sm:$0xf]
  %v27 = vld [vmem:[%s1 + $0x2c] sm:$0xf]
  %v28 = vld [vmem:[%s1 + $0x30] sm:$0xf]
  %v29 = vld [vmem:[%s1 + $0x34] sm:$0xf]
  %v30 = vld [vmem:[%s1 + $0x38] sm:$0xf]
  %v31 = vld [vmem:[%s1 + $0x3c] sm:$0xf]
  %v32 = vld [vmem:[%s1 + $0x40] sm:$0xf]
  %v33 = vld [vmem:[%s1 + $0x44] sm:$0xf]
  %v34 = vld [vmem:[%s1 + $0x48] sm:$0xf]
  %v35 = vld [vmem:[%s1 + $0x4c] sm:$0xf]
  %v36 = vld [vmem:[%s1 + $0x50] sm:$0xf]
  %v37 = vld [vmem:[%s1 + $0x54] sm:$0xf]
  %v38 = vld [vmem:[%s1 + $0x58] sm:$0xf]
  %v39 = vld [vmem:[%s1 + $0x5c] sm:$0xf]
  %v40 = vld [vmem:[%s1 + $0x60] sm:$0xf]
  %v41 = vld [vmem:[%s1 + $0x64] sm:$0xf]
  %v42 = vld [vmem:[%s1 + $0x68] sm:$0xf]
  %v43 = vld [vmem:[%s1 + $0x6c] sm:$0xf]
  %v44 = vld [vmem:[%s1 + $0x70] sm:$0xf]
  %v45 = vld [vmem:[%s1 + $0x74] sm:$0xf]
  %v46 = vld [vmem:[%s1 + $0x78] sm:$0xf]
  %v47 = vld [vmem:[%s1 + $0x7c] sm:$0xf]
  %v48 = vld [vmem:[%s2] sm:$0x1]
  %v50 = vlaneseq
  %v51 = vshrl.u32 %v50, 7
  %v52 = vsub.s32 0, %v51
  %v53 = vrot.slane %v48, %v52
  %v56 = vunpack.c.l.b16 %v15
  %v57 = vunpack.c.h.b16 %v15
  %v58 = vpack.c.b16 %v56, %v56
  %v59 = vpack.c.b16 %v57, %v57
  %v94 = vunpack.c.l.b16 %v16
  %v95 = vunpack.c.l.b16 %v17
  %v96 = vunpack.c.l.b16 %v18
  %v97 = vunpack.c.l.b16 %v19
  %v98 = vunpack.c.l.b16 %v20
  %v99 = vunpack.c.l.b16 %v21
  %v100 = vunpack.c.l.b16 %v22
  %v101 = vunpack.c.l.b16 %v23
  %v102 = vunpack.c.l.b16 %v24
  %v103 = vunpack.c.l.b16 %v25
  %v104 = vunpack.c.l.b16 %v26
  %v105 = vunpack.c.l.b16 %v27
  %v106 = vunpack.c.l.b16 %v28
  %v107 = vunpack.c.l.b16 %v29
  %v108 = vunpack.c.l.b16 %v30
  %v109 = vunpack.c.l.b16 %v31
  %v110 = vunpack.c.l.b16 %v32
  %v111 = vunpack.c.l.b16 %v33
  %v112 = vunpack.c.l.b16 %v34
  %v113 = vunpack.c.l.b16 %v35
  %v114 = vunpack.c.l.b16 %v36
  %v115 = vunpack.c.l.b16 %v37
  %v116 = vunpack.c.l.b16 %v38
  %v117 = vunpack.c.l.b16 %v39
  %v118 = vunpack.c.l.b16 %v40
  %v119 = vunpack.c.l.b16 %v41
  %v120 = vunpack.c.l.b16 %v42
  %v121 = vunpack.c.l.b16 %v43
  %v122 = vunpack.c.l.b16 %v44
  %v123 = vunpack.c.l.b16 %v45
  %v124 = vunpack.c.l.b16 %v46
  %v125 = vunpack.c.l.b16 %v47
  %v126 = vpack.c.b16 %v95, %v94
  %v127 = vpack.c.b16 %v97, %v96
  %v128 = vpack.c.b16 %v99, %v98
  %v129 = vpack.c.b16 %v101, %v100
  %v130 = vpack.c.b16 %v103, %v102
  %v131 = vpack.c.b16 %v105, %v104
  %v132 = vpack.c.b16 %v107, %v106
  %v133 = vpack.c.b16 %v109, %v108
  %v134 = vpack.c.b16 %v111, %v110
  %v135 = vpack.c.b16 %v113, %v112
  %v136 = vpack.c.b16 %v115, %v114
  %v137 = vpack.c.b16 %v117, %v116
  %v138 = vpack.c.b16 %v119, %v118
  %v139 = vpack.c.b16 %v121, %v120
  %v140 = vpack.c.b16 %v123, %v122
  %v141 = vpack.c.b16 %v125, %v124
  %158 = vmatprep.subr.bf16.mxu0 0
  %159 = vmatpush1.bf16.msra.mxu0 %v126
  %160 = vmatprep.subr.bf16.mxu0 0
  %161 = vmatpush1.bf16.msra.mxu0 %v127
  %162 = vmatprep.subr.bf16.mxu0 0
  %163 = vmatpush1.bf16.msra.mxu0 %v128
  %164 = vmatprep.subr.bf16.mxu0 0
  %165 = vmatpush1.bf16.msra.mxu0 %v129
  %166 = vmatprep.subr.bf16.mxu0 0
  %167 = vmatpush1.bf16.msra.mxu0 %v130
  %168 = vmatprep.subr.bf16.mxu0 0
  %169 = vmatpush1.bf16.msra.mxu0 %v131
  %170 = vmatprep.subr.bf16.mxu0 0
  %171 = vmatpush1.bf16.msra.mxu0 %v132
  %172 = vmatprep.subr.bf16.mxu0 0
  %173 = vmatpush1.bf16.msra.mxu0 %v133
  %174 = vmatprep.subr.bf16.mxu0 0
  %175 = vmatpush1.bf16.msra.mxu0 %v134
  %176 = vmatprep.subr.bf16.mxu0 0
  %177 = vmatpush1.bf16.msra.mxu0 %v135
  %178 = vmatprep.subr.bf16.mxu0 0
  %179 = vmatpush1.bf16.msra.mxu0 %v136
  %180 = vmatprep.subr.bf16.mxu0 0
  %181 = vmatpush1.bf16.msra.mxu0 %v137
  %182 = vmatprep.subr.bf16.mxu0 0
  %183 = vmatpush1.bf16.msra.mxu0 %v138
  %184 = vmatprep.subr.bf16.mxu0 0
  %185 = vmatpush1.bf16.msra.mxu0 %v139
  %186 = vmatprep.subr.bf16.mxu0 0
  %187 = vmatpush1.bf16.msra.mxu0 %v140
  %188 = vmatprep.subr.bf16.mxu0 0
  %189 = vmatpush1.bf16.msra.mxu0 %v141
  %190 = vmatprep.mubr.bf16.mxu0 %v59
  %191 = vmatmul.mubr.bf16.gmra.mrb[0].mxu0 %v58
  %v192 = vpop.f32.mrb[0].mxu0
  %v193 = vadd.f32 %v53, %v192
  %v194 = vpop.f32.mrb[0].mxu0
  %v195 = vpop.f32.mrb[0].mxu0
  %v196 = vpop.f32.mrb[0].mxu0
  %197 = vdwg.mxu0
  %vm198 = vcmp.ge.f32.partialorder %v193, 0.0
  %v199 = vmul.f32 %v193, 0.01
  %v200 = vsel %vm198, %v193, %v199
  %201 = vst [vmem:[%s3] sm:$0xff] %v200
  // Predicated region
  $region14: #{_lambda_.14} parent=0 // pred_check
    _
  $region15: #{_lambda_.14} parent=0 // pred_check_branch
    %203 = sbr.rel (0) target = $region17
  $region16: #{_lambda_.14} parent=0 // pred_region
    _
  $region17: #{_lambda_.14} parent=0 // pred_fallthru
    _
  // Predicated region
  $region18: #{_lambda_.14} parent=0 // pred_check
    _
  $region19: #{_lambda_.14} parent=0 // pred_check_branch
    %205 = sbr.rel (0) target = $region21
  $region20: #{_lambda_.14} parent=0 // pred_region
    _
  $region21: #{_lambda_.14} parent=0 // pred_fallthru
    _

</llo_original>
